<compile_context>
chip_gen: v5e
topology: v5e:2x2
jax: 0.10.0
libtpu: 0.0.40
codegen_flags: <defaults>
</compile_context>

<pallas_src>
import numpy as np
import jax
import jax.numpy as jnp
from jax.experimental import pallas as pl
from jax.experimental.pallas import tpu as pltpu

HIGH = jax.lax.Precision.HIGHEST

HIDDEN = 64          # hidden_dim (kept small; original default is 256)
LATENT = 16          # latent_dim
NUM_IMAGES = 4
NUM_POS_FREQS = 10
NUM_DIR_FREQS = 4
POS_DIM = 3
DIR_DIM = 3
POS_ENC_DIM = POS_DIM * (2 * NUM_POS_FREQS + 1)   # 63
DIR_ENC_DIM = DIR_DIM * (2 * NUM_DIR_FREQS + 1)   # 27

TN = 512             # rows per grid step (swept 512-2048; 512 keeps >=2 steps
                     # at the demo size so both v7x TensorCores get work)
PACK = 128           # packed per-ray input width (lane-dense)
OUT_W = 16           # packed output width

# packed-input lane layout
OFF_X = 0                          # x          lanes [0, 3)
OFF_XE = OFF_X + POS_DIM           # x_enc      lanes [3, 66)
OFF_DE = OFF_XE + POS_ENC_DIM      # d_enc      lanes [66, 93)
OFF_EB = OFF_DE + DIR_ENC_DIM      # embed_b    lanes [93, 109)
PACK_USED = OFF_EB + LATENT        # 109 (rest zeros)


def _relu(v):
    return jnp.maximum(v, 0.0)


# ---------------------------------------------------------------------------
# Kernel
# ---------------------------------------------------------------------------
def nerfw_kernel(xin_ref, wcore_ref, win_ref, wsf_ref, wout_ref,
                 bhid_ref, bsf_ref, bout_ref, out_ref):
    # xin_ref : (TN, 128) f32   packed [x | x_enc | d_enc | embed_b | 0]
    # wcore_ref: (9, 64, 64) bf16  [W1,W2,W3,W4h,W5,W6,W7,Wt2,Wd1f(pad)]
    # win_ref  : (4, 128, 64) bf16 [W0p, W4xp, Wd1dp(pad), Wt1p]  (packed-K)
    # wsf_ref  : (64, 128) bf16    fused [Wfeat | Wsig | 0]
    # wout_ref : (2, 64, 16) bf16  [Wd2(pad), Wt3(pad)]
    # bhid_ref : (11, 64) f32  [b0..b7, bd1(pad), bt1, bt2]
    # bsf_ref  : (1, 128) f32  [bfeat | bsig | 0]
    # bout_ref : (2, 16) f32   [bd2(pad), bt3(pad)]
    # out_ref  : (TN, 16) f32  [rgb(3) sigma(1) trgb(3) tsig(1) conf(1) 0(7)]

    xin = xin_ref[...]                           # f32
    xin_bf = xin.astype(jnp.bfloat16)            # cast once for all MXU uses
    bh = bhid_ref[...]                           # (11, 64) f32
    bout = bout_ref[...]                         # (2, 16) f32

    def dot(a, w):                               # bf16 MXU, f32 accumulation
        return jnp.dot(a.astype(jnp.bfloat16), w,
                       preferred_element_type=jnp.float32)

    def pdot(widx):                              # packed input @ packed-K weight
        return jnp.dot(xin_bf, win_ref[widx],
                       preferred_element_type=jnp.float32)

    # ---- static MLP: 8 pts_linears, skip (cat[x_enc, h]) at layer 4 ----
    h = _relu(pdot(0) + bh[0:1])                          # layer 0
    h = _relu(dot(h, wcore_ref[0]) + bh[1:2])             # layer 1
    h = _relu(dot(h, wcore_ref[1]) + bh[2:3])             # layer 2
    h = _relu(dot(h, wcore_ref[2]) + bh[3:4])             # layer 3
    h = _relu(pdot(1) + dot(h, wcore_ref[3]) + bh[4:5])   # layer 4 (skip)
    h = _relu(dot(h, wcore_ref[4]) + bh[5:6])             # layer 5
    h = _relu(dot(h, wcore_ref[5]) + bh[6:7])             # layer 6
    h = _relu(dot(h, wcore_ref[6]) + bh[7:8])             # layer 7

    # ---- fused feature + density heads (one MXU launch) ----
    sf = dot(h, wsf_ref[...]) + bsf_ref[...]              # (TN, 128)
    feat = sf[:, 0:HIDDEN]                                # (TN, 64)
    sigma = sf[:, HIDDEN:HIDDEN + 1]                      # (TN, 1) unactivated

    # ---- view-direction branch: cat([features, d_enc]) -> 32 -> 3 ----
    hd = _relu(dot(feat, wcore_ref[8]) + pdot(2) + bh[8:9])
    rgb_pre = dot(hd, wout_ref[0]) + bout[0:1]            # (TN, 16), cols 0:3 real
    rgb = jax.nn.sigmoid(rgb_pre[:, 0:3])

    # ---- transient head: cat([x, embed_b]) -> 64 -> 64 -> 5 ----
    t = _relu(pdot(3) + bh[9:10])
    t = _relu(dot(t, wcore_ref[7]) + bh[10:11])
    tout = dot(t, wout_ref[1]) + bout[1:2]                # (TN, 16), cols 0:5 real
    trgb = jax.nn.sigmoid(tout[:, 0:3])
    tsig = _relu(tout[:, 3:4])
    conf = jax.nn.sigmoid(tout[:, 4:5])

    # single lane-packed store per tile
    out_ref[...] = jnp.concatenate(
        [rgb, sigma, trgb, tsig, conf,
         jnp.zeros((rgb.shape[0], OUT_W - 9), jnp.float32)], axis=-1)


# ---------------------------------------------------------------------------
# Glue: positional encoding, parameter init, slab packing, pallas_call wrapper
# ---------------------------------------------------------------------------
def positional_encoding(v, num_freqs):
    parts = [v]
    for f in range(num_freqs):
        parts.append(jnp.sin((2.0 ** f) * v))
        parts.append(jnp.cos((2.0 ** f) * v))
    return jnp.concatenate(parts, axis=-1)


def _linear(key, din, dout):
    kw, kb = jax.random.split(key)
    bound = 1.0 / np.sqrt(din)
    W = jax.random.uniform(kw, (din, dout), jnp.float32, -bound, bound)
    b = jax.random.uniform(kb, (1, dout), jnp.float32, -bound, bound)
    return W, b


def init_params(key):
    keys = jax.random.split(key, 18)
    pts_in = [POS_ENC_DIM, HIDDEN, HIDDEN, HIDDEN,
              HIDDEN + POS_ENC_DIM, HIDDEN, HIDDEN, HIDDEN]
    params = {"pts": [_linear(keys[i], pts_in[i], HIDDEN) for i in range(8)]}
    params["Wsig"], params["bsig"] = _linear(keys[8], HIDDEN, 1)
    params["Wfeat"], params["bfeat"] = _linear(keys[9], HIDDEN, HIDDEN)
    params["Wd1"], params["bd1"] = _linear(keys[10], HIDDEN + DIR_ENC_DIM, HIDDEN // 2)
    params["Wd2"], params["bd2"] = _linear(keys[11], HIDDEN // 2, 3)
    params["Wt1"], params["bt1"] = _linear(keys[12], LATENT + POS_DIM, HIDDEN)
    params["Wt2"], params["bt2"] = _linear(keys[13], HIDDEN, HIDDEN)
    params["Wt3"], params["bt3"] = _linear(keys[14], HIDDEN, 5)
    params["emb_a"] = jax.random.normal(keys[15], (NUM_IMAGES, LATENT), jnp.float32)
    params["emb_b"] = jax.random.normal(keys[16], (NUM_IMAGES, LATENT), jnp.float32)
    return params


def _zpad2(w, rows, cols):
    return jnp.zeros((rows, cols), jnp.float32).at[:w.shape[0], :w.shape[1]].set(w)


def _brow(b, width=HIDDEN):
    return jnp.zeros((width,), jnp.float32).at[:b.shape[-1]].set(b.reshape(-1))


def build_slabs(params):
    """Pack the 33 individual weights/biases into 7 lane-aligned slabs."""
    p = params
    BF = jnp.bfloat16

    W4 = p["pts"][4][0]
    w4x, w4h = W4[:POS_ENC_DIM], W4[POS_ENC_DIM:]
    Wd1 = p["Wd1"]
    wd1f, wd1d = Wd1[:HIDDEN], Wd1[HIDDEN:]
    Wt1 = p["Wt1"]
    wt1x, wt1e = Wt1[:POS_DIM], Wt1[POS_DIM:]

    # (9, 64, 64): hidden->hidden weights (Wd1f output-padded 32->64)
    wcore = jnp.stack([
        p["pts"][1][0], p["pts"][2][0], p["pts"][3][0], w4h,
        p["pts"][5][0], p["pts"][6][0], p["pts"][7][0],
        p["Wt2"],
        _zpad2(wd1f, HIDDEN, HIDDEN),
    ]).astype(BF)

    # (4, 128, 64): weights consuming the packed 128-lane input slab.
    # Rows outside each sub-input's lane range are zero, so
    # packed @ W_packed == sub_input @ W  (no in-kernel slicing / concat).
    def place(row_off, w):
        z = jnp.zeros((PACK, HIDDEN), jnp.float32)
        return z.at[row_off:row_off + w.shape[0], :w.shape[1]].set(w)

    win = jnp.stack([
        place(OFF_XE, p["pts"][0][0]),        # W0  (x_enc)
        place(OFF_XE, w4x),                   # W4x (x_enc, skip)
        place(OFF_DE, wd1d),                  # Wd1d (d_enc), out-padded 32->64
        place(OFF_X, wt1x) + place(OFF_EB, wt1e),   # Wt1 (x | embed_b)
    ]).astype(BF)

    # (64, 128): fused [feature | sigma] head
    wsf = jnp.zeros((HIDDEN, PACK), jnp.float32)
    wsf = wsf.at[:, :HIDDEN].set(p["Wfeat"]).at[:, HIDDEN:HIDDEN + 1].set(p["Wsig"])
    wsf = wsf.astype(BF)

    # (2, 64, 16): final tiny heads [Wd2 (rows 0:32, cols 0:3), Wt3 (cols 0:5)]
    wout = jnp.stack([_zpad2(p["Wd2"], HIDDEN, OUT_W),
                      _zpad2(p["Wt3"], HIDDEN, OUT_W)]).astype(BF)

    # biases (kept f32: added after f32 accumulation)
    bhid = jnp.stack([
        _brow(p["pts"][0][1]), _brow(p["pts"][1][1]), _brow(p["pts"][2][1]),
        _brow(p["pts"][3][1]), _brow(p["pts"][4][1]), _brow(p["pts"][5][1]),
        _brow(p["pts"][6][1]), _brow(p["pts"][7][1]),
        _brow(p["bd1"]), _brow(p["bt1"]), _brow(p["bt2"]),
    ])                                                     # (11, 64)
    bsf = jnp.zeros((1, PACK), jnp.float32)
    bsf = bsf.at[:, :HIDDEN].set(p["bfeat"]).at[:, HIDDEN:HIDDEN + 1].set(p["bsig"])
    bout = jnp.stack([_brow(p["bd2"], OUT_W), _brow(p["bt3"], OUT_W)])   # (2, 16)

    return wcore, win, wsf, wout, bhid, bsf, bout


def _const_spec(arr):
    nd = arr.ndim
    return pl.BlockSpec(arr.shape, lambda i, nd=nd: (0,) * nd)


def nerfw_forward(params, x, d, image_index):
    N = x.shape[0]
    x_enc = positional_encoding(x, NUM_POS_FREQS)
    d_enc = positional_encoding(d, NUM_DIR_FREQS)
    # embedding_a lookup intentionally omitted: unused in all returned outputs.
    embed_b = params["emb_b"][image_index]          # gather done in JAX glue

    # one lane-dense packed input slab: [x | x_enc | d_enc | embed_b | zeros]
    packed = jnp.concatenate(
        [x, x_enc, d_enc, embed_b,
         jnp.zeros((N, PACK - PACK_USED), jnp.float32)], axis=-1)

    tn = TN
    n_pad = (-N) % tn
    if n_pad:
        packed = jnp.pad(packed, ((0, n_pad), (0, 0)))
    Np = N + n_pad

    wcore, win, wsf, wout, bhid, bsf, bout = build_slabs(params)
    weight_args = (wcore, win, wsf, wout, bhid, bsf, bout)

    in_specs = ([pl.BlockSpec((tn, PACK), lambda i: (i, 0))]
                + [_const_spec(a) for a in weight_args])
    out_specs = pl.BlockSpec((tn, OUT_W), lambda i: (i, 0))
    out_shape = jax.ShapeDtypeStruct((Np, OUT_W), jnp.float32)

    out = pl.pallas_call(
        nerfw_kernel,
        out_shape=out_shape,
        grid_spec=pltpu.PrefetchScalarGridSpec(
            num_scalar_prefetch=0,
            grid=(Np // tn,),
            in_specs=in_specs,
            out_specs=out_specs,
        ),
        compiler_params=pltpu.CompilerParams(
            dimension_semantics=("parallel",)),
    )(packed, *weight_args)

    out = out[:N]
    static_rgb = out[:, 0:3]
    static_sigma = out[:, 3:4]
    transient_rgb = out[:, 4:7]
    transient_sigma = out[:, 7:8]
    confidence = out[:, 8:9]
    return static_rgb, static_sigma, transient_rgb, transient_sigma, confidence


# ---------------------------------------------------------------------------
# Pure-JAX reference (mirrors the PyTorch module, f32)
# ---------------------------------------------------------------------------
def reference_forward(params, x, d, image_index):
    xe = positional_encoding(x, NUM_POS_FREQS)
    de = positional_encoding(d, NUM_DIR_FREQS)
    h = xe
    for i in range(8):
        W, b = params["pts"][i]
        if i == 4:  # skips=[4]
            h = jnp.concatenate([xe, h], axis=-1)
        h = _relu(jnp.dot(h, W, precision=HIGH) + b)
    sigma = jnp.dot(h, params["Wsig"], precision=HIGH) + params["bsig"]
    feat = jnp.dot(h, params["Wfeat"], precision=HIGH) + params["bfeat"]
    hd = jnp.concatenate([feat, de], axis=-1)
    hd = _relu(jnp.dot(hd, params["Wd1"], precision=HIGH) + params["bd1"])
    rgb = jax.nn.sigmoid(jnp.dot(hd, params["Wd2"], precision=HIGH) + params["bd2"])
    eb = params["emb_b"][image_index]
    t = jnp.concatenate([x, eb], axis=-1)
    t = _relu(jnp.dot(t, params["Wt1"], precision=HIGH) + params["bt1"])
    t = _relu(jnp.dot(t, params["Wt2"], precision=HIGH) + params["bt2"])
    out = jnp.dot(t, params["Wt3"], precision=HIGH) + params["bt3"]
    return (rgb, sigma, jax.nn.sigmoid(out[:, :3]),
            _relu(out[:, 3:4]), jax.nn.sigmoid(out[:, 4:5]))


if __name__ == "__main__":
    N = 1024          # 2 grid steps of TN=512 (keeps both v7x TCs busy)
    key = jax.random.PRNGKey(0)
    kx, kd, ki, kp = jax.random.split(key, 4)
    x = jax.random.normal(kx, (N, POS_DIM), jnp.float32)
    d = jax.random.normal(kd, (N, DIR_DIM), jnp.float32)
    d = d / jnp.linalg.norm(d, axis=-1, keepdims=True)
    image_index = jax.random.randint(ki, (N,), 0, NUM_IMAGES)
    params = init_params(kp)

    fwd = jax.jit(nerfw_forward)
    outs = fwd(params, x, d, image_index)
    outs = jax.block_until_ready(outs)

    refs = reference_forward(params, x, d, image_index)
    # tolerance slightly loosened vs f32: kernel uses bf16 MXU matmuls with
    # f32 accumulation (per perf review).
    for o, r in zip(outs, refs):
        np.testing.assert_allclose(np.asarray(o), np.asarray(r),
                                   atol=3e-2, rtol=3e-2)

    print("KERNEL_OK")
</pallas_src>

<mosaic_0001>
module attributes {stable_mosaic.version = 11 : i64} {
  func.func @nerfw_kernel(%arg0: i32, %arg1: memref<512x128xf32, #tpu.memory_space<vmem>>, %arg2: memref<9x64x64xbf16, #tpu.memory_space<vmem>>, %arg3: memref<4x128x64xbf16, #tpu.memory_space<vmem>>, %arg4: memref<64x128xbf16, #tpu.memory_space<vmem>>, %arg5: memref<2x64x16xbf16, #tpu.memory_space<vmem>>, %arg6: memref<11x64xf32, #tpu.memory_space<vmem>>, %arg7: memref<1x128xf32, #tpu.memory_space<vmem>>, %arg8: memref<2x16xf32, #tpu.memory_space<vmem>>, %arg9: memref<512x16xf32, #tpu.memory_space<vmem>>) attributes {dimension_semantics = [#tpu.dimension_semantics<parallel>], iteration_bounds = array<i64: 2>, scalar_prefetch = 0 : i64, scratch_operands = 0 : i64, tpu.core_type = #tpu.core_type<tc>, window_params = [{transform_indices = @transform_0, window_bounds = array<i64: 512, 128>}, {pipeline_mode = #tpu.pipeline_mode<synchronous>, transform_indices = @transform_1, window_bounds = array<i64: 9, 64, 64>}, {pipeline_mode = #tpu.pipeline_mode<synchronous>, transform_indices = @transform_2, window_bounds = array<i64: 4, 128, 64>}, {pipeline_mode = #tpu.pipeline_mode<synchronous>, transform_indices = @transform_3, window_bounds = array<i64: 64, 128>}, {pipeline_mode = #tpu.pipeline_mode<synchronous>, transform_indices = @transform_4, window_bounds = array<i64: 2, 64, 16>}, {pipeline_mode = #tpu.pipeline_mode<synchronous>, transform_indices = @transform_5, window_bounds = array<i64: 11, 64>}, {pipeline_mode = #tpu.pipeline_mode<synchronous>, transform_indices = @transform_6, window_bounds = array<i64: 1, 128>}, {pipeline_mode = #tpu.pipeline_mode<synchronous>, transform_indices = @transform_7, window_bounds = array<i64: 2, 16>}, {transform_indices = @transform_8, window_bounds = array<i64: 512, 16>}]} {
    %c0 = arith.constant 0 : index
    %c0_0 = arith.constant 0 : index
    %0 = vector.load %arg1[%c0, %c0_0] : memref<512x128xf32, #tpu.memory_space<vmem>>, vector<512x128xf32>
    %1 = arith.truncf %0 : vector<512x128xf32> to vector<512x128xbf16>
    %c0_1 = arith.constant 0 : index
    %c0_2 = arith.constant 0 : index
    %2 = vector.load %arg6[%c0_1, %c0_2] : memref<11x64xf32, #tpu.memory_space<vmem>>, vector<11x64xf32>
    %c0_3 = arith.constant 0 : index
    %c0_4 = arith.constant 0 : index
    %3 = vector.load %arg8[%c0_3, %c0_4] : memref<2x16xf32, #tpu.memory_space<vmem>>, vector<2x16xf32>
    %c0_5 = arith.constant 0 : index
    %c0_6 = arith.constant 0 : index
    %c0_7 = arith.constant 0 : index
    %4 = vector.load %arg3[%c0_5, %c0_6, %c0_7] : memref<4x128x64xbf16, #tpu.memory_space<vmem>>, vector<1x128x64xbf16>
    %5 = vector.shape_cast %4 : vector<1x128x64xbf16> to vector<128x64xbf16>
    %cst = arith.constant dense<0.000000e+00> : vector<512x64xf32>
    %6 = tpu.matmul %1, %5, %cst {dimension_numbers = #tpu.dot_dimension_numbers<[1], [0], [0], [1], [0, 0, 1, 1], [], []>} : vector<512x128xbf16>, vector<128x64xbf16>, vector<512x64xf32> -> vector<512x64xf32>
    %7 = vector.extract_strided_slice %2 {offsets = [0, 0], sizes = [1, 64], strides = [1, 1]} : vector<11x64xf32> to vector<1x64xf32>
    %8 = vector.broadcast %7 : vector<1x64xf32> to vector<512x64xf32>
    %9 = arith.addf %6, %8 : vector<512x64xf32>
    %cst_8 = arith.constant 0.000000e+00 : f32
    %10 = vector.broadcast %cst_8 : f32 to vector<512x64xf32>
    %11 = arith.maximumf %9, %10 : vector<512x64xf32>
    %c0_9 = arith.constant 0 : index
    %c0_10 = arith.constant 0 : index
    %c0_11 = arith.constant 0 : index
    %12 = vector.load %arg2[%c0_9, %c0_10, %c0_11] : memref<9x64x64xbf16, #tpu.memory_space<vmem>>, vector<1x64x64xbf16>
    %13 = vector.shape_cast %12 : vector<1x64x64xbf16> to vector<64x64xbf16>
    %14 = arith.truncf %11 : vector<512x64xf32> to vector<512x64xbf16>
    %cst_12 = arith.constant dense<0.000000e+00> : vector<512x64xf32>
    %15 = tpu.matmul %14, %13, %cst_12 {dimension_numbers = #tpu.dot_dimension_numbers<[1], [0], [0], [1], [0, 0, 1, 1], [], []>} : vector<512x64xbf16>, vector<64x64xbf16>, vector<512x64xf32> -> vector<512x64xf32>
    %16 = vector.extract_strided_slice %2 {offsets = [1, 0], sizes = [1, 64], strides = [1, 1]} : vector<11x64xf32> to vector<1x64xf32>
    %17 = vector.broadcast %16 : vector<1x64xf32> to vector<512x64xf32>
    %18 = arith.addf %15, %17 : vector<512x64xf32>
    %cst_13 = arith.constant 0.000000e+00 : f32
    %19 = vector.broadcast %cst_13 : f32 to vector<512x64xf32>
    %20 = arith.maximumf %18, %19 : vector<512x64xf32>
    %c1 = arith.constant 1 : index
    %c0_14 = arith.constant 0 : index
    %c0_15 = arith.constant 0 : index
    %21 = vector.load %arg2[%c1, %c0_14, %c0_15] : memref<9x64x64xbf16, #tpu.memory_space<vmem>>, vector<1x64x64xbf16>
    %22 = vector.shape_cast %21 : vector<1x64x64xbf16> to vector<64x64xbf16>
    %23 = arith.truncf %20 : vector<512x64xf32> to vector<512x64xbf16>
    %cst_16 = arith.constant dense<0.000000e+00> : vector<512x64xf32>
    %24 = tpu.matmul %23, %22, %cst_16 {dimension_numbers = #tpu.dot_dimension_numbers<[1], [0], [0], [1], [0, 0, 1, 1], [], []>} : vector<512x64xbf16>, vector<64x64xbf16>, vector<512x64xf32> -> vector<512x64xf32>
    %25 = vector.extract_strided_slice %2 {offsets = [2, 0], sizes = [1, 64], strides = [1, 1]} : vector<11x64xf32> to vector<1x64xf32>
    %26 = vector.broadcast %25 : vector<1x64xf32> to vector<512x64xf32>
    %27 = arith.addf %24, %26 : vector<512x64xf32>
    %cst_17 = arith.constant 0.000000e+00 : f32
    %28 = vector.broadcast %cst_17 : f32 to vector<512x64xf32>
    %29 = arith.maximumf %27, %28 : vector<512x64xf32>
    %c2 = arith.constant 2 : index
    %c0_18 = arith.constant 0 : index
    %c0_19 = arith.constant 0 : index
    %30 = vector.load %arg2[%c2, %c0_18, %c0_19] : memref<9x64x64xbf16, #tpu.memory_space<vmem>>, vector<1x64x64xbf16>
    %31 = vector.shape_cast %30 : vector<1x64x64xbf16> to vector<64x64xbf16>
    %32 = arith.truncf %29 : vector<512x64xf32> to vector<512x64xbf16>
    %cst_20 = arith.constant dense<0.000000e+00> : vector<512x64xf32>
    %33 = tpu.matmul %32, %31, %cst_20 {dimension_numbers = #tpu.dot_dimension_numbers<[1], [0], [0], [1], [0, 0, 1, 1], [], []>} : vector<512x64xbf16>, vector<64x64xbf16>, vector<512x64xf32> -> vector<512x64xf32>
    %34 = vector.extract_strided_slice %2 {offsets = [3, 0], sizes = [1, 64], strides = [1, 1]} : vector<11x64xf32> to vector<1x64xf32>
    %35 = vector.broadcast %34 : vector<1x64xf32> to vector<512x64xf32>
    %36 = arith.addf %33, %35 : vector<512x64xf32>
    %cst_21 = arith.constant 0.000000e+00 : f32
    %37 = vector.broadcast %cst_21 : f32 to vector<512x64xf32>
    %38 = arith.maximumf %36, %37 : vector<512x64xf32>
    %c1_22 = arith.constant 1 : index
    %c0_23 = arith.constant 0 : index
    %c0_24 = arith.constant 0 : index
    %39 = vector.load %arg3[%c1_22, %c0_23, %c0_24] : memref<4x128x64xbf16, #tpu.memory_space<vmem>>, vector<1x128x64xbf16>
    %40 = vector.shape_cast %39 : vector<1x128x64xbf16> to vector<128x64xbf16>
    %cst_25 = arith.constant dense<0.000000e+00> : vector<512x64xf32>
    %41 = tpu.matmul %1, %40, %cst_25 {dimension_numbers = #tpu.dot_dimension_numbers<[1], [0], [0], [1], [0, 0, 1, 1], [], []>} : vector<512x128xbf16>, vector<128x64xbf16>, vector<512x64xf32> -> vector<512x64xf32>
    %c3 = arith.constant 3 : index
    %c0_26 = arith.constant 0 : index
    %c0_27 = arith.constant 0 : index
    %42 = vector.load %arg2[%c3, %c0_26, %c0_27] : memref<9x64x64xbf16, #tpu.memory_space<vmem>>, vector<1x64x64xbf16>
    %43 = vector.shape_cast %42 : vector<1x64x64xbf16> to vector<64x64xbf16>
    %44 = arith.truncf %38 : vector<512x64xf32> to vector<512x64xbf16>
    %cst_28 = arith.constant dense<0.000000e+00> : vector<512x64xf32>
    %45 = tpu.matmul %44, %43, %cst_28 {dimension_numbers = #tpu.dot_dimension_numbers<[1], [0], [0], [1], [0, 0, 1, 1], [], []>} : vector<512x64xbf16>, vector<64x64xbf16>, vector<512x64xf32> -> vector<512x64xf32>
    %46 = arith.addf %41, %45 : vector<512x64xf32>
    %47 = vector.extract_strided_slice %2 {offsets = [4, 0], sizes = [1, 64], strides = [1, 1]} : vector<11x64xf32> to vector<1x64xf32>
    %48 = vector.broadcast %47 : vector<1x64xf32> to vector<512x64xf32>
    %49 = arith.addf %46, %48 : vector<512x64xf32>
    %cst_29 = arith.constant 0.000000e+00 : f32
    %50 = vector.broadcast %cst_29 : f32 to vector<512x64xf32>
    %51 = arith.maximumf %49, %50 : vector<512x64xf32>
    %c4 = arith.constant 4 : index
    %c0_30 = arith.constant 0 : index
    %c0_31 = arith.constant 0 : index
    %52 = vector.load %arg2[%c4, %c0_30, %c0_31] : memref<9x64x64xbf16, #tpu.memory_space<vmem>>, vector<1x64x64xbf16>
    %53 = vector.shape_cast %52 : vector<1x64x64xbf16> to vector<64x64xbf16>
    %54 = arith.truncf %51 : vector<512x64xf32> to vector<512x64xbf16>
    %cst_32 = arith.constant dense<0.000000e+00> : vector<512x64xf32>
    %55 = tpu.matmul %54, %53, %cst_32 {dimension_numbers = #tpu.dot_dimension_numbers<[1], [0], [0], [1], [0, 0, 1, 1], [], []>} : vector<512x64xbf16>, vector<64x64xbf16>, vector<512x64xf32> -> vector<512x64xf32>
    %56 = vector.extract_strided_slice %2 {offsets = [5, 0], sizes = [1, 64], strides = [1, 1]} : vector<11x64xf32> to vector<1x64xf32>
    %57 = vector.broadcast %56 : vector<1x64xf32> to vector<512x64xf32>
    %58 = arith.addf %55, %57 : vector<512x64xf32>
    %cst_33 = arith.constant 0.000000e+00 : f32
    %59 = vector.broadcast %cst_33 : f32 to vector<512x64xf32>
    %60 = arith.maximumf %58, %59 : vector<512x64xf32>
    %c5 = arith.constant 5 : index
    %c0_34 = arith.constant 0 : index
    %c0_35 = arith.constant 0 : index
    %61 = vector.load %arg2[%c5, %c0_34, %c0_35] : memref<9x64x64xbf16, #tpu.memory_space<vmem>>, vector<1x64x64xbf16>
    %62 = vector.shape_cast %61 : vector<1x64x64xbf16> to vector<64x64xbf16>
    %63 = arith.truncf %60 : vector<512x64xf32> to vector<512x64xbf16>
    %cst_36 = arith.constant dense<0.000000e+00> : vector<512x64xf32>
    %64 = tpu.matmul %63, %62, %cst_36 {dimension_numbers = #tpu.dot_dimension_numbers<[1], [0], [0], [1], [0, 0, 1, 1], [], []>} : vector<512x64xbf16>, vector<64x64xbf16>, vector<512x64xf32> -> vector<512x64xf32>
    %65 = vector.extract_strided_slice %2 {offsets = [6, 0], sizes = [1, 64], strides = [1, 1]} : vector<11x64xf32> to vector<1x64xf32>
    %66 = vector.broadcast %65 : vector<1x64xf32> to vector<512x64xf32>
    %67 = arith.addf %64, %66 : vector<512x64xf32>
    %cst_37 = arith.constant 0.000000e+00 : f32
    %68 = vector.broadcast %cst_37 : f32 to vector<512x64xf32>
    %69 = arith.maximumf %67, %68 : vector<512x64xf32>
    %c6 = arith.constant 6 : index
    %c0_38 = arith.constant 0 : index
    %c0_39 = arith.constant 0 : index
    %70 = vector.load %arg2[%c6, %c0_38, %c0_39] : memref<9x64x64xbf16, #tpu.memory_space<vmem>>, vector<1x64x64xbf16>
    %71 = vector.shape_cast %70 : vector<1x64x64xbf16> to vector<64x64xbf16>
    %72 = arith.truncf %69 : vector<512x64xf32> to vector<512x64xbf16>
    %cst_40 = arith.constant dense<0.000000e+00> : vector<512x64xf32>
    %73 = tpu.matmul %72, %71, %cst_40 {dimension_numbers = #tpu.dot_dimension_numbers<[1], [0], [0], [1], [0, 0, 1, 1], [], []>} : vector<512x64xbf16>, vector<64x64xbf16>, vector<512x64xf32> -> vector<512x64xf32>
    %74 = vector.extract_strided_slice %2 {offsets = [7, 0], sizes = [1, 64], strides = [1, 1]} : vector<11x64xf32> to vector<1x64xf32>
    %75 = vector.broadcast %74 : vector<1x64xf32> to vector<512x64xf32>
    %76 = arith.addf %73, %75 : vector<512x64xf32>
    %cst_41 = arith.constant 0.000000e+00 : f32
    %77 = vector.broadcast %cst_41 : f32 to vector<512x64xf32>
    %78 = arith.maximumf %76, %77 : vector<512x64xf32>
    %c0_42 = arith.constant 0 : index
    %c0_43 = arith.constant 0 : index
    %79 = vector.load %arg4[%c0_42, %c0_43] : memref<64x128xbf16, #tpu.memory_space<vmem>>, vector<64x128xbf16>
    %80 = arith.truncf %78 : vector<512x64xf32> to vector<512x64xbf16>
    %cst_44 = arith.constant dense<0.000000e+00> : vector<512x128xf32>
    %81 = tpu.matmul %80, %79, %cst_44 {dimension_numbers = #tpu.dot_dimension_numbers<[1], [0], [0], [1], [0, 0, 1, 1], [], []>} : vector<512x64xbf16>, vector<64x128xbf16>, vector<512x128xf32> -> vector<512x128xf32>
    %c0_45 = arith.constant 0 : index
    %c0_46 = arith.constant 0 : index
    %82 = vector.load %arg7[%c0_45, %c0_46] : memref<1x128xf32, #tpu.memory_space<vmem>>, vector<1x128xf32>
    %83 = vector.broadcast %82 : vector<1x128xf32> to vector<512x128xf32>
    %84 = arith.addf %81, %83 : vector<512x128xf32>
    %85 = vector.extract_strided_slice %84 {offsets = [0, 0], sizes = [512, 64], strides = [1, 1]} : vector<512x128xf32> to vector<512x64xf32>
    %86 = vector.extract_strided_slice %84 {offsets = [0, 64], sizes = [512, 1], strides = [1, 1]} : vector<512x128xf32> to vector<512x1xf32>
    %c8 = arith.constant 8 : index
    %c0_47 = arith.constant 0 : index
    %c0_48 = arith.constant 0 : index
    %87 = vector.load %arg2[%c8, %c0_47, %c0_48] : memref<9x64x64xbf16, #tpu.memory_space<vmem>>, vector<1x64x64xbf16>
    %88 = vector.shape_cast %87 : vector<1x64x64xbf16> to vector<64x64xbf16>
    %89 = arith.truncf %85 : vector<512x64xf32> to vector<512x64xbf16>
    %cst_49 = arith.constant dense<0.000000e+00> : vector<512x64xf32>
    %90 = tpu.matmul %89, %88, %cst_49 {dimension_numbers = #tpu.dot_dimension_numbers<[1], [0], [0], [1], [0, 0, 1, 1], [], []>} : vector<512x64xbf16>, vector<64x64xbf16>, vector<512x64xf32> -> vector<512x64xf32>
    %c2_50 = arith.constant 2 : index
    %c0_51 = arith.constant 0 : index
    %c0_52 = arith.constant 0 : index
    %91 = vector.load %arg3[%c2_50, %c0_51, %c0_52] : memref<4x128x64xbf16, #tpu.memory_space<vmem>>, vector<1x128x64xbf16>
    %92 = vector.shape_cast %91 : vector<1x128x64xbf16> to vector<128x64xbf16>
    %cst_53 = arith.constant dense<0.000000e+00> : vector<512x64xf32>
    %93 = tpu.matmul %1, %92, %cst_53 {dimension_numbers = #tpu.dot_dimension_numbers<[1], [0], [0], [1], [0, 0, 1, 1], [], []>} : vector<512x128xbf16>, vector<128x64xbf16>, vector<512x64xf32> -> vector<512x64xf32>
    %94 = arith.addf %90, %93 : vector<512x64xf32>
    %95 = vector.extract_strided_slice %2 {offsets = [8, 0], sizes = [1, 64], strides = [1, 1]} : vector<11x64xf32> to vector<1x64xf32>
    %96 = vector.broadcast %95 : vector<1x64xf32> to vector<512x64xf32>
    %97 = arith.addf %94, %96 : vector<512x64xf32>
    %cst_54 = arith.constant 0.000000e+00 : f32
    %98 = vector.broadcast %cst_54 : f32 to vector<512x64xf32>
    %99 = arith.maximumf %97, %98 : vector<512x64xf32>
    %c0_55 = arith.constant 0 : index
    %c0_56 = arith.constant 0 : index
    %c0_57 = arith.constant 0 : index
    %100 = vector.load %arg5[%c0_55, %c0_56, %c0_57] : memref<2x64x16xbf16, #tpu.memory_space<vmem>>, vector<1x64x16xbf16>
    %101 = vector.shape_cast %100 : vector<1x64x16xbf16> to vector<64x16xbf16>
    %102 = arith.truncf %99 : vector<512x64xf32> to vector<512x64xbf16>
    %cst_58 = arith.constant dense<0.000000e+00> : vector<512x16xf32>
    %103 = tpu.matmul %102, %101, %cst_58 {dimension_numbers = #tpu.dot_dimension_numbers<[1], [0], [0], [1], [0, 0, 1, 1], [], []>} : vector<512x64xbf16>, vector<64x16xbf16>, vector<512x16xf32> -> vector<512x16xf32>
    %104 = vector.extract_strided_slice %3 {offsets = [0, 0], sizes = [1, 16], strides = [1, 1]} : vector<2x16xf32> to vector<1x16xf32>
    %105 = vector.broadcast %104 : vector<1x16xf32> to vector<512x16xf32>
    %106 = arith.addf %103, %105 : vector<512x16xf32>
    %107 = vector.extract_strided_slice %106 {offsets = [0, 0], sizes = [512, 3], strides = [1, 1]} : vector<512x16xf32> to vector<512x3xf32>
    %108 = arith.negf %107 : vector<512x3xf32>
    %109 = math.exp %108 : vector<512x3xf32>
    %cst_59 = arith.constant 1.000000e+00 : f32
    %110 = vector.broadcast %cst_59 : f32 to vector<512x3xf32>
    %111 = arith.addf %110, %109 : vector<512x3xf32>
    %112 = arith.divf %110, %111 : vector<512x3xf32>
    %c3_60 = arith.constant 3 : index
    %c0_61 = arith.constant 0 : index
    %c0_62 = arith.constant 0 : index
    %113 = vector.load %arg3[%c3_60, %c0_61, %c0_62] : memref<4x128x64xbf16, #tpu.memory_space<vmem>>, vector<1x128x64xbf16>
    %114 = vector.shape_cast %113 : vector<1x128x64xbf16> to vector<128x64xbf16>
    %cst_63 = arith.constant dense<0.000000e+00> : vector<512x64xf32>
    %115 = tpu.matmul %1, %114, %cst_63 {dimension_numbers = #tpu.dot_dimension_numbers<[1], [0], [0], [1], [0, 0, 1, 1], [], []>} : vector<512x128xbf16>, vector<128x64xbf16>, vector<512x64xf32> -> vector<512x64xf32>
    %116 = vector.extract_strided_slice %2 {offsets = [9, 0], sizes = [1, 64], strides = [1, 1]} : vector<11x64xf32> to vector<1x64xf32>
    %117 = vector.broadcast %116 : vector<1x64xf32> to vector<512x64xf32>
    %118 = arith.addf %115, %117 : vector<512x64xf32>
    %cst_64 = arith.constant 0.000000e+00 : f32
    %119 = vector.broadcast %cst_64 : f32 to vector<512x64xf32>
    %120 = arith.maximumf %118, %119 : vector<512x64xf32>
    %c7 = arith.constant 7 : index
    %c0_65 = arith.constant 0 : index
    %c0_66 = arith.constant 0 : index
    %121 = vector.load %arg2[%c7, %c0_65, %c0_66] : memref<9x64x64xbf16, #tpu.memory_space<vmem>>, vector<1x64x64xbf16>
    %122 = vector.shape_cast %121 : vector<1x64x64xbf16> to vector<64x64xbf16>
    %123 = arith.truncf %120 : vector<512x64xf32> to vector<512x64xbf16>
    %cst_67 = arith.constant dense<0.000000e+00> : vector<512x64xf32>
    %124 = tpu.matmul %123, %122, %cst_67 {dimension_numbers = #tpu.dot_dimension_numbers<[1], [0], [0], [1], [0, 0, 1, 1], [], []>} : vector<512x64xbf16>, vector<64x64xbf16>, vector<512x64xf32> -> vector<512x64xf32>
    %125 = vector.extract_strided_slice %2 {offsets = [10, 0], sizes = [1, 64], strides = [1, 1]} : vector<11x64xf32> to vector<1x64xf32>
    %126 = vector.broadcast %125 : vector<1x64xf32> to vector<512x64xf32>
    %127 = arith.addf %124, %126 : vector<512x64xf32>
    %cst_68 = arith.constant 0.000000e+00 : f32
    %128 = vector.broadcast %cst_68 : f32 to vector<512x64xf32>
    %129 = arith.maximumf %127, %128 : vector<512x64xf32>
    %c1_69 = arith.constant 1 : index
    %c0_70 = arith.constant 0 : index
    %c0_71 = arith.constant 0 : index
    %130 = vector.load %arg5[%c1_69, %c0_70, %c0_71] : memref<2x64x16xbf16, #tpu.memory_space<vmem>>, vector<1x64x16xbf16>
    %131 = vector.shape_cast %130 : vector<1x64x16xbf16> to vector<64x16xbf16>
    %132 = arith.truncf %129 : vector<512x64xf32> to vector<512x64xbf16>
    %cst_72 = arith.constant dense<0.000000e+00> : vector<512x16xf32>
    %133 = tpu.matmul %132, %131, %cst_72 {dimension_numbers = #tpu.dot_dimension_numbers<[1], [0], [0], [1], [0, 0, 1, 1], [], []>} : vector<512x64xbf16>, vector<64x16xbf16>, vector<512x16xf32> -> vector<512x16xf32>
    %134 = vector.extract_strided_slice %3 {offsets = [1, 0], sizes = [1, 16], strides = [1, 1]} : vector<2x16xf32> to vector<1x16xf32>
    %135 = vector.broadcast %134 : vector<1x16xf32> to vector<512x16xf32>
    %136 = arith.addf %133, %135 : vector<512x16xf32>
    %137 = vector.extract_strided_slice %136 {offsets = [0, 0], sizes = [512, 3], strides = [1, 1]} : vector<512x16xf32> to vector<512x3xf32>
    %138 = arith.negf %137 : vector<512x3xf32>
    %139 = math.exp %138 : vector<512x3xf32>
    %cst_73 = arith.constant 1.000000e+00 : f32
    %140 = vector.broadcast %cst_73 : f32 to vector<512x3xf32>
    %141 = arith.addf %140, %139 : vector<512x3xf32>
    %142 = arith.divf %140, %141 : vector<512x3xf32>
    %143 = vector.extract_strided_slice %136 {offsets = [0, 3], sizes = [512, 1], strides = [1, 1]} : vector<512x16xf32> to vector<512x1xf32>
    %cst_74 = arith.constant 0.000000e+00 : f32
    %144 = vector.broadcast %cst_74 : f32 to vector<512x1xf32>
    %145 = arith.maximumf %143, %144 : vector<512x1xf32>
    %146 = vector.extract_strided_slice %136 {offsets = [0, 4], sizes = [512, 1], strides = [1, 1]} : vector<512x16xf32> to vector<512x1xf32>
    %147 = arith.negf %146 : vector<512x1xf32>
    %148 = math.exp %147 : vector<512x1xf32>
    %cst_75 = arith.constant 1.000000e+00 : f32
    %149 = vector.broadcast %cst_75 : f32 to vector<512x1xf32>
    %150 = arith.addf %149, %148 : vector<512x1xf32>
    %151 = arith.divf %149, %150 : vector<512x1xf32>
    %cst_76 = arith.constant 0.000000e+00 : f32
    %152 = vector.broadcast %cst_76 : f32 to vector<512x7xf32>
    %153 = tpu.concatenate %112, %86, %142, %145, %151, %152 in 1 : vector<512x3xf32>, vector<512x1xf32>, vector<512x3xf32>, vector<512x1xf32>, vector<512x1xf32>, vector<512x7xf32> -> vector<512x16xf32>
    %c0_77 = arith.constant 0 : index
    %c0_78 = arith.constant 0 : index
    %154 = vector.load %arg9[%c0_77, %c0_78] : memref<512x16xf32, #tpu.memory_space<vmem>>, vector<512x16xf32>
    tpu.vector_store %arg9[%c0_77, %c0_78], %153 {strides = array<i32>} : memref<512x16xf32, #tpu.memory_space<vmem>>, vector<512x16xf32>,
    return
  }
  func.func @transform_0(%arg0: i32) -> (i32, i32) {
    %c0_i32 = arith.constant 0 : i32
    %c0_i32_0 = arith.constant 0 : i32
    return %arg0, %c0_i32 : i32, i32
  }
  func.func @transform_1(%arg0: i32) -> (i32, i32, i32) {
    %c0_i32 = arith.constant 0 : i32
    %c0_i32_0 = arith.constant 0 : i32
    %c0_i32_1 = arith.constant 0 : i32
    %c0_i32_2 = arith.constant 0 : i32
    return %c0_i32, %c0_i32_0, %c0_i32_1 : i32, i32, i32
  }
  func.func @transform_2(%arg0: i32) -> (i32, i32, i32) {
    %c0_i32 = arith.constant 0 : i32
    %c0_i32_0 = arith.constant 0 : i32
    %c0_i32_1 = arith.constant 0 : i32
    %c0_i32_2 = arith.constant 0 : i32
    return %c0_i32, %c0_i32_0, %c0_i32_1 : i32, i32, i32
  }
  func.func @transform_3(%arg0: i32) -> (i32, i32) {
    %c0_i32 = arith.constant 0 : i32
    %c0_i32_0 = arith.constant 0 : i32
    %c0_i32_1 = arith.constant 0 : i32
    return %c0_i32, %c0_i32_0 : i32, i32
  }
  func.func @transform_4(%arg0: i32) -> (i32, i32, i32) {
    %c0_i32 = arith.constant 0 : i32
    %c0_i32_0 = arith.constant 0 : i32
    %c0_i32_1 = arith.constant 0 : i32
    %c0_i32_2 = arith.constant 0 : i32
    return %c0_i32, %c0_i32_0, %c0_i32_1 : i32, i32, i32
  }
  func.func @transform_5(%arg0: i32) -> (i32, i32) {
    %c0_i32 = arith.constant 0 : i32
    %c0_i32_0 = arith.constant 0 : i32
    %c0_i32_1 = arith.constant 0 : i32
    return %c0_i32, %c0_i32_0 : i32, i32
  }
  func.func @transform_6(%arg0: i32) -> (i32, i32) {
    %c0_i32 = arith.constant 0 : i32
    %c0_i32_0 = arith.constant 0 : i32
    %c0_i32_1 = arith.constant 0 : i32
    return %c0_i32, %c0_i32_0 : i32, i32
  }
  func.func @transform_7(%arg0: i32) -> (i32, i32) {
    %c0_i32 = arith.constant 0 : i32
    %c0_i32_0 = arith.constant 0 : i32
    %c0_i32_1 = arith.constant 0 : i32
    return %c0_i32, %c0_i32_0 : i32, i32
  }
  func.func @transform_8(%arg0: i32) -> (i32, i32) {
    %c0_i32 = arith.constant 0 : i32
    %c0_i32_0 = arith.constant 0 : i32
    return %arg0, %c0_i32 : i32, i32
  }
}

</mosaic_0001>

<llo_original>
// kernel: nerfw_forward.1
$region0: #{nerfw_forward.1}
  #allocation0 [shape = 'u32[]', space=smem, size = 0x4, offset = 0x4, fixed_abs, tag = 'smem constant byte address 0x4 - core index']
  #allocation1 [shape = 'u32[72,128]{1,0:T(1,128)}', space=vmem, size = 0x9000, scoped, tag = 'internal scratch']
  %s0 = inlined_call_operand.vmem [shape: f32[1024,128], index: 0, kind: input, shape index: {}]
  %s1 = inlined_call_operand.vmem [shape: bf16[9,64,64], index: 1, kind: input, shape index: {}]
  %s2 = inlined_call_operand.vmem [shape: bf16[4,128,64], index: 2, kind: input, shape index: {}]
  %s3 = inlined_call_operand.vmem [shape: bf16[64,128], index: 3, kind: input, shape index: {}]
  %s4 = inlined_call_operand.vmem [shape: bf16[2,64,16], index: 4, kind: input, shape index: {}]
  %s5 = inlined_call_operand.vmem [shape: f32[11,64], index: 5, kind: input, shape index: {}]
  %s6 = inlined_call_operand.vmem [shape: f32[1,128], index: 6, kind: input, shape index: {}]
  %s7 = inlined_call_operand.vmem [shape: f32[2,16], index: 7, kind: input, shape index: {}]
  %s8 = inlined_call_operand.vmem [shape: f32[1024,16], index: 8, kind: output, shape index: {}]
  %s9 = sld [smem:[#allocation0]]
  $region65: #{nerfw_forward.1} parent=0
    _
  %s11 = ssub.s32 1, %s9
  %s12 = scalar_select 0, %s11, %s9
  loop: start=0, step=1, limit=4
  $region2: #{nerfw_forward.1} parent=0 // loop_pre_header
    _
  $region3: #{nerfw_forward.1} parent=0 // loop_header
    %s14 = sphi 0, %s18
    %p15 = scmp.ge.s32.totalorder %s14, 4
    %s24 = sphi 0, %s26
    %s27 = sphi 0, %s24
    %s28 = sphi 0, %s27
    %s44 = sphi 0, %s28
    %s48 = sphi 0, %s48
    %s50 = sphi 0, %s48
    %s51 = sphi 0, %s50
    %s65 = sphi 0, %s51
    %s69 = sphi 0, %s69
    %s71 = sphi 0, %s69
    %s72 = sphi 0, %s71
    %s86 = sphi 0, %s72
    %s90 = sphi 0, %s90
    %s92 = sphi 0, %s90
    %s93 = sphi 0, %s92
    %s107 = sphi 0, %s93
    %s111 = sphi 0, %s111
    %s113 = sphi 0, %s111
    %s114 = sphi 0, %s113
    %s128 = sphi 0, %s114
    %s132 = sphi 0, %s132
    %s134 = sphi 0, %s132
    %s135 = sphi 0, %s134
    %s149 = sphi 0, %s135
    %s153 = sphi 0, %s153
    %s155 = sphi 0, %s153
    %s156 = sphi 0, %s155
    %s170 = sphi 0, %s156
    %s174 = sphi 0, %s174
    %s176 = sphi 0, %s174
    %s177 = sphi 0, %s176
    %s191 = sphi 0, %s177
    %s197 = sphi 0, %s199
    %s200 = sphi 0, %s197
    %s201 = sphi 0, %s200
    %s217 = sphi 0, %s201
  $region4: #{nerfw_forward.1} parent=0 // loop_header_branch
    %17 = sbr.rel (%p15) target = $region8
  $region5: #{nerfw_forward.1} parent=0 // loop_body
    %s19 = ssub.s32 %s14, 1
    %s20 = ssub.s32 %s14, 2
    %s21 = sadd.s32 %s14, 1
    %s22 = ssub.s32 %s14, %s21
    %p23 = scmp.eq.s32.totalorder %s22, 0
    %s25 = sadd.s32 %s24, 1
    %s26 = scalar_select %p23, %s24, %s25
    %p29 = pneg %p23
    %p30 = scmp.eq.s32.totalorder %s14, 1
    %p31 = por %p29, %p30
    %p32 = scmp.ne.s32.totalorder %s24, %s27
    %p33 = scmp.eq.s32.totalorder %s14, 0
    %p34 = por %p32, %p33
    %p35 = scmp.ne.s32.totalorder %s24, %s27
    %p36 = scmp.eq.s32.totalorder %s19, 1
    %p37 = por %p35, %p36
    %p38 = scmp.ne.s32.totalorder %s27, %s28
    %p39 = scmp.eq.s32.totalorder %s19, 0
    %p40 = por %p38, %p39
    %p41 = scmp.ne.s32.totalorder %s27, %s28
    %p42 = scmp.eq.s32.totalorder %s20, 1
    %p43 = por %p41, %p42
    %p45 = scmp.ne.s32.totalorder %s28, %s44
    %p46 = scmp.eq.s32.totalorder %s20, 0
    %p47 = por %p45, %p46
    %s49 = sadd.s32 %s48, 1
    %p52 = scmp.eq.s32.totalorder %s14, 1
    %p53 = scmp.ne.s32.totalorder %s48, %s50
    %p54 = scmp.eq.s32.totalorder %s14, 0
    %p55 = por %p53, %p54
    %p56 = scmp.ne.s32.totalorder %s48, %s50
    %p57 = scmp.eq.s32.totalorder %s19, 1
    %p58 = por %p56, %p57
    %p59 = scmp.ne.s32.totalorder %s50, %s51
    %p60 = scmp.eq.s32.totalorder %s19, 0
    %p61 = por %p59, %p60
    %p62 = scmp.ne.s32.totalorder %s50, %s51
    %p63 = scmp.eq.s32.totalorder %s20, 1
    %p64 = por %p62, %p63
    %p66 = scmp.ne.s32.totalorder %s51, %s65
    %p67 = scmp.eq.s32.totalorder %s20, 0
    %p68 = por %p66, %p67
    %s70 = sadd.s32 %s69, 1
    %p73 = scmp.eq.s32.totalorder %s14, 1
    %p74 = scmp.ne.s32.totalorder %s69, %s71
    %p75 = scmp.eq.s32.totalorder %s14, 0
    %p76 = por %p74, %p75
    %p77 = scmp.ne.s32.totalorder %s69, %s71
    %p78 = scmp.eq.s32.totalorder %s19, 1
    %p79 = por %p77, %p78
    %p80 = scmp.ne.s32.totalorder %s71, %s72
    %p81 = scmp.eq.s32.totalorder %s19, 0
    %p82 = por %p80, %p81
    %p83 = scmp.ne.s32.totalorder %s71, %s72
    %p84 = scmp.eq.s32.totalorder %s20, 1
    %p85 = por %p83, %p84
    %p87 = scmp.ne.s32.totalorder %s72, %s86
    %p88 = scmp.eq.s32.totalorder %s20, 0
    %p89 = por %p87, %p88
    %s91 = sadd.s32 %s90, 1
    %p94 = scmp.eq.s32.totalorder %s14, 1
    %p95 = scmp.ne.s32.totalorder %s90, %s92
    %p96 = scmp.eq.s32.totalorder %s14, 0
    %p97 = por %p95, %p96
    %p98 = scmp.ne.s32.totalorder %s90, %s92
    %p99 = scmp.eq.s32.totalorder %s19, 1
    %p100 = por %p98, %p99
    %p101 = scmp.ne.s32.totalorder %s92, %s93
    %p102 = scmp.eq.s32.totalorder %s19, 0
    %p103 = por %p101, %p102
    %p104 = scmp.ne.s32.totalorder %s92, %s93
    %p105 = scmp.eq.s32.totalorder %s20, 1
    %p106 = por %p104, %p105
    %p108 = scmp.ne.s32.totalorder %s93, %s107
    %p109 = scmp.eq.s32.totalorder %s20, 0
    %p110 = por %p108, %p109
    %s112 = sadd.s32 %s111, 1
    %p115 = scmp.eq.s32.totalorder %s14, 1
    %p116 = scmp.ne.s32.totalorder %s111, %s113
    %p117 = scmp.eq.s32.totalorder %s14, 0
    %p118 = por %p116, %p117
    %p119 = scmp.ne.s32.totalorder %s111, %s113
    %p120 = scmp.eq.s32.totalorder %s19, 1
    %p121 = por %p119, %p120
    %p122 = scmp.ne.s32.totalorder %s113, %s114
    %p123 = scmp.eq.s32.totalorder %s19, 0
    %p124 = por %p122, %p123
    %p125 = scmp.ne.s32.totalorder %s113, %s114
    %p126 = scmp.eq.s32.totalorder %s20, 1
    %p127 = por %p125, %p126
    %p129 = scmp.ne.s32.totalorder %s114, %s128
    %p130 = scmp.eq.s32.totalorder %s20, 0
    %p131 = por %p129, %p130
    %s133 = sadd.s32 %s132, 1
    %p136 = scmp.eq.s32.totalorder %s14, 1
    %p137 = scmp.ne.s32.totalorder %s132, %s134
    %p138 = scmp.eq.s32.totalorder %s14, 0
    %p139 = por %p137, %p138
    %p140 = scmp.ne.s32.totalorder %s132, %s134
    %p141 = scmp.eq.s32.totalorder %s19, 1
    %p142 = por %p140, %p141
    %p143 = scmp.ne.s32.totalorder %s134, %s135
    %p144 = scmp.eq.s32.totalorder %s19, 0
    %p145 = por %p143, %p144
    %p146 = scmp.ne.s32.totalorder %s134, %s135
    %p147 = scmp.eq.s32.totalorder %s20, 1
    %p148 = por %p146, %p147
    %p150 = scmp.ne.s32.totalorder %s135, %s149
    %p151 = scmp.eq.s32.totalorder %s20, 0
    %p152 = por %p150, %p151
    %s154 = sadd.s32 %s153, 1
    %p157 = scmp.eq.s32.totalorder %s14, 1
    %p158 = scmp.ne.s32.totalorder %s153, %s155
    %p159 = scmp.eq.s32.totalorder %s14, 0
    %p160 = por %p158, %p159
    %p161 = scmp.ne.s32.totalorder %s153, %s155
    %p162 = scmp.eq.s32.totalorder %s19, 1
    %p163 = por %p161, %p162
    %p164 = scmp.ne.s32.totalorder %s155, %s156
    %p165 = scmp.eq.s32.totalorder %s19, 0
    %p166 = por %p164, %p165
    %p167 = scmp.ne.s32.totalorder %s155, %s156
    %p168 = scmp.eq.s32.totalorder %s20, 1
    %p169 = por %p167, %p168
    %p171 = scmp.ne.s32.totalorder %s156, %s170
    %p172 = scmp.eq.s32.totalorder %s20, 0
    %p173 = por %p171, %p172
    %s175 = sadd.s32 %s174, 1
    %p178 = scmp.eq.s32.totalorder %s14, 1
    %p179 = scmp.ne.s32.totalorder %s174, %s176
    %p180 = scmp.eq.s32.totalorder %s14, 0
    %p181 = por %p179, %p180
    %p182 = scmp.ne.s32.totalorder %s174, %s176
    %p183 = scmp.eq.s32.totalorder %s19, 1
    %p184 = por %p182, %p183
    %p185 = scmp.ne.s32.totalorder %s176, %s177
    %p186 = scmp.eq.s32.totalorder %s19, 0
    %p187 = por %p185, %p186
    %p188 = scmp.ne.s32.totalorder %s176, %s177
    %p189 = scmp.eq.s32.totalorder %s20, 1
    %p190 = por %p188, %p189
    %p192 = scmp.ne.s32.totalorder %s177, %s191
    %p193 = scmp.eq.s32.totalorder %s20, 0
    %p194 = por %p192, %p193
    %s195 = ssub.s32 %s14, %s21
    %p196 = scmp.eq.s32.totalorder %s195, 0
    %s198 = sadd.s32 %s197, 1
    %s199 = scalar_select %p196, %s197, %s198
    %p202 = pneg %p196
    %p203 = scmp.eq.s32.totalorder %s14, 1
    %p204 = por %p202, %p203
    %p205 = scmp.ne.s32.totalorder %s197, %s200
    %p206 = scmp.eq.s32.totalorder %s14, 0
    %p207 = por %p205, %p206
    %p208 = scmp.ne.s32.totalorder %s197, %s200
    %p209 = scmp.eq.s32.totalorder %s19, 1
    %p210 = por %p208, %p209
    %p211 = scmp.ne.s32.totalorder %s200, %s201
    %p212 = scmp.eq.s32.totalorder %s19, 0
    %p213 = por %p211, %p212
    %p214 = scmp.ne.s32.totalorder %s200, %s201
    %p215 = scmp.eq.s32.totalorder %s20, 1
    %p216 = por %p214, %p215
    %p218 = scmp.ne.s32.totalorder %s201, %s217
    %p219 = scmp.eq.s32.totalorder %s20, 0
    %p220 = por %p218, %p219
    %p221 = scmp.le.s32.totalorder 1, %s14
    %p222 = scmp.lt.s32.totalorder %s14, 3
    %p223 = pnand %p221, %p222
    %p224 = pneg %p223
    // Predicated region
    $region9: #{nerfw_forward.1} parent=5 // pred_check
      _
    $region10: #{nerfw_forward.1} parent=5 // pred_check_branch
      %226 = sbr.rel (%p223) target = $region12
    $region11: #{nerfw_forward.1} parent=5 // pred_region
      %s227 = ssub.s32 %s14, 1
      // Predicated region
      $region13: #{nerfw_forward.1} parent=11 // pred_check
        %p228 = pneg %p61
      $region14: #{nerfw_forward.1} parent=11 // pred_check_branch
        %230 = sbr.rel (%p228) target = $region16
      $region15: #{nerfw_forward.1} parent=11 // pred_region
        _
      $region16: #{nerfw_forward.1} parent=11 // pred_fallthru
        _
      // Predicated region
      $region17: #{nerfw_forward.1} parent=11 // pred_check
        %p231 = pneg %p82
      $region18: #{nerfw_forward.1} parent=11 // pred_check_branch
        %233 = sbr.rel (%p231) target = $region20
      $region19: #{nerfw_forward.1} parent=11 // pred_region
        _
      $region20: #{nerfw_forward.1} parent=11 // pred_fallthru
        _
      // Predicated region
      $region21: #{nerfw_forward.1} parent=11 // pred_check
        %p234 = pneg %p103
      $region22: #{nerfw_forward.1} parent=11 // pred_check_branch
        %236 = sbr.rel (%p234) target = $region24
      $region23: #{nerfw_forward.1} parent=11 // pred_region
        _
      $region24: #{nerfw_forward.1} parent=11 // pred_fallthru
        _
      // Predicated region
      $region25: #{nerfw_forward.1} parent=11 // pred_check
        %p237 = pneg %p124
      $region26: #{nerfw_forward.1} parent=11 // pred_check_branch
        %239 = sbr.rel (%p237) target = $region28
      $region27: #{nerfw_forward.1} parent=11 // pred_region
        _
      $region28: #{nerfw_forward.1} parent=11 // pred_fallthru
        _
      // Predicated region
      $region29: #{nerfw_forward.1} parent=11 // pred_check
        %p240 = pneg %p145
      $region30: #{nerfw_forward.1} parent=11 // pred_check_branch
        %242 = sbr.rel (%p240) target = $region32
      $region31: #{nerfw_forward.1} parent=11 // pred_region
        _
      $region32: #{nerfw_forward.1} parent=11 // pred_fallthru
        _
      // Predicated region
      $region33: #{nerfw_forward.1} parent=11 // pred_check
        %p243 = pneg %p166
      $region34: #{nerfw_forward.1} parent=11 // pred_check_branch
        %245 = sbr.rel (%p243) target = $region36
      $region35: #{nerfw_forward.1} parent=11 // pred_region
        _
      $region36: #{nerfw_forward.1} parent=11 // pred_fallthru
        _
      // Predicated region
      $region37: #{nerfw_forward.1} parent=11 // pred_check
        %p246 = pneg %p187
      $region38: #{nerfw_forward.1} parent=11 // pred_check_branch
        %248 = sbr.rel (%p246) target = $region40
      $region39: #{nerfw_forward.1} parent=11 // pred_region
        _
      $region40: #{nerfw_forward.1} parent=11 // pred_fallthru
        _
    $region12: #{nerfw_forward.1} parent=5 // pred_fallthru
      _
    %p249 = scmp.lt.s32.totalorder %s14, 2
    // Predicated region
    $region41: #{nerfw_forward.1} parent=5 // pred_check
      %p250 = pneg %p249
    $region42: #{nerfw_forward.1} parent=5 // pred_check_branch
      %252 = sbr.rel (%p250) target = $region44
    $region43: #{nerfw_forward.1} parent=5 // pred_region
      // Predicated region
      $region45: #{nerfw_forward.1} parent=43 // pred_check
        %p253 = pneg %p34
      $region46: #{nerfw_forward.1} parent=43 // pred_check_branch
        %255 = sbr.rel (%p253) target = $region48
      $region47: #{nerfw_forward.1} parent=43 // pred_region
        %s256 = smul.u32 64, %s14
        %p257 = scmp.lt.s32.totalorder %s256, 127
        %s258 = scalar_select %p257, %s256, 127
        %s259 = smul.addr %s258, 8
        %s260 = scalar_lea.vmem %s0, %s259
        %s261 = smul.u32 64, %s14
      $region48: #{nerfw_forward.1} parent=43 // pred_fallthru
        _
    $region44: #{nerfw_forward.1} parent=5 // pred_fallthru
      _
    %p262 = scmp.le.s32.totalorder 1, %s14
    %p263 = scmp.lt.s32.totalorder %s14, 3
    %p264 = pnand %p262, %p263
    %p265 = pneg %p264
    // Predicated region
    $region49: #{nerfw_forward.1} parent=5 // pred_check
      _
    $region50: #{nerfw_forward.1} parent=5 // pred_check_branch
      %267 = sbr.rel (%p264) target = $region52
    $region51: #{nerfw_forward.1} parent=5 // pred_region
      %s268 = ssub.s32 %s14, 1
      %s269 = smul.u32 64, %s19
      %p270 = scmp.lt.s32.totalorder %s269, 127
      %s271 = scalar_select %p270, %s269, 127
      %s272 = smul.addr %s271, 8
      %s273 = scalar_lea.vmem %s0, %s272
      %p274 = pneg %p40
      %p275 = pneg %p37
      %p276 = pneg %p61
      %p277 = pneg %p58
      %p278 = pneg %p82
      %p279 = pneg %p79
      %p280 = pneg %p103
      %p281 = pneg %p100
      %p282 = pneg %p124
      %p283 = pneg %p121
      %p284 = pneg %p145
      %p285 = pneg %p142
      %p286 = pneg %p166
      %p287 = pneg %p163
      %p288 = pneg %p187
      %p289 = pneg %p184
      %p290 = pneg %p213
      %p291 = pneg %p210
      %s292 = smul.u32 64, %s19
      %p293 = scmp.lt.s32.totalorder %s292, 127
      %s294 = scalar_select %p293, %s292, 127
      %s295 = smul.addr %s294, 8
      %s296 = scalar_lea.vmem %s8, %s295
      %s297 = smul.u32 64, %s19
      %p298 = scmp.lt.s32.totalorder %s297, 127
      %s299 = scalar_select %p298, %s297, 127
      %s300 = smul.addr %s299, 8
      %s301 = scalar_lea.vmem %s0, %s300
      %s302 = smul.u32 64, %s19
      %s303 = smul.u32 64, %s19
      %p304 = scmp.lt.s32.totalorder %s303, 127
      %s305 = scalar_select %p304, %s303, 127
      %s306 = smul.addr %s305, 8
      %s307 = scalar_lea.vmem %s8, %s306
      %s308 = smul.u32 64, %s19
      %v310 = vld [vmem:[%s301] sm:$0xff]
      %v311 = vld [vmem:[%s301 + $0x8] sm:$0xff]
      %v312 = vld [vmem:[%s301 + $0x10] sm:$0xff]
      %v313 = vld [vmem:[%s301 + $0x18] sm:$0xff]
      %v314 = vld [vmem:[%s301 + $0x20] sm:$0xff]
      %v315 = vld [vmem:[%s301 + $0x28] sm:$0xff]
      %v316 = vld [vmem:[%s301 + $0x30] sm:$0xff]
      %v317 = vld [vmem:[%s301 + $0x38] sm:$0xff]
      %v318 = vld [vmem:[%s301 + $0x40] sm:$0xff]
      %v319 = vld [vmem:[%s301 + $0x48] sm:$0xff]
      %v320 = vld [vmem:[%s301 + $0x50] sm:$0xff]
      %v321 = vld [vmem:[%s301 + $0x58] sm:$0xff]
      %v322 = vld [vmem:[%s301 + $0x60] sm:$0xff]
      %v323 = vld [vmem:[%s301 + $0x68] sm:$0xff]
      %v324 = vld [vmem:[%s301 + $0x70] sm:$0xff]
      %v325 = vld [vmem:[%s301 + $0x78] sm:$0xff]
      %v326 = vld [vmem:[%s301 + $0x80] sm:$0xff]
      %v327 = vld [vmem:[%s301 + $0x88] sm:$0xff]
      %v328 = vld [vmem:[%s301 + $0x90] sm:$0xff]
      %v329 = vld [vmem:[%s301 + $0x98] sm:$0xff]
      %v330 = vld [vmem:[%s301 + $0xa0] sm:$0xff]
      %v331 = vld [vmem:[%s301 + $0xa8] sm:$0xff]
      %v332 = vld [vmem:[%s301 + $0xb0] sm:$0xff]
      %v333 = vld [vmem:[%s301 + $0xb8] sm:$0xff]
      %v334 = vld [vmem:[%s301 + $0xc0] sm:$0xff]
      %v335 = vld [vmem:[%s301 + $0xc8] sm:$0xff]
      %v336 = vld [vmem:[%s301 + $0xd0] sm:$0xff]
      %v337 = vld [vmem:[%s301 + $0xd8] sm:$0xff]
      %v338 = vld [vmem:[%s301 + $0xe0] sm:$0xff]
      %v339 = vld [vmem:[%s301 + $0xe8] sm:$0xff]
      %v340 = vld [vmem:[%s301 + $0xf0] sm:$0xff]
      %v341 = vld [vmem:[%s301 + $0xf8] sm:$0xff]
      %v342 = vld [vmem:[%s301 + $0x100] sm:$0xff]
      %v343 = vld [vmem:[%s301 + $0x108] sm:$0xff]
      %v344 = vld [vmem:[%s301 + $0x110] sm:$0xff]
      %v345 = vld [vmem:[%s301 + $0x118] sm:$0xff]
      %v346 = vld [vmem:[%s301 + $0x120] sm:$0xff]
      %v347 = vld [vmem:[%s301 + $0x128] sm:$0xff]
      %v348 = vld [vmem:[%s301 + $0x130] sm:$0xff]
      %v349 = vld [vmem:[%s301 + $0x138] sm:$0xff]
      %v350 = vld [vmem:[%s301 + $0x140] sm:$0xff]
      %v351 = vld [vmem:[%s301 + $0x148] sm:$0xff]
      %v352 = vld [vmem:[%s301 + $0x150] sm:$0xff]
      %v353 = vld [vmem:[%s301 + $0x158] sm:$0xff]
      %v354 = vld [vmem:[%s301 + $0x160] sm:$0xff]
      %v355 = vld [vmem:[%s301 + $0x168] sm:$0xff]
      %v356 = vld [vmem:[%s301 + $0x170] sm:$0xff]
      %v357 = vld [vmem:[%s301 + $0x178] sm:$0xff]
      %v358 = vld [vmem:[%s301 + $0x180] sm:$0xff]
      %v359 = vld [vmem:[%s301 + $0x188] sm:$0xff]
      %v360 = vld [vmem:[%s301 + $0x190] sm:$0xff]
      %v361 = vld [vmem:[%s301 + $0x198] sm:$0xff]
      %v362 = vld [vmem:[%s301 + $0x1a0] sm:$0xff]
      %v363 = vld [vmem:[%s301 + $0x1a8] sm:$0xff]
      %v364 = vld [vmem:[%s301 + $0x1b0] sm:$0xff]
      %v365 = vld [vmem:[%s301 + $0x1b8] sm:$0xff]
      %v366 = vld [vmem:[%s301 + $0x1c0] sm:$0xff]
      %v367 = vld [vmem:[%s301 + $0x1c8] sm:$0xff]
      %v368 = vld [vmem:[%s301 + $0x1d0] sm:$0xff]
      %v369 = vld [vmem:[%s301 + $0x1d8] sm:$0xff]
      %v370 = vld [vmem:[%s301 + $0x1e0] sm:$0xff]
      %v371 = vld [vmem:[%s301 + $0x1e8] sm:$0xff]
      %v372 = vld [vmem:[%s301 + $0x1f0] sm:$0xff]
      %v373 = vld [vmem:[%s301 + $0x1f8] sm:$0xff]
      %v374 = vpack.c.bf16 %v311, %v310
      %v375 = vpack.c.bf16 %v313, %v312
      %v376 = vpack.c.bf16 %v315, %v314
      %v377 = vpack.c.bf16 %v317, %v316
      %v378 = vpack.c.bf16 %v319, %v318
      %v379 = vpack.c.bf16 %v321, %v320
      %v380 = vpack.c.bf16 %v323, %v322
      %v381 = vpack.c.bf16 %v325, %v324
      %v382 = vpack.c.bf16 %v327, %v326
      %v383 = vpack.c.bf16 %v329, %v328
      %v384 = vpack.c.bf16 %v331, %v330
      %v385 = vpack.c.bf16 %v333, %v332
      %v386 = vpack.c.bf16 %v335, %v334
      %v387 = vpack.c.bf16 %v337, %v336
      %v388 = vpack.c.bf16 %v339, %v338
      %v389 = vpack.c.bf16 %v341, %v340
      %v390 = vpack.c.bf16 %v343, %v342
      %v391 = vpack.c.bf16 %v345, %v344
      %v392 = vpack.c.bf16 %v347, %v346
      %v393 = vpack.c.bf16 %v349, %v348
      %v394 = vpack.c.bf16 %v351, %v350
      %v395 = vpack.c.bf16 %v353, %v352
      %v396 = vpack.c.bf16 %v355, %v354
      %v397 = vpack.c.bf16 %v357, %v356
      %v398 = vpack.c.bf16 %v359, %v358
      %v399 = vpack.c.bf16 %v361, %v360
      %v400 = vpack.c.bf16 %v363, %v362
      %v401 = vpack.c.bf16 %v365, %v364
      %v402 = vpack.c.bf16 %v367, %v366
      %v403 = vpack.c.bf16 %v369, %v368
      %v404 = vpack.c.bf16 %v371, %v370
      %v405 = vpack.c.bf16 %v373, %v372
      %v406 = vld [vmem:[%s5] sm:$0xff]
      %v407 = vld [vmem:[%s5 + $0x8] sm:$0x7]
      %v408 = vld [vmem:[%s7] sm:$0x3]
      %v409 = vld [vmem:[%s2] sm:$0xf]
      %v410 = vld [vmem:[%s2 + $0x4] sm:$0xf]
      %v411 = vld [vmem:[%s2 + $0x8] sm:$0xf]
      %v412 = vld [vmem:[%s2 + $0xc] sm:$0xf]
      %v413 = vld [vmem:[%s2 + $0x10] sm:$0xf]
      %v414 = vld [vmem:[%s2 + $0x14] sm:$0xf]
      %v415 = vld [vmem:[%s2 + $0x18] sm:$0xf]
      %v416 = vld [vmem:[%s2 + $0x1c] sm:$0xf]
      %v417 = vld [vmem:[%s2 + $0x20] sm:$0xf]
      %v418 = vld [vmem:[%s2 + $0x24] sm:$0xf]
      %v419 = vld [vmem:[%s2 + $0x28] sm:$0xf]
      %v420 = vld [vmem:[%s2 + $0x2c] sm:$0xf]
      %v421 = vld [vmem:[%s2 + $0x30] sm:$0xf]
      %v422 = vld [vmem:[%s2 + $0x34] sm:$0xf]
      %v423 = vld [vmem:[%s2 + $0x38] sm:$0xf]
      %v424 = vld [vmem:[%s2 + $0x3c] sm:$0xf]
      %v425 = vperm.slane %v406, 0
      %v442 = vunpack.c.l.b16 %v409
      %v443 = vunpack.c.l.b16 %v410
      %v444 = vunpack.c.l.b16 %v411
      %v445 = vunpack.c.l.b16 %v412
      %v446 = vunpack.c.l.b16 %v413
      %v447 = vunpack.c.l.b16 %v414
      %v448 = vunpack.c.l.b16 %v415
      %v449 = vunpack.c.l.b16 %v416
      %v450 = vunpack.c.l.b16 %v417
      %v451 = vunpack.c.l.b16 %v418
      %v452 = vunpack.c.l.b16 %v419
      %v453 = vunpack.c.l.b16 %v420
      %v454 = vunpack.c.l.b16 %v421
      %v455 = vunpack.c.l.b16 %v422
      %v456 = vunpack.c.l.b16 %v423
      %v457 = vunpack.c.l.b16 %v424
      %v458 = vpack.c.b16 %v443, %v442
      %v459 = vpack.c.b16 %v445, %v444
      %v460 = vpack.c.b16 %v447, %v446
      %v461 = vpack.c.b16 %v449, %v448
      %v462 = vpack.c.b16 %v451, %v450
      %v463 = vpack.c.b16 %v453, %v452
      %v464 = vpack.c.b16 %v455, %v454
      %v465 = vpack.c.b16 %v457, %v456
      %474 = vmatpush.bf16.msra.mxu0 %v465
      %475 = vmatpush.bf16.msra.mxu0 %v464
      %476 = vmatpush.bf16.msra.mxu0 %v463
      %477 = vmatpush.bf16.msra.mxu0 %v462
      %478 = vmatpush.bf16.msra.mxu0 %v461
      %479 = vmatpush.bf16.msra.mxu0 %v460
      %480 = vmatpush.bf16.msra.mxu0 %v459
      %481 = vmatpush.bf16.msra.mxu0 %v458
      %482 = vmatmul.bf16.gmra.mxu0 %v374
      %v483 = vpop.f32.mrf.mxu0
      %v484 = vadd.f32 %v425, %v483
      %v485 = vpop.f32.mrf.mxu0
      %v486 = vadd.f32 %v425, %v485
      %487 = vmatmul.bf16.gmra.mxu0 %v375
      %v488 = vpop.f32.mrf.mxu0
      %v489 = vadd.f32 %v425, %v488
      %v490 = vpop.f32.mrf.mxu0
      %v491 = vadd.f32 %v425, %v490
      %492 = vmatmul.bf16.gmra.mxu0 %v376
      %v493 = vpop.f32.mrf.mxu0
      %v494 = vadd.f32 %v425, %v493
      %v495 = vpop.f32.mrf.mxu0
      %v496 = vadd.f32 %v425, %v495
      %497 = vmatmul.bf16.gmra.mxu0 %v377
      %v498 = vpop.f32.mrf.mxu0
      %v499 = vadd.f32 %v425, %v498
      %v500 = vpop.f32.mrf.mxu0
      %v501 = vadd.f32 %v425, %v500
      %502 = vmatmul.bf16.gmra.mxu0 %v378
      %v503 = vpop.f32.mrf.mxu0
      %v504 = vadd.f32 %v425, %v503
      %v505 = vpop.f32.mrf.mxu0
      %v506 = vadd.f32 %v425, %v505
      %507 = vmatmul.bf16.gmra.mxu0 %v379
      %v508 = vpop.f32.mrf.mxu0
      %v509 = vadd.f32 %v425, %v508
      %v510 = vpop.f32.mrf.mxu0
      %v511 = vadd.f32 %v425, %v510
      %512 = vmatmul.bf16.gmra.mxu0 %v380
      %v513 = vpop.f32.mrf.mxu0
      %v514 = vadd.f32 %v425, %v513
      %v515 = vpop.f32.mrf.mxu0
      %v516 = vadd.f32 %v425, %v515
      %517 = vmatmul.bf16.gmra.mxu0 %v381
      %v518 = vpop.f32.mrf.mxu0
      %v519 = vadd.f32 %v425, %v518
      %v520 = vpop.f32.mrf.mxu0
      %v521 = vadd.f32 %v425, %v520
      %522 = vmatmul.bf16.gmra.mxu0 %v382
      %v523 = vpop.f32.mrf.mxu0
      %v524 = vadd.f32 %v425, %v523
      %v525 = vpop.f32.mrf.mxu0
      %v526 = vadd.f32 %v425, %v525
      %527 = vmatmul.bf16.gmra.mxu0 %v383
      %v528 = vpop.f32.mrf.mxu0
      %v529 = vadd.f32 %v425, %v528
      %v530 = vpop.f32.mrf.mxu0
      %v531 = vadd.f32 %v425, %v530
      %532 = vmatmul.bf16.gmra.mxu0 %v384
      %v533 = vpop.f32.mrf.mxu0
      %v534 = vadd.f32 %v425, %v533
      %v535 = vpop.f32.mrf.mxu0
      %v536 = vadd.f32 %v425, %v535
      %537 = vmatmul.bf16.gmra.mxu0 %v385
      %v538 = vpop.f32.mrf.mxu0
      %v539 = vadd.f32 %v425, %v538
      %v540 = vpop.f32.mrf.mxu0
      %v541 = vadd.f32 %v425, %v540
      %542 = vmatmul.bf16.gmra.mxu0 %v386
      %v543 = vpop.f32.mrf.mxu0
      %v544 = vadd.f32 %v425, %v543
      %v545 = vpop.f32.mrf.mxu0
      %v546 = vadd.f32 %v425, %v545
      %547 = vmatmul.bf16.gmra.mxu0 %v387
      %v548 = vpop.f32.mrf.mxu0
      %v549 = vadd.f32 %v425, %v548
      %v550 = vpop.f32.mrf.mxu0
      %v551 = vadd.f32 %v425, %v550
      %552 = vmatmul.bf16.gmra.mxu0 %v388
      %v553 = vpop.f32.mrf.mxu0
      %v554 = vadd.f32 %v425, %v553
      %v555 = vpop.f32.mrf.mxu0
      %v556 = vadd.f32 %v425, %v555
      %557 = vmatmul.bf16.gmra.mxu0 %v389
      %v558 = vpop.f32.mrf.mxu0
      %v559 = vadd.f32 %v425, %v558
      %v560 = vpop.f32.mrf.mxu0
      %v561 = vadd.f32 %v425, %v560
      %562 = vmatmul.bf16.gmra.mxu0 %v390
      %v563 = vpop.f32.mrf.mxu0
      %v564 = vadd.f32 %v425, %v563
      %v565 = vpop.f32.mrf.mxu0
      %v566 = vadd.f32 %v425, %v565
      %567 = vmatmul.bf16.gmra.mxu0 %v391
      %v568 = vpop.f32.mrf.mxu0
      %v569 = vadd.f32 %v425, %v568
      %v570 = vpop.f32.mrf.mxu0
      %v571 = vadd.f32 %v425, %v570
      %572 = vmatmul.bf16.gmra.mxu0 %v392
      %v573 = vpop.f32.mrf.mxu0
      %v574 = vadd.f32 %v425, %v573
      %v575 = vpop.f32.mrf.mxu0
      %v576 = vadd.f32 %v425, %v575
      %577 = vmatmul.bf16.gmra.mxu0 %v393
      %v578 = vpop.f32.mrf.mxu0
      %v579 = vadd.f32 %v425, %v578
      %v580 = vpop.f32.mrf.mxu0
      %v581 = vadd.f32 %v425, %v580
      %582 = vmatmul.bf16.gmra.mxu0 %v394
      %v583 = vpop.f32.mrf.mxu0
      %v584 = vadd.f32 %v425, %v583
      %v585 = vpop.f32.mrf.mxu0
      %v586 = vadd.f32 %v425, %v585
      %587 = vmatmul.bf16.gmra.mxu0 %v395
      %v588 = vpop.f32.mrf.mxu0
      %v589 = vadd.f32 %v425, %v588
      %v590 = vpop.f32.mrf.mxu0
      %v591 = vadd.f32 %v425, %v590
      %592 = vmatmul.bf16.gmra.mxu0 %v396
      %v593 = vpop.f32.mrf.mxu0
      %v594 = vadd.f32 %v425, %v593
      %v595 = vpop.f32.mrf.mxu0
      %v596 = vadd.f32 %v425, %v595
      %597 = vmatmul.bf16.gmra.mxu0 %v397
      %v598 = vpop.f32.mrf.mxu0
      %v599 = vadd.f32 %v425, %v598
      %v600 = vpop.f32.mrf.mxu0
      %v601 = vadd.f32 %v425, %v600
      %602 = vmatmul.bf16.gmra.mxu0 %v398
      %v603 = vpop.f32.mrf.mxu0
      %v604 = vadd.f32 %v425, %v603
      %v605 = vpop.f32.mrf.mxu0
      %v606 = vadd.f32 %v425, %v605
      %607 = vmatmul.bf16.gmra.mxu0 %v399
      %v608 = vpop.f32.mrf.mxu0
      %v609 = vadd.f32 %v425, %v608
      %v610 = vpop.f32.mrf.mxu0
      %v611 = vadd.f32 %v425, %v610
      %612 = vmatmul.bf16.gmra.mxu0 %v400
      %v613 = vpop.f32.mrf.mxu0
      %v614 = vadd.f32 %v425, %v613
      %v615 = vpop.f32.mrf.mxu0
      %v616 = vadd.f32 %v425, %v615
      %617 = vmatmul.bf16.gmra.mxu0 %v401
      %v618 = vpop.f32.mrf.mxu0
      %v619 = vadd.f32 %v425, %v618
      %v620 = vpop.f32.mrf.mxu0
      %v621 = vadd.f32 %v425, %v620
      %622 = vmatmul.bf16.gmra.mxu0 %v402
      %v623 = vpop.f32.mrf.mxu0
      %v624 = vadd.f32 %v425, %v623
      %v625 = vpop.f32.mrf.mxu0
      %v626 = vadd.f32 %v425, %v625
      %627 = vmatmul.bf16.gmra.mxu0 %v403
      %v628 = vpop.f32.mrf.mxu0
      %v629 = vadd.f32 %v425, %v628
      %v630 = vpop.f32.mrf.mxu0
      %v631 = vadd.f32 %v425, %v630
      %632 = vmatmul.bf16.gmra.mxu0 %v404
      %v633 = vpop.f32.mrf.mxu0
      %v634 = vadd.f32 %v425, %v633
      %v635 = vpop.f32.mrf.mxu0
      %v636 = vadd.f32 %v425, %v635
      %637 = vmatmul.bf16.gmra.mxu0 %v405
      %v638 = vpop.f32.mrf.mxu0
      %v639 = vadd.f32 %v425, %v638
      %v640 = vpop.f32.mrf.mxu0
      %v641 = vadd.f32 %v425, %v640
      %642 = vdwg.mxu0
      %v643 = vmax.f32 %v484, 0.0
      %v644 = vmax.f32 %v486, 0.0
      %v645 = vmax.f32 %v489, 0.0
      %v646 = vmax.f32 %v491, 0.0
      %v647 = vmax.f32 %v494, 0.0
      %v648 = vmax.f32 %v496, 0.0
      %v649 = vmax.f32 %v499, 0.0
      %v650 = vmax.f32 %v501, 0.0
      %v651 = vmax.f32 %v504, 0.0
      %v652 = vmax.f32 %v506, 0.0
      %v653 = vmax.f32 %v509, 0.0
      %v654 = vmax.f32 %v511, 0.0
      %v655 = vmax.f32 %v514, 0.0
      %v656 = vmax.f32 %v516, 0.0
      %v657 = vmax.f32 %v519, 0.0
      %v658 = vmax.f32 %v521, 0.0
      %v659 = vmax.f32 %v524, 0.0
      %v660 = vmax.f32 %v526, 0.0
      %v661 = vmax.f32 %v529, 0.0
      %v662 = vmax.f32 %v531, 0.0
      %v663 = vmax.f32 %v534, 0.0
      %v664 = vmax.f32 %v536, 0.0
      %v665 = vmax.f32 %v539, 0.0
      %v666 = vmax.f32 %v541, 0.0
      %v667 = vmax.f32 %v544, 0.0
      %v668 = vmax.f32 %v546, 0.0
      %v669 = vmax.f32 %v549, 0.0
      %v670 = vmax.f32 %v551, 0.0
      %v671 = vmax.f32 %v554, 0.0
      %v672 = vmax.f32 %v556, 0.0
      %v673 = vmax.f32 %v559, 0.0
      %v674 = vmax.f32 %v561, 0.0
      %v675 = vmax.f32 %v564, 0.0
      %v676 = vmax.f32 %v566, 0.0
      %v677 = vmax.f32 %v569, 0.0
      %v678 = vmax.f32 %v571, 0.0
      %v679 = vmax.f32 %v574, 0.0
      %v680 = vmax.f32 %v576, 0.0
      %v681 = vmax.f32 %v579, 0.0
      %v682 = vmax.f32 %v581, 0.0
      %v683 = vmax.f32 %v584, 0.0
      %v684 = vmax.f32 %v586, 0.0
      %v685 = vmax.f32 %v589, 0.0
      %v686 = vmax.f32 %v591, 0.0
      %v687 = vmax.f32 %v594, 0.0
      %v688 = vmax.f32 %v596, 0.0
      %v689 = vmax.f32 %v599, 0.0
      %v690 = vmax.f32 %v601, 0.0
      %v691 = vmax.f32 %v604, 0.0
      %v692 = vmax.f32 %v606, 0.0
      %v693 = vmax.f32 %v609, 0.0
      %v694 = vmax.f32 %v611, 0.0
      %v695 = vmax.f32 %v614, 0.0
      %v696 = vmax.f32 %v616, 0.0
      %v697 = vmax.f32 %v619, 0.0
      %v698 = vmax.f32 %v621, 0.0
      %v699 = vmax.f32 %v624, 0.0
      %v700 = vmax.f32 %v626, 0.0
      %v701 = vmax.f32 %v629, 0.0
      %v702 = vmax.f32 %v631, 0.0
      %v703 = vmax.f32 %v634, 0.0
      %v704 = vmax.f32 %v636, 0.0
      %v705 = vmax.f32 %v639, 0.0
      %v706 = vmax.f32 %v641, 0.0
      %v707 = vld [vmem:[%s1] sm:$0xf]
      %v708 = vld [vmem:[%s1 + $0x4] sm:$0xf]
      %v709 = vld [vmem:[%s1 + $0x8] sm:$0xf]
      %v710 = vld [vmem:[%s1 + $0xc] sm:$0xf]
      %v711 = vld [vmem:[%s1 + $0x10] sm:$0xf]
      %v712 = vld [vmem:[%s1 + $0x14] sm:$0xf]
      %v713 = vld [vmem:[%s1 + $0x18] sm:$0xf]
      %v714 = vld [vmem:[%s1 + $0x1c] sm:$0xf]
      %v715 = vpack.c.bf16 %v644, %v643
      %v716 = vpack.c.bf16 %v646, %v645
      %v717 = vpack.c.bf16 %v648, %v647
      %v718 = vpack.c.bf16 %v650, %v649
      %v719 = vpack.c.bf16 %v652, %v651
      %v720 = vpack.c.bf16 %v654, %v653
      %v721 = vpack.c.bf16 %v656, %v655
      %v722 = vpack.c.bf16 %v658, %v657
      %v723 = vpack.c.bf16 %v660, %v659
      %v724 = vpack.c.bf16 %v662, %v661
      %v725 = vpack.c.bf16 %v664, %v663
      %v726 = vpack.c.bf16 %v666, %v665
      %v727 = vpack.c.bf16 %v668, %v667
      %v728 = vpack.c.bf16 %v670, %v669
      %v729 = vpack.c.bf16 %v672, %v671
      %v730 = vpack.c.bf16 %v674, %v673
      %v731 = vpack.c.bf16 %v676, %v675
      %v732 = vpack.c.bf16 %v678, %v677
      %v733 = vpack.c.bf16 %v680, %v679
      %v734 = vpack.c.bf16 %v682, %v681
      %v735 = vpack.c.bf16 %v684, %v683
      %v736 = vpack.c.bf16 %v686, %v685
      %v737 = vpack.c.bf16 %v688, %v687
      %v738 = vpack.c.bf16 %v690, %v689
      %v739 = vpack.c.bf16 %v692, %v691
      %v740 = vpack.c.bf16 %v694, %v693
      %v741 = vpack.c.bf16 %v696, %v695
      %v742 = vpack.c.bf16 %v698, %v697
      %v743 = vpack.c.bf16 %v700, %v699
      %v744 = vpack.c.bf16 %v702, %v701
      %v745 = vpack.c.bf16 %v704, %v703
      %v746 = vpack.c.bf16 %v706, %v705
      %v747 = vperm.slane %v406, 1
      %v756 = vunpack.c.l.b16 %v707
      %v757 = vunpack.c.l.b16 %v708
      %v758 = vunpack.c.l.b16 %v709
      %v759 = vunpack.c.l.b16 %v710
      %v760 = vunpack.c.l.b16 %v711
      %v761 = vunpack.c.l.b16 %v712
      %v762 = vunpack.c.l.b16 %v713
      %v763 = vunpack.c.l.b16 %v714
      %v764 = vpack.c.b16 %v757, %v756
      %v765 = vpack.c.b16 %v759, %v758
      %v766 = vpack.c.b16 %v761, %v760
      %v767 = vpack.c.b16 %v763, %v762
      %vm772 = vcmask 523264
      %v774 = vsel %vm772, %v715, 0
      %v777 = vsel %vm772, %v716, 0
      %v780 = vsel %vm772, %v717, 0
      %v783 = vsel %vm772, %v718, 0
      %v786 = vsel %vm772, %v719, 0
      %v789 = vsel %vm772, %v720, 0
      %v792 = vsel %vm772, %v721, 0
      %v795 = vsel %vm772, %v722, 0
      %v798 = vsel %vm772, %v723, 0
      %v801 = vsel %vm772, %v724, 0
      %v804 = vsel %vm772, %v725, 0
      %v807 = vsel %vm772, %v726, 0
      %v810 = vsel %vm772, %v727, 0
      %v813 = vsel %vm772, %v728, 0
      %v816 = vsel %vm772, %v729, 0
      %v819 = vsel %vm772, %v730, 0
      %v822 = vsel %vm772, %v731, 0
      %v825 = vsel %vm772, %v732, 0
      %v828 = vsel %vm772, %v733, 0
      %v831 = vsel %vm772, %v734, 0
      %v834 = vsel %vm772, %v735, 0
      %v837 = vsel %vm772, %v736, 0
      %v840 = vsel %vm772, %v737, 0
      %v843 = vsel %vm772, %v738, 0
      %v846 = vsel %vm772, %v739, 0
      %v849 = vsel %vm772, %v740, 0
      %v852 = vsel %vm772, %v741, 0
      %v855 = vsel %vm772, %v742, 0
      %v858 = vsel %vm772, %v743, 0
      %v861 = vsel %vm772, %v744, 0
      %v864 = vsel %vm772, %v745, 0
      %v867 = vsel %vm772, %v746, 0
      %869 = vmatpush.bf16.msra.mxu0 0
      %870 = vmatpush.bf16.msra.mxu0 0
      %871 = vmatpush.bf16.msra.mxu0 0
      %872 = vmatpush.bf16.msra.mxu0 0
      %873 = vmatpush.bf16.msra.mxu0 %v767
      %874 = vmatpush.bf16.msra.mxu0 %v766
      %875 = vmatpush.bf16.msra.mxu0 %v765
      %876 = vmatpush.bf16.msra.mxu0 %v764
      %877 = vmatmul.bf16.gmra.mxu0 %v774
      %v878 = vpop.f32.mrf.mxu0
      %v879 = vadd.f32 %v747, %v878
      %v880 = vpop.f32.mrf.mxu0
      %v881 = vadd.f32 %v747, %v880
      %882 = vmatmul.bf16.gmra.mxu0 %v777
      %v883 = vpop.f32.mrf.mxu0
      %v884 = vadd.f32 %v747, %v883
      %v885 = vpop.f32.mrf.mxu0
      %v886 = vadd.f32 %v747, %v885
      %887 = vmatmul.bf16.gmra.mxu0 %v780
      %v888 = vpop.f32.mrf.mxu0
      %v889 = vadd.f32 %v747, %v888
      %v890 = vpop.f32.mrf.mxu0
      %v891 = vadd.f32 %v747, %v890
      %892 = vmatmul.bf16.gmra.mxu0 %v783
      %v893 = vpop.f32.mrf.mxu0
      %v894 = vadd.f32 %v747, %v893
      %v895 = vpop.f32.mrf.mxu0
      %v896 = vadd.f32 %v747, %v895
      %897 = vmatmul.bf16.gmra.mxu0 %v786
      %v898 = vpop.f32.mrf.mxu0
      %v899 = vadd.f32 %v747, %v898
      %v900 = vpop.f32.mrf.mxu0
      %v901 = vadd.f32 %v747, %v900
      %902 = vmatmul.bf16.gmra.mxu0 %v789
      %v903 = vpop.f32.mrf.mxu0
      %v904 = vadd.f32 %v747, %v903
      %v905 = vpop.f32.mrf.mxu0
      %v906 = vadd.f32 %v747, %v905
      %907 = vmatmul.bf16.gmra.mxu0 %v792
      %v908 = vpop.f32.mrf.mxu0
      %v909 = vadd.f32 %v747, %v908
      %v910 = vpop.f32.mrf.mxu0
      %v911 = vadd.f32 %v747, %v910
      %912 = vmatmul.bf16.gmra.mxu0 %v795
      %v913 = vpop.f32.mrf.mxu0
      %v914 = vadd.f32 %v747, %v913
      %v915 = vpop.f32.mrf.mxu0
      %v916 = vadd.f32 %v747, %v915
      %917 = vmatmul.bf16.gmra.mxu0 %v798
      %v918 = vpop.f32.mrf.mxu0
      %v919 = vadd.f32 %v747, %v918
      %v920 = vpop.f32.mrf.mxu0
      %v921 = vadd.f32 %v747, %v920
      %922 = vmatmul.bf16.gmra.mxu0 %v801
      %v923 = vpop.f32.mrf.mxu0
      %v924 = vadd.f32 %v747, %v923
      %v925 = vpop.f32.mrf.mxu0
      %v926 = vadd.f32 %v747, %v925
      %927 = vmatmul.bf16.gmra.mxu0 %v804
      %v928 = vpop.f32.mrf.mxu0
      %v929 = vadd.f32 %v747, %v928
      %v930 = vpop.f32.mrf.mxu0
      %v931 = vadd.f32 %v747, %v930
      %932 = vmatmul.bf16.gmra.mxu0 %v807
      %v933 = vpop.f32.mrf.mxu0
      %v934 = vadd.f32 %v747, %v933
      %v935 = vpop.f32.mrf.mxu0
      %v936 = vadd.f32 %v747, %v935
      %937 = vmatmul.bf16.gmra.mxu0 %v810
      %v938 = vpop.f32.mrf.mxu0
      %v939 = vadd.f32 %v747, %v938
      %v940 = vpop.f32.mrf.mxu0
      %v941 = vadd.f32 %v747, %v940
      %942 = vmatmul.bf16.gmra.mxu0 %v813
      %v943 = vpop.f32.mrf.mxu0
      %v944 = vadd.f32 %v747, %v943
      %v945 = vpop.f32.mrf.mxu0
      %v946 = vadd.f32 %v747, %v945
      %947 = vmatmul.bf16.gmra.mxu0 %v816
      %v948 = vpop.f32.mrf.mxu0
      %v949 = vadd.f32 %v747, %v948
      %v950 = vpop.f32.mrf.mxu0
      %v951 = vadd.f32 %v747, %v950
      %952 = vmatmul.bf16.gmra.mxu0 %v819
      %v953 = vpop.f32.mrf.mxu0
      %v954 = vadd.f32 %v747, %v953
      %v955 = vpop.f32.mrf.mxu0
      %v956 = vadd.f32 %v747, %v955
      %957 = vmatmul.bf16.gmra.mxu0 %v822
      %v958 = vpop.f32.mrf.mxu0
      %v959 = vadd.f32 %v747, %v958
      %v960 = vpop.f32.mrf.mxu0
      %v961 = vadd.f32 %v747, %v960
      %962 = vmatmul.bf16.gmra.mxu0 %v825
      %v963 = vpop.f32.mrf.mxu0
      %v964 = vadd.f32 %v747, %v963
      %v965 = vpop.f32.mrf.mxu0
      %v966 = vadd.f32 %v747, %v965
      %967 = vmatmul.bf16.gmra.mxu0 %v828
      %v968 = vpop.f32.mrf.mxu0
      %v969 = vadd.f32 %v747, %v968
      %v970 = vpop.f32.mrf.mxu0
      %v971 = vadd.f32 %v747, %v970
      %972 = vmatmul.bf16.gmra.mxu0 %v831
      %v973 = vpop.f32.mrf.mxu0
      %v974 = vadd.f32 %v747, %v973
      %v975 = vpop.f32.mrf.mxu0
      %v976 = vadd.f32 %v747, %v975
      %977 = vmatmul.bf16.gmra.mxu0 %v834
      %v978 = vpop.f32.mrf.mxu0
      %v979 = vadd.f32 %v747, %v978
      %v980 = vpop.f32.mrf.mxu0
      %v981 = vadd.f32 %v747, %v980
      %982 = vmatmul.bf16.gmra.mxu0 %v837
      %v983 = vpop.f32.mrf.mxu0
      %v984 = vadd.f32 %v747, %v983
      %v985 = vpop.f32.mrf.mxu0
      %v986 = vadd.f32 %v747, %v985
      %987 = vmatmul.bf16.gmra.mxu0 %v840
      %v988 = vpop.f32.mrf.mxu0
      %v989 = vadd.f32 %v747, %v988
      %v990 = vpop.f32.mrf.mxu0
      %v991 = vadd.f32 %v747, %v990
      %992 = vmatmul.bf16.gmra.mxu0 %v843
      %v993 = vpop.f32.mrf.mxu0
      %v994 = vadd.f32 %v747, %v993
      %v995 = vpop.f32.mrf.mxu0
      %v996 = vadd.f32 %v747, %v995
      %997 = vmatmul.bf16.gmra.mxu0 %v846
      %v998 = vpop.f32.mrf.mxu0
      %v999 = vadd.f32 %v747, %v998
      %v1000 = vpop.f32.mrf.mxu0
      %v1001 = vadd.f32 %v747, %v1000
      %1002 = vmatmul.bf16.gmra.mxu0 %v849
      %v1003 = vpop.f32.mrf.mxu0
      %v1004 = vadd.f32 %v747, %v1003
      %v1005 = vpop.f32.mrf.mxu0
      %v1006 = vadd.f32 %v747, %v1005
      %1007 = vmatmul.bf16.gmra.mxu0 %v852
      %v1008 = vpop.f32.mrf.mxu0
      %v1009 = vadd.f32 %v747, %v1008
      %v1010 = vpop.f32.mrf.mxu0
      %v1011 = vadd.f32 %v747, %v1010
      %1012 = vmatmul.bf16.gmra.mxu0 %v855
      %v1013 = vpop.f32.mrf.mxu0
      %v1014 = vadd.f32 %v747, %v1013
      %v1015 = vpop.f32.mrf.mxu0
      %v1016 = vadd.f32 %v747, %v1015
      %1017 = vmatmul.bf16.gmra.mxu0 %v858
      %v1018 = vpop.f32.mrf.mxu0
      %v1019 = vadd.f32 %v747, %v1018
      %v1020 = vpop.f32.mrf.mxu0
      %v1021 = vadd.f32 %v747, %v1020
      %1022 = vmatmul.bf16.gmra.mxu0 %v861
      %v1023 = vpop.f32.mrf.mxu0
      %v1024 = vadd.f32 %v747, %v1023
      %v1025 = vpop.f32.mrf.mxu0
      %v1026 = vadd.f32 %v747, %v1025
      %1027 = vmatmul.bf16.gmra.mxu0 %v864
      %v1028 = vpop.f32.mrf.mxu0
      %v1029 = vadd.f32 %v747, %v1028
      %v1030 = vpop.f32.mrf.mxu0
      %v1031 = vadd.f32 %v747, %v1030
      %1032 = vmatmul.bf16.gmra.mxu0 %v867
      %v1033 = vpop.f32.mrf.mxu0
      %v1034 = vadd.f32 %v747, %v1033
      %v1035 = vpop.f32.mrf.mxu0
      %v1036 = vadd.f32 %v747, %v1035
      %1037 = vdwg.mxu0
      %v1038 = vmax.f32 %v879, 0.0
      %v1039 = vmax.f32 %v881, 0.0
      %v1040 = vmax.f32 %v884, 0.0
      %v1041 = vmax.f32 %v886, 0.0
      %v1042 = vmax.f32 %v889, 0.0
      %v1043 = vmax.f32 %v891, 0.0
      %v1044 = vmax.f32 %v894, 0.0
      %v1045 = vmax.f32 %v896, 0.0
      %v1046 = vmax.f32 %v899, 0.0
      %v1047 = vmax.f32 %v901, 0.0
      %v1048 = vmax.f32 %v904, 0.0
      %v1049 = vmax.f32 %v906, 0.0
      %v1050 = vmax.f32 %v909, 0.0
      %v1051 = vmax.f32 %v911, 0.0
      %v1052 = vmax.f32 %v914, 0.0
      %v1053 = vmax.f32 %v916, 0.0
      %v1054 = vmax.f32 %v919, 0.0
      %v1055 = vmax.f32 %v921, 0.0
      %v1056 = vmax.f32 %v924, 0.0
      %v1057 = vmax.f32 %v926, 0.0
      %v1058 = vmax.f32 %v929, 0.0
      %v1059 = vmax.f32 %v931, 0.0
      %v1060 = vmax.f32 %v934, 0.0
      %v1061 = vmax.f32 %v936, 0.0
      %v1062 = vmax.f32 %v939, 0.0
      %v1063 = vmax.f32 %v941, 0.0
      %v1064 = vmax.f32 %v944, 0.0
      %v1065 = vmax.f32 %v946, 0.0
      %v1066 = vmax.f32 %v949, 0.0
      %v1067 = vmax.f32 %v951, 0.0
      %v1068 = vmax.f32 %v954, 0.0
      %v1069 = vmax.f32 %v956, 0.0
      %v1070 = vmax.f32 %v959, 0.0
      %v1071 = vmax.f32 %v961, 0.0
      %v1072 = vmax.f32 %v964, 0.0
      %v1073 = vmax.f32 %v966, 0.0
      %v1074 = vmax.f32 %v969, 0.0
      %v1075 = vmax.f32 %v971, 0.0
      %v1076 = vmax.f32 %v974, 0.0
      %v1077 = vmax.f32 %v976, 0.0
      %v1078 = vmax.f32 %v979, 0.0
      %v1079 = vmax.f32 %v981, 0.0
      %v1080 = vmax.f32 %v984, 0.0
      %v1081 = vmax.f32 %v986, 0.0
      %v1082 = vmax.f32 %v989, 0.0
      %v1083 = vmax.f32 %v991, 0.0
      %v1084 = vmax.f32 %v994, 0.0
      %v1085 = vmax.f32 %v996, 0.0
      %v1086 = vmax.f32 %v999, 0.0
      %v1087 = vmax.f32 %v1001, 0.0
      %v1088 = vmax.f32 %v1004, 0.0
      %v1089 = vmax.f32 %v1006, 0.0
      %v1090 = vmax.f32 %v1009, 0.0
      %v1091 = vmax.f32 %v1011, 0.0
      %v1092 = vmax.f32 %v1014, 0.0
      %v1093 = vmax.f32 %v1016, 0.0
      %v1094 = vmax.f32 %v1019, 0.0
      %v1095 = vmax.f32 %v1021, 0.0
      %v1096 = vmax.f32 %v1024, 0.0
      %v1097 = vmax.f32 %v1026, 0.0
      %v1098 = vmax.f32 %v1029, 0.0
      %v1099 = vmax.f32 %v1031, 0.0
      %v1100 = vmax.f32 %v1034, 0.0
      %v1101 = vmax.f32 %v1036, 0.0
      %s1102 = scalar_lea.vmem %s1, 32
      %v1103 = vld [vmem:[%s1102] sm:$0xf]
      %v1104 = vld [vmem:[%s1102 + $0x4] sm:$0xf]
      %v1105 = vld [vmem:[%s1102 + $0x8] sm:$0xf]
      %v1106 = vld [vmem:[%s1102 + $0xc] sm:$0xf]
      %v1107 = vld [vmem:[%s1102 + $0x10] sm:$0xf]
      %v1108 = vld [vmem:[%s1102 + $0x14] sm:$0xf]
      %v1109 = vld [vmem:[%s1102 + $0x18] sm:$0xf]
      %v1110 = vld [vmem:[%s1102 + $0x1c] sm:$0xf]
      %v1111 = vpack.c.bf16 %v1039, %v1038
      %v1112 = vpack.c.bf16 %v1041, %v1040
      %v1113 = vpack.c.bf16 %v1043, %v1042
      %v1114 = vpack.c.bf16 %v1045, %v1044
      %v1115 = vpack.c.bf16 %v1047, %v1046
      %v1116 = vpack.c.bf16 %v1049, %v1048
      %v1117 = vpack.c.bf16 %v1051, %v1050
      %v1118 = vpack.c.bf16 %v1053, %v1052
      %v1119 = vpack.c.bf16 %v1055, %v1054
      %v1120 = vpack.c.bf16 %v1057, %v1056
      %v1121 = vpack.c.bf16 %v1059, %v1058
      %v1122 = vpack.c.bf16 %v1061, %v1060
      %v1123 = vpack.c.bf16 %v1063, %v1062
      %v1124 = vpack.c.bf16 %v1065, %v1064
      %v1125 = vpack.c.bf16 %v1067, %v1066
      %v1126 = vpack.c.bf16 %v1069, %v1068
      %v1127 = vpack.c.bf16 %v1071, %v1070
      %v1128 = vpack.c.bf16 %v1073, %v1072
      %v1129 = vpack.c.bf16 %v1075, %v1074
      %v1130 = vpack.c.bf16 %v1077, %v1076
      %v1131 = vpack.c.bf16 %v1079, %v1078
      %v1132 = vpack.c.bf16 %v1081, %v1080
      %v1133 = vpack.c.bf16 %v1083, %v1082
      %v1134 = vpack.c.bf16 %v1085, %v1084
      %v1135 = vpack.c.bf16 %v1087, %v1086
      %v1136 = vpack.c.bf16 %v1089, %v1088
      %v1137 = vpack.c.bf16 %v1091, %v1090
      %v1138 = vpack.c.bf16 %v1093, %v1092
      %v1139 = vpack.c.bf16 %v1095, %v1094
      %v1140 = vpack.c.bf16 %v1097, %v1096
      %v1141 = vpack.c.bf16 %v1099, %v1098
      %v1142 = vpack.c.bf16 %v1101, %v1100
      %v1143 = vperm.slane %v406, 2
      %v1152 = vunpack.c.l.b16 %v1103
      %v1153 = vunpack.c.l.b16 %v1104
      %v1154 = vunpack.c.l.b16 %v1105
      %v1155 = vunpack.c.l.b16 %v1106
      %v1156 = vunpack.c.l.b16 %v1107
      %v1157 = vunpack.c.l.b16 %v1108
      %v1158 = vunpack.c.l.b16 %v1109
      %v1159 = vunpack.c.l.b16 %v1110
      %v1160 = vpack.c.b16 %v1153, %v1152
      %v1161 = vpack.c.b16 %v1155, %v1154
      %v1162 = vpack.c.b16 %v1157, %v1156
      %v1163 = vpack.c.b16 %v1159, %v1158
      %v1169 = vsel %vm772, %v1111, 0
      %v1172 = vsel %vm772, %v1112, 0
      %v1175 = vsel %vm772, %v1113, 0
      %v1178 = vsel %vm772, %v1114, 0
      %v1181 = vsel %vm772, %v1115, 0
      %v1184 = vsel %vm772, %v1116, 0
      %v1187 = vsel %vm772, %v1117, 0
      %v1190 = vsel %vm772, %v1118, 0
      %v1193 = vsel %vm772, %v1119, 0
      %v1196 = vsel %vm772, %v1120, 0
      %v1199 = vsel %vm772, %v1121, 0
      %v1202 = vsel %vm772, %v1122, 0
      %v1205 = vsel %vm772, %v1123, 0
      %v1208 = vsel %vm772, %v1124, 0
      %v1211 = vsel %vm772, %v1125, 0
      %v1214 = vsel %vm772, %v1126, 0
      %v1217 = vsel %vm772, %v1127, 0
      %v1220 = vsel %vm772, %v1128, 0
      %v1223 = vsel %vm772, %v1129, 0
      %v1226 = vsel %vm772, %v1130, 0
      %v1229 = vsel %vm772, %v1131, 0
      %v1232 = vsel %vm772, %v1132, 0
      %v1235 = vsel %vm772, %v1133, 0
      %v1238 = vsel %vm772, %v1134, 0
      %v1241 = vsel %vm772, %v1135, 0
      %v1244 = vsel %vm772, %v1136, 0
      %v1247 = vsel %vm772, %v1137, 0
      %v1250 = vsel %vm772, %v1138, 0
      %v1253 = vsel %vm772, %v1139, 0
      %v1256 = vsel %vm772, %v1140, 0
      %v1259 = vsel %vm772, %v1141, 0
      %v1262 = vsel %vm772, %v1142, 0
      %1264 = vmatpush.bf16.msra.mxu0 0
      %1265 = vmatpush.bf16.msra.mxu0 0
      %1266 = vmatpush.bf16.msra.mxu0 0
      %1267 = vmatpush.bf16.msra.mxu0 0
      %1268 = vmatpush.bf16.msra.mxu0 %v1163
      %1269 = vmatpush.bf16.msra.mxu0 %v1162
      %1270 = vmatpush.bf16.msra.mxu0 %v1161
      %1271 = vmatpush.bf16.msra.mxu0 %v1160
      %1272 = vmatmul.bf16.gmra.mxu0 %v1169
      %v1273 = vpop.f32.mrf.mxu0
      %v1274 = vadd.f32 %v1143, %v1273
      %v1275 = vpop.f32.mrf.mxu0
      %v1276 = vadd.f32 %v1143, %v1275
      %1277 = vmatmul.bf16.gmra.mxu0 %v1172
      %v1278 = vpop.f32.mrf.mxu0
      %v1279 = vadd.f32 %v1143, %v1278
      %v1280 = vpop.f32.mrf.mxu0
      %v1281 = vadd.f32 %v1143, %v1280
      %1282 = vmatmul.bf16.gmra.mxu0 %v1175
      %v1283 = vpop.f32.mrf.mxu0
      %v1284 = vadd.f32 %v1143, %v1283
      %v1285 = vpop.f32.mrf.mxu0
      %v1286 = vadd.f32 %v1143, %v1285
      %1287 = vmatmul.bf16.gmra.mxu0 %v1178
      %v1288 = vpop.f32.mrf.mxu0
      %v1289 = vadd.f32 %v1143, %v1288
      %v1290 = vpop.f32.mrf.mxu0
      %v1291 = vadd.f32 %v1143, %v1290
      %1292 = vmatmul.bf16.gmra.mxu0 %v1181
      %v1293 = vpop.f32.mrf.mxu0
      %v1294 = vadd.f32 %v1143, %v1293
      %v1295 = vpop.f32.mrf.mxu0
      %v1296 = vadd.f32 %v1143, %v1295
      %1297 = vmatmul.bf16.gmra.mxu0 %v1184
      %v1298 = vpop.f32.mrf.mxu0
      %v1299 = vadd.f32 %v1143, %v1298
      %v1300 = vpop.f32.mrf.mxu0
      %v1301 = vadd.f32 %v1143, %v1300
      %1302 = vmatmul.bf16.gmra.mxu0 %v1187
      %v1303 = vpop.f32.mrf.mxu0
      %v1304 = vadd.f32 %v1143, %v1303
      %v1305 = vpop.f32.mrf.mxu0
      %v1306 = vadd.f32 %v1143, %v1305
      %1307 = vmatmul.bf16.gmra.mxu0 %v1190
      %v1308 = vpop.f32.mrf.mxu0
      %v1309 = vadd.f32 %v1143, %v1308
      %v1310 = vpop.f32.mrf.mxu0
      %v1311 = vadd.f32 %v1143, %v1310
      %1312 = vmatmul.bf16.gmra.mxu0 %v1193
      %v1313 = vpop.f32.mrf.mxu0
      %v1314 = vadd.f32 %v1143, %v1313
      %v1315 = vpop.f32.mrf.mxu0
      %v1316 = vadd.f32 %v1143, %v1315
      %1317 = vmatmul.bf16.gmra.mxu0 %v1196
      %v1318 = vpop.f32.mrf.mxu0
      %v1319 = vadd.f32 %v1143, %v1318
      %v1320 = vpop.f32.mrf.mxu0
      %v1321 = vadd.f32 %v1143, %v1320
      %1322 = vmatmul.bf16.gmra.mxu0 %v1199
      %v1323 = vpop.f32.mrf.mxu0
      %v1324 = vadd.f32 %v1143, %v1323
      %v1325 = vpop.f32.mrf.mxu0
      %v1326 = vadd.f32 %v1143, %v1325
      %1327 = vmatmul.bf16.gmra.mxu0 %v1202
      %v1328 = vpop.f32.mrf.mxu0
      %v1329 = vadd.f32 %v1143, %v1328
      %v1330 = vpop.f32.mrf.mxu0
      %v1331 = vadd.f32 %v1143, %v1330
      %1332 = vmatmul.bf16.gmra.mxu0 %v1205
      %v1333 = vpop.f32.mrf.mxu0
      %v1334 = vadd.f32 %v1143, %v1333
      %v1335 = vpop.f32.mrf.mxu0
      %v1336 = vadd.f32 %v1143, %v1335
      %1337 = vmatmul.bf16.gmra.mxu0 %v1208
      %v1338 = vpop.f32.mrf.mxu0
      %v1339 = vadd.f32 %v1143, %v1338
      %v1340 = vpop.f32.mrf.mxu0
      %v1341 = vadd.f32 %v1143, %v1340
      %1342 = vmatmul.bf16.gmra.mxu0 %v1211
      %v1343 = vpop.f32.mrf.mxu0
      %v1344 = vadd.f32 %v1143, %v1343
      %v1345 = vpop.f32.mrf.mxu0
      %v1346 = vadd.f32 %v1143, %v1345
      %1347 = vmatmul.bf16.gmra.mxu0 %v1214
      %v1348 = vpop.f32.mrf.mxu0
      %v1349 = vadd.f32 %v1143, %v1348
      %v1350 = vpop.f32.mrf.mxu0
      %v1351 = vadd.f32 %v1143, %v1350
      %1352 = vmatmul.bf16.gmra.mxu0 %v1217
      %v1353 = vpop.f32.mrf.mxu0
      %v1354 = vadd.f32 %v1143, %v1353
      %v1355 = vpop.f32.mrf.mxu0
      %v1356 = vadd.f32 %v1143, %v1355
      %1357 = vmatmul.bf16.gmra.mxu0 %v1220
      %v1358 = vpop.f32.mrf.mxu0
      %v1359 = vadd.f32 %v1143, %v1358
      %v1360 = vpop.f32.mrf.mxu0
      %v1361 = vadd.f32 %v1143, %v1360
      %1362 = vmatmul.bf16.gmra.mxu0 %v1223
      %v1363 = vpop.f32.mrf.mxu0
      %v1364 = vadd.f32 %v1143, %v1363
      %v1365 = vpop.f32.mrf.mxu0
      %v1366 = vadd.f32 %v1143, %v1365
      %1367 = vmatmul.bf16.gmra.mxu0 %v1226
      %v1368 = vpop.f32.mrf.mxu0
      %v1369 = vadd.f32 %v1143, %v1368
      %v1370 = vpop.f32.mrf.mxu0
      %v1371 = vadd.f32 %v1143, %v1370
      %1372 = vmatmul.bf16.gmra.mxu0 %v1229
      %v1373 = vpop.f32.mrf.mxu0
      %v1374 = vadd.f32 %v1143, %v1373
      %v1375 = vpop.f32.mrf.mxu0
      %v1376 = vadd.f32 %v1143, %v1375
      %1377 = vmatmul.bf16.gmra.mxu0 %v1232
      %v1378 = vpop.f32.mrf.mxu0
      %v1379 = vadd.f32 %v1143, %v1378
      %v1380 = vpop.f32.mrf.mxu0
      %v1381 = vadd.f32 %v1143, %v1380
      %1382 = vmatmul.bf16.gmra.mxu0 %v1235
      %v1383 = vpop.f32.mrf.mxu0
      %v1384 = vadd.f32 %v1143, %v1383
      %v1385 = vpop.f32.mrf.mxu0
      %v1386 = vadd.f32 %v1143, %v1385
      %1387 = vmatmul.bf16.gmra.mxu0 %v1238
      %v1388 = vpop.f32.mrf.mxu0
      %v1389 = vadd.f32 %v1143, %v1388
      %v1390 = vpop.f32.mrf.mxu0
      %v1391 = vadd.f32 %v1143, %v1390
      %1392 = vmatmul.bf16.gmra.mxu0 %v1241
      %v1393 = vpop.f32.mrf.mxu0
      %v1394 = vadd.f32 %v1143, %v1393
      %v1395 = vpop.f32.mrf.mxu0
      %v1396 = vadd.f32 %v1143, %v1395
      %1397 = vmatmul.bf16.gmra.mxu0 %v1244
      %v1398 = vpop.f32.mrf.mxu0
      %v1399 = vadd.f32 %v1143, %v1398
      %v1400 = vpop.f32.mrf.mxu0
      %v1401 = vadd.f32 %v1143, %v1400
      %1402 = vmatmul.bf16.gmra.mxu0 %v1247
      %v1403 = vpop.f32.mrf.mxu0
      %v1404 = vadd.f32 %v1143, %v1403
      %v1405 = vpop.f32.mrf.mxu0
      %v1406 = vadd.f32 %v1143, %v1405
      %1407 = vmatmul.bf16.gmra.mxu0 %v1250
      %v1408 = vpop.f32.mrf.mxu0
      %v1409 = vadd.f32 %v1143, %v1408
      %v1410 = vpop.f32.mrf.mxu0
      %v1411 = vadd.f32 %v1143, %v1410
      %1412 = vmatmul.bf16.gmra.mxu0 %v1253
      %v1413 = vpop.f32.mrf.mxu0
      %v1414 = vadd.f32 %v1143, %v1413
      %v1415 = vpop.f32.mrf.mxu0
      %v1416 = vadd.f32 %v1143, %v1415
      %1417 = vmatmul.bf16.gmra.mxu0 %v1256
      %v1418 = vpop.f32.mrf.mxu0
      %v1419 = vadd.f32 %v1143, %v1418
      %v1420 = vpop.f32.mrf.mxu0
      %v1421 = vadd.f32 %v1143, %v1420
      %1422 = vmatmul.bf16.gmra.mxu0 %v1259
      %v1423 = vpop.f32.mrf.mxu0
      %v1424 = vadd.f32 %v1143, %v1423
      %v1425 = vpop.f32.mrf.mxu0
      %v1426 = vadd.f32 %v1143, %v1425
      %1427 = vmatmul.bf16.gmra.mxu0 %v1262
      %v1428 = vpop.f32.mrf.mxu0
      %v1429 = vadd.f32 %v1143, %v1428
      %v1430 = vpop.f32.mrf.mxu0
      %v1431 = vadd.f32 %v1143, %v1430
      %1432 = vdwg.mxu0
      %v1433 = vmax.f32 %v1274, 0.0
      %v1434 = vmax.f32 %v1276, 0.0
      %v1435 = vmax.f32 %v1279, 0.0
      %v1436 = vmax.f32 %v1281, 0.0
      %v1437 = vmax.f32 %v1284, 0.0
      %v1438 = vmax.f32 %v1286, 0.0
      %v1439 = vmax.f32 %v1289, 0.0
      %v1440 = vmax.f32 %v1291, 0.0
      %v1441 = vmax.f32 %v1294, 0.0
      %v1442 = vmax.f32 %v1296, 0.0
      %v1443 = vmax.f32 %v1299, 0.0
      %v1444 = vmax.f32 %v1301, 0.0
      %v1445 = vmax.f32 %v1304, 0.0
      %v1446 = vmax.f32 %v1306, 0.0
      %v1447 = vmax.f32 %v1309, 0.0
      %v1448 = vmax.f32 %v1311, 0.0
      %v1449 = vmax.f32 %v1314, 0.0
      %v1450 = vmax.f32 %v1316, 0.0
      %v1451 = vmax.f32 %v1319, 0.0
      %v1452 = vmax.f32 %v1321, 0.0
      %v1453 = vmax.f32 %v1324, 0.0
      %v1454 = vmax.f32 %v1326, 0.0
      %v1455 = vmax.f32 %v1329, 0.0
      %v1456 = vmax.f32 %v1331, 0.0
      %v1457 = vmax.f32 %v1334, 0.0
      %v1458 = vmax.f32 %v1336, 0.0
      %v1459 = vmax.f32 %v1339, 0.0
      %v1460 = vmax.f32 %v1341, 0.0
      %v1461 = vmax.f32 %v1344, 0.0
      %v1462 = vmax.f32 %v1346, 0.0
      %v1463 = vmax.f32 %v1349, 0.0
      %v1464 = vmax.f32 %v1351, 0.0
      %v1465 = vmax.f32 %v1354, 0.0
      %v1466 = vmax.f32 %v1356, 0.0
      %v1467 = vmax.f32 %v1359, 0.0
      %v1468 = vmax.f32 %v1361, 0.0
      %v1469 = vmax.f32 %v1364, 0.0
      %v1470 = vmax.f32 %v1366, 0.0
      %v1471 = vmax.f32 %v1369, 0.0
      %v1472 = vmax.f32 %v1371, 0.0
      %v1473 = vmax.f32 %v1374, 0.0
      %v1474 = vmax.f32 %v1376, 0.0
      %v1475 = vmax.f32 %v1379, 0.0
      %v1476 = vmax.f32 %v1381, 0.0
      %v1477 = vmax.f32 %v1384, 0.0
      %v1478 = vmax.f32 %v1386, 0.0
      %v1479 = vmax.f32 %v1389, 0.0
      %v1480 = vmax.f32 %v1391, 0.0
      %v1481 = vmax.f32 %v1394, 0.0
      %v1482 = vmax.f32 %v1396, 0.0
      %v1483 = vmax.f32 %v1399, 0.0
      %v1484 = vmax.f32 %v1401, 0.0
      %v1485 = vmax.f32 %v1404, 0.0
      %v1486 = vmax.f32 %v1406, 0.0
      %v1487 = vmax.f32 %v1409, 0.0
      %v1488 = vmax.f32 %v1411, 0.0
      %v1489 = vmax.f32 %v1414, 0.0
      %v1490 = vmax.f32 %v1416, 0.0
      %v1491 = vmax.f32 %v1419, 0.0
      %v1492 = vmax.f32 %v1421, 0.0
      %v1493 = vmax.f32 %v1424, 0.0
      %v1494 = vmax.f32 %v1426, 0.0
      %v1495 = vmax.f32 %v1429, 0.0
      %v1496 = vmax.f32 %v1431, 0.0
      %s1497 = scalar_lea.vmem %s1, 64
      %v1498 = vld [vmem:[%s1497] sm:$0xf]
      %v1499 = vld [vmem:[%s1497 + $0x4] sm:$0xf]
      %v1500 = vld [vmem:[%s1497 + $0x8] sm:$0xf]
      %v1501 = vld [vmem:[%s1497 + $0xc] sm:$0xf]
      %v1502 = vld [vmem:[%s1497 + $0x10] sm:$0xf]
      %v1503 = vld [vmem:[%s1497 + $0x14] sm:$0xf]
      %v1504 = vld [vmem:[%s1497 + $0x18] sm:$0xf]
      %v1505 = vld [vmem:[%s1497 + $0x1c] sm:$0xf]
      %v1506 = vpack.c.bf16 %v1434, %v1433
      %v1507 = vpack.c.bf16 %v1436, %v1435
      %v1508 = vpack.c.bf16 %v1438, %v1437
      %v1509 = vpack.c.bf16 %v1440, %v1439
      %v1510 = vpack.c.bf16 %v1442, %v1441
      %v1511 = vpack.c.bf16 %v1444, %v1443
      %v1512 = vpack.c.bf16 %v1446, %v1445
      %v1513 = vpack.c.bf16 %v1448, %v1447
      %v1514 = vpack.c.bf16 %v1450, %v1449
      %v1515 = vpack.c.bf16 %v1452, %v1451
      %v1516 = vpack.c.bf16 %v1454, %v1453
      %v1517 = vpack.c.bf16 %v1456, %v1455
      %v1518 = vpack.c.bf16 %v1458, %v1457
      %v1519 = vpack.c.bf16 %v1460, %v1459
      %v1520 = vpack.c.bf16 %v1462, %v1461
      %v1521 = vpack.c.bf16 %v1464, %v1463
      %v1522 = vpack.c.bf16 %v1466, %v1465
      %v1523 = vpack.c.bf16 %v1468, %v1467
      %v1524 = vpack.c.bf16 %v1470, %v1469
      %v1525 = vpack.c.bf16 %v1472, %v1471
      %v1526 = vpack.c.bf16 %v1474, %v1473
      %v1527 = vpack.c.bf16 %v1476, %v1475
      %v1528 = vpack.c.bf16 %v1478, %v1477
      %v1529 = vpack.c.bf16 %v1480, %v1479
      %v1530 = vpack.c.bf16 %v1482, %v1481
      %v1531 = vpack.c.bf16 %v1484, %v1483
      %v1532 = vpack.c.bf16 %v1486, %v1485
      %v1533 = vpack.c.bf16 %v1488, %v1487
      %v1534 = vpack.c.bf16 %v1490, %v1489
      %v1535 = vpack.c.bf16 %v1492, %v1491
      %v1536 = vpack.c.bf16 %v1494, %v1493
      %v1537 = vpack.c.bf16 %v1496, %v1495
      %v1538 = vperm.slane %v406, 3
      %v1547 = vunpack.c.l.b16 %v1498
      %v1548 = vunpack.c.l.b16 %v1499
      %v1549 = vunpack.c.l.b16 %v1500
      %v1550 = vunpack.c.l.b16 %v1501
      %v1551 = vunpack.c.l.b16 %v1502
      %v1552 = vunpack.c.l.b16 %v1503
      %v1553 = vunpack.c.l.b16 %v1504
      %v1554 = vunpack.c.l.b16 %v1505
      %v1555 = vpack.c.b16 %v1548, %v1547
      %v1556 = vpack.c.b16 %v1550, %v1549
      %v1557 = vpack.c.b16 %v1552, %v1551
      %v1558 = vpack.c.b16 %v1554, %v1553
      %v1564 = vsel %vm772, %v1506, 0
      %v1567 = vsel %vm772, %v1507, 0
      %v1570 = vsel %vm772, %v1508, 0
      %v1573 = vsel %vm772, %v1509, 0
      %v1576 = vsel %vm772, %v1510, 0
      %v1579 = vsel %vm772, %v1511, 0
      %v1582 = vsel %vm772, %v1512, 0
      %v1585 = vsel %vm772, %v1513, 0
      %v1588 = vsel %vm772, %v1514, 0
      %v1591 = vsel %vm772, %v1515, 0
      %v1594 = vsel %vm772, %v1516, 0
      %v1597 = vsel %vm772, %v1517, 0
      %v1600 = vsel %vm772, %v1518, 0
      %v1603 = vsel %vm772, %v1519, 0
      %v1606 = vsel %vm772, %v1520, 0
      %v1609 = vsel %vm772, %v1521, 0
      %v1612 = vsel %vm772, %v1522, 0
      %v1615 = vsel %vm772, %v1523, 0
      %v1618 = vsel %vm772, %v1524, 0
      %v1621 = vsel %vm772, %v1525, 0
      %v1624 = vsel %vm772, %v1526, 0
      %v1627 = vsel %vm772, %v1527, 0
      %v1630 = vsel %vm772, %v1528, 0
      %v1633 = vsel %vm772, %v1529, 0
      %v1636 = vsel %vm772, %v1530, 0
      %v1639 = vsel %vm772, %v1531, 0
      %v1642 = vsel %vm772, %v1532, 0
      %v1645 = vsel %vm772, %v1533, 0
      %v1648 = vsel %vm772, %v1534, 0
      %v1651 = vsel %vm772, %v1535, 0
      %v1654 = vsel %vm772, %v1536, 0
      %v1657 = vsel %vm772, %v1537, 0
      %1659 = vmatpush.bf16.msra.mxu0 0
      %1660 = vmatpush.bf16.msra.mxu0 0
      %1661 = vmatpush.bf16.msra.mxu0 0
      %1662 = vmatpush.bf16.msra.mxu0 0
      %1663 = vmatpush.bf16.msra.mxu0 %v1558
      %1664 = vmatpush.bf16.msra.mxu0 %v1557
      %1665 = vmatpush.bf16.msra.mxu0 %v1556
      %1666 = vmatpush.bf16.msra.mxu0 %v1555
      %1667 = vmatmul.bf16.gmra.mxu0 %v1564
      %v1668 = vpop.f32.mrf.mxu0
      %v1669 = vadd.f32 %v1538, %v1668
      %v1670 = vpop.f32.mrf.mxu0
      %v1671 = vadd.f32 %v1538, %v1670
      %1672 = vmatmul.bf16.gmra.mxu0 %v1567
      %v1673 = vpop.f32.mrf.mxu0
      %v1674 = vadd.f32 %v1538, %v1673
      %v1675 = vpop.f32.mrf.mxu0
      %v1676 = vadd.f32 %v1538, %v1675
      %1677 = vmatmul.bf16.gmra.mxu0 %v1570
      %v1678 = vpop.f32.mrf.mxu0
      %v1679 = vadd.f32 %v1538, %v1678
      %v1680 = vpop.f32.mrf.mxu0
      %v1681 = vadd.f32 %v1538, %v1680
      %1682 = vmatmul.bf16.gmra.mxu0 %v1573
      %v1683 = vpop.f32.mrf.mxu0
      %v1684 = vadd.f32 %v1538, %v1683
      %v1685 = vpop.f32.mrf.mxu0
      %v1686 = vadd.f32 %v1538, %v1685
      %1687 = vmatmul.bf16.gmra.mxu0 %v1576
      %v1688 = vpop.f32.mrf.mxu0
      %v1689 = vadd.f32 %v1538, %v1688
      %v1690 = vpop.f32.mrf.mxu0
      %v1691 = vadd.f32 %v1538, %v1690
      %1692 = vmatmul.bf16.gmra.mxu0 %v1579
      %v1693 = vpop.f32.mrf.mxu0
      %v1694 = vadd.f32 %v1538, %v1693
      %v1695 = vpop.f32.mrf.mxu0
      %v1696 = vadd.f32 %v1538, %v1695
      %1697 = vmatmul.bf16.gmra.mxu0 %v1582
      %v1698 = vpop.f32.mrf.mxu0
      %v1699 = vadd.f32 %v1538, %v1698
      %v1700 = vpop.f32.mrf.mxu0
      %v1701 = vadd.f32 %v1538, %v1700
      %1702 = vmatmul.bf16.gmra.mxu0 %v1585
      %v1703 = vpop.f32.mrf.mxu0
      %v1704 = vadd.f32 %v1538, %v1703
      %v1705 = vpop.f32.mrf.mxu0
      %v1706 = vadd.f32 %v1538, %v1705
      %1707 = vmatmul.bf16.gmra.mxu0 %v1588
      %v1708 = vpop.f32.mrf.mxu0
      %v1709 = vadd.f32 %v1538, %v1708
      %v1710 = vpop.f32.mrf.mxu0
      %v1711 = vadd.f32 %v1538, %v1710
      %1712 = vmatmul.bf16.gmra.mxu0 %v1591
      %v1713 = vpop.f32.mrf.mxu0
      %v1714 = vadd.f32 %v1538, %v1713
      %v1715 = vpop.f32.mrf.mxu0
      %v1716 = vadd.f32 %v1538, %v1715
      %1717 = vmatmul.bf16.gmra.mxu0 %v1594
      %v1718 = vpop.f32.mrf.mxu0
      %v1719 = vadd.f32 %v1538, %v1718
      %v1720 = vpop.f32.mrf.mxu0
      %v1721 = vadd.f32 %v1538, %v1720
      %1722 = vmatmul.bf16.gmra.mxu0 %v1597
      %v1723 = vpop.f32.mrf.mxu0
      %v1724 = vadd.f32 %v1538, %v1723
      %v1725 = vpop.f32.mrf.mxu0
      %v1726 = vadd.f32 %v1538, %v1725
      %1727 = vmatmul.bf16.gmra.mxu0 %v1600
      %v1728 = vpop.f32.mrf.mxu0
      %v1729 = vadd.f32 %v1538, %v1728
      %v1730 = vpop.f32.mrf.mxu0
      %v1731 = vadd.f32 %v1538, %v1730
      %1732 = vmatmul.bf16.gmra.mxu0 %v1603
      %v1733 = vpop.f32.mrf.mxu0
      %v1734 = vadd.f32 %v1538, %v1733
      %v1735 = vpop.f32.mrf.mxu0
      %v1736 = vadd.f32 %v1538, %v1735
      %1737 = vmatmul.bf16.gmra.mxu0 %v1606
      %v1738 = vpop.f32.mrf.mxu0
      %v1739 = vadd.f32 %v1538, %v1738
      %v1740 = vpop.f32.mrf.mxu0
      %v1741 = vadd.f32 %v1538, %v1740
      %1742 = vmatmul.bf16.gmra.mxu0 %v1609
      %v1743 = vpop.f32.mrf.mxu0
      %v1744 = vadd.f32 %v1538, %v1743
      %v1745 = vpop.f32.mrf.mxu0
      %v1746 = vadd.f32 %v1538, %v1745
      %1747 = vmatmul.bf16.gmra.mxu0 %v1612
      %v1748 = vpop.f32.mrf.mxu0
      %v1749 = vadd.f32 %v1538, %v1748
      %v1750 = vpop.f32.mrf.mxu0
      %v1751 = vadd.f32 %v1538, %v1750
      %1752 = vmatmul.bf16.gmra.mxu0 %v1615
      %v1753 = vpop.f32.mrf.mxu0
      %v1754 = vadd.f32 %v1538, %v1753
      %v1755 = vpop.f32.mrf.mxu0
      %v1756 = vadd.f32 %v1538, %v1755
      %1757 = vmatmul.bf16.gmra.mxu0 %v1618
      %v1758 = vpop.f32.mrf.mxu0
      %v1759 = vadd.f32 %v1538, %v1758
      %v1760 = vpop.f32.mrf.mxu0
      %v1761 = vadd.f32 %v1538, %v1760
      %1762 = vmatmul.bf16.gmra.mxu0 %v1621
      %v1763 = vpop.f32.mrf.mxu0
      %v1764 = vadd.f32 %v1538, %v1763
      %v1765 = vpop.f32.mrf.mxu0
      %v1766 = vadd.f32 %v1538, %v1765
      %1767 = vmatmul.bf16.gmra.mxu0 %v1624
      %v1768 = vpop.f32.mrf.mxu0
      %v1769 = vadd.f32 %v1538, %v1768
      %v1770 = vpop.f32.mrf.mxu0
      %v1771 = vadd.f32 %v1538, %v1770
      %1772 = vmatmul.bf16.gmra.mxu0 %v1627
      %v1773 = vpop.f32.mrf.mxu0
      %v1774 = vadd.f32 %v1538, %v1773
      %v1775 = vpop.f32.mrf.mxu0
      %v1776 = vadd.f32 %v1538, %v1775
      %1777 = vmatmul.bf16.gmra.mxu0 %v1630
      %v1778 = vpop.f32.mrf.mxu0
      %v1779 = vadd.f32 %v1538, %v1778
      %v1780 = vpop.f32.mrf.mxu0
      %v1781 = vadd.f32 %v1538, %v1780
      %1782 = vmatmul.bf16.gmra.mxu0 %v1633
      %v1783 = vpop.f32.mrf.mxu0
      %v1784 = vadd.f32 %v1538, %v1783
      %v1785 = vpop.f32.mrf.mxu0
      %v1786 = vadd.f32 %v1538, %v1785
      %1787 = vmatmul.bf16.gmra.mxu0 %v1636
      %v1788 = vpop.f32.mrf.mxu0
      %v1789 = vadd.f32 %v1538, %v1788
      %v1790 = vpop.f32.mrf.mxu0
      %v1791 = vadd.f32 %v1538, %v1790
      %1792 = vmatmul.bf16.gmra.mxu0 %v1639
      %v1793 = vpop.f32.mrf.mxu0
      %v1794 = vadd.f32 %v1538, %v1793
      %v1795 = vpop.f32.mrf.mxu0
      %v1796 = vadd.f32 %v1538, %v1795
      %1797 = vmatmul.bf16.gmra.mxu0 %v1642
      %v1798 = vpop.f32.mrf.mxu0
      %v1799 = vadd.f32 %v1538, %v1798
      %v1800 = vpop.f32.mrf.mxu0
      %v1801 = vadd.f32 %v1538, %v1800
      %1802 = vmatmul.bf16.gmra.mxu0 %v1645
      %v1803 = vpop.f32.mrf.mxu0
      %v1804 = vadd.f32 %v1538, %v1803
      %v1805 = vpop.f32.mrf.mxu0
      %v1806 = vadd.f32 %v1538, %v1805
      %1807 = vmatmul.bf16.gmra.mxu0 %v1648
      %v1808 = vpop.f32.mrf.mxu0
      %v1809 = vadd.f32 %v1538, %v1808
      %v1810 = vpop.f32.mrf.mxu0
      %v1811 = vadd.f32 %v1538, %v1810
      %1812 = vmatmul.bf16.gmra.mxu0 %v1651
      %v1813 = vpop.f32.mrf.mxu0
      %v1814 = vadd.f32 %v1538, %v1813
      %v1815 = vpop.f32.mrf.mxu0
      %v1816 = vadd.f32 %v1538, %v1815
      %1817 = vmatmul.bf16.gmra.mxu0 %v1654
      %v1818 = vpop.f32.mrf.mxu0
      %v1819 = vadd.f32 %v1538, %v1818
      %v1820 = vpop.f32.mrf.mxu0
      %v1821 = vadd.f32 %v1538, %v1820
      %1822 = vmatmul.bf16.gmra.mxu0 %v1657
      %v1823 = vpop.f32.mrf.mxu0
      %v1824 = vadd.f32 %v1538, %v1823
      %v1825 = vpop.f32.mrf.mxu0
      %v1826 = vadd.f32 %v1538, %v1825
      %1827 = vdwg.mxu0
      %v1828 = vmax.f32 %v1669, 0.0
      %v1829 = vmax.f32 %v1671, 0.0
      %v1830 = vmax.f32 %v1674, 0.0
      %v1831 = vmax.f32 %v1676, 0.0
      %v1832 = vmax.f32 %v1679, 0.0
      %v1833 = vmax.f32 %v1681, 0.0
      %v1834 = vmax.f32 %v1684, 0.0
      %v1835 = vmax.f32 %v1686, 0.0
      %v1836 = vmax.f32 %v1689, 0.0
      %v1837 = vmax.f32 %v1691, 0.0
      %v1838 = vmax.f32 %v1694, 0.0
      %v1839 = vmax.f32 %v1696, 0.0
      %v1840 = vmax.f32 %v1699, 0.0
      %v1841 = vmax.f32 %v1701, 0.0
      %v1842 = vmax.f32 %v1704, 0.0
      %v1843 = vmax.f32 %v1706, 0.0
      %v1844 = vmax.f32 %v1709, 0.0
      %v1845 = vmax.f32 %v1711, 0.0
      %v1846 = vmax.f32 %v1714, 0.0
      %v1847 = vmax.f32 %v1716, 0.0
      %v1848 = vmax.f32 %v1719, 0.0
      %v1849 = vmax.f32 %v1721, 0.0
      %v1850 = vmax.f32 %v1724, 0.0
      %v1851 = vmax.f32 %v1726, 0.0
      %v1852 = vmax.f32 %v1729, 0.0
      %v1853 = vmax.f32 %v1731, 0.0
      %v1854 = vmax.f32 %v1734, 0.0
      %v1855 = vmax.f32 %v1736, 0.0
      %v1856 = vmax.f32 %v1739, 0.0
      %v1857 = vmax.f32 %v1741, 0.0
      %v1858 = vmax.f32 %v1744, 0.0
      %v1859 = vmax.f32 %v1746, 0.0
      %v1860 = vmax.f32 %v1749, 0.0
      %v1861 = vmax.f32 %v1751, 0.0
      %v1862 = vmax.f32 %v1754, 0.0
      %v1863 = vmax.f32 %v1756, 0.0
      %v1864 = vmax.f32 %v1759, 0.0
      %v1865 = vmax.f32 %v1761, 0.0
      %v1866 = vmax.f32 %v1764, 0.0
      %v1867 = vmax.f32 %v1766, 0.0
      %v1868 = vmax.f32 %v1769, 0.0
      %v1869 = vmax.f32 %v1771, 0.0
      %v1870 = vmax.f32 %v1774, 0.0
      %v1871 = vmax.f32 %v1776, 0.0
      %v1872 = vmax.f32 %v1779, 0.0
      %v1873 = vmax.f32 %v1781, 0.0
      %v1874 = vmax.f32 %v1784, 0.0
      %v1875 = vmax.f32 %v1786, 0.0
      %v1876 = vmax.f32 %v1789, 0.0
      %v1877 = vmax.f32 %v1791, 0.0
      %v1878 = vmax.f32 %v1794, 0.0
      %v1879 = vmax.f32 %v1796, 0.0
      %v1880 = vmax.f32 %v1799, 0.0
      %v1881 = vmax.f32 %v1801, 0.0
      %v1882 = vmax.f32 %v1804, 0.0
      %v1883 = vmax.f32 %v1806, 0.0
      %v1884 = vmax.f32 %v1809, 0.0
      %v1885 = vmax.f32 %v1811, 0.0
      %v1886 = vmax.f32 %v1814, 0.0
      %v1887 = vmax.f32 %v1816, 0.0
      %v1888 = vmax.f32 %v1819, 0.0
      %v1889 = vmax.f32 %v1821, 0.0
      %v1890 = vmax.f32 %v1824, 0.0
      %v1891 = vmax.f32 %v1826, 0.0
      %s1892 = scalar_lea.vmem %s2, 64
      %v1893 = vld [vmem:[%s1892] sm:$0xf]
      %v1894 = vld [vmem:[%s1892 + $0x4] sm:$0xf]
      %v1895 = vld [vmem:[%s1892 + $0x8] sm:$0xf]
      %v1896 = vld [vmem:[%s1892 + $0xc] sm:$0xf]
      %v1897 = vld [vmem:[%s1892 + $0x10] sm:$0xf]
      %v1898 = vld [vmem:[%s1892 + $0x14] sm:$0xf]
      %v1899 = vld [vmem:[%s1892 + $0x18] sm:$0xf]
      %v1900 = vld [vmem:[%s1892 + $0x1c] sm:$0xf]
      %v1901 = vld [vmem:[%s1892 + $0x20] sm:$0xf]
      %v1902 = vld [vmem:[%s1892 + $0x24] sm:$0xf]
      %v1903 = vld [vmem:[%s1892 + $0x28] sm:$0xf]
      %v1904 = vld [vmem:[%s1892 + $0x2c] sm:$0xf]
      %v1905 = vld [vmem:[%s1892 + $0x30] sm:$0xf]
      %v1906 = vld [vmem:[%s1892 + $0x34] sm:$0xf]
      %v1907 = vld [vmem:[%s1892 + $0x38] sm:$0xf]
      %v1908 = vld [vmem:[%s1892 + $0x3c] sm:$0xf]
      %s1909 = scalar_lea.vmem %s1, 96
      %v1910 = vld [vmem:[%s1909] sm:$0xf]
      %v1911 = vld [vmem:[%s1909 + $0x4] sm:$0xf]
      %v1912 = vld [vmem:[%s1909 + $0x8] sm:$0xf]
      %v1913 = vld [vmem:[%s1909 + $0xc] sm:$0xf]
      %v1914 = vld [vmem:[%s1909 + $0x10] sm:$0xf]
      %v1915 = vld [vmem:[%s1909 + $0x14] sm:$0xf]
      %v1916 = vld [vmem:[%s1909 + $0x18] sm:$0xf]
      %v1917 = vld [vmem:[%s1909 + $0x1c] sm:$0xf]
      %v1918 = vpack.c.bf16 %v1829, %v1828
      %v1919 = vpack.c.bf16 %v1831, %v1830
      %v1920 = vpack.c.bf16 %v1833, %v1832
      %v1921 = vpack.c.bf16 %v1835, %v1834
      %v1922 = vpack.c.bf16 %v1837, %v1836
      %v1923 = vpack.c.bf16 %v1839, %v1838
      %v1924 = vpack.c.bf16 %v1841, %v1840
      %v1925 = vpack.c.bf16 %v1843, %v1842
      %v1926 = vpack.c.bf16 %v1845, %v1844
      %v1927 = vpack.c.bf16 %v1847, %v1846
      %v1928 = vpack.c.bf16 %v1849, %v1848
      %v1929 = vpack.c.bf16 %v1851, %v1850
      %v1930 = vpack.c.bf16 %v1853, %v1852
      %v1931 = vpack.c.bf16 %v1855, %v1854
      %v1932 = vpack.c.bf16 %v1857, %v1856
      %v1933 = vpack.c.bf16 %v1859, %v1858
      %v1934 = vpack.c.bf16 %v1861, %v1860
      %v1935 = vpack.c.bf16 %v1863, %v1862
      %v1936 = vpack.c.bf16 %v1865, %v1864
      %v1937 = vpack.c.bf16 %v1867, %v1866
      %v1938 = vpack.c.bf16 %v1869, %v1868
      %v1939 = vpack.c.bf16 %v1871, %v1870
      %v1940 = vpack.c.bf16 %v1873, %v1872
      %v1941 = vpack.c.bf16 %v1875, %v1874
      %v1942 = vpack.c.bf16 %v1877, %v1876
      %v1943 = vpack.c.bf16 %v1879, %v1878
      %v1944 = vpack.c.bf16 %v1881, %v1880
      %v1945 = vpack.c.bf16 %v1883, %v1882
      %v1946 = vpack.c.bf16 %v1885, %v1884
      %v1947 = vpack.c.bf16 %v1887, %v1886
      %v1948 = vpack.c.bf16 %v1889, %v1888
      %v1949 = vpack.c.bf16 %v1891, %v1890
      %v1958 = vunpack.c.l.b16 %v1910
      %v1959 = vunpack.c.l.b16 %v1911
      %v1960 = vunpack.c.l.b16 %v1912
      %v1961 = vunpack.c.l.b16 %v1913
      %v1962 = vunpack.c.l.b16 %v1914
      %v1963 = vunpack.c.l.b16 %v1915
      %v1964 = vunpack.c.l.b16 %v1916
      %v1965 = vunpack.c.l.b16 %v1917
      %v1966 = vpack.c.b16 %v1959, %v1958
      %v1967 = vpack.c.b16 %v1961, %v1960
      %v1968 = vpack.c.b16 %v1963, %v1962
      %v1969 = vpack.c.b16 %v1965, %v1964
      %v1975 = vsel %vm772, %v1918, 0
      %v1978 = vsel %vm772, %v1919, 0
      %v1981 = vsel %vm772, %v1920, 0
      %v1984 = vsel %vm772, %v1921, 0
      %v1987 = vsel %vm772, %v1922, 0
      %v1990 = vsel %vm772, %v1923, 0
      %v1993 = vsel %vm772, %v1924, 0
      %v1996 = vsel %vm772, %v1925, 0
      %v1999 = vsel %vm772, %v1926, 0
      %v2002 = vsel %vm772, %v1927, 0
      %v2005 = vsel %vm772, %v1928, 0
      %v2008 = vsel %vm772, %v1929, 0
      %v2011 = vsel %vm772, %v1930, 0
      %v2014 = vsel %vm772, %v1931, 0
      %v2017 = vsel %vm772, %v1932, 0
      %v2020 = vsel %vm772, %v1933, 0
      %v2023 = vsel %vm772, %v1934, 0
      %v2026 = vsel %vm772, %v1935, 0
      %v2029 = vsel %vm772, %v1936, 0
      %v2032 = vsel %vm772, %v1937, 0
      %v2035 = vsel %vm772, %v1938, 0
      %v2038 = vsel %vm772, %v1939, 0
      %v2041 = vsel %vm772, %v1940, 0
      %v2044 = vsel %vm772, %v1941, 0
      %v2047 = vsel %vm772, %v1942, 0
      %v2050 = vsel %vm772, %v1943, 0
      %v2053 = vsel %vm772, %v1944, 0
      %v2056 = vsel %vm772, %v1945, 0
      %v2059 = vsel %vm772, %v1946, 0
      %v2062 = vsel %vm772, %v1947, 0
      %v2065 = vsel %vm772, %v1948, 0
      %v2068 = vsel %vm772, %v1949, 0
      %2070 = vmatpush.bf16.msra.mxu0 0
      %2071 = vmatpush.bf16.msra.mxu0 0
      %2072 = vmatpush.bf16.msra.mxu0 0
      %2073 = vmatpush.bf16.msra.mxu0 0
      %2074 = vmatpush.bf16.msra.mxu0 %v1969
      %2075 = vmatpush.bf16.msra.mxu0 %v1968
      %2076 = vmatpush.bf16.msra.mxu0 %v1967
      %2077 = vmatpush.bf16.msra.mxu0 %v1966
      %2078 = vmatmul.bf16.gmra.mxu0 %v1975
      %v2079 = vpop.f32.mrf.mxu0
      %v2080 = vadd.f32 0.0, %v2079
      %v2081 = vpop.f32.mrf.mxu0
      %v2082 = vadd.f32 0.0, %v2081
      %2083 = vmatmul.bf16.gmra.mxu0 %v1978
      %v2084 = vpop.f32.mrf.mxu0
      %v2085 = vadd.f32 0.0, %v2084
      %v2086 = vpop.f32.mrf.mxu0
      %v2087 = vadd.f32 0.0, %v2086
      %2088 = vmatmul.bf16.gmra.mxu0 %v1981
      %v2089 = vpop.f32.mrf.mxu0
      %v2090 = vadd.f32 0.0, %v2089
      %v2091 = vpop.f32.mrf.mxu0
      %v2092 = vadd.f32 0.0, %v2091
      %2093 = vmatmul.bf16.gmra.mxu0 %v1984
      %v2094 = vpop.f32.mrf.mxu0
      %v2095 = vadd.f32 0.0, %v2094
      %v2096 = vpop.f32.mrf.mxu0
      %v2097 = vadd.f32 0.0, %v2096
      %2098 = vmatmul.bf16.gmra.mxu0 %v1987
      %v2099 = vpop.f32.mrf.mxu0
      %v2100 = vadd.f32 0.0, %v2099
      %v2101 = vpop.f32.mrf.mxu0
      %v2102 = vadd.f32 0.0, %v2101
      %2103 = vmatmul.bf16.gmra.mxu0 %v1990
      %v2104 = vpop.f32.mrf.mxu0
      %v2105 = vadd.f32 0.0, %v2104
      %v2106 = vpop.f32.mrf.mxu0
      %v2107 = vadd.f32 0.0, %v2106
      %2108 = vmatmul.bf16.gmra.mxu0 %v1993
      %v2109 = vpop.f32.mrf.mxu0
      %v2110 = vadd.f32 0.0, %v2109
      %v2111 = vpop.f32.mrf.mxu0
      %v2112 = vadd.f32 0.0, %v2111
      %2113 = vmatmul.bf16.gmra.mxu0 %v1996
      %v2114 = vpop.f32.mrf.mxu0
      %v2115 = vadd.f32 0.0, %v2114
      %v2116 = vpop.f32.mrf.mxu0
      %v2117 = vadd.f32 0.0, %v2116
      %2118 = vmatmul.bf16.gmra.mxu0 %v1999
      %v2119 = vpop.f32.mrf.mxu0
      %v2120 = vadd.f32 0.0, %v2119
      %v2121 = vpop.f32.mrf.mxu0
      %v2122 = vadd.f32 0.0, %v2121
      %2123 = vmatmul.bf16.gmra.mxu0 %v2002
      %v2124 = vpop.f32.mrf.mxu0
      %v2125 = vadd.f32 0.0, %v2124
      %v2126 = vpop.f32.mrf.mxu0
      %v2127 = vadd.f32 0.0, %v2126
      %2128 = vmatmul.bf16.gmra.mxu0 %v2005
      %v2129 = vpop.f32.mrf.mxu0
      %v2130 = vadd.f32 0.0, %v2129
      %v2131 = vpop.f32.mrf.mxu0
      %v2132 = vadd.f32 0.0, %v2131
      %2133 = vmatmul.bf16.gmra.mxu0 %v2008
      %v2134 = vpop.f32.mrf.mxu0
      %v2135 = vadd.f32 0.0, %v2134
      %v2136 = vpop.f32.mrf.mxu0
      %v2137 = vadd.f32 0.0, %v2136
      %2138 = vmatmul.bf16.gmra.mxu0 %v2011
      %v2139 = vpop.f32.mrf.mxu0
      %v2140 = vadd.f32 0.0, %v2139
      %v2141 = vpop.f32.mrf.mxu0
      %v2142 = vadd.f32 0.0, %v2141
      %2143 = vmatmul.bf16.gmra.mxu0 %v2014
      %v2144 = vpop.f32.mrf.mxu0
      %v2145 = vadd.f32 0.0, %v2144
      %v2146 = vpop.f32.mrf.mxu0
      %v2147 = vadd.f32 0.0, %v2146
      %2148 = vmatmul.bf16.gmra.mxu0 %v2017
      %v2149 = vpop.f32.mrf.mxu0
      %v2150 = vadd.f32 0.0, %v2149
      %v2151 = vpop.f32.mrf.mxu0
      %v2152 = vadd.f32 0.0, %v2151
      %2153 = vmatmul.bf16.gmra.mxu0 %v2020
      %v2154 = vpop.f32.mrf.mxu0
      %v2155 = vadd.f32 0.0, %v2154
      %v2156 = vpop.f32.mrf.mxu0
      %v2157 = vadd.f32 0.0, %v2156
      %2158 = vmatmul.bf16.gmra.mxu0 %v2023
      %v2159 = vpop.f32.mrf.mxu0
      %v2160 = vadd.f32 0.0, %v2159
      %v2161 = vpop.f32.mrf.mxu0
      %v2162 = vadd.f32 0.0, %v2161
      %2163 = vmatmul.bf16.gmra.mxu0 %v2026
      %v2164 = vpop.f32.mrf.mxu0
      %v2165 = vadd.f32 0.0, %v2164
      %v2166 = vpop.f32.mrf.mxu0
      %v2167 = vadd.f32 0.0, %v2166
      %2168 = vmatmul.bf16.gmra.mxu0 %v2029
      %v2169 = vpop.f32.mrf.mxu0
      %v2170 = vadd.f32 0.0, %v2169
      %v2171 = vpop.f32.mrf.mxu0
      %v2172 = vadd.f32 0.0, %v2171
      %2173 = vmatmul.bf16.gmra.mxu0 %v2032
      %v2174 = vpop.f32.mrf.mxu0
      %v2175 = vadd.f32 0.0, %v2174
      %v2176 = vpop.f32.mrf.mxu0
      %v2177 = vadd.f32 0.0, %v2176
      %2178 = vmatmul.bf16.gmra.mxu0 %v2035
      %v2179 = vpop.f32.mrf.mxu0
      %v2180 = vadd.f32 0.0, %v2179
      %v2181 = vpop.f32.mrf.mxu0
      %v2182 = vadd.f32 0.0, %v2181
      %2183 = vmatmul.bf16.gmra.mxu0 %v2038
      %v2184 = vpop.f32.mrf.mxu0
      %v2185 = vadd.f32 0.0, %v2184
      %v2186 = vpop.f32.mrf.mxu0
      %v2187 = vadd.f32 0.0, %v2186
      %2188 = vmatmul.bf16.gmra.mxu0 %v2041
      %v2189 = vpop.f32.mrf.mxu0
      %v2190 = vadd.f32 0.0, %v2189
      %v2191 = vpop.f32.mrf.mxu0
      %v2192 = vadd.f32 0.0, %v2191
      %2193 = vmatmul.bf16.gmra.mxu0 %v2044
      %v2194 = vpop.f32.mrf.mxu0
      %v2195 = vadd.f32 0.0, %v2194
      %v2196 = vpop.f32.mrf.mxu0
      %v2197 = vadd.f32 0.0, %v2196
      %2198 = vmatmul.bf16.gmra.mxu0 %v2047
      %v2199 = vpop.f32.mrf.mxu0
      %v2200 = vadd.f32 0.0, %v2199
      %v2201 = vpop.f32.mrf.mxu0
      %v2202 = vadd.f32 0.0, %v2201
      %2203 = vmatmul.bf16.gmra.mxu0 %v2050
      %v2204 = vpop.f32.mrf.mxu0
      %v2205 = vadd.f32 0.0, %v2204
      %v2206 = vpop.f32.mrf.mxu0
      %v2207 = vadd.f32 0.0, %v2206
      %2208 = vmatmul.bf16.gmra.mxu0 %v2053
      %v2209 = vpop.f32.mrf.mxu0
      %v2210 = vadd.f32 0.0, %v2209
      %v2211 = vpop.f32.mrf.mxu0
      %v2212 = vadd.f32 0.0, %v2211
      %2213 = vmatmul.bf16.gmra.mxu0 %v2056
      %v2214 = vpop.f32.mrf.mxu0
      %v2215 = vadd.f32 0.0, %v2214
      %v2216 = vpop.f32.mrf.mxu0
      %v2217 = vadd.f32 0.0, %v2216
      %2218 = vmatmul.bf16.gmra.mxu0 %v2059
      %v2219 = vpop.f32.mrf.mxu0
      %v2220 = vadd.f32 0.0, %v2219
      %v2221 = vpop.f32.mrf.mxu0
      %v2222 = vadd.f32 0.0, %v2221
      %2223 = vmatmul.bf16.gmra.mxu0 %v2062
      %v2224 = vpop.f32.mrf.mxu0
      %v2225 = vadd.f32 0.0, %v2224
      %v2226 = vpop.f32.mrf.mxu0
      %v2227 = vadd.f32 0.0, %v2226
      %2228 = vmatmul.bf16.gmra.mxu0 %v2065
      %v2229 = vpop.f32.mrf.mxu0
      %v2230 = vadd.f32 0.0, %v2229
      %v2231 = vpop.f32.mrf.mxu0
      %v2232 = vadd.f32 0.0, %v2231
      %2233 = vmatmul.bf16.gmra.mxu0 %v2068
      %v2234 = vpop.f32.mrf.mxu0
      %v2235 = vadd.f32 0.0, %v2234
      %v2236 = vpop.f32.mrf.mxu0
      %v2237 = vadd.f32 0.0, %v2236
      %2238 = vdwg.mxu0
      %v2255 = vunpack.c.l.b16 %v1893
      %v2256 = vunpack.c.l.b16 %v1894
      %v2257 = vunpack.c.l.b16 %v1895
      %v2258 = vunpack.c.l.b16 %v1896
      %v2259 = vunpack.c.l.b16 %v1897
      %v2260 = vunpack.c.l.b16 %v1898
      %v2261 = vunpack.c.l.b16 %v1899
      %v2262 = vunpack.c.l.b16 %v1900
      %v2263 = vunpack.c.l.b16 %v1901
      %v2264 = vunpack.c.l.b16 %v1902
      %v2265 = vunpack.c.l.b16 %v1903
      %v2266 = vunpack.c.l.b16 %v1904
      %v2267 = vunpack.c.l.b16 %v1905
      %v2268 = vunpack.c.l.b16 %v1906
      %v2269 = vunpack.c.l.b16 %v1907
      %v2270 = vunpack.c.l.b16 %v1908
      %v2271 = vpack.c.b16 %v2256, %v2255
      %v2272 = vpack.c.b16 %v2258, %v2257
      %v2273 = vpack.c.b16 %v2260, %v2259
      %v2274 = vpack.c.b16 %v2262, %v2261
      %v2275 = vpack.c.b16 %v2264, %v2263
      %v2276 = vpack.c.b16 %v2266, %v2265
      %v2277 = vpack.c.b16 %v2268, %v2267
      %v2278 = vpack.c.b16 %v2270, %v2269
      %2287 = vmatpush.bf16.msra.mxu0 %v2278
      %2288 = vmatpush.bf16.msra.mxu0 %v2277
      %2289 = vmatpush.bf16.msra.mxu0 %v2276
      %2290 = vmatpush.bf16.msra.mxu0 %v2275
      %2291 = vmatpush.bf16.msra.mxu0 %v2274
      %2292 = vmatpush.bf16.msra.mxu0 %v2273
      %2293 = vmatpush.bf16.msra.mxu0 %v2272
      %2294 = vmatpush.bf16.msra.mxu0 %v2271
      %2295 = vmatmul.bf16.gmra.mxu0 %v374
      %v2296 = vpop.f32.mrf.mxu0
      %v2297 = vadd.f32 %v2080, %v2296
      %v2298 = vpop.f32.mrf.mxu0
      %v2299 = vadd.f32 %v2082, %v2298
      %2300 = vmatmul.bf16.gmra.mxu0 %v375
      %v2301 = vpop.f32.mrf.mxu0
      %v2302 = vadd.f32 %v2085, %v2301
      %v2303 = vpop.f32.mrf.mxu0
      %v2304 = vadd.f32 %v2087, %v2303
      %2305 = vmatmul.bf16.gmra.mxu0 %v376
      %v2306 = vpop.f32.mrf.mxu0
      %v2307 = vadd.f32 %v2090, %v2306
      %v2308 = vpop.f32.mrf.mxu0
      %v2309 = vadd.f32 %v2092, %v2308
      %2310 = vmatmul.bf16.gmra.mxu0 %v377
      %v2311 = vpop.f32.mrf.mxu0
      %v2312 = vadd.f32 %v2095, %v2311
      %v2313 = vpop.f32.mrf.mxu0
      %v2314 = vadd.f32 %v2097, %v2313
      %2315 = vmatmul.bf16.gmra.mxu0 %v378
      %v2316 = vpop.f32.mrf.mxu0
      %v2317 = vadd.f32 %v2100, %v2316
      %v2318 = vpop.f32.mrf.mxu0
      %v2319 = vadd.f32 %v2102, %v2318
      %2320 = vmatmul.bf16.gmra.mxu0 %v379
      %v2321 = vpop.f32.mrf.mxu0
      %v2322 = vadd.f32 %v2105, %v2321
      %v2323 = vpop.f32.mrf.mxu0
      %v2324 = vadd.f32 %v2107, %v2323
      %2325 = vmatmul.bf16.gmra.mxu0 %v380
      %v2326 = vpop.f32.mrf.mxu0
      %v2327 = vadd.f32 %v2110, %v2326
      %v2328 = vpop.f32.mrf.mxu0
      %v2329 = vadd.f32 %v2112, %v2328
      %2330 = vmatmul.bf16.gmra.mxu0 %v381
      %v2331 = vpop.f32.mrf.mxu0
      %v2332 = vadd.f32 %v2115, %v2331
      %v2333 = vpop.f32.mrf.mxu0
      %v2334 = vadd.f32 %v2117, %v2333
      %2335 = vmatmul.bf16.gmra.mxu0 %v382
      %v2336 = vpop.f32.mrf.mxu0
      %v2337 = vadd.f32 %v2120, %v2336
      %v2338 = vpop.f32.mrf.mxu0
      %v2339 = vadd.f32 %v2122, %v2338
      %2340 = vmatmul.bf16.gmra.mxu0 %v383
      %v2341 = vpop.f32.mrf.mxu0
      %v2342 = vadd.f32 %v2125, %v2341
      %v2343 = vpop.f32.mrf.mxu0
      %v2344 = vadd.f32 %v2127, %v2343
      %2345 = vmatmul.bf16.gmra.mxu0 %v384
      %v2346 = vpop.f32.mrf.mxu0
      %v2347 = vadd.f32 %v2130, %v2346
      %v2348 = vpop.f32.mrf.mxu0
      %v2349 = vadd.f32 %v2132, %v2348
      %2350 = vmatmul.bf16.gmra.mxu0 %v385
      %v2351 = vpop.f32.mrf.mxu0
      %v2352 = vadd.f32 %v2135, %v2351
      %v2353 = vpop.f32.mrf.mxu0
      %v2354 = vadd.f32 %v2137, %v2353
      %2355 = vmatmul.bf16.gmra.mxu0 %v386
      %v2356 = vpop.f32.mrf.mxu0
      %v2357 = vadd.f32 %v2140, %v2356
      %v2358 = vpop.f32.mrf.mxu0
      %v2359 = vadd.f32 %v2142, %v2358
      %2360 = vmatmul.bf16.gmra.mxu0 %v387
      %v2361 = vpop.f32.mrf.mxu0
      %v2362 = vadd.f32 %v2145, %v2361
      %v2363 = vpop.f32.mrf.mxu0
      %v2364 = vadd.f32 %v2147, %v2363
      %2365 = vmatmul.bf16.gmra.mxu0 %v388
      %v2366 = vpop.f32.mrf.mxu0
      %v2367 = vadd.f32 %v2150, %v2366
      %v2368 = vpop.f32.mrf.mxu0
      %v2369 = vadd.f32 %v2152, %v2368
      %2370 = vmatmul.bf16.gmra.mxu0 %v389
      %v2371 = vpop.f32.mrf.mxu0
      %v2372 = vadd.f32 %v2155, %v2371
      %v2373 = vpop.f32.mrf.mxu0
      %v2374 = vadd.f32 %v2157, %v2373
      %2375 = vmatmul.bf16.gmra.mxu0 %v390
      %v2376 = vpop.f32.mrf.mxu0
      %v2377 = vadd.f32 %v2160, %v2376
      %v2378 = vpop.f32.mrf.mxu0
      %v2379 = vadd.f32 %v2162, %v2378
      %2380 = vmatmul.bf16.gmra.mxu0 %v391
      %v2381 = vpop.f32.mrf.mxu0
      %v2382 = vadd.f32 %v2165, %v2381
      %v2383 = vpop.f32.mrf.mxu0
      %v2384 = vadd.f32 %v2167, %v2383
      %2385 = vmatmul.bf16.gmra.mxu0 %v392
      %v2386 = vpop.f32.mrf.mxu0
      %v2387 = vadd.f32 %v2170, %v2386
      %v2388 = vpop.f32.mrf.mxu0
      %v2389 = vadd.f32 %v2172, %v2388
      %2390 = vmatmul.bf16.gmra.mxu0 %v393
      %v2391 = vpop.f32.mrf.mxu0
      %v2392 = vadd.f32 %v2175, %v2391
      %v2393 = vpop.f32.mrf.mxu0
      %v2394 = vadd.f32 %v2177, %v2393
      %2395 = vmatmul.bf16.gmra.mxu0 %v394
      %v2396 = vpop.f32.mrf.mxu0
      %v2397 = vadd.f32 %v2180, %v2396
      %v2398 = vpop.f32.mrf.mxu0
      %v2399 = vadd.f32 %v2182, %v2398
      %2400 = vmatmul.bf16.gmra.mxu0 %v395
      %v2401 = vpop.f32.mrf.mxu0
      %v2402 = vadd.f32 %v2185, %v2401
      %v2403 = vpop.f32.mrf.mxu0
      %v2404 = vadd.f32 %v2187, %v2403
      %2405 = vmatmul.bf16.gmra.mxu0 %v396
      %v2406 = vpop.f32.mrf.mxu0
      %v2407 = vadd.f32 %v2190, %v2406
      %v2408 = vpop.f32.mrf.mxu0
      %v2409 = vadd.f32 %v2192, %v2408
      %2410 = vmatmul.bf16.gmra.mxu0 %v397
      %v2411 = vpop.f32.mrf.mxu0
      %v2412 = vadd.f32 %v2195, %v2411
      %v2413 = vpop.f32.mrf.mxu0
      %v2414 = vadd.f32 %v2197, %v2413
      %2415 = vmatmul.bf16.gmra.mxu0 %v398
      %v2416 = vpop.f32.mrf.mxu0
      %v2417 = vadd.f32 %v2200, %v2416
      %v2418 = vpop.f32.mrf.mxu0
      %v2419 = vadd.f32 %v2202, %v2418
      %2420 = vmatmul.bf16.gmra.mxu0 %v399
      %v2421 = vpop.f32.mrf.mxu0
      %v2422 = vadd.f32 %v2205, %v2421
      %v2423 = vpop.f32.mrf.mxu0
      %v2424 = vadd.f32 %v2207, %v2423
      %2425 = vmatmul.bf16.gmra.mxu0 %v400
      %v2426 = vpop.f32.mrf.mxu0
      %v2427 = vadd.f32 %v2210, %v2426
      %v2428 = vpop.f32.mrf.mxu0
      %v2429 = vadd.f32 %v2212, %v2428
      %2430 = vmatmul.bf16.gmra.mxu0 %v401
      %v2431 = vpop.f32.mrf.mxu0
      %v2432 = vadd.f32 %v2215, %v2431
      %v2433 = vpop.f32.mrf.mxu0
      %v2434 = vadd.f32 %v2217, %v2433
      %2435 = vmatmul.bf16.gmra.mxu0 %v402
      %v2436 = vpop.f32.mrf.mxu0
      %v2437 = vadd.f32 %v2220, %v2436
      %v2438 = vpop.f32.mrf.mxu0
      %v2439 = vadd.f32 %v2222, %v2438
      %2440 = vmatmul.bf16.gmra.mxu0 %v403
      %v2441 = vpop.f32.mrf.mxu0
      %v2442 = vadd.f32 %v2225, %v2441
      %v2443 = vpop.f32.mrf.mxu0
      %v2444 = vadd.f32 %v2227, %v2443
      %2445 = vmatmul.bf16.gmra.mxu0 %v404
      %v2446 = vpop.f32.mrf.mxu0
      %v2447 = vadd.f32 %v2230, %v2446
      %v2448 = vpop.f32.mrf.mxu0
      %v2449 = vadd.f32 %v2232, %v2448
      %2450 = vmatmul.bf16.gmra.mxu0 %v405
      %v2451 = vpop.f32.mrf.mxu0
      %v2452 = vadd.f32 %v2235, %v2451
      %v2453 = vpop.f32.mrf.mxu0
      %v2454 = vadd.f32 %v2237, %v2453
      %2455 = vdwg.mxu0
      %v2456 = vperm.slane %v406, 4
      %v2457 = vadd.f32 %v2297, %v2456
      %v2458 = vadd.f32 %v2299, %v2456
      %v2459 = vadd.f32 %v2302, %v2456
      %v2460 = vadd.f32 %v2304, %v2456
      %v2461 = vadd.f32 %v2307, %v2456
      %v2462 = vadd.f32 %v2309, %v2456
      %v2463 = vadd.f32 %v2312, %v2456
      %v2464 = vadd.f32 %v2314, %v2456
      %v2465 = vadd.f32 %v2317, %v2456
      %v2466 = vadd.f32 %v2319, %v2456
      %v2467 = vadd.f32 %v2322, %v2456
      %v2468 = vadd.f32 %v2324, %v2456
      %v2469 = vadd.f32 %v2327, %v2456
      %v2470 = vadd.f32 %v2329, %v2456
      %v2471 = vadd.f32 %v2332, %v2456
      %v2472 = vadd.f32 %v2334, %v2456
      %v2473 = vadd.f32 %v2337, %v2456
      %v2474 = vadd.f32 %v2339, %v2456
      %v2475 = vadd.f32 %v2342, %v2456
      %v2476 = vadd.f32 %v2344, %v2456
      %v2477 = vadd.f32 %v2347, %v2456
      %v2478 = vadd.f32 %v2349, %v2456
      %v2479 = vadd.f32 %v2352, %v2456
      %v2480 = vadd.f32 %v2354, %v2456
      %v2481 = vadd.f32 %v2357, %v2456
      %v2482 = vadd.f32 %v2359, %v2456
      %v2483 = vadd.f32 %v2362, %v2456
      %v2484 = vadd.f32 %v2364, %v2456
      %v2485 = vadd.f32 %v2367, %v2456
      %v2486 = vadd.f32 %v2369, %v2456
      %v2487 = vadd.f32 %v2372, %v2456
      %v2488 = vadd.f32 %v2374, %v2456
      %v2489 = vadd.f32 %v2377, %v2456
      %v2490 = vadd.f32 %v2379, %v2456
      %v2491 = vadd.f32 %v2382, %v2456
      %v2492 = vadd.f32 %v2384, %v2456
      %v2493 = vadd.f32 %v2387, %v2456
      %v2494 = vadd.f32 %v2389, %v2456
      %v2495 = vadd.f32 %v2392, %v2456
      %v2496 = vadd.f32 %v2394, %v2456
      %v2497 = vadd.f32 %v2397, %v2456
      %v2498 = vadd.f32 %v2399, %v2456
      %v2499 = vadd.f32 %v2402, %v2456
      %v2500 = vadd.f32 %v2404, %v2456
      %v2501 = vadd.f32 %v2407, %v2456
      %v2502 = vadd.f32 %v2409, %v2456
      %v2503 = vadd.f32 %v2412, %v2456
      %v2504 = vadd.f32 %v2414, %v2456
      %v2505 = vadd.f32 %v2417, %v2456
      %v2506 = vadd.f32 %v2419, %v2456
      %v2507 = vadd.f32 %v2422, %v2456
      %v2508 = vadd.f32 %v2424, %v2456
      %v2509 = vadd.f32 %v2427, %v2456
      %v2510 = vadd.f32 %v2429, %v2456
      %v2511 = vadd.f32 %v2432, %v2456
      %v2512 = vadd.f32 %v2434, %v2456
      %v2513 = vadd.f32 %v2437, %v2456
      %v2514 = vadd.f32 %v2439, %v2456
      %v2515 = vadd.f32 %v2442, %v2456
      %v2516 = vadd.f32 %v2444, %v2456
      %v2517 = vadd.f32 %v2447, %v2456
      %v2518 = vadd.f32 %v2449, %v2456
      %v2519 = vadd.f32 %v2452, %v2456
      %v2520 = vadd.f32 %v2454, %v2456
      %v2521 = vmax.f32 %v2457, 0.0
      %v2522 = vmax.f32 %v2458, 0.0
      %v2523 = vmax.f32 %v2459, 0.0
      %v2524 = vmax.f32 %v2460, 0.0
      %v2525 = vmax.f32 %v2461, 0.0
      %v2526 = vmax.f32 %v2462, 0.0
      %v2527 = vmax.f32 %v2463, 0.0
      %v2528 = vmax.f32 %v2464, 0.0
      %v2529 = vmax.f32 %v2465, 0.0
      %v2530 = vmax.f32 %v2466, 0.0
      %v2531 = vmax.f32 %v2467, 0.0
      %v2532 = vmax.f32 %v2468, 0.0
      %v2533 = vmax.f32 %v2469, 0.0
      %v2534 = vmax.f32 %v2470, 0.0
      %v2535 = vmax.f32 %v2471, 0.0
      %v2536 = vmax.f32 %v2472, 0.0
      %v2537 = vmax.f32 %v2473, 0.0
      %v2538 = vmax.f32 %v2474, 0.0
      %v2539 = vmax.f32 %v2475, 0.0
      %v2540 = vmax.f32 %v2476, 0.0
      %v2541 = vmax.f32 %v2477, 0.0
      %v2542 = vmax.f32 %v2478, 0.0
      %v2543 = vmax.f32 %v2479, 0.0
      %v2544 = vmax.f32 %v2480, 0.0
      %v2545 = vmax.f32 %v2481, 0.0
      %v2546 = vmax.f32 %v2482, 0.0
      %v2547 = vmax.f32 %v2483, 0.0
      %v2548 = vmax.f32 %v2484, 0.0
      %v2549 = vmax.f32 %v2485, 0.0
      %v2550 = vmax.f32 %v2486, 0.0
      %v2551 = vmax.f32 %v2487, 0.0
      %v2552 = vmax.f32 %v2488, 0.0
      %v2553 = vmax.f32 %v2489, 0.0
      %v2554 = vmax.f32 %v2490, 0.0
      %v2555 = vmax.f32 %v2491, 0.0
      %v2556 = vmax.f32 %v2492, 0.0
      %v2557 = vmax.f32 %v2493, 0.0
      %v2558 = vmax.f32 %v2494, 0.0
      %v2559 = vmax.f32 %v2495, 0.0
      %v2560 = vmax.f32 %v2496, 0.0
      %v2561 = vmax.f32 %v2497, 0.0
      %v2562 = vmax.f32 %v2498, 0.0
      %v2563 = vmax.f32 %v2499, 0.0
      %v2564 = vmax.f32 %v2500, 0.0
      %v2565 = vmax.f32 %v2501, 0.0
      %v2566 = vmax.f32 %v2502, 0.0
      %v2567 = vmax.f32 %v2503, 0.0
      %v2568 = vmax.f32 %v2504, 0.0
      %v2569 = vmax.f32 %v2505, 0.0
      %v2570 = vmax.f32 %v2506, 0.0
      %v2571 = vmax.f32 %v2507, 0.0
      %v2572 = vmax.f32 %v2508, 0.0
      %v2573 = vmax.f32 %v2509, 0.0
      %v2574 = vmax.f32 %v2510, 0.0
      %v2575 = vmax.f32 %v2511, 0.0
      %v2576 = vmax.f32 %v2512, 0.0
      %v2577 = vmax.f32 %v2513, 0.0
      %v2578 = vmax.f32 %v2514, 0.0
      %v2579 = vmax.f32 %v2515, 0.0
      %v2580 = vmax.f32 %v2516, 0.0
      %v2581 = vmax.f32 %v2517, 0.0
      %v2582 = vmax.f32 %v2518, 0.0
      %v2583 = vmax.f32 %v2519, 0.0
      %v2584 = vmax.f32 %v2520, 0.0
      %s2585 = scalar_lea.vmem %s1, 128
      %v2586 = vld [vmem:[%s2585] sm:$0xf]
      %v2587 = vld [vmem:[%s2585 + $0x4] sm:$0xf]
      %v2588 = vld [vmem:[%s2585 + $0x8] sm:$0xf]
      %v2589 = vld [vmem:[%s2585 + $0xc] sm:$0xf]
      %v2590 = vld [vmem:[%s2585 + $0x10] sm:$0xf]
      %v2591 = vld [vmem:[%s2585 + $0x14] sm:$0xf]
      %v2592 = vld [vmem:[%s2585 + $0x18] sm:$0xf]
      %v2593 = vld [vmem:[%s2585 + $0x1c] sm:$0xf]
      %v2594 = vpack.c.bf16 %v2522, %v2521
      %v2595 = vpack.c.bf16 %v2524, %v2523
      %v2596 = vpack.c.bf16 %v2526, %v2525
      %v2597 = vpack.c.bf16 %v2528, %v2527
      %v2598 = vpack.c.bf16 %v2530, %v2529
      %v2599 = vpack.c.bf16 %v2532, %v2531
      %v2600 = vpack.c.bf16 %v2534, %v2533
      %v2601 = vpack.c.bf16 %v2536, %v2535
      %v2602 = vpack.c.bf16 %v2538, %v2537
      %v2603 = vpack.c.bf16 %v2540, %v2539
      %v2604 = vpack.c.bf16 %v2542, %v2541
      %v2605 = vpack.c.bf16 %v2544, %v2543
      %v2606 = vpack.c.bf16 %v2546, %v2545
      %v2607 = vpack.c.bf16 %v2548, %v2547
      %v2608 = vpack.c.bf16 %v2550, %v2549
      %v2609 = vpack.c.bf16 %v2552, %v2551
      %v2610 = vpack.c.bf16 %v2554, %v2553
      %v2611 = vpack.c.bf16 %v2556, %v2555
      %v2612 = vpack.c.bf16 %v2558, %v2557
      %v2613 = vpack.c.bf16 %v2560, %v2559
      %v2614 = vpack.c.bf16 %v2562, %v2561
      %v2615 = vpack.c.bf16 %v2564, %v2563
      %v2616 = vpack.c.bf16 %v2566, %v2565
      %v2617 = vpack.c.bf16 %v2568, %v2567
      %v2618 = vpack.c.bf16 %v2570, %v2569
      %v2619 = vpack.c.bf16 %v2572, %v2571
      %v2620 = vpack.c.bf16 %v2574, %v2573
      %v2621 = vpack.c.bf16 %v2576, %v2575
      %v2622 = vpack.c.bf16 %v2578, %v2577
      %v2623 = vpack.c.bf16 %v2580, %v2579
      %v2624 = vpack.c.bf16 %v2582, %v2581
      %v2625 = vpack.c.bf16 %v2584, %v2583
      %v2626 = vperm.slane %v406, 5
      %v2635 = vunpack.c.l.b16 %v2586
      %v2636 = vunpack.c.l.b16 %v2587
      %v2637 = vunpack.c.l.b16 %v2588
      %v2638 = vunpack.c.l.b16 %v2589
      %v2639 = vunpack.c.l.b16 %v2590
      %v2640 = vunpack.c.l.b16 %v2591
      %v2641 = vunpack.c.l.b16 %v2592
      %v2642 = vunpack.c.l.b16 %v2593
      %v2643 = vpack.c.b16 %v2636, %v2635
      %v2644 = vpack.c.b16 %v2638, %v2637
      %v2645 = vpack.c.b16 %v2640, %v2639
      %v2646 = vpack.c.b16 %v2642, %v2641
      %v2652 = vsel %vm772, %v2594, 0
      %v2655 = vsel %vm772, %v2595, 0
      %v2658 = vsel %vm772, %v2596, 0
      %v2661 = vsel %vm772, %v2597, 0
      %v2664 = vsel %vm772, %v2598, 0
      %v2667 = vsel %vm772, %v2599, 0
      %v2670 = vsel %vm772, %v2600, 0
      %v2673 = vsel %vm772, %v2601, 0
      %v2676 = vsel %vm772, %v2602, 0
      %v2679 = vsel %vm772, %v2603, 0
      %v2682 = vsel %vm772, %v2604, 0
      %v2685 = vsel %vm772, %v2605, 0
      %v2688 = vsel %vm772, %v2606, 0
      %v2691 = vsel %vm772, %v2607, 0
      %v2694 = vsel %vm772, %v2608, 0
      %v2697 = vsel %vm772, %v2609, 0
      %v2700 = vsel %vm772, %v2610, 0
      %v2703 = vsel %vm772, %v2611, 0
      %v2706 = vsel %vm772, %v2612, 0
      %v2709 = vsel %vm772, %v2613, 0
      %v2712 = vsel %vm772, %v2614, 0
      %v2715 = vsel %vm772, %v2615, 0
      %v2718 = vsel %vm772, %v2616, 0
      %v2721 = vsel %vm772, %v2617, 0
      %v2724 = vsel %vm772, %v2618, 0
      %v2727 = vsel %vm772, %v2619, 0
      %v2730 = vsel %vm772, %v2620, 0
      %v2733 = vsel %vm772, %v2621, 0
      %v2736 = vsel %vm772, %v2622, 0
      %v2739 = vsel %vm772, %v2623, 0
      %v2742 = vsel %vm772, %v2624, 0
      %v2745 = vsel %vm772, %v2625, 0
      %2747 = vmatpush.bf16.msra.mxu0 0
      %2748 = vmatpush.bf16.msra.mxu0 0
      %2749 = vmatpush.bf16.msra.mxu0 0
      %2750 = vmatpush.bf16.msra.mxu0 0
      %2751 = vmatpush.bf16.msra.mxu0 %v2646
      %2752 = vmatpush.bf16.msra.mxu0 %v2645
      %2753 = vmatpush.bf16.msra.mxu0 %v2644
      %2754 = vmatpush.bf16.msra.mxu0 %v2643
      %2755 = vmatmul.bf16.gmra.mxu0 %v2652
      %v2756 = vpop.f32.mrf.mxu0
      %v2757 = vadd.f32 %v2626, %v2756
      %v2758 = vpop.f32.mrf.mxu0
      %v2759 = vadd.f32 %v2626, %v2758
      %2760 = vmatmul.bf16.gmra.mxu0 %v2655
      %v2761 = vpop.f32.mrf.mxu0
      %v2762 = vadd.f32 %v2626, %v2761
      %v2763 = vpop.f32.mrf.mxu0
      %v2764 = vadd.f32 %v2626, %v2763
      %2765 = vmatmul.bf16.gmra.mxu0 %v2658
      %v2766 = vpop.f32.mrf.mxu0
      %v2767 = vadd.f32 %v2626, %v2766
      %v2768 = vpop.f32.mrf.mxu0
      %v2769 = vadd.f32 %v2626, %v2768
      %2770 = vmatmul.bf16.gmra.mxu0 %v2661
      %v2771 = vpop.f32.mrf.mxu0
      %v2772 = vadd.f32 %v2626, %v2771
      %v2773 = vpop.f32.mrf.mxu0
      %v2774 = vadd.f32 %v2626, %v2773
      %2775 = vmatmul.bf16.gmra.mxu0 %v2664
      %v2776 = vpop.f32.mrf.mxu0
      %v2777 = vadd.f32 %v2626, %v2776
      %v2778 = vpop.f32.mrf.mxu0
      %v2779 = vadd.f32 %v2626, %v2778
      %2780 = vmatmul.bf16.gmra.mxu0 %v2667
      %v2781 = vpop.f32.mrf.mxu0
      %v2782 = vadd.f32 %v2626, %v2781
      %v2783 = vpop.f32.mrf.mxu0
      %v2784 = vadd.f32 %v2626, %v2783
      %2785 = vmatmul.bf16.gmra.mxu0 %v2670
      %v2786 = vpop.f32.mrf.mxu0
      %v2787 = vadd.f32 %v2626, %v2786
      %v2788 = vpop.f32.mrf.mxu0
      %v2789 = vadd.f32 %v2626, %v2788
      %2790 = vmatmul.bf16.gmra.mxu0 %v2673
      %v2791 = vpop.f32.mrf.mxu0
      %v2792 = vadd.f32 %v2626, %v2791
      %v2793 = vpop.f32.mrf.mxu0
      %v2794 = vadd.f32 %v2626, %v2793
      %2795 = vmatmul.bf16.gmra.mxu0 %v2676
      %v2796 = vpop.f32.mrf.mxu0
      %v2797 = vadd.f32 %v2626, %v2796
      %v2798 = vpop.f32.mrf.mxu0
      %v2799 = vadd.f32 %v2626, %v2798
      %2800 = vmatmul.bf16.gmra.mxu0 %v2679
      %v2801 = vpop.f32.mrf.mxu0
      %v2802 = vadd.f32 %v2626, %v2801
      %v2803 = vpop.f32.mrf.mxu0
      %v2804 = vadd.f32 %v2626, %v2803
      %2805 = vmatmul.bf16.gmra.mxu0 %v2682
      %v2806 = vpop.f32.mrf.mxu0
      %v2807 = vadd.f32 %v2626, %v2806
      %v2808 = vpop.f32.mrf.mxu0
      %v2809 = vadd.f32 %v2626, %v2808
      %2810 = vmatmul.bf16.gmra.mxu0 %v2685
      %v2811 = vpop.f32.mrf.mxu0
      %v2812 = vadd.f32 %v2626, %v2811
      %v2813 = vpop.f32.mrf.mxu0
      %v2814 = vadd.f32 %v2626, %v2813
      %2815 = vmatmul.bf16.gmra.mxu0 %v2688
      %v2816 = vpop.f32.mrf.mxu0
      %v2817 = vadd.f32 %v2626, %v2816
      %v2818 = vpop.f32.mrf.mxu0
      %v2819 = vadd.f32 %v2626, %v2818
      %2820 = vmatmul.bf16.gmra.mxu0 %v2691
      %v2821 = vpop.f32.mrf.mxu0
      %v2822 = vadd.f32 %v2626, %v2821
      %v2823 = vpop.f32.mrf.mxu0
      %v2824 = vadd.f32 %v2626, %v2823
      %2825 = vmatmul.bf16.gmra.mxu0 %v2694
      %v2826 = vpop.f32.mrf.mxu0
      %v2827 = vadd.f32 %v2626, %v2826
      %v2828 = vpop.f32.mrf.mxu0
      %v2829 = vadd.f32 %v2626, %v2828
      %2830 = vmatmul.bf16.gmra.mxu0 %v2697
      %v2831 = vpop.f32.mrf.mxu0
      %v2832 = vadd.f32 %v2626, %v2831
      %v2833 = vpop.f32.mrf.mxu0
      %v2834 = vadd.f32 %v2626, %v2833
      %2835 = vmatmul.bf16.gmra.mxu0 %v2700
      %v2836 = vpop.f32.mrf.mxu0
      %v2837 = vadd.f32 %v2626, %v2836
      %v2838 = vpop.f32.mrf.mxu0
      %v2839 = vadd.f32 %v2626, %v2838
      %2840 = vmatmul.bf16.gmra.mxu0 %v2703
      %v2841 = vpop.f32.mrf.mxu0
      %v2842 = vadd.f32 %v2626, %v2841
      %v2843 = vpop.f32.mrf.mxu0
      %v2844 = vadd.f32 %v2626, %v2843
      %2845 = vmatmul.bf16.gmra.mxu0 %v2706
      %v2846 = vpop.f32.mrf.mxu0
      %v2847 = vadd.f32 %v2626, %v2846
      %v2848 = vpop.f32.mrf.mxu0
      %v2849 = vadd.f32 %v2626, %v2848
      %2850 = vmatmul.bf16.gmra.mxu0 %v2709
      %v2851 = vpop.f32.mrf.mxu0
      %v2852 = vadd.f32 %v2626, %v2851
      %v2853 = vpop.f32.mrf.mxu0
      %v2854 = vadd.f32 %v2626, %v2853
      %2855 = vmatmul.bf16.gmra.mxu0 %v2712
      %v2856 = vpop.f32.mrf.mxu0
      %v2857 = vadd.f32 %v2626, %v2856
      %v2858 = vpop.f32.mrf.mxu0
      %v2859 = vadd.f32 %v2626, %v2858
      %2860 = vmatmul.bf16.gmra.mxu0 %v2715
      %v2861 = vpop.f32.mrf.mxu0
      %v2862 = vadd.f32 %v2626, %v2861
      %v2863 = vpop.f32.mrf.mxu0
      %v2864 = vadd.f32 %v2626, %v2863
      %2865 = vmatmul.bf16.gmra.mxu0 %v2718
      %v2866 = vpop.f32.mrf.mxu0
      %v2867 = vadd.f32 %v2626, %v2866
      %v2868 = vpop.f32.mrf.mxu0
      %v2869 = vadd.f32 %v2626, %v2868
      %2870 = vmatmul.bf16.gmra.mxu0 %v2721
      %v2871 = vpop.f32.mrf.mxu0
      %v2872 = vadd.f32 %v2626, %v2871
      %v2873 = vpop.f32.mrf.mxu0
      %v2874 = vadd.f32 %v2626, %v2873
      %2875 = vmatmul.bf16.gmra.mxu0 %v2724
      %v2876 = vpop.f32.mrf.mxu0
      %v2877 = vadd.f32 %v2626, %v2876
      %v2878 = vpop.f32.mrf.mxu0
      %v2879 = vadd.f32 %v2626, %v2878
      %2880 = vmatmul.bf16.gmra.mxu0 %v2727
      %v2881 = vpop.f32.mrf.mxu0
      %v2882 = vadd.f32 %v2626, %v2881
      %v2883 = vpop.f32.mrf.mxu0
      %v2884 = vadd.f32 %v2626, %v2883
      %2885 = vmatmul.bf16.gmra.mxu0 %v2730
      %v2886 = vpop.f32.mrf.mxu0
      %v2887 = vadd.f32 %v2626, %v2886
      %v2888 = vpop.f32.mrf.mxu0
      %v2889 = vadd.f32 %v2626, %v2888
      %2890 = vmatmul.bf16.gmra.mxu0 %v2733
      %v2891 = vpop.f32.mrf.mxu0
      %v2892 = vadd.f32 %v2626, %v2891
      %v2893 = vpop.f32.mrf.mxu0
      %v2894 = vadd.f32 %v2626, %v2893
      %2895 = vmatmul.bf16.gmra.mxu0 %v2736
      %v2896 = vpop.f32.mrf.mxu0
      %v2897 = vadd.f32 %v2626, %v2896
      %v2898 = vpop.f32.mrf.mxu0
      %v2899 = vadd.f32 %v2626, %v2898
      %2900 = vmatmul.bf16.gmra.mxu0 %v2739
      %v2901 = vpop.f32.mrf.mxu0
      %v2902 = vadd.f32 %v2626, %v2901
      %v2903 = vpop.f32.mrf.mxu0
      %v2904 = vadd.f32 %v2626, %v2903
      %2905 = vmatmul.bf16.gmra.mxu0 %v2742
      %v2906 = vpop.f32.mrf.mxu0
      %v2907 = vadd.f32 %v2626, %v2906
      %v2908 = vpop.f32.mrf.mxu0
      %v2909 = vadd.f32 %v2626, %v2908
      %2910 = vmatmul.bf16.gmra.mxu0 %v2745
      %v2911 = vpop.f32.mrf.mxu0
      %v2912 = vadd.f32 %v2626, %v2911
      %v2913 = vpop.f32.mrf.mxu0
      %v2914 = vadd.f32 %v2626, %v2913
      %2915 = vdwg.mxu0
      %v2916 = vmax.f32 %v2757, 0.0
      %v2917 = vmax.f32 %v2759, 0.0
      %v2918 = vmax.f32 %v2762, 0.0
      %v2919 = vmax.f32 %v2764, 0.0
      %v2920 = vmax.f32 %v2767, 0.0
      %v2921 = vmax.f32 %v2769, 0.0
      %v2922 = vmax.f32 %v2772, 0.0
      %v2923 = vmax.f32 %v2774, 0.0
      %v2924 = vmax.f32 %v2777, 0.0
      %v2925 = vmax.f32 %v2779, 0.0
      %v2926 = vmax.f32 %v2782, 0.0
      %v2927 = vmax.f32 %v2784, 0.0
      %v2928 = vmax.f32 %v2787, 0.0
      %v2929 = vmax.f32 %v2789, 0.0
      %v2930 = vmax.f32 %v2792, 0.0
      %v2931 = vmax.f32 %v2794, 0.0
      %v2932 = vmax.f32 %v2797, 0.0
      %v2933 = vmax.f32 %v2799, 0.0
      %v2934 = vmax.f32 %v2802, 0.0
      %v2935 = vmax.f32 %v2804, 0.0
      %v2936 = vmax.f32 %v2807, 0.0
      %v2937 = vmax.f32 %v2809, 0.0
      %v2938 = vmax.f32 %v2812, 0.0
      %v2939 = vmax.f32 %v2814, 0.0
      %v2940 = vmax.f32 %v2817, 0.0
      %v2941 = vmax.f32 %v2819, 0.0
      %v2942 = vmax.f32 %v2822, 0.0
      %v2943 = vmax.f32 %v2824, 0.0
      %v2944 = vmax.f32 %v2827, 0.0
      %v2945 = vmax.f32 %v2829, 0.0
      %v2946 = vmax.f32 %v2832, 0.0
      %v2947 = vmax.f32 %v2834, 0.0
      %v2948 = vmax.f32 %v2837, 0.0
      %v2949 = vmax.f32 %v2839, 0.0
      %v2950 = vmax.f32 %v2842, 0.0
      %v2951 = vmax.f32 %v2844, 0.0
      %v2952 = vmax.f32 %v2847, 0.0
      %v2953 = vmax.f32 %v2849, 0.0
      %v2954 = vmax.f32 %v2852, 0.0
      %v2955 = vmax.f32 %v2854, 0.0
      %v2956 = vmax.f32 %v2857, 0.0
      %v2957 = vmax.f32 %v2859, 0.0
      %v2958 = vmax.f32 %v2862, 0.0
      %v2959 = vmax.f32 %v2864, 0.0
      %v2960 = vmax.f32 %v2867, 0.0
      %v2961 = vmax.f32 %v2869, 0.0
      %v2962 = vmax.f32 %v2872, 0.0
      %v2963 = vmax.f32 %v2874, 0.0
      %v2964 = vmax.f32 %v2877, 0.0
      %v2965 = vmax.f32 %v2879, 0.0
      %v2966 = vmax.f32 %v2882, 0.0
      %v2967 = vmax.f32 %v2884, 0.0
      %v2968 = vmax.f32 %v2887, 0.0
      %v2969 = vmax.f32 %v2889, 0.0
      %v2970 = vmax.f32 %v2892, 0.0
      %v2971 = vmax.f32 %v2894, 0.0
      %v2972 = vmax.f32 %v2897, 0.0
      %v2973 = vmax.f32 %v2899, 0.0
      %v2974 = vmax.f32 %v2902, 0.0
      %v2975 = vmax.f32 %v2904, 0.0
      %v2976 = vmax.f32 %v2907, 0.0
      %v2977 = vmax.f32 %v2909, 0.0
      %v2978 = vmax.f32 %v2912, 0.0
      %v2979 = vmax.f32 %v2914, 0.0
      %s2980 = scalar_lea.vmem %s1, 160
      %v2981 = vld [vmem:[%s2980] sm:$0xf]
      %v2982 = vld [vmem:[%s2980 + $0x4] sm:$0xf]
      %v2983 = vld [vmem:[%s2980 + $0x8] sm:$0xf]
      %v2984 = vld [vmem:[%s2980 + $0xc] sm:$0xf]
      %v2985 = vld [vmem:[%s2980 + $0x10] sm:$0xf]
      %v2986 = vld [vmem:[%s2980 + $0x14] sm:$0xf]
      %v2987 = vld [vmem:[%s2980 + $0x18] sm:$0xf]
      %v2988 = vld [vmem:[%s2980 + $0x1c] sm:$0xf]
      %v2989 = vpack.c.bf16 %v2917, %v2916
      %v2990 = vpack.c.bf16 %v2919, %v2918
      %v2991 = vpack.c.bf16 %v2921, %v2920
      %v2992 = vpack.c.bf16 %v2923, %v2922
      %v2993 = vpack.c.bf16 %v2925, %v2924
      %v2994 = vpack.c.bf16 %v2927, %v2926
      %v2995 = vpack.c.bf16 %v2929, %v2928
      %v2996 = vpack.c.bf16 %v2931, %v2930
      %v2997 = vpack.c.bf16 %v2933, %v2932
      %v2998 = vpack.c.bf16 %v2935, %v2934
      %v2999 = vpack.c.bf16 %v2937, %v2936
      %v3000 = vpack.c.bf16 %v2939, %v2938
      %v3001 = vpack.c.bf16 %v2941, %v2940
      %v3002 = vpack.c.bf16 %v2943, %v2942
      %v3003 = vpack.c.bf16 %v2945, %v2944
      %v3004 = vpack.c.bf16 %v2947, %v2946
      %v3005 = vpack.c.bf16 %v2949, %v2948
      %v3006 = vpack.c.bf16 %v2951, %v2950
      %v3007 = vpack.c.bf16 %v2953, %v2952
      %v3008 = vpack.c.bf16 %v2955, %v2954
      %v3009 = vpack.c.bf16 %v2957, %v2956
      %v3010 = vpack.c.bf16 %v2959, %v2958
      %v3011 = vpack.c.bf16 %v2961, %v2960
      %v3012 = vpack.c.bf16 %v2963, %v2962
      %v3013 = vpack.c.bf16 %v2965, %v2964
      %v3014 = vpack.c.bf16 %v2967, %v2966
      %v3015 = vpack.c.bf16 %v2969, %v2968
      %v3016 = vpack.c.bf16 %v2971, %v2970
      %v3017 = vpack.c.bf16 %v2973, %v2972
      %v3018 = vpack.c.bf16 %v2975, %v2974
      %v3019 = vpack.c.bf16 %v2977, %v2976
      %v3020 = vpack.c.bf16 %v2979, %v2978
      %v3021 = vperm.slane %v406, 6
      %v3030 = vunpack.c.l.b16 %v2981
      %v3031 = vunpack.c.l.b16 %v2982
      %v3032 = vunpack.c.l.b16 %v2983
      %v3033 = vunpack.c.l.b16 %v2984
      %v3034 = vunpack.c.l.b16 %v2985
      %v3035 = vunpack.c.l.b16 %v2986
      %v3036 = vunpack.c.l.b16 %v2987
      %v3037 = vunpack.c.l.b16 %v2988
      %v3038 = vpack.c.b16 %v3031, %v3030
      %v3039 = vpack.c.b16 %v3033, %v3032
      %v3040 = vpack.c.b16 %v3035, %v3034
      %v3041 = vpack.c.b16 %v3037, %v3036
      %v3047 = vsel %vm772, %v2989, 0
      %v3050 = vsel %vm772, %v2990, 0
      %v3053 = vsel %vm772, %v2991, 0
      %v3056 = vsel %vm772, %v2992, 0
      %v3059 = vsel %vm772, %v2993, 0
      %v3062 = vsel %vm772, %v2994, 0
      %v3065 = vsel %vm772, %v2995, 0
      %v3068 = vsel %vm772, %v2996, 0
      %v3071 = vsel %vm772, %v2997, 0
      %v3074 = vsel %vm772, %v2998, 0
      %v3077 = vsel %vm772, %v2999, 0
      %v3080 = vsel %vm772, %v3000, 0
      %v3083 = vsel %vm772, %v3001, 0
      %v3086 = vsel %vm772, %v3002, 0
      %v3089 = vsel %vm772, %v3003, 0
      %v3092 = vsel %vm772, %v3004, 0
      %v3095 = vsel %vm772, %v3005, 0
      %v3098 = vsel %vm772, %v3006, 0
      %v3101 = vsel %vm772, %v3007, 0
      %v3104 = vsel %vm772, %v3008, 0
      %v3107 = vsel %vm772, %v3009, 0
      %v3110 = vsel %vm772, %v3010, 0
      %v3113 = vsel %vm772, %v3011, 0
      %v3116 = vsel %vm772, %v3012, 0
      %v3119 = vsel %vm772, %v3013, 0
      %v3122 = vsel %vm772, %v3014, 0
      %v3125 = vsel %vm772, %v3015, 0
      %v3128 = vsel %vm772, %v3016, 0
      %v3131 = vsel %vm772, %v3017, 0
      %v3134 = vsel %vm772, %v3018, 0
      %v3137 = vsel %vm772, %v3019, 0
      %v3140 = vsel %vm772, %v3020, 0
      %3142 = vmatpush.bf16.msra.mxu0 0
      %3143 = vmatpush.bf16.msra.mxu0 0
      %3144 = vmatpush.bf16.msra.mxu0 0
      %3145 = vmatpush.bf16.msra.mxu0 0
      %3146 = vmatpush.bf16.msra.mxu0 %v3041
      %3147 = vmatpush.bf16.msra.mxu0 %v3040
      %3148 = vmatpush.bf16.msra.mxu0 %v3039
      %3149 = vmatpush.bf16.msra.mxu0 %v3038
      %3150 = vmatmul.bf16.gmra.mxu0 %v3047
      %v3151 = vpop.f32.mrf.mxu0
      %v3152 = vadd.f32 %v3021, %v3151
      %v3153 = vpop.f32.mrf.mxu0
      %v3154 = vadd.f32 %v3021, %v3153
      %3155 = vmatmul.bf16.gmra.mxu0 %v3050
      %v3156 = vpop.f32.mrf.mxu0
      %v3157 = vadd.f32 %v3021, %v3156
      %v3158 = vpop.f32.mrf.mxu0
      %v3159 = vadd.f32 %v3021, %v3158
      %3160 = vmatmul.bf16.gmra.mxu0 %v3053
      %v3161 = vpop.f32.mrf.mxu0
      %v3162 = vadd.f32 %v3021, %v3161
      %v3163 = vpop.f32.mrf.mxu0
      %v3164 = vadd.f32 %v3021, %v3163
      %3165 = vmatmul.bf16.gmra.mxu0 %v3056
      %v3166 = vpop.f32.mrf.mxu0
      %v3167 = vadd.f32 %v3021, %v3166
      %v3168 = vpop.f32.mrf.mxu0
      %v3169 = vadd.f32 %v3021, %v3168
      %3170 = vmatmul.bf16.gmra.mxu0 %v3059
      %v3171 = vpop.f32.mrf.mxu0
      %v3172 = vadd.f32 %v3021, %v3171
      %v3173 = vpop.f32.mrf.mxu0
      %v3174 = vadd.f32 %v3021, %v3173
      %3175 = vmatmul.bf16.gmra.mxu0 %v3062
      %v3176 = vpop.f32.mrf.mxu0
      %v3177 = vadd.f32 %v3021, %v3176
      %v3178 = vpop.f32.mrf.mxu0
      %v3179 = vadd.f32 %v3021, %v3178
      %3180 = vmatmul.bf16.gmra.mxu0 %v3065
      %v3181 = vpop.f32.mrf.mxu0
      %v3182 = vadd.f32 %v3021, %v3181
      %v3183 = vpop.f32.mrf.mxu0
      %v3184 = vadd.f32 %v3021, %v3183
      %3185 = vmatmul.bf16.gmra.mxu0 %v3068
      %v3186 = vpop.f32.mrf.mxu0
      %v3187 = vadd.f32 %v3021, %v3186
      %v3188 = vpop.f32.mrf.mxu0
      %v3189 = vadd.f32 %v3021, %v3188
      %3190 = vmatmul.bf16.gmra.mxu0 %v3071
      %v3191 = vpop.f32.mrf.mxu0
      %v3192 = vadd.f32 %v3021, %v3191
      %v3193 = vpop.f32.mrf.mxu0
      %v3194 = vadd.f32 %v3021, %v3193
      %3195 = vmatmul.bf16.gmra.mxu0 %v3074
      %v3196 = vpop.f32.mrf.mxu0
      %v3197 = vadd.f32 %v3021, %v3196
      %v3198 = vpop.f32.mrf.mxu0
      %v3199 = vadd.f32 %v3021, %v3198
      %3200 = vmatmul.bf16.gmra.mxu0 %v3077
      %v3201 = vpop.f32.mrf.mxu0
      %v3202 = vadd.f32 %v3021, %v3201
      %v3203 = vpop.f32.mrf.mxu0
      %v3204 = vadd.f32 %v3021, %v3203
      %3205 = vmatmul.bf16.gmra.mxu0 %v3080
      %v3206 = vpop.f32.mrf.mxu0
      %v3207 = vadd.f32 %v3021, %v3206
      %v3208 = vpop.f32.mrf.mxu0
      %v3209 = vadd.f32 %v3021, %v3208
      %3210 = vmatmul.bf16.gmra.mxu0 %v3083
      %v3211 = vpop.f32.mrf.mxu0
      %v3212 = vadd.f32 %v3021, %v3211
      %v3213 = vpop.f32.mrf.mxu0
      %v3214 = vadd.f32 %v3021, %v3213
      %3215 = vmatmul.bf16.gmra.mxu0 %v3086
      %v3216 = vpop.f32.mrf.mxu0
      %v3217 = vadd.f32 %v3021, %v3216
      %v3218 = vpop.f32.mrf.mxu0
      %v3219 = vadd.f32 %v3021, %v3218
      %3220 = vmatmul.bf16.gmra.mxu0 %v3089
      %v3221 = vpop.f32.mrf.mxu0
      %v3222 = vadd.f32 %v3021, %v3221
      %v3223 = vpop.f32.mrf.mxu0
      %v3224 = vadd.f32 %v3021, %v3223
      %3225 = vmatmul.bf16.gmra.mxu0 %v3092
      %v3226 = vpop.f32.mrf.mxu0
      %v3227 = vadd.f32 %v3021, %v3226
      %v3228 = vpop.f32.mrf.mxu0
      %v3229 = vadd.f32 %v3021, %v3228
      %3230 = vmatmul.bf16.gmra.mxu0 %v3095
      %v3231 = vpop.f32.mrf.mxu0
      %v3232 = vadd.f32 %v3021, %v3231
      %v3233 = vpop.f32.mrf.mxu0
      %v3234 = vadd.f32 %v3021, %v3233
      %3235 = vmatmul.bf16.gmra.mxu0 %v3098
      %v3236 = vpop.f32.mrf.mxu0
      %v3237 = vadd.f32 %v3021, %v3236
      %v3238 = vpop.f32.mrf.mxu0
      %v3239 = vadd.f32 %v3021, %v3238
      %3240 = vmatmul.bf16.gmra.mxu0 %v3101
      %v3241 = vpop.f32.mrf.mxu0
      %v3242 = vadd.f32 %v3021, %v3241
      %v3243 = vpop.f32.mrf.mxu0
      %v3244 = vadd.f32 %v3021, %v3243
      %3245 = vmatmul.bf16.gmra.mxu0 %v3104
      %v3246 = vpop.f32.mrf.mxu0
      %v3247 = vadd.f32 %v3021, %v3246
      %v3248 = vpop.f32.mrf.mxu0
      %v3249 = vadd.f32 %v3021, %v3248
      %3250 = vmatmul.bf16.gmra.mxu0 %v3107
      %v3251 = vpop.f32.mrf.mxu0
      %v3252 = vadd.f32 %v3021, %v3251
      %v3253 = vpop.f32.mrf.mxu0
      %v3254 = vadd.f32 %v3021, %v3253
      %3255 = vmatmul.bf16.gmra.mxu0 %v3110
      %v3256 = vpop.f32.mrf.mxu0
      %v3257 = vadd.f32 %v3021, %v3256
      %v3258 = vpop.f32.mrf.mxu0
      %v3259 = vadd.f32 %v3021, %v3258
      %3260 = vmatmul.bf16.gmra.mxu0 %v3113
      %v3261 = vpop.f32.mrf.mxu0
      %v3262 = vadd.f32 %v3021, %v3261
      %v3263 = vpop.f32.mrf.mxu0
      %v3264 = vadd.f32 %v3021, %v3263
      %3265 = vmatmul.bf16.gmra.mxu0 %v3116
      %v3266 = vpop.f32.mrf.mxu0
      %v3267 = vadd.f32 %v3021, %v3266
      %v3268 = vpop.f32.mrf.mxu0
      %v3269 = vadd.f32 %v3021, %v3268
      %3270 = vmatmul.bf16.gmra.mxu0 %v3119
      %v3271 = vpop.f32.mrf.mxu0
      %v3272 = vadd.f32 %v3021, %v3271
      %v3273 = vpop.f32.mrf.mxu0
      %v3274 = vadd.f32 %v3021, %v3273
      %3275 = vmatmul.bf16.gmra.mxu0 %v3122
      %v3276 = vpop.f32.mrf.mxu0
      %v3277 = vadd.f32 %v3021, %v3276
      %v3278 = vpop.f32.mrf.mxu0
      %v3279 = vadd.f32 %v3021, %v3278
      %3280 = vmatmul.bf16.gmra.mxu0 %v3125
      %v3281 = vpop.f32.mrf.mxu0
      %v3282 = vadd.f32 %v3021, %v3281
      %v3283 = vpop.f32.mrf.mxu0
      %v3284 = vadd.f32 %v3021, %v3283
      %3285 = vmatmul.bf16.gmra.mxu0 %v3128
      %v3286 = vpop.f32.mrf.mxu0
      %v3287 = vadd.f32 %v3021, %v3286
      %v3288 = vpop.f32.mrf.mxu0
      %v3289 = vadd.f32 %v3021, %v3288
      %3290 = vmatmul.bf16.gmra.mxu0 %v3131
      %v3291 = vpop.f32.mrf.mxu0
      %v3292 = vadd.f32 %v3021, %v3291
      %v3293 = vpop.f32.mrf.mxu0
      %v3294 = vadd.f32 %v3021, %v3293
      %3295 = vmatmul.bf16.gmra.mxu0 %v3134
      %v3296 = vpop.f32.mrf.mxu0
      %v3297 = vadd.f32 %v3021, %v3296
      %v3298 = vpop.f32.mrf.mxu0
      %v3299 = vadd.f32 %v3021, %v3298
      %3300 = vmatmul.bf16.gmra.mxu0 %v3137
      %v3301 = vpop.f32.mrf.mxu0
      %v3302 = vadd.f32 %v3021, %v3301
      %v3303 = vpop.f32.mrf.mxu0
      %v3304 = vadd.f32 %v3021, %v3303
      %3305 = vmatmul.bf16.gmra.mxu0 %v3140
      %v3306 = vpop.f32.mrf.mxu0
      %v3307 = vadd.f32 %v3021, %v3306
      %v3308 = vpop.f32.mrf.mxu0
      %v3309 = vadd.f32 %v3021, %v3308
      %3310 = vdwg.mxu0
      %v3311 = vmax.f32 %v3152, 0.0
      %v3312 = vmax.f32 %v3154, 0.0
      %v3313 = vmax.f32 %v3157, 0.0
      %v3314 = vmax.f32 %v3159, 0.0
      %v3315 = vmax.f32 %v3162, 0.0
      %v3316 = vmax.f32 %v3164, 0.0
      %v3317 = vmax.f32 %v3167, 0.0
      %v3318 = vmax.f32 %v3169, 0.0
      %v3319 = vmax.f32 %v3172, 0.0
      %v3320 = vmax.f32 %v3174, 0.0
      %v3321 = vmax.f32 %v3177, 0.0
      %v3322 = vmax.f32 %v3179, 0.0
      %v3323 = vmax.f32 %v3182, 0.0
      %v3324 = vmax.f32 %v3184, 0.0
      %v3325 = vmax.f32 %v3187, 0.0
      %v3326 = vmax.f32 %v3189, 0.0
      %v3327 = vmax.f32 %v3192, 0.0
      %v3328 = vmax.f32 %v3194, 0.0
      %v3329 = vmax.f32 %v3197, 0.0
      %v3330 = vmax.f32 %v3199, 0.0
      %v3331 = vmax.f32 %v3202, 0.0
      %v3332 = vmax.f32 %v3204, 0.0
      %v3333 = vmax.f32 %v3207, 0.0
      %v3334 = vmax.f32 %v3209, 0.0
      %v3335 = vmax.f32 %v3212, 0.0
      %v3336 = vmax.f32 %v3214, 0.0
      %v3337 = vmax.f32 %v3217, 0.0
      %v3338 = vmax.f32 %v3219, 0.0
      %v3339 = vmax.f32 %v3222, 0.0
      %v3340 = vmax.f32 %v3224, 0.0
      %v3341 = vmax.f32 %v3227, 0.0
      %v3342 = vmax.f32 %v3229, 0.0
      %v3343 = vmax.f32 %v3232, 0.0
      %v3344 = vmax.f32 %v3234, 0.0
      %v3345 = vmax.f32 %v3237, 0.0
      %v3346 = vmax.f32 %v3239, 0.0
      %v3347 = vmax.f32 %v3242, 0.0
      %v3348 = vmax.f32 %v3244, 0.0
      %v3349 = vmax.f32 %v3247, 0.0
      %v3350 = vmax.f32 %v3249, 0.0
      %v3351 = vmax.f32 %v3252, 0.0
      %v3352 = vmax.f32 %v3254, 0.0
      %v3353 = vmax.f32 %v3257, 0.0
      %v3354 = vmax.f32 %v3259, 0.0
      %v3355 = vmax.f32 %v3262, 0.0
      %v3356 = vmax.f32 %v3264, 0.0
      %v3357 = vmax.f32 %v3267, 0.0
      %v3358 = vmax.f32 %v3269, 0.0
      %v3359 = vmax.f32 %v3272, 0.0
      %v3360 = vmax.f32 %v3274, 0.0
      %v3361 = vmax.f32 %v3277, 0.0
      %v3362 = vmax.f32 %v3279, 0.0
      %v3363 = vmax.f32 %v3282, 0.0
      %v3364 = vmax.f32 %v3284, 0.0
      %v3365 = vmax.f32 %v3287, 0.0
      %v3366 = vmax.f32 %v3289, 0.0
      %v3367 = vmax.f32 %v3292, 0.0
      %v3368 = vmax.f32 %v3294, 0.0
      %v3369 = vmax.f32 %v3297, 0.0
      %v3370 = vmax.f32 %v3299, 0.0
      %v3371 = vmax.f32 %v3302, 0.0
      %v3372 = vmax.f32 %v3304, 0.0
      %v3373 = vmax.f32 %v3307, 0.0
      %v3374 = vmax.f32 %v3309, 0.0
      %s3375 = scalar_lea.vmem %s1, 192
      %v3376 = vld [vmem:[%s3375] sm:$0xf]
      %v3377 = vld [vmem:[%s3375 + $0x4] sm:$0xf]
      %v3378 = vld [vmem:[%s3375 + $0x8] sm:$0xf]
      %v3379 = vld [vmem:[%s3375 + $0xc] sm:$0xf]
      %v3380 = vld [vmem:[%s3375 + $0x10] sm:$0xf]
      %v3381 = vld [vmem:[%s3375 + $0x14] sm:$0xf]
      %v3382 = vld [vmem:[%s3375 + $0x18] sm:$0xf]
      %v3383 = vld [vmem:[%s3375 + $0x1c] sm:$0xf]
      %v3384 = vpack.c.bf16 %v3312, %v3311
      %v3385 = vpack.c.bf16 %v3314, %v3313
      %v3386 = vpack.c.bf16 %v3316, %v3315
      %v3387 = vpack.c.bf16 %v3318, %v3317
      %v3388 = vpack.c.bf16 %v3320, %v3319
      %v3389 = vpack.c.bf16 %v3322, %v3321
      %v3390 = vpack.c.bf16 %v3324, %v3323
      %v3391 = vpack.c.bf16 %v3326, %v3325
      %v3392 = vpack.c.bf16 %v3328, %v3327
      %v3393 = vpack.c.bf16 %v3330, %v3329
      %v3394 = vpack.c.bf16 %v3332, %v3331
      %v3395 = vpack.c.bf16 %v3334, %v3333
      %v3396 = vpack.c.bf16 %v3336, %v3335
      %v3397 = vpack.c.bf16 %v3338, %v3337
      %v3398 = vpack.c.bf16 %v3340, %v3339
      %v3399 = vpack.c.bf16 %v3342, %v3341
      %v3400 = vpack.c.bf16 %v3344, %v3343
      %v3401 = vpack.c.bf16 %v3346, %v3345
      %v3402 = vpack.c.bf16 %v3348, %v3347
      %v3403 = vpack.c.bf16 %v3350, %v3349
      %v3404 = vpack.c.bf16 %v3352, %v3351
      %v3405 = vpack.c.bf16 %v3354, %v3353
      %v3406 = vpack.c.bf16 %v3356, %v3355
      %v3407 = vpack.c.bf16 %v3358, %v3357
      %v3408 = vpack.c.bf16 %v3360, %v3359
      %v3409 = vpack.c.bf16 %v3362, %v3361
      %v3410 = vpack.c.bf16 %v3364, %v3363
      %v3411 = vpack.c.bf16 %v3366, %v3365
      %v3412 = vpack.c.bf16 %v3368, %v3367
      %v3413 = vpack.c.bf16 %v3370, %v3369
      %v3414 = vpack.c.bf16 %v3372, %v3371
      %v3415 = vpack.c.bf16 %v3374, %v3373
      %v3416 = vperm.slane %v406, 7
      %v3425 = vunpack.c.l.b16 %v3376
      %v3426 = vunpack.c.l.b16 %v3377
      %v3427 = vunpack.c.l.b16 %v3378
      %v3428 = vunpack.c.l.b16 %v3379
      %v3429 = vunpack.c.l.b16 %v3380
      %v3430 = vunpack.c.l.b16 %v3381
      %v3431 = vunpack.c.l.b16 %v3382
      %v3432 = vunpack.c.l.b16 %v3383
      %v3433 = vpack.c.b16 %v3426, %v3425
      %v3434 = vpack.c.b16 %v3428, %v3427
      %v3435 = vpack.c.b16 %v3430, %v3429
      %v3436 = vpack.c.b16 %v3432, %v3431
      %v3442 = vsel %vm772, %v3384, 0
      %v3445 = vsel %vm772, %v3385, 0
      %v3448 = vsel %vm772, %v3386, 0
      %v3451 = vsel %vm772, %v3387, 0
      %v3454 = vsel %vm772, %v3388, 0
      %v3457 = vsel %vm772, %v3389, 0
      %v3460 = vsel %vm772, %v3390, 0
      %v3463 = vsel %vm772, %v3391, 0
      %v3466 = vsel %vm772, %v3392, 0
      %v3469 = vsel %vm772, %v3393, 0
      %v3472 = vsel %vm772, %v3394, 0
      %v3475 = vsel %vm772, %v3395, 0
      %v3478 = vsel %vm772, %v3396, 0
      %v3481 = vsel %vm772, %v3397, 0
      %v3484 = vsel %vm772, %v3398, 0
      %v3487 = vsel %vm772, %v3399, 0
      %v3490 = vsel %vm772, %v3400, 0
      %v3493 = vsel %vm772, %v3401, 0
      %v3496 = vsel %vm772, %v3402, 0
      %v3499 = vsel %vm772, %v3403, 0
      %v3502 = vsel %vm772, %v3404, 0
      %v3505 = vsel %vm772, %v3405, 0
      %v3508 = vsel %vm772, %v3406, 0
      %v3511 = vsel %vm772, %v3407, 0
      %v3514 = vsel %vm772, %v3408, 0
      %v3517 = vsel %vm772, %v3409, 0
      %v3520 = vsel %vm772, %v3410, 0
      %v3523 = vsel %vm772, %v3411, 0
      %v3526 = vsel %vm772, %v3412, 0
      %v3529 = vsel %vm772, %v3413, 0
      %v3532 = vsel %vm772, %v3414, 0
      %v3535 = vsel %vm772, %v3415, 0
      %3537 = vmatpush.bf16.msra.mxu0 0
      %3538 = vmatpush.bf16.msra.mxu0 0
      %3539 = vmatpush.bf16.msra.mxu0 0
      %3540 = vmatpush.bf16.msra.mxu0 0
      %3541 = vmatpush.bf16.msra.mxu0 %v3436
      %3542 = vmatpush.bf16.msra.mxu0 %v3435
      %3543 = vmatpush.bf16.msra.mxu0 %v3434
      %3544 = vmatpush.bf16.msra.mxu0 %v3433
      %3545 = vmatmul.bf16.gmra.mxu0 %v3442
      %v3546 = vpop.f32.mrf.mxu0
      %v3547 = vadd.f32 %v3416, %v3546
      %v3548 = vpop.f32.mrf.mxu0
      %v3549 = vadd.f32 %v3416, %v3548
      %3550 = vmatmul.bf16.gmra.mxu0 %v3445
      %v3551 = vpop.f32.mrf.mxu0
      %v3552 = vadd.f32 %v3416, %v3551
      %v3553 = vpop.f32.mrf.mxu0
      %v3554 = vadd.f32 %v3416, %v3553
      %3555 = vmatmul.bf16.gmra.mxu0 %v3448
      %v3556 = vpop.f32.mrf.mxu0
      %v3557 = vadd.f32 %v3416, %v3556
      %v3558 = vpop.f32.mrf.mxu0
      %v3559 = vadd.f32 %v3416, %v3558
      %3560 = vmatmul.bf16.gmra.mxu0 %v3451
      %v3561 = vpop.f32.mrf.mxu0
      %v3562 = vadd.f32 %v3416, %v3561
      %v3563 = vpop.f32.mrf.mxu0
      %v3564 = vadd.f32 %v3416, %v3563
      %3565 = vmatmul.bf16.gmra.mxu0 %v3454
      %v3566 = vpop.f32.mrf.mxu0
      %v3567 = vadd.f32 %v3416, %v3566
      %v3568 = vpop.f32.mrf.mxu0
      %v3569 = vadd.f32 %v3416, %v3568
      %3570 = vmatmul.bf16.gmra.mxu0 %v3457
      %v3571 = vpop.f32.mrf.mxu0
      %v3572 = vadd.f32 %v3416, %v3571
      %v3573 = vpop.f32.mrf.mxu0
      %v3574 = vadd.f32 %v3416, %v3573
      %3575 = vmatmul.bf16.gmra.mxu0 %v3460
      %v3576 = vpop.f32.mrf.mxu0
      %v3577 = vadd.f32 %v3416, %v3576
      %v3578 = vpop.f32.mrf.mxu0
      %v3579 = vadd.f32 %v3416, %v3578
      %3580 = vmatmul.bf16.gmra.mxu0 %v3463
      %v3581 = vpop.f32.mrf.mxu0
      %v3582 = vadd.f32 %v3416, %v3581
      %v3583 = vpop.f32.mrf.mxu0
      %v3584 = vadd.f32 %v3416, %v3583
      %3585 = vmatmul.bf16.gmra.mxu0 %v3466
      %v3586 = vpop.f32.mrf.mxu0
      %v3587 = vadd.f32 %v3416, %v3586
      %v3588 = vpop.f32.mrf.mxu0
      %v3589 = vadd.f32 %v3416, %v3588
      %3590 = vmatmul.bf16.gmra.mxu0 %v3469
      %v3591 = vpop.f32.mrf.mxu0
      %v3592 = vadd.f32 %v3416, %v3591
      %v3593 = vpop.f32.mrf.mxu0
      %v3594 = vadd.f32 %v3416, %v3593
      %3595 = vmatmul.bf16.gmra.mxu0 %v3472
      %v3596 = vpop.f32.mrf.mxu0
      %v3597 = vadd.f32 %v3416, %v3596
      %v3598 = vpop.f32.mrf.mxu0
      %v3599 = vadd.f32 %v3416, %v3598
      %3600 = vmatmul.bf16.gmra.mxu0 %v3475
      %v3601 = vpop.f32.mrf.mxu0
      %v3602 = vadd.f32 %v3416, %v3601
      %v3603 = vpop.f32.mrf.mxu0
      %v3604 = vadd.f32 %v3416, %v3603
      %3605 = vmatmul.bf16.gmra.mxu0 %v3478
      %v3606 = vpop.f32.mrf.mxu0
      %v3607 = vadd.f32 %v3416, %v3606
      %v3608 = vpop.f32.mrf.mxu0
      %v3609 = vadd.f32 %v3416, %v3608
      %3610 = vmatmul.bf16.gmra.mxu0 %v3481
      %v3611 = vpop.f32.mrf.mxu0
      %v3612 = vadd.f32 %v3416, %v3611
      %v3613 = vpop.f32.mrf.mxu0
      %v3614 = vadd.f32 %v3416, %v3613
      %3615 = vmatmul.bf16.gmra.mxu0 %v3484
      %v3616 = vpop.f32.mrf.mxu0
      %v3617 = vadd.f32 %v3416, %v3616
      %v3618 = vpop.f32.mrf.mxu0
      %v3619 = vadd.f32 %v3416, %v3618
      %3620 = vmatmul.bf16.gmra.mxu0 %v3487
      %v3621 = vpop.f32.mrf.mxu0
      %v3622 = vadd.f32 %v3416, %v3621
      %v3623 = vpop.f32.mrf.mxu0
      %v3624 = vadd.f32 %v3416, %v3623
      %3625 = vmatmul.bf16.gmra.mxu0 %v3490
      %v3626 = vpop.f32.mrf.mxu0
      %v3627 = vadd.f32 %v3416, %v3626
      %v3628 = vpop.f32.mrf.mxu0
      %v3629 = vadd.f32 %v3416, %v3628
      %3630 = vmatmul.bf16.gmra.mxu0 %v3493
      %v3631 = vpop.f32.mrf.mxu0
      %v3632 = vadd.f32 %v3416, %v3631
      %v3633 = vpop.f32.mrf.mxu0
      %v3634 = vadd.f32 %v3416, %v3633
      %3635 = vmatmul.bf16.gmra.mxu0 %v3496
      %v3636 = vpop.f32.mrf.mxu0
      %v3637 = vadd.f32 %v3416, %v3636
      %v3638 = vpop.f32.mrf.mxu0
      %v3639 = vadd.f32 %v3416, %v3638
      %3640 = vmatmul.bf16.gmra.mxu0 %v3499
      %v3641 = vpop.f32.mrf.mxu0
      %v3642 = vadd.f32 %v3416, %v3641
      %v3643 = vpop.f32.mrf.mxu0
      %v3644 = vadd.f32 %v3416, %v3643
      %3645 = vmatmul.bf16.gmra.mxu0 %v3502
      %v3646 = vpop.f32.mrf.mxu0
      %v3647 = vadd.f32 %v3416, %v3646
      %v3648 = vpop.f32.mrf.mxu0
      %v3649 = vadd.f32 %v3416, %v3648
      %3650 = vmatmul.bf16.gmra.mxu0 %v3505
      %v3651 = vpop.f32.mrf.mxu0
      %v3652 = vadd.f32 %v3416, %v3651
      %v3653 = vpop.f32.mrf.mxu0
      %v3654 = vadd.f32 %v3416, %v3653
      %3655 = vmatmul.bf16.gmra.mxu0 %v3508
      %v3656 = vpop.f32.mrf.mxu0
      %v3657 = vadd.f32 %v3416, %v3656
      %v3658 = vpop.f32.mrf.mxu0
      %v3659 = vadd.f32 %v3416, %v3658
      %3660 = vmatmul.bf16.gmra.mxu0 %v3511
      %v3661 = vpop.f32.mrf.mxu0
      %v3662 = vadd.f32 %v3416, %v3661
      %v3663 = vpop.f32.mrf.mxu0
      %v3664 = vadd.f32 %v3416, %v3663
      %3665 = vmatmul.bf16.gmra.mxu0 %v3514
      %v3666 = vpop.f32.mrf.mxu0
      %v3667 = vadd.f32 %v3416, %v3666
      %v3668 = vpop.f32.mrf.mxu0
      %v3669 = vadd.f32 %v3416, %v3668
      %3670 = vmatmul.bf16.gmra.mxu0 %v3517
      %v3671 = vpop.f32.mrf.mxu0
      %v3672 = vadd.f32 %v3416, %v3671
      %v3673 = vpop.f32.mrf.mxu0
      %v3674 = vadd.f32 %v3416, %v3673
      %3675 = vmatmul.bf16.gmra.mxu0 %v3520
      %v3676 = vpop.f32.mrf.mxu0
      %v3677 = vadd.f32 %v3416, %v3676
      %v3678 = vpop.f32.mrf.mxu0
      %v3679 = vadd.f32 %v3416, %v3678
      %3680 = vmatmul.bf16.gmra.mxu0 %v3523
      %v3681 = vpop.f32.mrf.mxu0
      %v3682 = vadd.f32 %v3416, %v3681
      %v3683 = vpop.f32.mrf.mxu0
      %v3684 = vadd.f32 %v3416, %v3683
      %3685 = vmatmul.bf16.gmra.mxu0 %v3526
      %v3686 = vpop.f32.mrf.mxu0
      %v3687 = vadd.f32 %v3416, %v3686
      %v3688 = vpop.f32.mrf.mxu0
      %v3689 = vadd.f32 %v3416, %v3688
      %3690 = vmatmul.bf16.gmra.mxu0 %v3529
      %v3691 = vpop.f32.mrf.mxu0
      %v3692 = vadd.f32 %v3416, %v3691
      %v3693 = vpop.f32.mrf.mxu0
      %v3694 = vadd.f32 %v3416, %v3693
      %3695 = vmatmul.bf16.gmra.mxu0 %v3532
      %v3696 = vpop.f32.mrf.mxu0
      %v3697 = vadd.f32 %v3416, %v3696
      %v3698 = vpop.f32.mrf.mxu0
      %v3699 = vadd.f32 %v3416, %v3698
      %3700 = vmatmul.bf16.gmra.mxu0 %v3535
      %v3701 = vpop.f32.mrf.mxu0
      %v3702 = vadd.f32 %v3416, %v3701
      %v3703 = vpop.f32.mrf.mxu0
      %v3704 = vadd.f32 %v3416, %v3703
      %3705 = vdwg.mxu0
      %v3706 = vmax.f32 %v3547, 0.0
      %v3707 = vmax.f32 %v3549, 0.0
      %v3708 = vmax.f32 %v3552, 0.0
      %v3709 = vmax.f32 %v3554, 0.0
      %v3710 = vmax.f32 %v3557, 0.0
      %v3711 = vmax.f32 %v3559, 0.0
      %v3712 = vmax.f32 %v3562, 0.0
      %v3713 = vmax.f32 %v3564, 0.0
      %v3714 = vmax.f32 %v3567, 0.0
      %v3715 = vmax.f32 %v3569, 0.0
      %v3716 = vmax.f32 %v3572, 0.0
      %v3717 = vmax.f32 %v3574, 0.0
      %v3718 = vmax.f32 %v3577, 0.0
      %v3719 = vmax.f32 %v3579, 0.0
      %v3720 = vmax.f32 %v3582, 0.0
      %v3721 = vmax.f32 %v3584, 0.0
      %v3722 = vmax.f32 %v3587, 0.0
      %v3723 = vmax.f32 %v3589, 0.0
      %v3724 = vmax.f32 %v3592, 0.0
      %v3725 = vmax.f32 %v3594, 0.0
      %v3726 = vmax.f32 %v3597, 0.0
      %v3727 = vmax.f32 %v3599, 0.0
      %v3728 = vmax.f32 %v3602, 0.0
      %v3729 = vmax.f32 %v3604, 0.0
      %v3730 = vmax.f32 %v3607, 0.0
      %v3731 = vmax.f32 %v3609, 0.0
      %v3732 = vmax.f32 %v3612, 0.0
      %v3733 = vmax.f32 %v3614, 0.0
      %v3734 = vmax.f32 %v3617, 0.0
      %v3735 = vmax.f32 %v3619, 0.0
      %v3736 = vmax.f32 %v3622, 0.0
      %v3737 = vmax.f32 %v3624, 0.0
      %v3738 = vmax.f32 %v3627, 0.0
      %v3739 = vmax.f32 %v3629, 0.0
      %v3740 = vmax.f32 %v3632, 0.0
      %v3741 = vmax.f32 %v3634, 0.0
      %v3742 = vmax.f32 %v3637, 0.0
      %v3743 = vmax.f32 %v3639, 0.0
      %v3744 = vmax.f32 %v3642, 0.0
      %v3745 = vmax.f32 %v3644, 0.0
      %v3746 = vmax.f32 %v3647, 0.0
      %v3747 = vmax.f32 %v3649, 0.0
      %v3748 = vmax.f32 %v3652, 0.0
      %v3749 = vmax.f32 %v3654, 0.0
      %v3750 = vmax.f32 %v3657, 0.0
      %v3751 = vmax.f32 %v3659, 0.0
      %v3752 = vmax.f32 %v3662, 0.0
      %v3753 = vmax.f32 %v3664, 0.0
      %v3754 = vmax.f32 %v3667, 0.0
      %v3755 = vmax.f32 %v3669, 0.0
      %v3756 = vmax.f32 %v3672, 0.0
      %v3757 = vmax.f32 %v3674, 0.0
      %v3758 = vmax.f32 %v3677, 0.0
      %v3759 = vmax.f32 %v3679, 0.0
      %v3760 = vmax.f32 %v3682, 0.0
      %v3761 = vmax.f32 %v3684, 0.0
      %v3762 = vmax.f32 %v3687, 0.0
      %v3763 = vmax.f32 %v3689, 0.0
      %v3764 = vmax.f32 %v3692, 0.0
      %v3765 = vmax.f32 %v3694, 0.0
      %v3766 = vmax.f32 %v3697, 0.0
      %v3767 = vmax.f32 %v3699, 0.0
      %v3768 = vmax.f32 %v3702, 0.0
      %v3769 = vmax.f32 %v3704, 0.0
      %v3770 = vld [vmem:[%s3] sm:$0xf]
      %v3771 = vld [vmem:[%s3 + $0x4] sm:$0xf]
      %v3772 = vld [vmem:[%s3 + $0x8] sm:$0xf]
      %v3773 = vld [vmem:[%s3 + $0xc] sm:$0xf]
      %v3774 = vld [vmem:[%s3 + $0x10] sm:$0xf]
      %v3775 = vld [vmem:[%s3 + $0x14] sm:$0xf]
      %v3776 = vld [vmem:[%s3 + $0x18] sm:$0xf]
      %v3777 = vld [vmem:[%s3 + $0x1c] sm:$0xf]
      %v3778 = vpack.c.bf16 %v3707, %v3706
      %v3779 = vpack.c.bf16 %v3709, %v3708
      %v3780 = vpack.c.bf16 %v3711, %v3710
      %v3781 = vpack.c.bf16 %v3713, %v3712
      %v3782 = vpack.c.bf16 %v3715, %v3714
      %v3783 = vpack.c.bf16 %v3717, %v3716
      %v3784 = vpack.c.bf16 %v3719, %v3718
      %v3785 = vpack.c.bf16 %v3721, %v3720
      %v3786 = vpack.c.bf16 %v3723, %v3722
      %v3787 = vpack.c.bf16 %v3725, %v3724
      %v3788 = vpack.c.bf16 %v3727, %v3726
      %v3789 = vpack.c.bf16 %v3729, %v3728
      %v3790 = vpack.c.bf16 %v3731, %v3730
      %v3791 = vpack.c.bf16 %v3733, %v3732
      %v3792 = vpack.c.bf16 %v3735, %v3734
      %v3793 = vpack.c.bf16 %v3737, %v3736
      %v3794 = vpack.c.bf16 %v3739, %v3738
      %v3795 = vpack.c.bf16 %v3741, %v3740
      %v3796 = vpack.c.bf16 %v3743, %v3742
      %v3797 = vpack.c.bf16 %v3745, %v3744
      %v3798 = vpack.c.bf16 %v3747, %v3746
      %v3799 = vpack.c.bf16 %v3749, %v3748
      %v3800 = vpack.c.bf16 %v3751, %v3750
      %v3801 = vpack.c.bf16 %v3753, %v3752
      %v3802 = vpack.c.bf16 %v3755, %v3754
      %v3803 = vpack.c.bf16 %v3757, %v3756
      %v3804 = vpack.c.bf16 %v3759, %v3758
      %v3805 = vpack.c.bf16 %v3761, %v3760
      %v3806 = vpack.c.bf16 %v3763, %v3762
      %v3807 = vpack.c.bf16 %v3765, %v3764
      %v3808 = vpack.c.bf16 %v3767, %v3766
      %v3809 = vpack.c.bf16 %v3769, %v3768
      %v3810 = vld [vmem:[%s6] sm:$0x1]
      %v3812 = vperm.slane %v3810, 0
      %v3822 = vunpack.c.l.b16 %v3770
      %v3823 = vunpack.c.l.b16 %v3771
      %v3824 = vunpack.c.l.b16 %v3772
      %v3825 = vunpack.c.l.b16 %v3773
      %v3826 = vunpack.c.l.b16 %v3774
      %v3827 = vunpack.c.l.b16 %v3775
      %v3828 = vunpack.c.l.b16 %v3776
      %v3829 = vunpack.c.l.b16 %v3777
      %v3830 = vpack.c.b16 %v3823, %v3822
      %v3831 = vpack.c.b16 %v3825, %v3824
      %v3832 = vpack.c.b16 %v3827, %v3826
      %v3833 = vpack.c.b16 %v3829, %v3828
      %v3839 = vsel %vm772, %v3778, 0
      %v3842 = vsel %vm772, %v3779, 0
      %v3845 = vsel %vm772, %v3780, 0
      %v3848 = vsel %vm772, %v3781, 0
      %v3851 = vsel %vm772, %v3782, 0
      %v3854 = vsel %vm772, %v3783, 0
      %v3857 = vsel %vm772, %v3784, 0
      %v3860 = vsel %vm772, %v3785, 0
      %v3863 = vsel %vm772, %v3786, 0
      %v3866 = vsel %vm772, %v3787, 0
      %v3869 = vsel %vm772, %v3788, 0
      %v3872 = vsel %vm772, %v3789, 0
      %v3875 = vsel %vm772, %v3790, 0
      %v3878 = vsel %vm772, %v3791, 0
      %v3881 = vsel %vm772, %v3792, 0
      %v3884 = vsel %vm772, %v3793, 0
      %v3887 = vsel %vm772, %v3794, 0
      %v3890 = vsel %vm772, %v3795, 0
      %v3893 = vsel %vm772, %v3796, 0
      %v3896 = vsel %vm772, %v3797, 0
      %v3899 = vsel %vm772, %v3798, 0
      %v3902 = vsel %vm772, %v3799, 0
      %v3905 = vsel %vm772, %v3800, 0
      %v3908 = vsel %vm772, %v3801, 0
      %v3911 = vsel %vm772, %v3802, 0
      %v3914 = vsel %vm772, %v3803, 0
      %v3917 = vsel %vm772, %v3804, 0
      %v3920 = vsel %vm772, %v3805, 0
      %v3923 = vsel %vm772, %v3806, 0
      %v3926 = vsel %vm772, %v3807, 0
      %v3929 = vsel %vm772, %v3808, 0
      %v3932 = vsel %vm772, %v3809, 0
      %3934 = vmatpush.bf16.msra.mxu0 0
      %3935 = vmatpush.bf16.msra.mxu0 0
      %3936 = vmatpush.bf16.msra.mxu0 0
      %3937 = vmatpush.bf16.msra.mxu0 0
      %3938 = vmatpush.bf16.msra.mxu0 %v3833
      %3939 = vmatpush.bf16.msra.mxu0 %v3832
      %3940 = vmatpush.bf16.msra.mxu0 %v3831
      %3941 = vmatpush.bf16.msra.mxu0 %v3830
      %3942 = vmatmul.bf16.gmra.mxu0 %v3839
      %v3943 = vpop.f32.mrf.mxu0
      %v3944 = vadd.f32 %v3812, %v3943
      %v3945 = vpop.f32.mrf.mxu0
      %v3946 = vadd.f32 %v3812, %v3945
      %3947 = vmatmul.bf16.gmra.mxu0 %v3842
      %v3948 = vpop.f32.mrf.mxu0
      %v3949 = vadd.f32 %v3812, %v3948
      %v3950 = vpop.f32.mrf.mxu0
      %v3951 = vadd.f32 %v3812, %v3950
      %3952 = vmatmul.bf16.gmra.mxu0 %v3845
      %v3953 = vpop.f32.mrf.mxu0
      %v3954 = vadd.f32 %v3812, %v3953
      %v3955 = vpop.f32.mrf.mxu0
      %v3956 = vadd.f32 %v3812, %v3955
      %3957 = vmatmul.bf16.gmra.mxu0 %v3848
      %v3958 = vpop.f32.mrf.mxu0
      %v3959 = vadd.f32 %v3812, %v3958
      %v3960 = vpop.f32.mrf.mxu0
      %v3961 = vadd.f32 %v3812, %v3960
      %3962 = vmatmul.bf16.gmra.mxu0 %v3851
      %v3963 = vpop.f32.mrf.mxu0
      %v3964 = vadd.f32 %v3812, %v3963
      %v3965 = vpop.f32.mrf.mxu0
      %v3966 = vadd.f32 %v3812, %v3965
      %3967 = vmatmul.bf16.gmra.mxu0 %v3854
      %v3968 = vpop.f32.mrf.mxu0
      %v3969 = vadd.f32 %v3812, %v3968
      %v3970 = vpop.f32.mrf.mxu0
      %v3971 = vadd.f32 %v3812, %v3970
      %3972 = vmatmul.bf16.gmra.mxu0 %v3857
      %v3973 = vpop.f32.mrf.mxu0
      %v3974 = vadd.f32 %v3812, %v3973
      %v3975 = vpop.f32.mrf.mxu0
      %v3976 = vadd.f32 %v3812, %v3975
      %3977 = vmatmul.bf16.gmra.mxu0 %v3860
      %v3978 = vpop.f32.mrf.mxu0
      %v3979 = vadd.f32 %v3812, %v3978
      %v3980 = vpop.f32.mrf.mxu0
      %v3981 = vadd.f32 %v3812, %v3980
      %3982 = vmatmul.bf16.gmra.mxu0 %v3863
      %v3983 = vpop.f32.mrf.mxu0
      %v3984 = vadd.f32 %v3812, %v3983
      %v3985 = vpop.f32.mrf.mxu0
      %v3986 = vadd.f32 %v3812, %v3985
      %3987 = vmatmul.bf16.gmra.mxu0 %v3866
      %v3988 = vpop.f32.mrf.mxu0
      %v3989 = vadd.f32 %v3812, %v3988
      %v3990 = vpop.f32.mrf.mxu0
      %v3991 = vadd.f32 %v3812, %v3990
      %3992 = vmatmul.bf16.gmra.mxu0 %v3869
      %v3993 = vpop.f32.mrf.mxu0
      %v3994 = vadd.f32 %v3812, %v3993
      %v3995 = vpop.f32.mrf.mxu0
      %v3996 = vadd.f32 %v3812, %v3995
      %3997 = vmatmul.bf16.gmra.mxu0 %v3872
      %v3998 = vpop.f32.mrf.mxu0
      %v3999 = vadd.f32 %v3812, %v3998
      %v4000 = vpop.f32.mrf.mxu0
      %v4001 = vadd.f32 %v3812, %v4000
      %4002 = vmatmul.bf16.gmra.mxu0 %v3875
      %v4003 = vpop.f32.mrf.mxu0
      %v4004 = vadd.f32 %v3812, %v4003
      %v4005 = vpop.f32.mrf.mxu0
      %v4006 = vadd.f32 %v3812, %v4005
      %4007 = vmatmul.bf16.gmra.mxu0 %v3878
      %v4008 = vpop.f32.mrf.mxu0
      %v4009 = vadd.f32 %v3812, %v4008
      %v4010 = vpop.f32.mrf.mxu0
      %v4011 = vadd.f32 %v3812, %v4010
      %4012 = vmatmul.bf16.gmra.mxu0 %v3881
      %v4013 = vpop.f32.mrf.mxu0
      %v4014 = vadd.f32 %v3812, %v4013
      %v4015 = vpop.f32.mrf.mxu0
      %v4016 = vadd.f32 %v3812, %v4015
      %4017 = vmatmul.bf16.gmra.mxu0 %v3884
      %v4018 = vpop.f32.mrf.mxu0
      %v4019 = vadd.f32 %v3812, %v4018
      %v4020 = vpop.f32.mrf.mxu0
      %v4021 = vadd.f32 %v3812, %v4020
      %4022 = vmatmul.bf16.gmra.mxu0 %v3887
      %v4023 = vpop.f32.mrf.mxu0
      %v4024 = vadd.f32 %v3812, %v4023
      %v4025 = vpop.f32.mrf.mxu0
      %v4026 = vadd.f32 %v3812, %v4025
      %4027 = vmatmul.bf16.gmra.mxu0 %v3890
      %v4028 = vpop.f32.mrf.mxu0
      %v4029 = vadd.f32 %v3812, %v4028
      %v4030 = vpop.f32.mrf.mxu0
      %v4031 = vadd.f32 %v3812, %v4030
      %4032 = vmatmul.bf16.gmra.mxu0 %v3893
      %v4033 = vpop.f32.mrf.mxu0
      %v4034 = vadd.f32 %v3812, %v4033
      %v4035 = vpop.f32.mrf.mxu0
      %v4036 = vadd.f32 %v3812, %v4035
      %4037 = vmatmul.bf16.gmra.mxu0 %v3896
      %v4038 = vpop.f32.mrf.mxu0
      %v4039 = vadd.f32 %v3812, %v4038
      %v4040 = vpop.f32.mrf.mxu0
      %v4041 = vadd.f32 %v3812, %v4040
      %4042 = vmatmul.bf16.gmra.mxu0 %v3899
      %v4043 = vpop.f32.mrf.mxu0
      %v4044 = vadd.f32 %v3812, %v4043
      %v4045 = vpop.f32.mrf.mxu0
      %v4046 = vadd.f32 %v3812, %v4045
      %4047 = vmatmul.bf16.gmra.mxu0 %v3902
      %v4048 = vpop.f32.mrf.mxu0
      %v4049 = vadd.f32 %v3812, %v4048
      %v4050 = vpop.f32.mrf.mxu0
      %v4051 = vadd.f32 %v3812, %v4050
      %4052 = vmatmul.bf16.gmra.mxu0 %v3905
      %v4053 = vpop.f32.mrf.mxu0
      %v4054 = vadd.f32 %v3812, %v4053
      %v4055 = vpop.f32.mrf.mxu0
      %v4056 = vadd.f32 %v3812, %v4055
      %4057 = vmatmul.bf16.gmra.mxu0 %v3908
      %v4058 = vpop.f32.mrf.mxu0
      %v4059 = vadd.f32 %v3812, %v4058
      %v4060 = vpop.f32.mrf.mxu0
      %v4061 = vadd.f32 %v3812, %v4060
      %4062 = vmatmul.bf16.gmra.mxu0 %v3911
      %v4063 = vpop.f32.mrf.mxu0
      %v4064 = vadd.f32 %v3812, %v4063
      %v4065 = vpop.f32.mrf.mxu0
      %v4066 = vadd.f32 %v3812, %v4065
      %4067 = vmatmul.bf16.gmra.mxu0 %v3914
      %v4068 = vpop.f32.mrf.mxu0
      %v4069 = vadd.f32 %v3812, %v4068
      %v4070 = vpop.f32.mrf.mxu0
      %v4071 = vadd.f32 %v3812, %v4070
      %4072 = vmatmul.bf16.gmra.mxu0 %v3917
      %v4073 = vpop.f32.mrf.mxu0
      %v4074 = vadd.f32 %v3812, %v4073
      %v4075 = vpop.f32.mrf.mxu0
      %v4076 = vadd.f32 %v3812, %v4075
      %4077 = vmatmul.bf16.gmra.mxu0 %v3920
      %v4078 = vpop.f32.mrf.mxu0
      %v4079 = vadd.f32 %v3812, %v4078
      %v4080 = vpop.f32.mrf.mxu0
      %v4081 = vadd.f32 %v3812, %v4080
      %4082 = vmatmul.bf16.gmra.mxu0 %v3923
      %v4083 = vpop.f32.mrf.mxu0
      %v4084 = vadd.f32 %v3812, %v4083
      %v4085 = vpop.f32.mrf.mxu0
      %v4086 = vadd.f32 %v3812, %v4085
      %4087 = vmatmul.bf16.gmra.mxu0 %v3926
      %v4088 = vpop.f32.mrf.mxu0
      %v4089 = vadd.f32 %v3812, %v4088
      %v4090 = vpop.f32.mrf.mxu0
      %v4091 = vadd.f32 %v3812, %v4090
      %4092 = vmatmul.bf16.gmra.mxu0 %v3929
      %v4093 = vpop.f32.mrf.mxu0
      %v4094 = vadd.f32 %v3812, %v4093
      %v4095 = vpop.f32.mrf.mxu0
      %v4096 = vadd.f32 %v3812, %v4095
      %4097 = vmatmul.bf16.gmra.mxu0 %v3932
      %v4098 = vpop.f32.mrf.mxu0
      %v4099 = vadd.f32 %v3812, %v4098
      %v4100 = vpop.f32.mrf.mxu0
      %v4101 = vadd.f32 %v3812, %v4100
      %4102 = vdwg.mxu0
      %s4103 = scalar_lea.vmem %s1, 256
      %v4104 = vld [vmem:[%s4103] sm:$0xf]
      %v4105 = vld [vmem:[%s4103 + $0x4] sm:$0xf]
      %v4106 = vld [vmem:[%s4103 + $0x8] sm:$0xf]
      %v4107 = vld [vmem:[%s4103 + $0xc] sm:$0xf]
      %v4108 = vld [vmem:[%s4103 + $0x10] sm:$0xf]
      %v4109 = vld [vmem:[%s4103 + $0x14] sm:$0xf]
      %v4110 = vld [vmem:[%s4103 + $0x18] sm:$0xf]
      %v4111 = vld [vmem:[%s4103 + $0x1c] sm:$0xf]
      %v4112 = vpack.c.bf16 %v3946, %v3944
      %v4113 = vpack.c.bf16 %v3951, %v3949
      %v4114 = vpack.c.bf16 %v3956, %v3954
      %v4115 = vpack.c.bf16 %v3961, %v3959
      %v4116 = vpack.c.bf16 %v3966, %v3964
      %v4117 = vpack.c.bf16 %v3971, %v3969
      %v4118 = vpack.c.bf16 %v3976, %v3974
      %v4119 = vpack.c.bf16 %v3981, %v3979
      %v4120 = vpack.c.bf16 %v3986, %v3984
      %v4121 = vpack.c.bf16 %v3991, %v3989
      %v4122 = vpack.c.bf16 %v3996, %v3994
      %v4123 = vpack.c.bf16 %v4001, %v3999
      %v4124 = vpack.c.bf16 %v4006, %v4004
      %v4125 = vpack.c.bf16 %v4011, %v4009
      %v4126 = vpack.c.bf16 %v4016, %v4014
      %v4127 = vpack.c.bf16 %v4021, %v4019
      %v4128 = vpack.c.bf16 %v4026, %v4024
      %v4129 = vpack.c.bf16 %v4031, %v4029
      %v4130 = vpack.c.bf16 %v4036, %v4034
      %v4131 = vpack.c.bf16 %v4041, %v4039
      %v4132 = vpack.c.bf16 %v4046, %v4044
      %v4133 = vpack.c.bf16 %v4051, %v4049
      %v4134 = vpack.c.bf16 %v4056, %v4054
      %v4135 = vpack.c.bf16 %v4061, %v4059
      %v4136 = vpack.c.bf16 %v4066, %v4064
      %v4137 = vpack.c.bf16 %v4071, %v4069
      %v4138 = vpack.c.bf16 %v4076, %v4074
      %v4139 = vpack.c.bf16 %v4081, %v4079
      %v4140 = vpack.c.bf16 %v4086, %v4084
      %v4141 = vpack.c.bf16 %v4091, %v4089
      %v4142 = vpack.c.bf16 %v4096, %v4094
      %v4143 = vpack.c.bf16 %v4101, %v4099
      %s4144 = scalar_lea.vmem %s2, 128
      %v4145 = vld [vmem:[%s4144] sm:$0xf]
      %v4146 = vld [vmem:[%s4144 + $0x4] sm:$0xf]
      %v4147 = vld [vmem:[%s4144 + $0x8] sm:$0xf]
      %v4148 = vld [vmem:[%s4144 + $0xc] sm:$0xf]
      %v4149 = vld [vmem:[%s4144 + $0x10] sm:$0xf]
      %v4150 = vld [vmem:[%s4144 + $0x14] sm:$0xf]
      %v4151 = vld [vmem:[%s4144 + $0x18] sm:$0xf]
      %v4152 = vld [vmem:[%s4144 + $0x1c] sm:$0xf]
      %v4153 = vld [vmem:[%s4144 + $0x20] sm:$0xf]
      %v4154 = vld [vmem:[%s4144 + $0x24] sm:$0xf]
      %v4155 = vld [vmem:[%s4144 + $0x28] sm:$0xf]
      %v4156 = vld [vmem:[%s4144 + $0x2c] sm:$0xf]
      %v4157 = vld [vmem:[%s4144 + $0x30] sm:$0xf]
      %v4158 = vld [vmem:[%s4144 + $0x34] sm:$0xf]
      %v4159 = vld [vmem:[%s4144 + $0x38] sm:$0xf]
      %v4160 = vld [vmem:[%s4144 + $0x3c] sm:$0xf]
      %v4177 = vunpack.c.l.b16 %v4145
      %v4178 = vunpack.c.l.b16 %v4146
      %v4179 = vunpack.c.l.b16 %v4147
      %v4180 = vunpack.c.l.b16 %v4148
      %v4181 = vunpack.c.l.b16 %v4149
      %v4182 = vunpack.c.l.b16 %v4150
      %v4183 = vunpack.c.l.b16 %v4151
      %v4184 = vunpack.c.l.b16 %v4152
      %v4185 = vunpack.c.l.b16 %v4153
      %v4186 = vunpack.c.l.b16 %v4154
      %v4187 = vunpack.c.l.b16 %v4155
      %v4188 = vunpack.c.l.b16 %v4156
      %v4189 = vunpack.c.l.b16 %v4157
      %v4190 = vunpack.c.l.b16 %v4158
      %v4191 = vunpack.c.l.b16 %v4159
      %v4192 = vunpack.c.l.b16 %v4160
      %v4193 = vpack.c.b16 %v4178, %v4177
      %v4194 = vpack.c.b16 %v4180, %v4179
      %v4195 = vpack.c.b16 %v4182, %v4181
      %v4196 = vpack.c.b16 %v4184, %v4183
      %v4197 = vpack.c.b16 %v4186, %v4185
      %v4198 = vpack.c.b16 %v4188, %v4187
      %v4199 = vpack.c.b16 %v4190, %v4189
      %v4200 = vpack.c.b16 %v4192, %v4191
      %4209 = vmatpush.bf16.msra.mxu0 %v4200
      %4210 = vmatpush.bf16.msra.mxu0 %v4199
      %4211 = vmatpush.bf16.msra.mxu0 %v4198
      %4212 = vmatpush.bf16.msra.mxu0 %v4197
      %4213 = vmatpush.bf16.msra.mxu0 %v4196
      %4214 = vmatpush.bf16.msra.mxu0 %v4195
      %4215 = vmatpush.bf16.msra.mxu0 %v4194
      %4216 = vmatpush.bf16.msra.mxu0 %v4193
      %4217 = vmatmul.bf16.gmra.mxu0 %v374
      %v4218 = vpop.f32.mrf.mxu0
      %v4219 = vadd.f32 0.0, %v4218
      %v4220 = vpop.f32.mrf.mxu0
      %v4221 = vadd.f32 0.0, %v4220
      %4222 = vmatmul.bf16.gmra.mxu0 %v375
      %v4223 = vpop.f32.mrf.mxu0
      %v4224 = vadd.f32 0.0, %v4223
      %v4225 = vpop.f32.mrf.mxu0
      %v4226 = vadd.f32 0.0, %v4225
      %4227 = vmatmul.bf16.gmra.mxu0 %v376
      %v4228 = vpop.f32.mrf.mxu0
      %v4229 = vadd.f32 0.0, %v4228
      %v4230 = vpop.f32.mrf.mxu0
      %v4231 = vadd.f32 0.0, %v4230
      %4232 = vmatmul.bf16.gmra.mxu0 %v377
      %v4233 = vpop.f32.mrf.mxu0
      %v4234 = vadd.f32 0.0, %v4233
      %v4235 = vpop.f32.mrf.mxu0
      %v4236 = vadd.f32 0.0, %v4235
      %4237 = vmatmul.bf16.gmra.mxu0 %v378
      %v4238 = vpop.f32.mrf.mxu0
      %v4239 = vadd.f32 0.0, %v4238
      %v4240 = vpop.f32.mrf.mxu0
      %v4241 = vadd.f32 0.0, %v4240
      %4242 = vmatmul.bf16.gmra.mxu0 %v379
      %v4243 = vpop.f32.mrf.mxu0
      %v4244 = vadd.f32 0.0, %v4243
      %v4245 = vpop.f32.mrf.mxu0
      %v4246 = vadd.f32 0.0, %v4245
      %4247 = vmatmul.bf16.gmra.mxu0 %v380
      %v4248 = vpop.f32.mrf.mxu0
      %v4249 = vadd.f32 0.0, %v4248
      %v4250 = vpop.f32.mrf.mxu0
      %v4251 = vadd.f32 0.0, %v4250
      %4252 = vmatmul.bf16.gmra.mxu0 %v381
      %v4253 = vpop.f32.mrf.mxu0
      %v4254 = vadd.f32 0.0, %v4253
      %v4255 = vpop.f32.mrf.mxu0
      %v4256 = vadd.f32 0.0, %v4255
      %4257 = vmatmul.bf16.gmra.mxu0 %v382
      %v4258 = vpop.f32.mrf.mxu0
      %v4259 = vadd.f32 0.0, %v4258
      %v4260 = vpop.f32.mrf.mxu0
      %v4261 = vadd.f32 0.0, %v4260
      %4262 = vmatmul.bf16.gmra.mxu0 %v383
      %v4263 = vpop.f32.mrf.mxu0
      %v4264 = vadd.f32 0.0, %v4263
      %v4265 = vpop.f32.mrf.mxu0
      %v4266 = vadd.f32 0.0, %v4265
      %4267 = vmatmul.bf16.gmra.mxu0 %v384
      %v4268 = vpop.f32.mrf.mxu0
      %v4269 = vadd.f32 0.0, %v4268
      %v4270 = vpop.f32.mrf.mxu0
      %v4271 = vadd.f32 0.0, %v4270
      %4272 = vmatmul.bf16.gmra.mxu0 %v385
      %v4273 = vpop.f32.mrf.mxu0
      %v4274 = vadd.f32 0.0, %v4273
      %v4275 = vpop.f32.mrf.mxu0
      %v4276 = vadd.f32 0.0, %v4275
      %4277 = vmatmul.bf16.gmra.mxu0 %v386
      %v4278 = vpop.f32.mrf.mxu0
      %v4279 = vadd.f32 0.0, %v4278
      %v4280 = vpop.f32.mrf.mxu0
      %v4281 = vadd.f32 0.0, %v4280
      %4282 = vmatmul.bf16.gmra.mxu0 %v387
      %v4283 = vpop.f32.mrf.mxu0
      %v4284 = vadd.f32 0.0, %v4283
      %v4285 = vpop.f32.mrf.mxu0
      %v4286 = vadd.f32 0.0, %v4285
      %4287 = vmatmul.bf16.gmra.mxu0 %v388
      %v4288 = vpop.f32.mrf.mxu0
      %v4289 = vadd.f32 0.0, %v4288
      %v4290 = vpop.f32.mrf.mxu0
      %v4291 = vadd.f32 0.0, %v4290
      %4292 = vmatmul.bf16.gmra.mxu0 %v389
      %v4293 = vpop.f32.mrf.mxu0
      %v4294 = vadd.f32 0.0, %v4293
      %v4295 = vpop.f32.mrf.mxu0
      %v4296 = vadd.f32 0.0, %v4295
      %4297 = vmatmul.bf16.gmra.mxu0 %v390
      %v4298 = vpop.f32.mrf.mxu0
      %v4299 = vadd.f32 0.0, %v4298
      %v4300 = vpop.f32.mrf.mxu0
      %v4301 = vadd.f32 0.0, %v4300
      %4302 = vmatmul.bf16.gmra.mxu0 %v391
      %v4303 = vpop.f32.mrf.mxu0
      %v4304 = vadd.f32 0.0, %v4303
      %v4305 = vpop.f32.mrf.mxu0
      %v4306 = vadd.f32 0.0, %v4305
      %4307 = vmatmul.bf16.gmra.mxu0 %v392
      %v4308 = vpop.f32.mrf.mxu0
      %v4309 = vadd.f32 0.0, %v4308
      %v4310 = vpop.f32.mrf.mxu0
      %v4311 = vadd.f32 0.0, %v4310
      %4312 = vmatmul.bf16.gmra.mxu0 %v393
      %v4313 = vpop.f32.mrf.mxu0
      %v4314 = vadd.f32 0.0, %v4313
      %v4315 = vpop.f32.mrf.mxu0
      %v4316 = vadd.f32 0.0, %v4315
      %4317 = vmatmul.bf16.gmra.mxu0 %v394
      %v4318 = vpop.f32.mrf.mxu0
      %v4319 = vadd.f32 0.0, %v4318
      %v4320 = vpop.f32.mrf.mxu0
      %v4321 = vadd.f32 0.0, %v4320
      %4322 = vmatmul.bf16.gmra.mxu0 %v395
      %v4323 = vpop.f32.mrf.mxu0
      %v4324 = vadd.f32 0.0, %v4323
      %v4325 = vpop.f32.mrf.mxu0
      %v4326 = vadd.f32 0.0, %v4325
      %4327 = vmatmul.bf16.gmra.mxu0 %v396
      %v4328 = vpop.f32.mrf.mxu0
      %v4329 = vadd.f32 0.0, %v4328
      %v4330 = vpop.f32.mrf.mxu0
      %v4331 = vadd.f32 0.0, %v4330
      %4332 = vmatmul.bf16.gmra.mxu0 %v397
      %v4333 = vpop.f32.mrf.mxu0
      %v4334 = vadd.f32 0.0, %v4333
      %v4335 = vpop.f32.mrf.mxu0
      %v4336 = vadd.f32 0.0, %v4335
      %4337 = vmatmul.bf16.gmra.mxu0 %v398
      %v4338 = vpop.f32.mrf.mxu0
      %v4339 = vadd.f32 0.0, %v4338
      %v4340 = vpop.f32.mrf.mxu0
      %v4341 = vadd.f32 0.0, %v4340
      %4342 = vmatmul.bf16.gmra.mxu0 %v399
      %v4343 = vpop.f32.mrf.mxu0
      %v4344 = vadd.f32 0.0, %v4343
      %v4345 = vpop.f32.mrf.mxu0
      %v4346 = vadd.f32 0.0, %v4345
      %4347 = vmatmul.bf16.gmra.mxu0 %v400
      %v4348 = vpop.f32.mrf.mxu0
      %v4349 = vadd.f32 0.0, %v4348
      %v4350 = vpop.f32.mrf.mxu0
      %v4351 = vadd.f32 0.0, %v4350
      %4352 = vmatmul.bf16.gmra.mxu0 %v401
      %v4353 = vpop.f32.mrf.mxu0
      %v4354 = vadd.f32 0.0, %v4353
      %v4355 = vpop.f32.mrf.mxu0
      %v4356 = vadd.f32 0.0, %v4355
      %4357 = vmatmul.bf16.gmra.mxu0 %v402
      %v4358 = vpop.f32.mrf.mxu0
      %v4359 = vadd.f32 0.0, %v4358
      %v4360 = vpop.f32.mrf.mxu0
      %v4361 = vadd.f32 0.0, %v4360
      %4362 = vmatmul.bf16.gmra.mxu0 %v403
      %v4363 = vpop.f32.mrf.mxu0
      %v4364 = vadd.f32 0.0, %v4363
      %v4365 = vpop.f32.mrf.mxu0
      %v4366 = vadd.f32 0.0, %v4365
      %4367 = vmatmul.bf16.gmra.mxu0 %v404
      %v4368 = vpop.f32.mrf.mxu0
      %v4369 = vadd.f32 0.0, %v4368
      %v4370 = vpop.f32.mrf.mxu0
      %v4371 = vadd.f32 0.0, %v4370
      %4372 = vmatmul.bf16.gmra.mxu0 %v405
      %v4373 = vpop.f32.mrf.mxu0
      %v4374 = vadd.f32 0.0, %v4373
      %v4375 = vpop.f32.mrf.mxu0
      %v4376 = vadd.f32 0.0, %v4375
      %4377 = vdwg.mxu0
      %v4386 = vunpack.c.l.b16 %v4104
      %v4387 = vunpack.c.l.b16 %v4105
      %v4388 = vunpack.c.l.b16 %v4106
      %v4389 = vunpack.c.l.b16 %v4107
      %v4390 = vunpack.c.l.b16 %v4108
      %v4391 = vunpack.c.l.b16 %v4109
      %v4392 = vunpack.c.l.b16 %v4110
      %v4393 = vunpack.c.l.b16 %v4111
      %v4394 = vpack.c.b16 %v4387, %v4386
      %v4395 = vpack.c.b16 %v4389, %v4388
      %v4396 = vpack.c.b16 %v4391, %v4390
      %v4397 = vpack.c.b16 %v4393, %v4392
      %v4403 = vsel %vm772, %v4112, 0
      %v4406 = vsel %vm772, %v4113, 0
      %v4409 = vsel %vm772, %v4114, 0
      %v4412 = vsel %vm772, %v4115, 0
      %v4415 = vsel %vm772, %v4116, 0
      %v4418 = vsel %vm772, %v4117, 0
      %v4421 = vsel %vm772, %v4118, 0
      %v4424 = vsel %vm772, %v4119, 0
      %v4427 = vsel %vm772, %v4120, 0
      %v4430 = vsel %vm772, %v4121, 0
      %v4433 = vsel %vm772, %v4122, 0
      %v4436 = vsel %vm772, %v4123, 0
      %v4439 = vsel %vm772, %v4124, 0
      %v4442 = vsel %vm772, %v4125, 0
      %v4445 = vsel %vm772, %v4126, 0
      %v4448 = vsel %vm772, %v4127, 0
      %v4451 = vsel %vm772, %v4128, 0
      %v4454 = vsel %vm772, %v4129, 0
      %v4457 = vsel %vm772, %v4130, 0
      %v4460 = vsel %vm772, %v4131, 0
      %v4463 = vsel %vm772, %v4132, 0
      %v4466 = vsel %vm772, %v4133, 0
      %v4469 = vsel %vm772, %v4134, 0
      %v4472 = vsel %vm772, %v4135, 0
      %v4475 = vsel %vm772, %v4136, 0
      %v4478 = vsel %vm772, %v4137, 0
      %v4481 = vsel %vm772, %v4138, 0
      %v4484 = vsel %vm772, %v4139, 0
      %v4487 = vsel %vm772, %v4140, 0
      %v4490 = vsel %vm772, %v4141, 0
      %v4493 = vsel %vm772, %v4142, 0
      %v4496 = vsel %vm772, %v4143, 0
      %4498 = vmatpush.bf16.msra.mxu0 0
      %4499 = vmatpush.bf16.msra.mxu0 0
      %4500 = vmatpush.bf16.msra.mxu0 0
      %4501 = vmatpush.bf16.msra.mxu0 0
      %4502 = vmatpush.bf16.msra.mxu0 %v4397
      %4503 = vmatpush.bf16.msra.mxu0 %v4396
      %4504 = vmatpush.bf16.msra.mxu0 %v4395
      %4505 = vmatpush.bf16.msra.mxu0 %v4394
      %4506 = vmatmul.bf16.gmra.mxu0 %v4403
      %v4507 = vpop.f32.mrf.mxu0
      %v4508 = vadd.f32 %v4219, %v4507
      %v4509 = vpop.f32.mrf.mxu0
      %v4510 = vadd.f32 %v4221, %v4509
      %4511 = vmatmul.bf16.gmra.mxu0 %v4406
      %v4512 = vpop.f32.mrf.mxu0
      %v4513 = vadd.f32 %v4224, %v4512
      %v4514 = vpop.f32.mrf.mxu0
      %v4515 = vadd.f32 %v4226, %v4514
      %4516 = vmatmul.bf16.gmra.mxu0 %v4409
      %v4517 = vpop.f32.mrf.mxu0
      %v4518 = vadd.f32 %v4229, %v4517
      %v4519 = vpop.f32.mrf.mxu0
      %v4520 = vadd.f32 %v4231, %v4519
      %4521 = vmatmul.bf16.gmra.mxu0 %v4412
      %v4522 = vpop.f32.mrf.mxu0
      %v4523 = vadd.f32 %v4234, %v4522
      %v4524 = vpop.f32.mrf.mxu0
      %v4525 = vadd.f32 %v4236, %v4524
      %4526 = vmatmul.bf16.gmra.mxu0 %v4415
      %v4527 = vpop.f32.mrf.mxu0
      %v4528 = vadd.f32 %v4239, %v4527
      %v4529 = vpop.f32.mrf.mxu0
      %v4530 = vadd.f32 %v4241, %v4529
      %4531 = vmatmul.bf16.gmra.mxu0 %v4418
      %v4532 = vpop.f32.mrf.mxu0
      %v4533 = vadd.f32 %v4244, %v4532
      %v4534 = vpop.f32.mrf.mxu0
      %v4535 = vadd.f32 %v4246, %v4534
      %4536 = vmatmul.bf16.gmra.mxu0 %v4421
      %v4537 = vpop.f32.mrf.mxu0
      %v4538 = vadd.f32 %v4249, %v4537
      %v4539 = vpop.f32.mrf.mxu0
      %v4540 = vadd.f32 %v4251, %v4539
      %4541 = vmatmul.bf16.gmra.mxu0 %v4424
      %v4542 = vpop.f32.mrf.mxu0
      %v4543 = vadd.f32 %v4254, %v4542
      %v4544 = vpop.f32.mrf.mxu0
      %v4545 = vadd.f32 %v4256, %v4544
      %4546 = vmatmul.bf16.gmra.mxu0 %v4427
      %v4547 = vpop.f32.mrf.mxu0
      %v4548 = vadd.f32 %v4259, %v4547
      %v4549 = vpop.f32.mrf.mxu0
      %v4550 = vadd.f32 %v4261, %v4549
      %4551 = vmatmul.bf16.gmra.mxu0 %v4430
      %v4552 = vpop.f32.mrf.mxu0
      %v4553 = vadd.f32 %v4264, %v4552
      %v4554 = vpop.f32.mrf.mxu0
      %v4555 = vadd.f32 %v4266, %v4554
      %4556 = vmatmul.bf16.gmra.mxu0 %v4433
      %v4557 = vpop.f32.mrf.mxu0
      %v4558 = vadd.f32 %v4269, %v4557
      %v4559 = vpop.f32.mrf.mxu0
      %v4560 = vadd.f32 %v4271, %v4559
      %4561 = vmatmul.bf16.gmra.mxu0 %v4436
      %v4562 = vpop.f32.mrf.mxu0
      %v4563 = vadd.f32 %v4274, %v4562
      %v4564 = vpop.f32.mrf.mxu0
      %v4565 = vadd.f32 %v4276, %v4564
      %4566 = vmatmul.bf16.gmra.mxu0 %v4439
      %v4567 = vpop.f32.mrf.mxu0
      %v4568 = vadd.f32 %v4279, %v4567
      %v4569 = vpop.f32.mrf.mxu0
      %v4570 = vadd.f32 %v4281, %v4569
      %4571 = vmatmul.bf16.gmra.mxu0 %v4442
      %v4572 = vpop.f32.mrf.mxu0
      %v4573 = vadd.f32 %v4284, %v4572
      %v4574 = vpop.f32.mrf.mxu0
      %v4575 = vadd.f32 %v4286, %v4574
      %4576 = vmatmul.bf16.gmra.mxu0 %v4445
      %v4577 = vpop.f32.mrf.mxu0
      %v4578 = vadd.f32 %v4289, %v4577
      %v4579 = vpop.f32.mrf.mxu0
      %v4580 = vadd.f32 %v4291, %v4579
      %4581 = vmatmul.bf16.gmra.mxu0 %v4448
      %v4582 = vpop.f32.mrf.mxu0
      %v4583 = vadd.f32 %v4294, %v4582
      %v4584 = vpop.f32.mrf.mxu0
      %v4585 = vadd.f32 %v4296, %v4584
      %4586 = vmatmul.bf16.gmra.mxu0 %v4451
      %v4587 = vpop.f32.mrf.mxu0
      %v4588 = vadd.f32 %v4299, %v4587
      %v4589 = vpop.f32.mrf.mxu0
      %v4590 = vadd.f32 %v4301, %v4589
      %4591 = vmatmul.bf16.gmra.mxu0 %v4454
      %v4592 = vpop.f32.mrf.mxu0
      %v4593 = vadd.f32 %v4304, %v4592
      %v4594 = vpop.f32.mrf.mxu0
      %v4595 = vadd.f32 %v4306, %v4594
      %4596 = vmatmul.bf16.gmra.mxu0 %v4457
      %v4597 = vpop.f32.mrf.mxu0
      %v4598 = vadd.f32 %v4309, %v4597
      %v4599 = vpop.f32.mrf.mxu0
      %v4600 = vadd.f32 %v4311, %v4599
      %4601 = vmatmul.bf16.gmra.mxu0 %v4460
      %v4602 = vpop.f32.mrf.mxu0
      %v4603 = vadd.f32 %v4314, %v4602
      %v4604 = vpop.f32.mrf.mxu0
      %v4605 = vadd.f32 %v4316, %v4604
      %4606 = vmatmul.bf16.gmra.mxu0 %v4463
      %v4607 = vpop.f32.mrf.mxu0
      %v4608 = vadd.f32 %v4319, %v4607
      %v4609 = vpop.f32.mrf.mxu0
      %v4610 = vadd.f32 %v4321, %v4609
      %4611 = vmatmul.bf16.gmra.mxu0 %v4466
      %v4612 = vpop.f32.mrf.mxu0
      %v4613 = vadd.f32 %v4324, %v4612
      %v4614 = vpop.f32.mrf.mxu0
      %v4615 = vadd.f32 %v4326, %v4614
      %4616 = vmatmul.bf16.gmra.mxu0 %v4469
      %v4617 = vpop.f32.mrf.mxu0
      %v4618 = vadd.f32 %v4329, %v4617
      %v4619 = vpop.f32.mrf.mxu0
      %v4620 = vadd.f32 %v4331, %v4619
      %4621 = vmatmul.bf16.gmra.mxu0 %v4472
      %v4622 = vpop.f32.mrf.mxu0
      %v4623 = vadd.f32 %v4334, %v4622
      %v4624 = vpop.f32.mrf.mxu0
      %v4625 = vadd.f32 %v4336, %v4624
      %4626 = vmatmul.bf16.gmra.mxu0 %v4475
      %v4627 = vpop.f32.mrf.mxu0
      %v4628 = vadd.f32 %v4339, %v4627
      %v4629 = vpop.f32.mrf.mxu0
      %v4630 = vadd.f32 %v4341, %v4629
      %4631 = vmatmul.bf16.gmra.mxu0 %v4478
      %v4632 = vpop.f32.mrf.mxu0
      %v4633 = vadd.f32 %v4344, %v4632
      %v4634 = vpop.f32.mrf.mxu0
      %v4635 = vadd.f32 %v4346, %v4634
      %4636 = vmatmul.bf16.gmra.mxu0 %v4481
      %v4637 = vpop.f32.mrf.mxu0
      %v4638 = vadd.f32 %v4349, %v4637
      %v4639 = vpop.f32.mrf.mxu0
      %v4640 = vadd.f32 %v4351, %v4639
      %4641 = vmatmul.bf16.gmra.mxu0 %v4484
      %v4642 = vpop.f32.mrf.mxu0
      %v4643 = vadd.f32 %v4354, %v4642
      %v4644 = vpop.f32.mrf.mxu0
      %v4645 = vadd.f32 %v4356, %v4644
      %4646 = vmatmul.bf16.gmra.mxu0 %v4487
      %v4647 = vpop.f32.mrf.mxu0
      %v4648 = vadd.f32 %v4359, %v4647
      %v4649 = vpop.f32.mrf.mxu0
      %v4650 = vadd.f32 %v4361, %v4649
      %4651 = vmatmul.bf16.gmra.mxu0 %v4490
      %v4652 = vpop.f32.mrf.mxu0
      %v4653 = vadd.f32 %v4364, %v4652
      %v4654 = vpop.f32.mrf.mxu0
      %v4655 = vadd.f32 %v4366, %v4654
      %4656 = vmatmul.bf16.gmra.mxu0 %v4493
      %v4657 = vpop.f32.mrf.mxu0
      %v4658 = vadd.f32 %v4369, %v4657
      %v4659 = vpop.f32.mrf.mxu0
      %v4660 = vadd.f32 %v4371, %v4659
      %4661 = vmatmul.bf16.gmra.mxu0 %v4496
      %v4662 = vpop.f32.mrf.mxu0
      %v4663 = vadd.f32 %v4374, %v4662
      %v4664 = vpop.f32.mrf.mxu0
      %v4665 = vadd.f32 %v4376, %v4664
      %4666 = vdwg.mxu0
      %v4667 = vperm.slane %v407, 0
      %v4668 = vadd.f32 %v4508, %v4667
      %v4669 = vadd.f32 %v4510, %v4667
      %v4670 = vadd.f32 %v4513, %v4667
      %v4671 = vadd.f32 %v4515, %v4667
      %v4672 = vadd.f32 %v4518, %v4667
      %v4673 = vadd.f32 %v4520, %v4667
      %v4674 = vadd.f32 %v4523, %v4667
      %v4675 = vadd.f32 %v4525, %v4667
      %v4676 = vadd.f32 %v4528, %v4667
      %v4677 = vadd.f32 %v4530, %v4667
      %v4678 = vadd.f32 %v4533, %v4667
      %v4679 = vadd.f32 %v4535, %v4667
      %v4680 = vadd.f32 %v4538, %v4667
      %v4681 = vadd.f32 %v4540, %v4667
      %v4682 = vadd.f32 %v4543, %v4667
      %v4683 = vadd.f32 %v4545, %v4667
      %v4684 = vadd.f32 %v4548, %v4667
      %v4685 = vadd.f32 %v4550, %v4667
      %v4686 = vadd.f32 %v4553, %v4667
      %v4687 = vadd.f32 %v4555, %v4667
      %v4688 = vadd.f32 %v4558, %v4667
      %v4689 = vadd.f32 %v4560, %v4667
      %v4690 = vadd.f32 %v4563, %v4667
      %v4691 = vadd.f32 %v4565, %v4667
      %v4692 = vadd.f32 %v4568, %v4667
      %v4693 = vadd.f32 %v4570, %v4667
      %v4694 = vadd.f32 %v4573, %v4667
      %v4695 = vadd.f32 %v4575, %v4667
      %v4696 = vadd.f32 %v4578, %v4667
      %v4697 = vadd.f32 %v4580, %v4667
      %v4698 = vadd.f32 %v4583, %v4667
      %v4699 = vadd.f32 %v4585, %v4667
      %v4700 = vadd.f32 %v4588, %v4667
      %v4701 = vadd.f32 %v4590, %v4667
      %v4702 = vadd.f32 %v4593, %v4667
      %v4703 = vadd.f32 %v4595, %v4667
      %v4704 = vadd.f32 %v4598, %v4667
      %v4705 = vadd.f32 %v4600, %v4667
      %v4706 = vadd.f32 %v4603, %v4667
      %v4707 = vadd.f32 %v4605, %v4667
      %v4708 = vadd.f32 %v4608, %v4667
      %v4709 = vadd.f32 %v4610, %v4667
      %v4710 = vadd.f32 %v4613, %v4667
      %v4711 = vadd.f32 %v4615, %v4667
      %v4712 = vadd.f32 %v4618, %v4667
      %v4713 = vadd.f32 %v4620, %v4667
      %v4714 = vadd.f32 %v4623, %v4667
      %v4715 = vadd.f32 %v4625, %v4667
      %v4716 = vadd.f32 %v4628, %v4667
      %v4717 = vadd.f32 %v4630, %v4667
      %v4718 = vadd.f32 %v4633, %v4667
      %v4719 = vadd.f32 %v4635, %v4667
      %v4720 = vadd.f32 %v4638, %v4667
      %v4721 = vadd.f32 %v4640, %v4667
      %v4722 = vadd.f32 %v4643, %v4667
      %v4723 = vadd.f32 %v4645, %v4667
      %v4724 = vadd.f32 %v4648, %v4667
      %v4725 = vadd.f32 %v4650, %v4667
      %v4726 = vadd.f32 %v4653, %v4667
      %v4727 = vadd.f32 %v4655, %v4667
      %v4728 = vadd.f32 %v4658, %v4667
      %v4729 = vadd.f32 %v4660, %v4667
      %v4730 = vadd.f32 %v4663, %v4667
      %v4731 = vadd.f32 %v4665, %v4667
      %v4732 = vmax.f32 %v4668, 0.0
      %v4733 = vmax.f32 %v4669, 0.0
      %v4734 = vmax.f32 %v4670, 0.0
      %v4735 = vmax.f32 %v4671, 0.0
      %v4736 = vmax.f32 %v4672, 0.0
      %v4737 = vmax.f32 %v4673, 0.0
      %v4738 = vmax.f32 %v4674, 0.0
      %v4739 = vmax.f32 %v4675, 0.0
      %v4740 = vmax.f32 %v4676, 0.0
      %v4741 = vmax.f32 %v4677, 0.0
      %v4742 = vmax.f32 %v4678, 0.0
      %v4743 = vmax.f32 %v4679, 0.0
      %v4744 = vmax.f32 %v4680, 0.0
      %v4745 = vmax.f32 %v4681, 0.0
      %v4746 = vmax.f32 %v4682, 0.0
      %v4747 = vmax.f32 %v4683, 0.0
      %v4748 = vmax.f32 %v4684, 0.0
      %v4749 = vmax.f32 %v4685, 0.0
      %v4750 = vmax.f32 %v4686, 0.0
      %v4751 = vmax.f32 %v4687, 0.0
      %v4752 = vmax.f32 %v4688, 0.0
      %v4753 = vmax.f32 %v4689, 0.0
      %v4754 = vmax.f32 %v4690, 0.0
      %v4755 = vmax.f32 %v4691, 0.0
      %v4756 = vmax.f32 %v4692, 0.0
      %v4757 = vmax.f32 %v4693, 0.0
      %v4758 = vmax.f32 %v4694, 0.0
      %v4759 = vmax.f32 %v4695, 0.0
      %v4760 = vmax.f32 %v4696, 0.0
      %v4761 = vmax.f32 %v4697, 0.0
      %v4762 = vmax.f32 %v4698, 0.0
      %v4763 = vmax.f32 %v4699, 0.0
      %v4764 = vmax.f32 %v4700, 0.0
      %v4765 = vmax.f32 %v4701, 0.0
      %v4766 = vmax.f32 %v4702, 0.0
      %v4767 = vmax.f32 %v4703, 0.0
      %v4768 = vmax.f32 %v4704, 0.0
      %v4769 = vmax.f32 %v4705, 0.0
      %v4770 = vmax.f32 %v4706, 0.0
      %v4771 = vmax.f32 %v4707, 0.0
      %v4772 = vmax.f32 %v4708, 0.0
      %v4773 = vmax.f32 %v4709, 0.0
      %v4774 = vmax.f32 %v4710, 0.0
      %v4775 = vmax.f32 %v4711, 0.0
      %v4776 = vmax.f32 %v4712, 0.0
      %v4777 = vmax.f32 %v4713, 0.0
      %v4778 = vmax.f32 %v4714, 0.0
      %v4779 = vmax.f32 %v4715, 0.0
      %v4780 = vmax.f32 %v4716, 0.0
      %v4781 = vmax.f32 %v4717, 0.0
      %v4782 = vmax.f32 %v4718, 0.0
      %v4783 = vmax.f32 %v4719, 0.0
      %v4784 = vmax.f32 %v4720, 0.0
      %v4785 = vmax.f32 %v4721, 0.0
      %v4786 = vmax.f32 %v4722, 0.0
      %v4787 = vmax.f32 %v4723, 0.0
      %v4788 = vmax.f32 %v4724, 0.0
      %v4789 = vmax.f32 %v4725, 0.0
      %v4790 = vmax.f32 %v4726, 0.0
      %v4791 = vmax.f32 %v4727, 0.0
      %v4792 = vmax.f32 %v4728, 0.0
      %v4793 = vmax.f32 %v4729, 0.0
      %v4794 = vmax.f32 %v4730, 0.0
      %v4795 = vmax.f32 %v4731, 0.0
      %v4796 = vld [vmem:[%s4] sm:$0xf]
      %v4797 = vld [vmem:[%s4 + $0x4] sm:$0xf]
      %v4798 = vld [vmem:[%s4 + $0x8] sm:$0xf]
      %v4799 = vld [vmem:[%s4 + $0xc] sm:$0xf]
      %v4800 = vld [vmem:[%s4 + $0x10] sm:$0xf]
      %v4801 = vld [vmem:[%s4 + $0x14] sm:$0xf]
      %v4802 = vld [vmem:[%s4 + $0x18] sm:$0xf]
      %v4803 = vld [vmem:[%s4 + $0x1c] sm:$0xf]
      %v4804 = vpack.c.bf16 %v4733, %v4732
      %v4805 = vpack.c.bf16 %v4735, %v4734
      %v4806 = vpack.c.bf16 %v4737, %v4736
      %v4807 = vpack.c.bf16 %v4739, %v4738
      %v4808 = vpack.c.bf16 %v4741, %v4740
      %v4809 = vpack.c.bf16 %v4743, %v4742
      %v4810 = vpack.c.bf16 %v4745, %v4744
      %v4811 = vpack.c.bf16 %v4747, %v4746
      %v4812 = vpack.c.bf16 %v4749, %v4748
      %v4813 = vpack.c.bf16 %v4751, %v4750
      %v4814 = vpack.c.bf16 %v4753, %v4752
      %v4815 = vpack.c.bf16 %v4755, %v4754
      %v4816 = vpack.c.bf16 %v4757, %v4756
      %v4817 = vpack.c.bf16 %v4759, %v4758
      %v4818 = vpack.c.bf16 %v4761, %v4760
      %v4819 = vpack.c.bf16 %v4763, %v4762
      %v4820 = vpack.c.bf16 %v4765, %v4764
      %v4821 = vpack.c.bf16 %v4767, %v4766
      %v4822 = vpack.c.bf16 %v4769, %v4768
      %v4823 = vpack.c.bf16 %v4771, %v4770
      %v4824 = vpack.c.bf16 %v4773, %v4772
      %v4825 = vpack.c.bf16 %v4775, %v4774
      %v4826 = vpack.c.bf16 %v4777, %v4776
      %v4827 = vpack.c.bf16 %v4779, %v4778
      %v4828 = vpack.c.bf16 %v4781, %v4780
      %v4829 = vpack.c.bf16 %v4783, %v4782
      %v4830 = vpack.c.bf16 %v4785, %v4784
      %v4831 = vpack.c.bf16 %v4787, %v4786
      %v4832 = vpack.c.bf16 %v4789, %v4788
      %v4833 = vpack.c.bf16 %v4791, %v4790
      %v4834 = vpack.c.bf16 %v4793, %v4792
      %v4835 = vpack.c.bf16 %v4795, %v4794
      %v4836 = vperm.slane %v408, 0
      %v4845 = vunpack.c.l.b16 %v4796
      %v4846 = vunpack.c.l.b16 %v4797
      %v4847 = vunpack.c.l.b16 %v4798
      %v4848 = vunpack.c.l.b16 %v4799
      %v4849 = vunpack.c.l.b16 %v4800
      %v4850 = vunpack.c.l.b16 %v4801
      %v4851 = vunpack.c.l.b16 %v4802
      %v4852 = vunpack.c.l.b16 %v4803
      %v4853 = vpack.c.b16 %v4846, %v4845
      %v4854 = vpack.c.b16 %v4848, %v4847
      %v4855 = vpack.c.b16 %v4850, %v4849
      %v4856 = vpack.c.b16 %v4852, %v4851
      %v4862 = vsel %vm772, %v4804, 0
      %v4865 = vsel %vm772, %v4805, 0
      %v4868 = vsel %vm772, %v4806, 0
      %v4871 = vsel %vm772, %v4807, 0
      %v4874 = vsel %vm772, %v4808, 0
      %v4877 = vsel %vm772, %v4809, 0
      %v4880 = vsel %vm772, %v4810, 0
      %v4883 = vsel %vm772, %v4811, 0
      %v4886 = vsel %vm772, %v4812, 0
      %v4889 = vsel %vm772, %v4813, 0
      %v4892 = vsel %vm772, %v4814, 0
      %v4895 = vsel %vm772, %v4815, 0
      %v4898 = vsel %vm772, %v4816, 0
      %v4901 = vsel %vm772, %v4817, 0
      %v4904 = vsel %vm772, %v4818, 0
      %v4907 = vsel %vm772, %v4819, 0
      %v4910 = vsel %vm772, %v4820, 0
      %v4913 = vsel %vm772, %v4821, 0
      %v4916 = vsel %vm772, %v4822, 0
      %v4919 = vsel %vm772, %v4823, 0
      %v4922 = vsel %vm772, %v4824, 0
      %v4925 = vsel %vm772, %v4825, 0
      %v4928 = vsel %vm772, %v4826, 0
      %v4931 = vsel %vm772, %v4827, 0
      %v4934 = vsel %vm772, %v4828, 0
      %v4937 = vsel %vm772, %v4829, 0
      %v4940 = vsel %vm772, %v4830, 0
      %v4943 = vsel %vm772, %v4831, 0
      %v4946 = vsel %vm772, %v4832, 0
      %v4949 = vsel %vm772, %v4833, 0
      %v4952 = vsel %vm772, %v4834, 0
      %v4955 = vsel %vm772, %v4835, 0
      %4957 = vmatpush.bf16.msra.mxu0 0
      %4958 = vmatpush.bf16.msra.mxu0 0
      %4959 = vmatpush.bf16.msra.mxu0 0
      %4960 = vmatpush.bf16.msra.mxu0 0
      %4961 = vmatpush.bf16.msra.mxu0 %v4856
      %4962 = vmatpush.bf16.msra.mxu0 %v4855
      %4963 = vmatpush.bf16.msra.mxu0 %v4854
      %4964 = vmatpush.bf16.msra.mxu0 %v4853
      %4965 = vmatmul.bf16.gmra.mxu0 %v4862
      %v4966 = vpop.f32.mrf.mxu0
      %v4967 = vadd.f32 %v4836, %v4966
      %v4968 = vpop.f32.mrf.mxu0
      %v4969 = vadd.f32 %v4836, %v4968
      %4970 = vmatmul.bf16.gmra.mxu0 %v4865
      %v4971 = vpop.f32.mrf.mxu0
      %v4972 = vadd.f32 %v4836, %v4971
      %v4973 = vpop.f32.mrf.mxu0
      %v4974 = vadd.f32 %v4836, %v4973
      %4975 = vmatmul.bf16.gmra.mxu0 %v4868
      %v4976 = vpop.f32.mrf.mxu0
      %v4977 = vadd.f32 %v4836, %v4976
      %v4978 = vpop.f32.mrf.mxu0
      %v4979 = vadd.f32 %v4836, %v4978
      %4980 = vmatmul.bf16.gmra.mxu0 %v4871
      %v4981 = vpop.f32.mrf.mxu0
      %v4982 = vadd.f32 %v4836, %v4981
      %v4983 = vpop.f32.mrf.mxu0
      %v4984 = vadd.f32 %v4836, %v4983
      %4985 = vmatmul.bf16.gmra.mxu0 %v4874
      %v4986 = vpop.f32.mrf.mxu0
      %v4987 = vadd.f32 %v4836, %v4986
      %v4988 = vpop.f32.mrf.mxu0
      %v4989 = vadd.f32 %v4836, %v4988
      %4990 = vmatmul.bf16.gmra.mxu0 %v4877
      %v4991 = vpop.f32.mrf.mxu0
      %v4992 = vadd.f32 %v4836, %v4991
      %v4993 = vpop.f32.mrf.mxu0
      %v4994 = vadd.f32 %v4836, %v4993
      %4995 = vmatmul.bf16.gmra.mxu0 %v4880
      %v4996 = vpop.f32.mrf.mxu0
      %v4997 = vadd.f32 %v4836, %v4996
      %v4998 = vpop.f32.mrf.mxu0
      %v4999 = vadd.f32 %v4836, %v4998
      %5000 = vmatmul.bf16.gmra.mxu0 %v4883
      %v5001 = vpop.f32.mrf.mxu0
      %v5002 = vadd.f32 %v4836, %v5001
      %v5003 = vpop.f32.mrf.mxu0
      %v5004 = vadd.f32 %v4836, %v5003
      %5005 = vmatmul.bf16.gmra.mxu0 %v4886
      %v5006 = vpop.f32.mrf.mxu0
      %v5007 = vadd.f32 %v4836, %v5006
      %v5008 = vpop.f32.mrf.mxu0
      %v5009 = vadd.f32 %v4836, %v5008
      %5010 = vmatmul.bf16.gmra.mxu0 %v4889
      %v5011 = vpop.f32.mrf.mxu0
      %v5012 = vadd.f32 %v4836, %v5011
      %v5013 = vpop.f32.mrf.mxu0
      %v5014 = vadd.f32 %v4836, %v5013
      %5015 = vmatmul.bf16.gmra.mxu0 %v4892
      %v5016 = vpop.f32.mrf.mxu0
      %v5017 = vadd.f32 %v4836, %v5016
      %v5018 = vpop.f32.mrf.mxu0
      %v5019 = vadd.f32 %v4836, %v5018
      %5020 = vmatmul.bf16.gmra.mxu0 %v4895
      %v5021 = vpop.f32.mrf.mxu0
      %v5022 = vadd.f32 %v4836, %v5021
      %v5023 = vpop.f32.mrf.mxu0
      %v5024 = vadd.f32 %v4836, %v5023
      %5025 = vmatmul.bf16.gmra.mxu0 %v4898
      %v5026 = vpop.f32.mrf.mxu0
      %v5027 = vadd.f32 %v4836, %v5026
      %v5028 = vpop.f32.mrf.mxu0
      %v5029 = vadd.f32 %v4836, %v5028
      %5030 = vmatmul.bf16.gmra.mxu0 %v4901
      %v5031 = vpop.f32.mrf.mxu0
      %v5032 = vadd.f32 %v4836, %v5031
      %v5033 = vpop.f32.mrf.mxu0
      %v5034 = vadd.f32 %v4836, %v5033
      %5035 = vmatmul.bf16.gmra.mxu0 %v4904
      %v5036 = vpop.f32.mrf.mxu0
      %v5037 = vadd.f32 %v4836, %v5036
      %v5038 = vpop.f32.mrf.mxu0
      %v5039 = vadd.f32 %v4836, %v5038
      %5040 = vmatmul.bf16.gmra.mxu0 %v4907
      %v5041 = vpop.f32.mrf.mxu0
      %v5042 = vadd.f32 %v4836, %v5041
      %v5043 = vpop.f32.mrf.mxu0
      %v5044 = vadd.f32 %v4836, %v5043
      %5045 = vmatmul.bf16.gmra.mxu0 %v4910
      %v5046 = vpop.f32.mrf.mxu0
      %v5047 = vadd.f32 %v4836, %v5046
      %v5048 = vpop.f32.mrf.mxu0
      %v5049 = vadd.f32 %v4836, %v5048
      %5050 = vmatmul.bf16.gmra.mxu0 %v4913
      %v5051 = vpop.f32.mrf.mxu0
      %v5052 = vadd.f32 %v4836, %v5051
      %v5053 = vpop.f32.mrf.mxu0
      %v5054 = vadd.f32 %v4836, %v5053
      %5055 = vmatmul.bf16.gmra.mxu0 %v4916
      %v5056 = vpop.f32.mrf.mxu0
      %v5057 = vadd.f32 %v4836, %v5056
      %v5058 = vpop.f32.mrf.mxu0
      %v5059 = vadd.f32 %v4836, %v5058
      %5060 = vmatmul.bf16.gmra.mxu0 %v4919
      %v5061 = vpop.f32.mrf.mxu0
      %v5062 = vadd.f32 %v4836, %v5061
      %v5063 = vpop.f32.mrf.mxu0
      %v5064 = vadd.f32 %v4836, %v5063
      %5065 = vmatmul.bf16.gmra.mxu0 %v4922
      %v5066 = vpop.f32.mrf.mxu0
      %v5067 = vadd.f32 %v4836, %v5066
      %v5068 = vpop.f32.mrf.mxu0
      %v5069 = vadd.f32 %v4836, %v5068
      %5070 = vmatmul.bf16.gmra.mxu0 %v4925
      %v5071 = vpop.f32.mrf.mxu0
      %v5072 = vadd.f32 %v4836, %v5071
      %v5073 = vpop.f32.mrf.mxu0
      %v5074 = vadd.f32 %v4836, %v5073
      %5075 = vmatmul.bf16.gmra.mxu0 %v4928
      %v5076 = vpop.f32.mrf.mxu0
      %v5077 = vadd.f32 %v4836, %v5076
      %v5078 = vpop.f32.mrf.mxu0
      %v5079 = vadd.f32 %v4836, %v5078
      %5080 = vmatmul.bf16.gmra.mxu0 %v4931
      %v5081 = vpop.f32.mrf.mxu0
      %v5082 = vadd.f32 %v4836, %v5081
      %v5083 = vpop.f32.mrf.mxu0
      %v5084 = vadd.f32 %v4836, %v5083
      %5085 = vmatmul.bf16.gmra.mxu0 %v4934
      %v5086 = vpop.f32.mrf.mxu0
      %v5087 = vadd.f32 %v4836, %v5086
      %v5088 = vpop.f32.mrf.mxu0
      %v5089 = vadd.f32 %v4836, %v5088
      %5090 = vmatmul.bf16.gmra.mxu0 %v4937
      %v5091 = vpop.f32.mrf.mxu0
      %v5092 = vadd.f32 %v4836, %v5091
      %v5093 = vpop.f32.mrf.mxu0
      %v5094 = vadd.f32 %v4836, %v5093
      %5095 = vmatmul.bf16.gmra.mxu0 %v4940
      %v5096 = vpop.f32.mrf.mxu0
      %v5097 = vadd.f32 %v4836, %v5096
      %v5098 = vpop.f32.mrf.mxu0
      %v5099 = vadd.f32 %v4836, %v5098
      %5100 = vmatmul.bf16.gmra.mxu0 %v4943
      %v5101 = vpop.f32.mrf.mxu0
      %v5102 = vadd.f32 %v4836, %v5101
      %v5103 = vpop.f32.mrf.mxu0
      %v5104 = vadd.f32 %v4836, %v5103
      %5105 = vmatmul.bf16.gmra.mxu0 %v4946
      %v5106 = vpop.f32.mrf.mxu0
      %v5107 = vadd.f32 %v4836, %v5106
      %v5108 = vpop.f32.mrf.mxu0
      %v5109 = vadd.f32 %v4836, %v5108
      %5110 = vmatmul.bf16.gmra.mxu0 %v4949
      %v5111 = vpop.f32.mrf.mxu0
      %v5112 = vadd.f32 %v4836, %v5111
      %v5113 = vpop.f32.mrf.mxu0
      %v5114 = vadd.f32 %v4836, %v5113
      %5115 = vmatmul.bf16.gmra.mxu0 %v4952
      %v5116 = vpop.f32.mrf.mxu0
      %v5117 = vadd.f32 %v4836, %v5116
      %v5118 = vpop.f32.mrf.mxu0
      %v5119 = vadd.f32 %v4836, %v5118
      %5120 = vmatmul.bf16.gmra.mxu0 %v4955
      %v5121 = vpop.f32.mrf.mxu0
      %v5122 = vadd.f32 %v4836, %v5121
      %v5123 = vpop.f32.mrf.mxu0
      %v5124 = vadd.f32 %v4836, %v5123
      %5125 = vdwg.mxu0
      %v5126 = vxor.u32 %v4967, 2147483648
      %v5127 = vxor.u32 %v4969, 2147483648
      %v5128 = vxor.u32 %v4972, 2147483648
      %v5129 = vxor.u32 %v4974, 2147483648
      %v5130 = vxor.u32 %v4977, 2147483648
      %v5131 = vxor.u32 %v4979, 2147483648
      %v5132 = vxor.u32 %v4982, 2147483648
      %v5133 = vxor.u32 %v4984, 2147483648
      %v5134 = vxor.u32 %v4987, 2147483648
      %v5135 = vxor.u32 %v4989, 2147483648
      %v5136 = vxor.u32 %v4992, 2147483648
      %v5137 = vxor.u32 %v4994, 2147483648
      %v5138 = vxor.u32 %v4997, 2147483648
      %v5139 = vxor.u32 %v4999, 2147483648
      %v5140 = vxor.u32 %v5002, 2147483648
      %v5141 = vxor.u32 %v5004, 2147483648
      %v5142 = vxor.u32 %v5007, 2147483648
      %v5143 = vxor.u32 %v5009, 2147483648
      %v5144 = vxor.u32 %v5012, 2147483648
      %v5145 = vxor.u32 %v5014, 2147483648
      %v5146 = vxor.u32 %v5017, 2147483648
      %v5147 = vxor.u32 %v5019, 2147483648
      %v5148 = vxor.u32 %v5022, 2147483648
      %v5149 = vxor.u32 %v5024, 2147483648
      %v5150 = vxor.u32 %v5027, 2147483648
      %v5151 = vxor.u32 %v5029, 2147483648
      %v5152 = vxor.u32 %v5032, 2147483648
      %v5153 = vxor.u32 %v5034, 2147483648
      %v5154 = vxor.u32 %v5037, 2147483648
      %v5155 = vxor.u32 %v5039, 2147483648
      %v5156 = vxor.u32 %v5042, 2147483648
      %v5157 = vxor.u32 %v5044, 2147483648
      %v5158 = vxor.u32 %v5047, 2147483648
      %v5159 = vxor.u32 %v5049, 2147483648
      %v5160 = vxor.u32 %v5052, 2147483648
      %v5161 = vxor.u32 %v5054, 2147483648
      %v5162 = vxor.u32 %v5057, 2147483648
      %v5163 = vxor.u32 %v5059, 2147483648
      %v5164 = vxor.u32 %v5062, 2147483648
      %v5165 = vxor.u32 %v5064, 2147483648
      %v5166 = vxor.u32 %v5067, 2147483648
      %v5167 = vxor.u32 %v5069, 2147483648
      %v5168 = vxor.u32 %v5072, 2147483648
      %v5169 = vxor.u32 %v5074, 2147483648
      %v5170 = vxor.u32 %v5077, 2147483648
      %v5171 = vxor.u32 %v5079, 2147483648
      %v5172 = vxor.u32 %v5082, 2147483648
      %v5173 = vxor.u32 %v5084, 2147483648
      %v5174 = vxor.u32 %v5087, 2147483648
      %v5175 = vxor.u32 %v5089, 2147483648
      %v5176 = vxor.u32 %v5092, 2147483648
      %v5177 = vxor.u32 %v5094, 2147483648
      %v5178 = vxor.u32 %v5097, 2147483648
      %v5179 = vxor.u32 %v5099, 2147483648
      %v5180 = vxor.u32 %v5102, 2147483648
      %v5181 = vxor.u32 %v5104, 2147483648
      %v5182 = vxor.u32 %v5107, 2147483648
      %v5183 = vxor.u32 %v5109, 2147483648
      %v5184 = vxor.u32 %v5112, 2147483648
      %v5185 = vxor.u32 %v5114, 2147483648
      %v5186 = vxor.u32 %v5117, 2147483648
      %v5187 = vxor.u32 %v5119, 2147483648
      %v5188 = vxor.u32 %v5122, 2147483648
      %v5189 = vxor.u32 %v5124, 2147483648
      %v5190 = vmul.f32 %v5126, 1.442695
      %v5191 = vpow.pop %v5190
      %v5192 = vmul.f32 %v5127, 1.442695
      %v5193 = vpow.pop %v5192
      %v5194 = vmul.f32 %v5128, 1.442695
      %v5195 = vpow.pop %v5194
      %v5196 = vmul.f32 %v5129, 1.442695
      %v5197 = vpow.pop %v5196
      %v5198 = vmul.f32 %v5130, 1.442695
      %v5199 = vpow.pop %v5198
      %v5200 = vmul.f32 %v5131, 1.442695
      %v5201 = vpow.pop %v5200
      %v5202 = vmul.f32 %v5132, 1.442695
      %v5203 = vpow.pop %v5202
      %v5204 = vmul.f32 %v5133, 1.442695
      %v5205 = vpow.pop %v5204
      %v5206 = vmul.f32 %v5134, 1.442695
      %v5207 = vpow.pop %v5206
      %v5208 = vmul.f32 %v5135, 1.442695
      %v5209 = vpow.pop %v5208
      %v5210 = vmul.f32 %v5136, 1.442695
      %v5211 = vpow.pop %v5210
      %v5212 = vmul.f32 %v5137, 1.442695
      %v5213 = vpow.pop %v5212
      %v5214 = vmul.f32 %v5138, 1.442695
      %v5215 = vpow.pop %v5214
      %v5216 = vmul.f32 %v5139, 1.442695
      %v5217 = vpow.pop %v5216
      %v5218 = vmul.f32 %v5140, 1.442695
      %v5219 = vpow.pop %v5218
      %v5220 = vmul.f32 %v5141, 1.442695
      %v5221 = vpow.pop %v5220
      %v5222 = vmul.f32 %v5142, 1.442695
      %v5223 = vpow.pop %v5222
      %v5224 = vmul.f32 %v5143, 1.442695
      %v5225 = vpow.pop %v5224
      %v5226 = vmul.f32 %v5144, 1.442695
      %v5227 = vpow.pop %v5226
      %v5228 = vmul.f32 %v5145, 1.442695
      %v5229 = vpow.pop %v5228
      %v5230 = vmul.f32 %v5146, 1.442695
      %v5231 = vpow.pop %v5230
      %v5232 = vmul.f32 %v5147, 1.442695
      %v5233 = vpow.pop %v5232
      %v5234 = vmul.f32 %v5148, 1.442695
      %v5235 = vpow.pop %v5234
      %v5236 = vmul.f32 %v5149, 1.442695
      %v5237 = vpow.pop %v5236
      %v5238 = vmul.f32 %v5150, 1.442695
      %v5239 = vpow.pop %v5238
      %v5240 = vmul.f32 %v5151, 1.442695
      %v5241 = vpow.pop %v5240
      %v5242 = vmul.f32 %v5152, 1.442695
      %v5243 = vpow.pop %v5242
      %v5244 = vmul.f32 %v5153, 1.442695
      %v5245 = vpow.pop %v5244
      %v5246 = vmul.f32 %v5154, 1.442695
      %v5247 = vpow.pop %v5246
      %v5248 = vmul.f32 %v5155, 1.442695
      %v5249 = vpow.pop %v5248
      %v5250 = vmul.f32 %v5156, 1.442695
      %v5251 = vpow.pop %v5250
      %v5252 = vmul.f32 %v5157, 1.442695
      %v5253 = vpow.pop %v5252
      %v5254 = vmul.f32 %v5158, 1.442695
      %v5255 = vpow.pop %v5254
      %v5256 = vmul.f32 %v5159, 1.442695
      %v5257 = vpow.pop %v5256
      %v5258 = vmul.f32 %v5160, 1.442695
      %v5259 = vpow.pop %v5258
      %v5260 = vmul.f32 %v5161, 1.442695
      %v5261 = vpow.pop %v5260
      %v5262 = vmul.f32 %v5162, 1.442695
      %v5263 = vpow.pop %v5262
      %v5264 = vmul.f32 %v5163, 1.442695
      %v5265 = vpow.pop %v5264
      %v5266 = vmul.f32 %v5164, 1.442695
      %v5267 = vpow.pop %v5266
      %v5268 = vmul.f32 %v5165, 1.442695
      %v5269 = vpow.pop %v5268
      %v5270 = vmul.f32 %v5166, 1.442695
      %v5271 = vpow.pop %v5270
      %v5272 = vmul.f32 %v5167, 1.442695
      %v5273 = vpow.pop %v5272
      %v5274 = vmul.f32 %v5168, 1.442695
      %v5275 = vpow.pop %v5274
      %v5276 = vmul.f32 %v5169, 1.442695
      %v5277 = vpow.pop %v5276
      %v5278 = vmul.f32 %v5170, 1.442695
      %v5279 = vpow.pop %v5278
      %v5280 = vmul.f32 %v5171, 1.442695
      %v5281 = vpow.pop %v5280
      %v5282 = vmul.f32 %v5172, 1.442695
      %v5283 = vpow.pop %v5282
      %v5284 = vmul.f32 %v5173, 1.442695
      %v5285 = vpow.pop %v5284
      %v5286 = vmul.f32 %v5174, 1.442695
      %v5287 = vpow.pop %v5286
      %v5288 = vmul.f32 %v5175, 1.442695
      %v5289 = vpow.pop %v5288
      %v5290 = vmul.f32 %v5176, 1.442695
      %v5291 = vpow.pop %v5290
      %v5292 = vmul.f32 %v5177, 1.442695
      %v5293 = vpow.pop %v5292
      %v5294 = vmul.f32 %v5178, 1.442695
      %v5295 = vpow.pop %v5294
      %v5296 = vmul.f32 %v5179, 1.442695
      %v5297 = vpow.pop %v5296
      %v5298 = vmul.f32 %v5180, 1.442695
      %v5299 = vpow.pop %v5298
      %v5300 = vmul.f32 %v5181, 1.442695
      %v5301 = vpow.pop %v5300
      %v5302 = vmul.f32 %v5182, 1.442695
      %v5303 = vpow.pop %v5302
      %v5304 = vmul.f32 %v5183, 1.442695
      %v5305 = vpow.pop %v5304
      %v5306 = vmul.f32 %v5184, 1.442695
      %v5307 = vpow.pop %v5306
      %v5308 = vmul.f32 %v5185, 1.442695
      %v5309 = vpow.pop %v5308
      %v5310 = vmul.f32 %v5186, 1.442695
      %v5311 = vpow.pop %v5310
      %v5312 = vmul.f32 %v5187, 1.442695
      %v5313 = vpow.pop %v5312
      %v5314 = vmul.f32 %v5188, 1.442695
      %v5315 = vpow.pop %v5314
      %v5316 = vmul.f32 %v5189, 1.442695
      %v5317 = vpow.pop %v5316
      %v5318 = vadd.f32 %v5191, 1.0
      %v5319 = vadd.f32 %v5193, 1.0
      %v5320 = vadd.f32 %v5195, 1.0
      %v5321 = vadd.f32 %v5197, 1.0
      %v5322 = vadd.f32 %v5199, 1.0
      %v5323 = vadd.f32 %v5201, 1.0
      %v5324 = vadd.f32 %v5203, 1.0
      %v5325 = vadd.f32 %v5205, 1.0
      %v5326 = vadd.f32 %v5207, 1.0
      %v5327 = vadd.f32 %v5209, 1.0
      %v5328 = vadd.f32 %v5211, 1.0
      %v5329 = vadd.f32 %v5213, 1.0
      %v5330 = vadd.f32 %v5215, 1.0
      %v5331 = vadd.f32 %v5217, 1.0
      %v5332 = vadd.f32 %v5219, 1.0
      %v5333 = vadd.f32 %v5221, 1.0
      %v5334 = vadd.f32 %v5223, 1.0
      %v5335 = vadd.f32 %v5225, 1.0
      %v5336 = vadd.f32 %v5227, 1.0
      %v5337 = vadd.f32 %v5229, 1.0
      %v5338 = vadd.f32 %v5231, 1.0
      %v5339 = vadd.f32 %v5233, 1.0
      %v5340 = vadd.f32 %v5235, 1.0
      %v5341 = vadd.f32 %v5237, 1.0
      %v5342 = vadd.f32 %v5239, 1.0
      %v5343 = vadd.f32 %v5241, 1.0
      %v5344 = vadd.f32 %v5243, 1.0
      %v5345 = vadd.f32 %v5245, 1.0
      %v5346 = vadd.f32 %v5247, 1.0
      %v5347 = vadd.f32 %v5249, 1.0
      %v5348 = vadd.f32 %v5251, 1.0
      %v5349 = vadd.f32 %v5253, 1.0
      %v5350 = vadd.f32 %v5255, 1.0
      %v5351 = vadd.f32 %v5257, 1.0
      %v5352 = vadd.f32 %v5259, 1.0
      %v5353 = vadd.f32 %v5261, 1.0
      %v5354 = vadd.f32 %v5263, 1.0
      %v5355 = vadd.f32 %v5265, 1.0
      %v5356 = vadd.f32 %v5267, 1.0
      %v5357 = vadd.f32 %v5269, 1.0
      %v5358 = vadd.f32 %v5271, 1.0
      %v5359 = vadd.f32 %v5273, 1.0
      %v5360 = vadd.f32 %v5275, 1.0
      %v5361 = vadd.f32 %v5277, 1.0
      %v5362 = vadd.f32 %v5279, 1.0
      %v5363 = vadd.f32 %v5281, 1.0
      %v5364 = vadd.f32 %v5283, 1.0
      %v5365 = vadd.f32 %v5285, 1.0
      %v5366 = vadd.f32 %v5287, 1.0
      %v5367 = vadd.f32 %v5289, 1.0
      %v5368 = vadd.f32 %v5291, 1.0
      %v5369 = vadd.f32 %v5293, 1.0
      %v5370 = vadd.f32 %v5295, 1.0
      %v5371 = vadd.f32 %v5297, 1.0
      %v5372 = vadd.f32 %v5299, 1.0
      %v5373 = vadd.f32 %v5301, 1.0
      %v5374 = vadd.f32 %v5303, 1.0
      %v5375 = vadd.f32 %v5305, 1.0
      %v5376 = vadd.f32 %v5307, 1.0
      %v5377 = vadd.f32 %v5309, 1.0
      %v5378 = vadd.f32 %v5311, 1.0
      %v5379 = vadd.f32 %v5313, 1.0
      %v5380 = vadd.f32 %v5315, 1.0
      %v5381 = vadd.f32 %v5317, 1.0
      %v5382 = vrcp.pop %v5318
      %v5383 = vmul.f32 %v5318, %v5382
      %v5384 = vsub.f32 1.0, %v5383
      %v5385 = vmul.f32 %v5382, %v5384
      %v5386 = vadd.f32 %v5382, %v5385
      %vm5387 = vweird.f32 %v5318
      %vm5388 = vweird.f32 %v5382
      %vm5389 = vmor %vm5387, %vm5388
      %v5390 = vsel %vm5389, %v5382, %v5386
      %v5391 = vand.u32 2147483647, %v5318
      %vm5392 = vcmp.eq.f32.partialorder %v5391, 8.507059e+37
      %v5393 = vand.u32 %v5318, 2147483648
      %v5394 = vor.u32 1.1754944e-38, %v5393
      %v5395 = vsel %vm5392, %v5394, %v5390
      %v5396 = vmul.f32 1.0, %v5395
      %v5397 = vrcp.pop %v5319
      %v5398 = vmul.f32 %v5319, %v5397
      %v5399 = vsub.f32 1.0, %v5398
      %v5400 = vmul.f32 %v5397, %v5399
      %v5401 = vadd.f32 %v5397, %v5400
      %vm5402 = vweird.f32 %v5319
      %vm5403 = vweird.f32 %v5397
      %vm5404 = vmor %vm5402, %vm5403
      %v5405 = vsel %vm5404, %v5397, %v5401
      %v5406 = vand.u32 2147483647, %v5319
      %vm5407 = vcmp.eq.f32.partialorder %v5406, 8.507059e+37
      %v5408 = vand.u32 %v5319, 2147483648
      %v5409 = vor.u32 1.1754944e-38, %v5408
      %v5410 = vsel %vm5407, %v5409, %v5405
      %v5411 = vmul.f32 1.0, %v5410
      %v5412 = vrcp.pop %v5320
      %v5413 = vmul.f32 %v5320, %v5412
      %v5414 = vsub.f32 1.0, %v5413
      %v5415 = vmul.f32 %v5412, %v5414
      %v5416 = vadd.f32 %v5412, %v5415
      %vm5417 = vweird.f32 %v5320
      %vm5418 = vweird.f32 %v5412
      %vm5419 = vmor %vm5417, %vm5418
      %v5420 = vsel %vm5419, %v5412, %v5416
      %v5421 = vand.u32 2147483647, %v5320
      %vm5422 = vcmp.eq.f32.partialorder %v5421, 8.507059e+37
      %v5423 = vand.u32 %v5320, 2147483648
      %v5424 = vor.u32 1.1754944e-38, %v5423
      %v5425 = vsel %vm5422, %v5424, %v5420
      %v5426 = vmul.f32 1.0, %v5425
      %v5427 = vrcp.pop %v5321
      %v5428 = vmul.f32 %v5321, %v5427
      %v5429 = vsub.f32 1.0, %v5428
      %v5430 = vmul.f32 %v5427, %v5429
      %v5431 = vadd.f32 %v5427, %v5430
      %vm5432 = vweird.f32 %v5321
      %vm5433 = vweird.f32 %v5427
      %vm5434 = vmor %vm5432, %vm5433
      %v5435 = vsel %vm5434, %v5427, %v5431
      %v5436 = vand.u32 2147483647, %v5321
      %vm5437 = vcmp.eq.f32.partialorder %v5436, 8.507059e+37
      %v5438 = vand.u32 %v5321, 2147483648
      %v5439 = vor.u32 1.1754944e-38, %v5438
      %v5440 = vsel %vm5437, %v5439, %v5435
      %v5441 = vmul.f32 1.0, %v5440
      %v5442 = vrcp.pop %v5322
      %v5443 = vmul.f32 %v5322, %v5442
      %v5444 = vsub.f32 1.0, %v5443
      %v5445 = vmul.f32 %v5442, %v5444
      %v5446 = vadd.f32 %v5442, %v5445
      %vm5447 = vweird.f32 %v5322
      %vm5448 = vweird.f32 %v5442
      %vm5449 = vmor %vm5447, %vm5448
      %v5450 = vsel %vm5449, %v5442, %v5446
      %v5451 = vand.u32 2147483647, %v5322
      %vm5452 = vcmp.eq.f32.partialorder %v5451, 8.507059e+37
      %v5453 = vand.u32 %v5322, 2147483648
      %v5454 = vor.u32 1.1754944e-38, %v5453
      %v5455 = vsel %vm5452, %v5454, %v5450
      %v5456 = vmul.f32 1.0, %v5455
      %v5457 = vrcp.pop %v5323
      %v5458 = vmul.f32 %v5323, %v5457
      %v5459 = vsub.f32 1.0, %v5458
      %v5460 = vmul.f32 %v5457, %v5459
      %v5461 = vadd.f32 %v5457, %v5460
      %vm5462 = vweird.f32 %v5323
      %vm5463 = vweird.f32 %v5457
      %vm5464 = vmor %vm5462, %vm5463
      %v5465 = vsel %vm5464, %v5457, %v5461
      %v5466 = vand.u32 2147483647, %v5323
      %vm5467 = vcmp.eq.f32.partialorder %v5466, 8.507059e+37
      %v5468 = vand.u32 %v5323, 2147483648
      %v5469 = vor.u32 1.1754944e-38, %v5468
      %v5470 = vsel %vm5467, %v5469, %v5465
      %v5471 = vmul.f32 1.0, %v5470
      %v5472 = vrcp.pop %v5324
      %v5473 = vmul.f32 %v5324, %v5472
      %v5474 = vsub.f32 1.0, %v5473
      %v5475 = vmul.f32 %v5472, %v5474
      %v5476 = vadd.f32 %v5472, %v5475
      %vm5477 = vweird.f32 %v5324
      %vm5478 = vweird.f32 %v5472
      %vm5479 = vmor %vm5477, %vm5478
      %v5480 = vsel %vm5479, %v5472, %v5476
      %v5481 = vand.u32 2147483647, %v5324
      %vm5482 = vcmp.eq.f32.partialorder %v5481, 8.507059e+37
      %v5483 = vand.u32 %v5324, 2147483648
      %v5484 = vor.u32 1.1754944e-38, %v5483
      %v5485 = vsel %vm5482, %v5484, %v5480
      %v5486 = vmul.f32 1.0, %v5485
      %v5487 = vrcp.pop %v5325
      %v5488 = vmul.f32 %v5325, %v5487
      %v5489 = vsub.f32 1.0, %v5488
      %v5490 = vmul.f32 %v5487, %v5489
      %v5491 = vadd.f32 %v5487, %v5490
      %vm5492 = vweird.f32 %v5325
      %vm5493 = vweird.f32 %v5487
      %vm5494 = vmor %vm5492, %vm5493
      %v5495 = vsel %vm5494, %v5487, %v5491
      %v5496 = vand.u32 2147483647, %v5325
      %vm5497 = vcmp.eq.f32.partialorder %v5496, 8.507059e+37
      %v5498 = vand.u32 %v5325, 2147483648
      %v5499 = vor.u32 1.1754944e-38, %v5498
      %v5500 = vsel %vm5497, %v5499, %v5495
      %v5501 = vmul.f32 1.0, %v5500
      %v5502 = vrcp.pop %v5326
      %v5503 = vmul.f32 %v5326, %v5502
      %v5504 = vsub.f32 1.0, %v5503
      %v5505 = vmul.f32 %v5502, %v5504
      %v5506 = vadd.f32 %v5502, %v5505
      %vm5507 = vweird.f32 %v5326
      %vm5508 = vweird.f32 %v5502
      %vm5509 = vmor %vm5507, %vm5508
      %v5510 = vsel %vm5509, %v5502, %v5506
      %v5511 = vand.u32 2147483647, %v5326
      %vm5512 = vcmp.eq.f32.partialorder %v5511, 8.507059e+37
      %v5513 = vand.u32 %v5326, 2147483648
      %v5514 = vor.u32 1.1754944e-38, %v5513
      %v5515 = vsel %vm5512, %v5514, %v5510
      %v5516 = vmul.f32 1.0, %v5515
      %v5517 = vrcp.pop %v5327
      %v5518 = vmul.f32 %v5327, %v5517
      %v5519 = vsub.f32 1.0, %v5518
      %v5520 = vmul.f32 %v5517, %v5519
      %v5521 = vadd.f32 %v5517, %v5520
      %vm5522 = vweird.f32 %v5327
      %vm5523 = vweird.f32 %v5517
      %vm5524 = vmor %vm5522, %vm5523
      %v5525 = vsel %vm5524, %v5517, %v5521
      %v5526 = vand.u32 2147483647, %v5327
      %vm5527 = vcmp.eq.f32.partialorder %v5526, 8.507059e+37
      %v5528 = vand.u32 %v5327, 2147483648
      %v5529 = vor.u32 1.1754944e-38, %v5528
      %v5530 = vsel %vm5527, %v5529, %v5525
      %v5531 = vmul.f32 1.0, %v5530
      %v5532 = vrcp.pop %v5328
      %v5533 = vmul.f32 %v5328, %v5532
      %v5534 = vsub.f32 1.0, %v5533
      %v5535 = vmul.f32 %v5532, %v5534
      %v5536 = vadd.f32 %v5532, %v5535
      %vm5537 = vweird.f32 %v5328
      %vm5538 = vweird.f32 %v5532
      %vm5539 = vmor %vm5537, %vm5538
      %v5540 = vsel %vm5539, %v5532, %v5536
      %v5541 = vand.u32 2147483647, %v5328
      %vm5542 = vcmp.eq.f32.partialorder %v5541, 8.507059e+37
      %v5543 = vand.u32 %v5328, 2147483648
      %v5544 = vor.u32 1.1754944e-38, %v5543
      %v5545 = vsel %vm5542, %v5544, %v5540
      %v5546 = vmul.f32 1.0, %v5545
      %v5547 = vrcp.pop %v5329
      %v5548 = vmul.f32 %v5329, %v5547
      %v5549 = vsub.f32 1.0, %v5548
      %v5550 = vmul.f32 %v5547, %v5549
      %v5551 = vadd.f32 %v5547, %v5550
      %vm5552 = vweird.f32 %v5329
      %vm5553 = vweird.f32 %v5547
      %vm5554 = vmor %vm5552, %vm5553
      %v5555 = vsel %vm5554, %v5547, %v5551
      %v5556 = vand.u32 2147483647, %v5329
      %vm5557 = vcmp.eq.f32.partialorder %v5556, 8.507059e+37
      %v5558 = vand.u32 %v5329, 2147483648
      %v5559 = vor.u32 1.1754944e-38, %v5558
      %v5560 = vsel %vm5557, %v5559, %v5555
      %v5561 = vmul.f32 1.0, %v5560
      %v5562 = vrcp.pop %v5330
      %v5563 = vmul.f32 %v5330, %v5562
      %v5564 = vsub.f32 1.0, %v5563
      %v5565 = vmul.f32 %v5562, %v5564
      %v5566 = vadd.f32 %v5562, %v5565
      %vm5567 = vweird.f32 %v5330
      %vm5568 = vweird.f32 %v5562
      %vm5569 = vmor %vm5567, %vm5568
      %v5570 = vsel %vm5569, %v5562, %v5566
      %v5571 = vand.u32 2147483647, %v5330
      %vm5572 = vcmp.eq.f32.partialorder %v5571, 8.507059e+37
      %v5573 = vand.u32 %v5330, 2147483648
      %v5574 = vor.u32 1.1754944e-38, %v5573
      %v5575 = vsel %vm5572, %v5574, %v5570
      %v5576 = vmul.f32 1.0, %v5575
      %v5577 = vrcp.pop %v5331
      %v5578 = vmul.f32 %v5331, %v5577
      %v5579 = vsub.f32 1.0, %v5578
      %v5580 = vmul.f32 %v5577, %v5579
      %v5581 = vadd.f32 %v5577, %v5580
      %vm5582 = vweird.f32 %v5331
      %vm5583 = vweird.f32 %v5577
      %vm5584 = vmor %vm5582, %vm5583
      %v5585 = vsel %vm5584, %v5577, %v5581
      %v5586 = vand.u32 2147483647, %v5331
      %vm5587 = vcmp.eq.f32.partialorder %v5586, 8.507059e+37
      %v5588 = vand.u32 %v5331, 2147483648
      %v5589 = vor.u32 1.1754944e-38, %v5588
      %v5590 = vsel %vm5587, %v5589, %v5585
      %v5591 = vmul.f32 1.0, %v5590
      %v5592 = vrcp.pop %v5332
      %v5593 = vmul.f32 %v5332, %v5592
      %v5594 = vsub.f32 1.0, %v5593
      %v5595 = vmul.f32 %v5592, %v5594
      %v5596 = vadd.f32 %v5592, %v5595
      %vm5597 = vweird.f32 %v5332
      %vm5598 = vweird.f32 %v5592
      %vm5599 = vmor %vm5597, %vm5598
      %v5600 = vsel %vm5599, %v5592, %v5596
      %v5601 = vand.u32 2147483647, %v5332
      %vm5602 = vcmp.eq.f32.partialorder %v5601, 8.507059e+37
      %v5603 = vand.u32 %v5332, 2147483648
      %v5604 = vor.u32 1.1754944e-38, %v5603
      %v5605 = vsel %vm5602, %v5604, %v5600
      %v5606 = vmul.f32 1.0, %v5605
      %v5607 = vrcp.pop %v5333
      %v5608 = vmul.f32 %v5333, %v5607
      %v5609 = vsub.f32 1.0, %v5608
      %v5610 = vmul.f32 %v5607, %v5609
      %v5611 = vadd.f32 %v5607, %v5610
      %vm5612 = vweird.f32 %v5333
      %vm5613 = vweird.f32 %v5607
      %vm5614 = vmor %vm5612, %vm5613
      %v5615 = vsel %vm5614, %v5607, %v5611
      %v5616 = vand.u32 2147483647, %v5333
      %vm5617 = vcmp.eq.f32.partialorder %v5616, 8.507059e+37
      %v5618 = vand.u32 %v5333, 2147483648
      %v5619 = vor.u32 1.1754944e-38, %v5618
      %v5620 = vsel %vm5617, %v5619, %v5615
      %v5621 = vmul.f32 1.0, %v5620
      %v5622 = vrcp.pop %v5334
      %v5623 = vmul.f32 %v5334, %v5622
      %v5624 = vsub.f32 1.0, %v5623
      %v5625 = vmul.f32 %v5622, %v5624
      %v5626 = vadd.f32 %v5622, %v5625
      %vm5627 = vweird.f32 %v5334
      %vm5628 = vweird.f32 %v5622
      %vm5629 = vmor %vm5627, %vm5628
      %v5630 = vsel %vm5629, %v5622, %v5626
      %v5631 = vand.u32 2147483647, %v5334
      %vm5632 = vcmp.eq.f32.partialorder %v5631, 8.507059e+37
      %v5633 = vand.u32 %v5334, 2147483648
      %v5634 = vor.u32 1.1754944e-38, %v5633
      %v5635 = vsel %vm5632, %v5634, %v5630
      %v5636 = vmul.f32 1.0, %v5635
      %v5637 = vrcp.pop %v5335
      %v5638 = vmul.f32 %v5335, %v5637
      %v5639 = vsub.f32 1.0, %v5638
      %v5640 = vmul.f32 %v5637, %v5639
      %v5641 = vadd.f32 %v5637, %v5640
      %vm5642 = vweird.f32 %v5335
      %vm5643 = vweird.f32 %v5637
      %vm5644 = vmor %vm5642, %vm5643
      %v5645 = vsel %vm5644, %v5637, %v5641
      %v5646 = vand.u32 2147483647, %v5335
      %vm5647 = vcmp.eq.f32.partialorder %v5646, 8.507059e+37
      %v5648 = vand.u32 %v5335, 2147483648
      %v5649 = vor.u32 1.1754944e-38, %v5648
      %v5650 = vsel %vm5647, %v5649, %v5645
      %v5651 = vmul.f32 1.0, %v5650
      %v5652 = vrcp.pop %v5336
      %v5653 = vmul.f32 %v5336, %v5652
      %v5654 = vsub.f32 1.0, %v5653
      %v5655 = vmul.f32 %v5652, %v5654
      %v5656 = vadd.f32 %v5652, %v5655
      %vm5657 = vweird.f32 %v5336
      %vm5658 = vweird.f32 %v5652
      %vm5659 = vmor %vm5657, %vm5658
      %v5660 = vsel %vm5659, %v5652, %v5656
      %v5661 = vand.u32 2147483647, %v5336
      %vm5662 = vcmp.eq.f32.partialorder %v5661, 8.507059e+37
      %v5663 = vand.u32 %v5336, 2147483648
      %v5664 = vor.u32 1.1754944e-38, %v5663
      %v5665 = vsel %vm5662, %v5664, %v5660
      %v5666 = vmul.f32 1.0, %v5665
      %v5667 = vrcp.pop %v5337
      %v5668 = vmul.f32 %v5337, %v5667
      %v5669 = vsub.f32 1.0, %v5668
      %v5670 = vmul.f32 %v5667, %v5669
      %v5671 = vadd.f32 %v5667, %v5670
      %vm5672 = vweird.f32 %v5337
      %vm5673 = vweird.f32 %v5667
      %vm5674 = vmor %vm5672, %vm5673
      %v5675 = vsel %vm5674, %v5667, %v5671
      %v5676 = vand.u32 2147483647, %v5337
      %vm5677 = vcmp.eq.f32.partialorder %v5676, 8.507059e+37
      %v5678 = vand.u32 %v5337, 2147483648
      %v5679 = vor.u32 1.1754944e-38, %v5678
      %v5680 = vsel %vm5677, %v5679, %v5675
      %v5681 = vmul.f32 1.0, %v5680
      %v5682 = vrcp.pop %v5338
      %v5683 = vmul.f32 %v5338, %v5682
      %v5684 = vsub.f32 1.0, %v5683
      %v5685 = vmul.f32 %v5682, %v5684
      %v5686 = vadd.f32 %v5682, %v5685
      %vm5687 = vweird.f32 %v5338
      %vm5688 = vweird.f32 %v5682
      %vm5689 = vmor %vm5687, %vm5688
      %v5690 = vsel %vm5689, %v5682, %v5686
      %v5691 = vand.u32 2147483647, %v5338
      %vm5692 = vcmp.eq.f32.partialorder %v5691, 8.507059e+37
      %v5693 = vand.u32 %v5338, 2147483648
      %v5694 = vor.u32 1.1754944e-38, %v5693
      %v5695 = vsel %vm5692, %v5694, %v5690
      %v5696 = vmul.f32 1.0, %v5695
      %v5697 = vrcp.pop %v5339
      %v5698 = vmul.f32 %v5339, %v5697
      %v5699 = vsub.f32 1.0, %v5698
      %v5700 = vmul.f32 %v5697, %v5699
      %v5701 = vadd.f32 %v5697, %v5700
      %vm5702 = vweird.f32 %v5339
      %vm5703 = vweird.f32 %v5697
      %vm5704 = vmor %vm5702, %vm5703
      %v5705 = vsel %vm5704, %v5697, %v5701
      %v5706 = vand.u32 2147483647, %v5339
      %vm5707 = vcmp.eq.f32.partialorder %v5706, 8.507059e+37
      %v5708 = vand.u32 %v5339, 2147483648
      %v5709 = vor.u32 1.1754944e-38, %v5708
      %v5710 = vsel %vm5707, %v5709, %v5705
      %v5711 = vmul.f32 1.0, %v5710
      %v5712 = vrcp.pop %v5340
      %v5713 = vmul.f32 %v5340, %v5712
      %v5714 = vsub.f32 1.0, %v5713
      %v5715 = vmul.f32 %v5712, %v5714
      %v5716 = vadd.f32 %v5712, %v5715
      %vm5717 = vweird.f32 %v5340
      %vm5718 = vweird.f32 %v5712
      %vm5719 = vmor %vm5717, %vm5718
      %v5720 = vsel %vm5719, %v5712, %v5716
      %v5721 = vand.u32 2147483647, %v5340
      %vm5722 = vcmp.eq.f32.partialorder %v5721, 8.507059e+37
      %v5723 = vand.u32 %v5340, 2147483648
      %v5724 = vor.u32 1.1754944e-38, %v5723
      %v5725 = vsel %vm5722, %v5724, %v5720
      %v5726 = vmul.f32 1.0, %v5725
      %v5727 = vrcp.pop %v5341
      %v5728 = vmul.f32 %v5341, %v5727
      %v5729 = vsub.f32 1.0, %v5728
      %v5730 = vmul.f32 %v5727, %v5729
      %v5731 = vadd.f32 %v5727, %v5730
      %vm5732 = vweird.f32 %v5341
      %vm5733 = vweird.f32 %v5727
      %vm5734 = vmor %vm5732, %vm5733
      %v5735 = vsel %vm5734, %v5727, %v5731
      %v5736 = vand.u32 2147483647, %v5341
      %vm5737 = vcmp.eq.f32.partialorder %v5736, 8.507059e+37
      %v5738 = vand.u32 %v5341, 2147483648
      %v5739 = vor.u32 1.1754944e-38, %v5738
      %v5740 = vsel %vm5737, %v5739, %v5735
      %v5741 = vmul.f32 1.0, %v5740
      %v5742 = vrcp.pop %v5342
      %v5743 = vmul.f32 %v5342, %v5742
      %v5744 = vsub.f32 1.0, %v5743
      %v5745 = vmul.f32 %v5742, %v5744
      %v5746 = vadd.f32 %v5742, %v5745
      %vm5747 = vweird.f32 %v5342
      %vm5748 = vweird.f32 %v5742
      %vm5749 = vmor %vm5747, %vm5748
      %v5750 = vsel %vm5749, %v5742, %v5746
      %v5751 = vand.u32 2147483647, %v5342
      %vm5752 = vcmp.eq.f32.partialorder %v5751, 8.507059e+37
      %v5753 = vand.u32 %v5342, 2147483648
      %v5754 = vor.u32 1.1754944e-38, %v5753
      %v5755 = vsel %vm5752, %v5754, %v5750
      %v5756 = vmul.f32 1.0, %v5755
      %v5757 = vrcp.pop %v5343
      %v5758 = vmul.f32 %v5343, %v5757
      %v5759 = vsub.f32 1.0, %v5758
      %v5760 = vmul.f32 %v5757, %v5759
      %v5761 = vadd.f32 %v5757, %v5760
      %vm5762 = vweird.f32 %v5343
      %vm5763 = vweird.f32 %v5757
      %vm5764 = vmor %vm5762, %vm5763
      %v5765 = vsel %vm5764, %v5757, %v5761
      %v5766 = vand.u32 2147483647, %v5343
      %vm5767 = vcmp.eq.f32.partialorder %v5766, 8.507059e+37
      %v5768 = vand.u32 %v5343, 2147483648
      %v5769 = vor.u32 1.1754944e-38, %v5768
      %v5770 = vsel %vm5767, %v5769, %v5765
      %v5771 = vmul.f32 1.0, %v5770
      %v5772 = vrcp.pop %v5344
      %v5773 = vmul.f32 %v5344, %v5772
      %v5774 = vsub.f32 1.0, %v5773
      %v5775 = vmul.f32 %v5772, %v5774
      %v5776 = vadd.f32 %v5772, %v5775
      %vm5777 = vweird.f32 %v5344
      %vm5778 = vweird.f32 %v5772
      %vm5779 = vmor %vm5777, %vm5778
      %v5780 = vsel %vm5779, %v5772, %v5776
      %v5781 = vand.u32 2147483647, %v5344
      %vm5782 = vcmp.eq.f32.partialorder %v5781, 8.507059e+37
      %v5783 = vand.u32 %v5344, 2147483648
      %v5784 = vor.u32 1.1754944e-38, %v5783
      %v5785 = vsel %vm5782, %v5784, %v5780
      %v5786 = vmul.f32 1.0, %v5785
      %v5787 = vrcp.pop %v5345
      %v5788 = vmul.f32 %v5345, %v5787
      %v5789 = vsub.f32 1.0, %v5788
      %v5790 = vmul.f32 %v5787, %v5789
      %v5791 = vadd.f32 %v5787, %v5790
      %vm5792 = vweird.f32 %v5345
      %vm5793 = vweird.f32 %v5787
      %vm5794 = vmor %vm5792, %vm5793
      %v5795 = vsel %vm5794, %v5787, %v5791
      %v5796 = vand.u32 2147483647, %v5345
      %vm5797 = vcmp.eq.f32.partialorder %v5796, 8.507059e+37
      %v5798 = vand.u32 %v5345, 2147483648
      %v5799 = vor.u32 1.1754944e-38, %v5798
      %v5800 = vsel %vm5797, %v5799, %v5795
      %v5801 = vmul.f32 1.0, %v5800
      %v5802 = vrcp.pop %v5346
      %v5803 = vmul.f32 %v5346, %v5802
      %v5804 = vsub.f32 1.0, %v5803
      %v5805 = vmul.f32 %v5802, %v5804
      %v5806 = vadd.f32 %v5802, %v5805
      %vm5807 = vweird.f32 %v5346
      %vm5808 = vweird.f32 %v5802
      %vm5809 = vmor %vm5807, %vm5808
      %v5810 = vsel %vm5809, %v5802, %v5806
      %v5811 = vand.u32 2147483647, %v5346
      %vm5812 = vcmp.eq.f32.partialorder %v5811, 8.507059e+37
      %v5813 = vand.u32 %v5346, 2147483648
      %v5814 = vor.u32 1.1754944e-38, %v5813
      %v5815 = vsel %vm5812, %v5814, %v5810
      %v5816 = vmul.f32 1.0, %v5815
      %v5817 = vrcp.pop %v5347
      %v5818 = vmul.f32 %v5347, %v5817
      %v5819 = vsub.f32 1.0, %v5818
      %v5820 = vmul.f32 %v5817, %v5819
      %v5821 = vadd.f32 %v5817, %v5820
      %vm5822 = vweird.f32 %v5347
      %vm5823 = vweird.f32 %v5817
      %vm5824 = vmor %vm5822, %vm5823
      %v5825 = vsel %vm5824, %v5817, %v5821
      %v5826 = vand.u32 2147483647, %v5347
      %vm5827 = vcmp.eq.f32.partialorder %v5826, 8.507059e+37
      %v5828 = vand.u32 %v5347, 2147483648
      %v5829 = vor.u32 1.1754944e-38, %v5828
      %v5830 = vsel %vm5827, %v5829, %v5825
      %v5831 = vmul.f32 1.0, %v5830
      %v5832 = vrcp.pop %v5348
      %v5833 = vmul.f32 %v5348, %v5832
      %v5834 = vsub.f32 1.0, %v5833
      %v5835 = vmul.f32 %v5832, %v5834
      %v5836 = vadd.f32 %v5832, %v5835
      %vm5837 = vweird.f32 %v5348
      %vm5838 = vweird.f32 %v5832
      %vm5839 = vmor %vm5837, %vm5838
      %v5840 = vsel %vm5839, %v5832, %v5836
      %v5841 = vand.u32 2147483647, %v5348
      %vm5842 = vcmp.eq.f32.partialorder %v5841, 8.507059e+37
      %v5843 = vand.u32 %v5348, 2147483648
      %v5844 = vor.u32 1.1754944e-38, %v5843
      %v5845 = vsel %vm5842, %v5844, %v5840
      %v5846 = vmul.f32 1.0, %v5845
      %v5847 = vrcp.pop %v5349
      %v5848 = vmul.f32 %v5349, %v5847
      %v5849 = vsub.f32 1.0, %v5848
      %v5850 = vmul.f32 %v5847, %v5849
      %v5851 = vadd.f32 %v5847, %v5850
      %vm5852 = vweird.f32 %v5349
      %vm5853 = vweird.f32 %v5847
      %vm5854 = vmor %vm5852, %vm5853
      %v5855 = vsel %vm5854, %v5847, %v5851
      %v5856 = vand.u32 2147483647, %v5349
      %vm5857 = vcmp.eq.f32.partialorder %v5856, 8.507059e+37
      %v5858 = vand.u32 %v5349, 2147483648
      %v5859 = vor.u32 1.1754944e-38, %v5858
      %v5860 = vsel %vm5857, %v5859, %v5855
      %v5861 = vmul.f32 1.0, %v5860
      %v5862 = vrcp.pop %v5350
      %v5863 = vmul.f32 %v5350, %v5862
      %v5864 = vsub.f32 1.0, %v5863
      %v5865 = vmul.f32 %v5862, %v5864
      %v5866 = vadd.f32 %v5862, %v5865
      %vm5867 = vweird.f32 %v5350
      %vm5868 = vweird.f32 %v5862
      %vm5869 = vmor %vm5867, %vm5868
      %v5870 = vsel %vm5869, %v5862, %v5866
      %v5871 = vand.u32 2147483647, %v5350
      %vm5872 = vcmp.eq.f32.partialorder %v5871, 8.507059e+37
      %v5873 = vand.u32 %v5350, 2147483648
      %v5874 = vor.u32 1.1754944e-38, %v5873
      %v5875 = vsel %vm5872, %v5874, %v5870
      %v5876 = vmul.f32 1.0, %v5875
      %v5877 = vrcp.pop %v5351
      %v5878 = vmul.f32 %v5351, %v5877
      %v5879 = vsub.f32 1.0, %v5878
      %v5880 = vmul.f32 %v5877, %v5879
      %v5881 = vadd.f32 %v5877, %v5880
      %vm5882 = vweird.f32 %v5351
      %vm5883 = vweird.f32 %v5877
      %vm5884 = vmor %vm5882, %vm5883
      %v5885 = vsel %vm5884, %v5877, %v5881
      %v5886 = vand.u32 2147483647, %v5351
      %vm5887 = vcmp.eq.f32.partialorder %v5886, 8.507059e+37
      %v5888 = vand.u32 %v5351, 2147483648
      %v5889 = vor.u32 1.1754944e-38, %v5888
      %v5890 = vsel %vm5887, %v5889, %v5885
      %v5891 = vmul.f32 1.0, %v5890
      %v5892 = vrcp.pop %v5352
      %v5893 = vmul.f32 %v5352, %v5892
      %v5894 = vsub.f32 1.0, %v5893
      %v5895 = vmul.f32 %v5892, %v5894
      %v5896 = vadd.f32 %v5892, %v5895
      %vm5897 = vweird.f32 %v5352
      %vm5898 = vweird.f32 %v5892
      %vm5899 = vmor %vm5897, %vm5898
      %v5900 = vsel %vm5899, %v5892, %v5896
      %v5901 = vand.u32 2147483647, %v5352
      %vm5902 = vcmp.eq.f32.partialorder %v5901, 8.507059e+37
      %v5903 = vand.u32 %v5352, 2147483648
      %v5904 = vor.u32 1.1754944e-38, %v5903
      %v5905 = vsel %vm5902, %v5904, %v5900
      %v5906 = vmul.f32 1.0, %v5905
      %v5907 = vrcp.pop %v5353
      %v5908 = vmul.f32 %v5353, %v5907
      %v5909 = vsub.f32 1.0, %v5908
      %v5910 = vmul.f32 %v5907, %v5909
      %v5911 = vadd.f32 %v5907, %v5910
      %vm5912 = vweird.f32 %v5353
      %vm5913 = vweird.f32 %v5907
      %vm5914 = vmor %vm5912, %vm5913
      %v5915 = vsel %vm5914, %v5907, %v5911
      %v5916 = vand.u32 2147483647, %v5353
      %vm5917 = vcmp.eq.f32.partialorder %v5916, 8.507059e+37
      %v5918 = vand.u32 %v5353, 2147483648
      %v5919 = vor.u32 1.1754944e-38, %v5918
      %v5920 = vsel %vm5917, %v5919, %v5915
      %v5921 = vmul.f32 1.0, %v5920
      %v5922 = vrcp.pop %v5354
      %v5923 = vmul.f32 %v5354, %v5922
      %v5924 = vsub.f32 1.0, %v5923
      %v5925 = vmul.f32 %v5922, %v5924
      %v5926 = vadd.f32 %v5922, %v5925
      %vm5927 = vweird.f32 %v5354
      %vm5928 = vweird.f32 %v5922
      %vm5929 = vmor %vm5927, %vm5928
      %v5930 = vsel %vm5929, %v5922, %v5926
      %v5931 = vand.u32 2147483647, %v5354
      %vm5932 = vcmp.eq.f32.partialorder %v5931, 8.507059e+37
      %v5933 = vand.u32 %v5354, 2147483648
      %v5934 = vor.u32 1.1754944e-38, %v5933
      %v5935 = vsel %vm5932, %v5934, %v5930
      %v5936 = vmul.f32 1.0, %v5935
      %v5937 = vrcp.pop %v5355
      %v5938 = vmul.f32 %v5355, %v5937
      %v5939 = vsub.f32 1.0, %v5938
      %v5940 = vmul.f32 %v5937, %v5939
      %v5941 = vadd.f32 %v5937, %v5940
      %vm5942 = vweird.f32 %v5355
      %vm5943 = vweird.f32 %v5937
      %vm5944 = vmor %vm5942, %vm5943
      %v5945 = vsel %vm5944, %v5937, %v5941
      %v5946 = vand.u32 2147483647, %v5355
      %vm5947 = vcmp.eq.f32.partialorder %v5946, 8.507059e+37
      %v5948 = vand.u32 %v5355, 2147483648
      %v5949 = vor.u32 1.1754944e-38, %v5948
      %v5950 = vsel %vm5947, %v5949, %v5945
      %v5951 = vmul.f32 1.0, %v5950
      %v5952 = vrcp.pop %v5356
      %v5953 = vmul.f32 %v5356, %v5952
      %v5954 = vsub.f32 1.0, %v5953
      %v5955 = vmul.f32 %v5952, %v5954
      %v5956 = vadd.f32 %v5952, %v5955
      %vm5957 = vweird.f32 %v5356
      %vm5958 = vweird.f32 %v5952
      %vm5959 = vmor %vm5957, %vm5958
      %v5960 = vsel %vm5959, %v5952, %v5956
      %v5961 = vand.u32 2147483647, %v5356
      %vm5962 = vcmp.eq.f32.partialorder %v5961, 8.507059e+37
      %v5963 = vand.u32 %v5356, 2147483648
      %v5964 = vor.u32 1.1754944e-38, %v5963
      %v5965 = vsel %vm5962, %v5964, %v5960
      %v5966 = vmul.f32 1.0, %v5965
      %v5967 = vrcp.pop %v5357
      %v5968 = vmul.f32 %v5357, %v5967
      %v5969 = vsub.f32 1.0, %v5968
      %v5970 = vmul.f32 %v5967, %v5969
      %v5971 = vadd.f32 %v5967, %v5970
      %vm5972 = vweird.f32 %v5357
      %vm5973 = vweird.f32 %v5967
      %vm5974 = vmor %vm5972, %vm5973
      %v5975 = vsel %vm5974, %v5967, %v5971
      %v5976 = vand.u32 2147483647, %v5357
      %vm5977 = vcmp.eq.f32.partialorder %v5976, 8.507059e+37
      %v5978 = vand.u32 %v5357, 2147483648
      %v5979 = vor.u32 1.1754944e-38, %v5978
      %v5980 = vsel %vm5977, %v5979, %v5975
      %v5981 = vmul.f32 1.0, %v5980
      %v5982 = vrcp.pop %v5358
      %v5983 = vmul.f32 %v5358, %v5982
      %v5984 = vsub.f32 1.0, %v5983
      %v5985 = vmul.f32 %v5982, %v5984
      %v5986 = vadd.f32 %v5982, %v5985
      %vm5987 = vweird.f32 %v5358
      %vm5988 = vweird.f32 %v5982
      %vm5989 = vmor %vm5987, %vm5988
      %v5990 = vsel %vm5989, %v5982, %v5986
      %v5991 = vand.u32 2147483647, %v5358
      %vm5992 = vcmp.eq.f32.partialorder %v5991, 8.507059e+37
      %v5993 = vand.u32 %v5358, 2147483648
      %v5994 = vor.u32 1.1754944e-38, %v5993
      %v5995 = vsel %vm5992, %v5994, %v5990
      %v5996 = vmul.f32 1.0, %v5995
      %v5997 = vrcp.pop %v5359
      %v5998 = vmul.f32 %v5359, %v5997
      %v5999 = vsub.f32 1.0, %v5998
      %v6000 = vmul.f32 %v5997, %v5999
      %v6001 = vadd.f32 %v5997, %v6000
      %vm6002 = vweird.f32 %v5359
      %vm6003 = vweird.f32 %v5997
      %vm6004 = vmor %vm6002, %vm6003
      %v6005 = vsel %vm6004, %v5997, %v6001
      %v6006 = vand.u32 2147483647, %v5359
      %vm6007 = vcmp.eq.f32.partialorder %v6006, 8.507059e+37
      %v6008 = vand.u32 %v5359, 2147483648
      %v6009 = vor.u32 1.1754944e-38, %v6008
      %v6010 = vsel %vm6007, %v6009, %v6005
      %v6011 = vmul.f32 1.0, %v6010
      %v6012 = vrcp.pop %v5360
      %v6013 = vmul.f32 %v5360, %v6012
      %v6014 = vsub.f32 1.0, %v6013
      %v6015 = vmul.f32 %v6012, %v6014
      %v6016 = vadd.f32 %v6012, %v6015
      %vm6017 = vweird.f32 %v5360
      %vm6018 = vweird.f32 %v6012
      %vm6019 = vmor %vm6017, %vm6018
      %v6020 = vsel %vm6019, %v6012, %v6016
      %v6021 = vand.u32 2147483647, %v5360
      %vm6022 = vcmp.eq.f32.partialorder %v6021, 8.507059e+37
      %v6023 = vand.u32 %v5360, 2147483648
      %v6024 = vor.u32 1.1754944e-38, %v6023
      %v6025 = vsel %vm6022, %v6024, %v6020
      %v6026 = vmul.f32 1.0, %v6025
      %v6027 = vrcp.pop %v5361
      %v6028 = vmul.f32 %v5361, %v6027
      %v6029 = vsub.f32 1.0, %v6028
      %v6030 = vmul.f32 %v6027, %v6029
      %v6031 = vadd.f32 %v6027, %v6030
      %vm6032 = vweird.f32 %v5361
      %vm6033 = vweird.f32 %v6027
      %vm6034 = vmor %vm6032, %vm6033
      %v6035 = vsel %vm6034, %v6027, %v6031
      %v6036 = vand.u32 2147483647, %v5361
      %vm6037 = vcmp.eq.f32.partialorder %v6036, 8.507059e+37
      %v6038 = vand.u32 %v5361, 2147483648
      %v6039 = vor.u32 1.1754944e-38, %v6038
      %v6040 = vsel %vm6037, %v6039, %v6035
      %v6041 = vmul.f32 1.0, %v6040
      %v6042 = vrcp.pop %v5362
      %v6043 = vmul.f32 %v5362, %v6042
      %v6044 = vsub.f32 1.0, %v6043
      %v6045 = vmul.f32 %v6042, %v6044
      %v6046 = vadd.f32 %v6042, %v6045
      %vm6047 = vweird.f32 %v5362
      %vm6048 = vweird.f32 %v6042
      %vm6049 = vmor %vm6047, %vm6048
      %v6050 = vsel %vm6049, %v6042, %v6046
      %v6051 = vand.u32 2147483647, %v5362
      %vm6052 = vcmp.eq.f32.partialorder %v6051, 8.507059e+37
      %v6053 = vand.u32 %v5362, 2147483648
      %v6054 = vor.u32 1.1754944e-38, %v6053
      %v6055 = vsel %vm6052, %v6054, %v6050
      %v6056 = vmul.f32 1.0, %v6055
      %v6057 = vrcp.pop %v5363
      %v6058 = vmul.f32 %v5363, %v6057
      %v6059 = vsub.f32 1.0, %v6058
      %v6060 = vmul.f32 %v6057, %v6059
      %v6061 = vadd.f32 %v6057, %v6060
      %vm6062 = vweird.f32 %v5363
      %vm6063 = vweird.f32 %v6057
      %vm6064 = vmor %vm6062, %vm6063
      %v6065 = vsel %vm6064, %v6057, %v6061
      %v6066 = vand.u32 2147483647, %v5363
      %vm6067 = vcmp.eq.f32.partialorder %v6066, 8.507059e+37
      %v6068 = vand.u32 %v5363, 2147483648
      %v6069 = vor.u32 1.1754944e-38, %v6068
      %v6070 = vsel %vm6067, %v6069, %v6065
      %v6071 = vmul.f32 1.0, %v6070
      %v6072 = vrcp.pop %v5364
      %v6073 = vmul.f32 %v5364, %v6072
      %v6074 = vsub.f32 1.0, %v6073
      %v6075 = vmul.f32 %v6072, %v6074
      %v6076 = vadd.f32 %v6072, %v6075
      %vm6077 = vweird.f32 %v5364
      %vm6078 = vweird.f32 %v6072
      %vm6079 = vmor %vm6077, %vm6078
      %v6080 = vsel %vm6079, %v6072, %v6076
      %v6081 = vand.u32 2147483647, %v5364
      %vm6082 = vcmp.eq.f32.partialorder %v6081, 8.507059e+37
      %v6083 = vand.u32 %v5364, 2147483648
      %v6084 = vor.u32 1.1754944e-38, %v6083
      %v6085 = vsel %vm6082, %v6084, %v6080
      %v6086 = vmul.f32 1.0, %v6085
      %v6087 = vrcp.pop %v5365
      %v6088 = vmul.f32 %v5365, %v6087
      %v6089 = vsub.f32 1.0, %v6088
      %v6090 = vmul.f32 %v6087, %v6089
      %v6091 = vadd.f32 %v6087, %v6090
      %vm6092 = vweird.f32 %v5365
      %vm6093 = vweird.f32 %v6087
      %vm6094 = vmor %vm6092, %vm6093
      %v6095 = vsel %vm6094, %v6087, %v6091
      %v6096 = vand.u32 2147483647, %v5365
      %vm6097 = vcmp.eq.f32.partialorder %v6096, 8.507059e+37
      %v6098 = vand.u32 %v5365, 2147483648
      %v6099 = vor.u32 1.1754944e-38, %v6098
      %v6100 = vsel %vm6097, %v6099, %v6095
      %v6101 = vmul.f32 1.0, %v6100
      %v6102 = vrcp.pop %v5366
      %v6103 = vmul.f32 %v5366, %v6102
      %v6104 = vsub.f32 1.0, %v6103
      %v6105 = vmul.f32 %v6102, %v6104
      %v6106 = vadd.f32 %v6102, %v6105
      %vm6107 = vweird.f32 %v5366
      %vm6108 = vweird.f32 %v6102
      %vm6109 = vmor %vm6107, %vm6108
      %v6110 = vsel %vm6109, %v6102, %v6106
      %v6111 = vand.u32 2147483647, %v5366
      %vm6112 = vcmp.eq.f32.partialorder %v6111, 8.507059e+37
      %v6113 = vand.u32 %v5366, 2147483648
      %v6114 = vor.u32 1.1754944e-38, %v6113
      %v6115 = vsel %vm6112, %v6114, %v6110
      %v6116 = vmul.f32 1.0, %v6115
      %v6117 = vrcp.pop %v5367
      %v6118 = vmul.f32 %v5367, %v6117
      %v6119 = vsub.f32 1.0, %v6118
      %v6120 = vmul.f32 %v6117, %v6119
      %v6121 = vadd.f32 %v6117, %v6120
      %vm6122 = vweird.f32 %v5367
      %vm6123 = vweird.f32 %v6117
      %vm6124 = vmor %vm6122, %vm6123
      %v6125 = vsel %vm6124, %v6117, %v6121
      %v6126 = vand.u32 2147483647, %v5367
      %vm6127 = vcmp.eq.f32.partialorder %v6126, 8.507059e+37
      %v6128 = vand.u32 %v5367, 2147483648
      %v6129 = vor.u32 1.1754944e-38, %v6128
      %v6130 = vsel %vm6127, %v6129, %v6125
      %v6131 = vmul.f32 1.0, %v6130
      %v6132 = vrcp.pop %v5368
      %v6133 = vmul.f32 %v5368, %v6132
      %v6134 = vsub.f32 1.0, %v6133
      %v6135 = vmul.f32 %v6132, %v6134
      %v6136 = vadd.f32 %v6132, %v6135
      %vm6137 = vweird.f32 %v5368
      %vm6138 = vweird.f32 %v6132
      %vm6139 = vmor %vm6137, %vm6138
      %v6140 = vsel %vm6139, %v6132, %v6136
      %v6141 = vand.u32 2147483647, %v5368
      %vm6142 = vcmp.eq.f32.partialorder %v6141, 8.507059e+37
      %v6143 = vand.u32 %v5368, 2147483648
      %v6144 = vor.u32 1.1754944e-38, %v6143
      %v6145 = vsel %vm6142, %v6144, %v6140
      %v6146 = vmul.f32 1.0, %v6145
      %v6147 = vrcp.pop %v5369
      %v6148 = vmul.f32 %v5369, %v6147
      %v6149 = vsub.f32 1.0, %v6148
      %v6150 = vmul.f32 %v6147, %v6149
      %v6151 = vadd.f32 %v6147, %v6150
      %vm6152 = vweird.f32 %v5369
      %vm6153 = vweird.f32 %v6147
      %vm6154 = vmor %vm6152, %vm6153
      %v6155 = vsel %vm6154, %v6147, %v6151
      %v6156 = vand.u32 2147483647, %v5369
      %vm6157 = vcmp.eq.f32.partialorder %v6156, 8.507059e+37
      %v6158 = vand.u32 %v5369, 2147483648
      %v6159 = vor.u32 1.1754944e-38, %v6158
      %v6160 = vsel %vm6157, %v6159, %v6155
      %v6161 = vmul.f32 1.0, %v6160
      %v6162 = vrcp.pop %v5370
      %v6163 = vmul.f32 %v5370, %v6162
      %v6164 = vsub.f32 1.0, %v6163
      %v6165 = vmul.f32 %v6162, %v6164
      %v6166 = vadd.f32 %v6162, %v6165
      %vm6167 = vweird.f32 %v5370
      %vm6168 = vweird.f32 %v6162
      %vm6169 = vmor %vm6167, %vm6168
      %v6170 = vsel %vm6169, %v6162, %v6166
      %v6171 = vand.u32 2147483647, %v5370
      %vm6172 = vcmp.eq.f32.partialorder %v6171, 8.507059e+37
      %v6173 = vand.u32 %v5370, 2147483648
      %v6174 = vor.u32 1.1754944e-38, %v6173
      %v6175 = vsel %vm6172, %v6174, %v6170
      %v6176 = vmul.f32 1.0, %v6175
      %v6177 = vrcp.pop %v5371
      %v6178 = vmul.f32 %v5371, %v6177
      %v6179 = vsub.f32 1.0, %v6178
      %v6180 = vmul.f32 %v6177, %v6179
      %v6181 = vadd.f32 %v6177, %v6180
      %vm6182 = vweird.f32 %v5371
      %vm6183 = vweird.f32 %v6177
      %vm6184 = vmor %vm6182, %vm6183
      %v6185 = vsel %vm6184, %v6177, %v6181
      %v6186 = vand.u32 2147483647, %v5371
      %vm6187 = vcmp.eq.f32.partialorder %v6186, 8.507059e+37
      %v6188 = vand.u32 %v5371, 2147483648
      %v6189 = vor.u32 1.1754944e-38, %v6188
      %v6190 = vsel %vm6187, %v6189, %v6185
      %v6191 = vmul.f32 1.0, %v6190
      %v6192 = vrcp.pop %v5372
      %v6193 = vmul.f32 %v5372, %v6192
      %v6194 = vsub.f32 1.0, %v6193
      %v6195 = vmul.f32 %v6192, %v6194
      %v6196 = vadd.f32 %v6192, %v6195
      %vm6197 = vweird.f32 %v5372
      %vm6198 = vweird.f32 %v6192
      %vm6199 = vmor %vm6197, %vm6198
      %v6200 = vsel %vm6199, %v6192, %v6196
      %v6201 = vand.u32 2147483647, %v5372
      %vm6202 = vcmp.eq.f32.partialorder %v6201, 8.507059e+37
      %v6203 = vand.u32 %v5372, 2147483648
      %v6204 = vor.u32 1.1754944e-38, %v6203
      %v6205 = vsel %vm6202, %v6204, %v6200
      %v6206 = vmul.f32 1.0, %v6205
      %v6207 = vrcp.pop %v5373
      %v6208 = vmul.f32 %v5373, %v6207
      %v6209 = vsub.f32 1.0, %v6208
      %v6210 = vmul.f32 %v6207, %v6209
      %v6211 = vadd.f32 %v6207, %v6210
      %vm6212 = vweird.f32 %v5373
      %vm6213 = vweird.f32 %v6207
      %vm6214 = vmor %vm6212, %vm6213
      %v6215 = vsel %vm6214, %v6207, %v6211
      %v6216 = vand.u32 2147483647, %v5373
      %vm6217 = vcmp.eq.f32.partialorder %v6216, 8.507059e+37
      %v6218 = vand.u32 %v5373, 2147483648
      %v6219 = vor.u32 1.1754944e-38, %v6218
      %v6220 = vsel %vm6217, %v6219, %v6215
      %v6221 = vmul.f32 1.0, %v6220
      %v6222 = vrcp.pop %v5374
      %v6223 = vmul.f32 %v5374, %v6222
      %v6224 = vsub.f32 1.0, %v6223
      %v6225 = vmul.f32 %v6222, %v6224
      %v6226 = vadd.f32 %v6222, %v6225
      %vm6227 = vweird.f32 %v5374
      %vm6228 = vweird.f32 %v6222
      %vm6229 = vmor %vm6227, %vm6228
      %v6230 = vsel %vm6229, %v6222, %v6226
      %v6231 = vand.u32 2147483647, %v5374
      %vm6232 = vcmp.eq.f32.partialorder %v6231, 8.507059e+37
      %v6233 = vand.u32 %v5374, 2147483648
      %v6234 = vor.u32 1.1754944e-38, %v6233
      %v6235 = vsel %vm6232, %v6234, %v6230
      %v6236 = vmul.f32 1.0, %v6235
      %v6237 = vrcp.pop %v5375
      %v6238 = vmul.f32 %v5375, %v6237
      %v6239 = vsub.f32 1.0, %v6238
      %v6240 = vmul.f32 %v6237, %v6239
      %v6241 = vadd.f32 %v6237, %v6240
      %vm6242 = vweird.f32 %v5375
      %vm6243 = vweird.f32 %v6237
      %vm6244 = vmor %vm6242, %vm6243
      %v6245 = vsel %vm6244, %v6237, %v6241
      %v6246 = vand.u32 2147483647, %v5375
      %vm6247 = vcmp.eq.f32.partialorder %v6246, 8.507059e+37
      %v6248 = vand.u32 %v5375, 2147483648
      %v6249 = vor.u32 1.1754944e-38, %v6248
      %v6250 = vsel %vm6247, %v6249, %v6245
      %v6251 = vmul.f32 1.0, %v6250
      %v6252 = vrcp.pop %v5376
      %v6253 = vmul.f32 %v5376, %v6252
      %v6254 = vsub.f32 1.0, %v6253
      %v6255 = vmul.f32 %v6252, %v6254
      %v6256 = vadd.f32 %v6252, %v6255
      %vm6257 = vweird.f32 %v5376
      %vm6258 = vweird.f32 %v6252
      %vm6259 = vmor %vm6257, %vm6258
      %v6260 = vsel %vm6259, %v6252, %v6256
      %v6261 = vand.u32 2147483647, %v5376
      %vm6262 = vcmp.eq.f32.partialorder %v6261, 8.507059e+37
      %v6263 = vand.u32 %v5376, 2147483648
      %v6264 = vor.u32 1.1754944e-38, %v6263
      %v6265 = vsel %vm6262, %v6264, %v6260
      %v6266 = vmul.f32 1.0, %v6265
      %v6267 = vrcp.pop %v5377
      %v6268 = vmul.f32 %v5377, %v6267
      %v6269 = vsub.f32 1.0, %v6268
      %v6270 = vmul.f32 %v6267, %v6269
      %v6271 = vadd.f32 %v6267, %v6270
      %vm6272 = vweird.f32 %v5377
      %vm6273 = vweird.f32 %v6267
      %vm6274 = vmor %vm6272, %vm6273
      %v6275 = vsel %vm6274, %v6267, %v6271
      %v6276 = vand.u32 2147483647, %v5377
      %vm6277 = vcmp.eq.f32.partialorder %v6276, 8.507059e+37
      %v6278 = vand.u32 %v5377, 2147483648
      %v6279 = vor.u32 1.1754944e-38, %v6278
      %v6280 = vsel %vm6277, %v6279, %v6275
      %v6281 = vmul.f32 1.0, %v6280
      %v6282 = vrcp.pop %v5378
      %v6283 = vmul.f32 %v5378, %v6282
      %v6284 = vsub.f32 1.0, %v6283
      %v6285 = vmul.f32 %v6282, %v6284
      %v6286 = vadd.f32 %v6282, %v6285
      %vm6287 = vweird.f32 %v5378
      %vm6288 = vweird.f32 %v6282
      %vm6289 = vmor %vm6287, %vm6288
      %v6290 = vsel %vm6289, %v6282, %v6286
      %v6291 = vand.u32 2147483647, %v5378
      %vm6292 = vcmp.eq.f32.partialorder %v6291, 8.507059e+37
      %v6293 = vand.u32 %v5378, 2147483648
      %v6294 = vor.u32 1.1754944e-38, %v6293
      %v6295 = vsel %vm6292, %v6294, %v6290
      %v6296 = vmul.f32 1.0, %v6295
      %v6297 = vrcp.pop %v5379
      %v6298 = vmul.f32 %v5379, %v6297
      %v6299 = vsub.f32 1.0, %v6298
      %v6300 = vmul.f32 %v6297, %v6299
      %v6301 = vadd.f32 %v6297, %v6300
      %vm6302 = vweird.f32 %v5379
      %vm6303 = vweird.f32 %v6297
      %vm6304 = vmor %vm6302, %vm6303
      %v6305 = vsel %vm6304, %v6297, %v6301
      %v6306 = vand.u32 2147483647, %v5379
      %vm6307 = vcmp.eq.f32.partialorder %v6306, 8.507059e+37
      %v6308 = vand.u32 %v5379, 2147483648
      %v6309 = vor.u32 1.1754944e-38, %v6308
      %v6310 = vsel %vm6307, %v6309, %v6305
      %v6311 = vmul.f32 1.0, %v6310
      %v6312 = vrcp.pop %v5380
      %v6313 = vmul.f32 %v5380, %v6312
      %v6314 = vsub.f32 1.0, %v6313
      %v6315 = vmul.f32 %v6312, %v6314
      %v6316 = vadd.f32 %v6312, %v6315
      %vm6317 = vweird.f32 %v5380
      %vm6318 = vweird.f32 %v6312
      %vm6319 = vmor %vm6317, %vm6318
      %v6320 = vsel %vm6319, %v6312, %v6316
      %v6321 = vand.u32 2147483647, %v5380
      %vm6322 = vcmp.eq.f32.partialorder %v6321, 8.507059e+37
      %v6323 = vand.u32 %v5380, 2147483648
      %v6324 = vor.u32 1.1754944e-38, %v6323
      %v6325 = vsel %vm6322, %v6324, %v6320
      %v6326 = vmul.f32 1.0, %v6325
      %v6327 = vrcp.pop %v5381
      %v6328 = vmul.f32 %v5381, %v6327
      %v6329 = vsub.f32 1.0, %v6328
      %v6330 = vmul.f32 %v6327, %v6329
      %v6331 = vadd.f32 %v6327, %v6330
      %vm6332 = vweird.f32 %v5381
      %vm6333 = vweird.f32 %v6327
      %vm6334 = vmor %vm6332, %vm6333
      %v6335 = vsel %vm6334, %v6327, %v6331
      %v6336 = vand.u32 2147483647, %v5381
      %vm6337 = vcmp.eq.f32.partialorder %v6336, 8.507059e+37
      %v6338 = vand.u32 %v5381, 2147483648
      %v6339 = vor.u32 1.1754944e-38, %v6338
      %v6340 = vsel %vm6337, %v6339, %v6335
      %v6341 = vmul.f32 1.0, %v6340
      %s6342 = scalar_lea.vmem %s2, 192
      %v6343 = vld [vmem:[%s6342] sm:$0xf]
      %v6344 = vld [vmem:[%s6342 + $0x4] sm:$0xf]
      %v6345 = vld [vmem:[%s6342 + $0x8] sm:$0xf]
      %v6346 = vld [vmem:[%s6342 + $0xc] sm:$0xf]
      %v6347 = vld [vmem:[%s6342 + $0x10] sm:$0xf]
      %v6348 = vld [vmem:[%s6342 + $0x14] sm:$0xf]
      %v6349 = vld [vmem:[%s6342 + $0x18] sm:$0xf]
      %v6350 = vld [vmem:[%s6342 + $0x1c] sm:$0xf]
      %v6351 = vld [vmem:[%s6342 + $0x20] sm:$0xf]
      %v6352 = vld [vmem:[%s6342 + $0x24] sm:$0xf]
      %v6353 = vld [vmem:[%s6342 + $0x28] sm:$0xf]
      %v6354 = vld [vmem:[%s6342 + $0x2c] sm:$0xf]
      %v6355 = vld [vmem:[%s6342 + $0x30] sm:$0xf]
      %v6356 = vld [vmem:[%s6342 + $0x34] sm:$0xf]
      %v6357 = vld [vmem:[%s6342 + $0x38] sm:$0xf]
      %v6358 = vld [vmem:[%s6342 + $0x3c] sm:$0xf]
      %v6359 = vperm.slane %v407, 1
      %v6376 = vunpack.c.l.b16 %v6343
      %v6377 = vunpack.c.l.b16 %v6344
      %v6378 = vunpack.c.l.b16 %v6345
      %v6379 = vunpack.c.l.b16 %v6346
      %v6380 = vunpack.c.l.b16 %v6347
      %v6381 = vunpack.c.l.b16 %v6348
      %v6382 = vunpack.c.l.b16 %v6349
      %v6383 = vunpack.c.l.b16 %v6350
      %v6384 = vunpack.c.l.b16 %v6351
      %v6385 = vunpack.c.l.b16 %v6352
      %v6386 = vunpack.c.l.b16 %v6353
      %v6387 = vunpack.c.l.b16 %v6354
      %v6388 = vunpack.c.l.b16 %v6355
      %v6389 = vunpack.c.l.b16 %v6356
      %v6390 = vunpack.c.l.b16 %v6357
      %v6391 = vunpack.c.l.b16 %v6358
      %v6392 = vpack.c.b16 %v6377, %v6376
      %v6393 = vpack.c.b16 %v6379, %v6378
      %v6394 = vpack.c.b16 %v6381, %v6380
      %v6395 = vpack.c.b16 %v6383, %v6382
      %v6396 = vpack.c.b16 %v6385, %v6384
      %v6397 = vpack.c.b16 %v6387, %v6386
      %v6398 = vpack.c.b16 %v6389, %v6388
      %v6399 = vpack.c.b16 %v6391, %v6390
      %6408 = vmatpush.bf16.msra.mxu0 %v6399
      %6409 = vmatpush.bf16.msra.mxu0 %v6398
      %6410 = vmatpush.bf16.msra.mxu0 %v6397
      %6411 = vmatpush.bf16.msra.mxu0 %v6396
      %6412 = vmatpush.bf16.msra.mxu0 %v6395
      %6413 = vmatpush.bf16.msra.mxu0 %v6394
      %6414 = vmatpush.bf16.msra.mxu0 %v6393
      %6415 = vmatpush.bf16.msra.mxu0 %v6392
      %6416 = vmatmul.bf16.gmra.mxu0 %v374
      %v6417 = vpop.f32.mrf.mxu0
      %v6418 = vadd.f32 %v6359, %v6417
      %v6419 = vpop.f32.mrf.mxu0
      %v6420 = vadd.f32 %v6359, %v6419
      %6421 = vmatmul.bf16.gmra.mxu0 %v375
      %v6422 = vpop.f32.mrf.mxu0
      %v6423 = vadd.f32 %v6359, %v6422
      %v6424 = vpop.f32.mrf.mxu0
      %v6425 = vadd.f32 %v6359, %v6424
      %6426 = vmatmul.bf16.gmra.mxu0 %v376
      %v6427 = vpop.f32.mrf.mxu0
      %v6428 = vadd.f32 %v6359, %v6427
      %v6429 = vpop.f32.mrf.mxu0
      %v6430 = vadd.f32 %v6359, %v6429
      %6431 = vmatmul.bf16.gmra.mxu0 %v377
      %v6432 = vpop.f32.mrf.mxu0
      %v6433 = vadd.f32 %v6359, %v6432
      %v6434 = vpop.f32.mrf.mxu0
      %v6435 = vadd.f32 %v6359, %v6434
      %6436 = vmatmul.bf16.gmra.mxu0 %v378
      %v6437 = vpop.f32.mrf.mxu0
      %v6438 = vadd.f32 %v6359, %v6437
      %v6439 = vpop.f32.mrf.mxu0
      %v6440 = vadd.f32 %v6359, %v6439
      %6441 = vmatmul.bf16.gmra.mxu0 %v379
      %v6442 = vpop.f32.mrf.mxu0
      %v6443 = vadd.f32 %v6359, %v6442
      %v6444 = vpop.f32.mrf.mxu0
      %v6445 = vadd.f32 %v6359, %v6444
      %6446 = vmatmul.bf16.gmra.mxu0 %v380
      %v6447 = vpop.f32.mrf.mxu0
      %v6448 = vadd.f32 %v6359, %v6447
      %v6449 = vpop.f32.mrf.mxu0
      %v6450 = vadd.f32 %v6359, %v6449
      %6451 = vmatmul.bf16.gmra.mxu0 %v381
      %v6452 = vpop.f32.mrf.mxu0
      %v6453 = vadd.f32 %v6359, %v6452
      %v6454 = vpop.f32.mrf.mxu0
      %v6455 = vadd.f32 %v6359, %v6454
      %6456 = vmatmul.bf16.gmra.mxu0 %v382
      %v6457 = vpop.f32.mrf.mxu0
      %v6458 = vadd.f32 %v6359, %v6457
      %v6459 = vpop.f32.mrf.mxu0
      %v6460 = vadd.f32 %v6359, %v6459
      %6461 = vmatmul.bf16.gmra.mxu0 %v383
      %v6462 = vpop.f32.mrf.mxu0
      %v6463 = vadd.f32 %v6359, %v6462
      %v6464 = vpop.f32.mrf.mxu0
      %v6465 = vadd.f32 %v6359, %v6464
      %6466 = vmatmul.bf16.gmra.mxu0 %v384
      %v6467 = vpop.f32.mrf.mxu0
      %v6468 = vadd.f32 %v6359, %v6467
      %v6469 = vpop.f32.mrf.mxu0
      %v6470 = vadd.f32 %v6359, %v6469
      %6471 = vmatmul.bf16.gmra.mxu0 %v385
      %v6472 = vpop.f32.mrf.mxu0
      %v6473 = vadd.f32 %v6359, %v6472
      %v6474 = vpop.f32.mrf.mxu0
      %v6475 = vadd.f32 %v6359, %v6474
      %6476 = vmatmul.bf16.gmra.mxu0 %v386
      %v6477 = vpop.f32.mrf.mxu0
      %v6478 = vadd.f32 %v6359, %v6477
      %v6479 = vpop.f32.mrf.mxu0
      %v6480 = vadd.f32 %v6359, %v6479
      %6481 = vmatmul.bf16.gmra.mxu0 %v387
      %v6482 = vpop.f32.mrf.mxu0
      %v6483 = vadd.f32 %v6359, %v6482
      %v6484 = vpop.f32.mrf.mxu0
      %v6485 = vadd.f32 %v6359, %v6484
      %6486 = vmatmul.bf16.gmra.mxu0 %v388
      %v6487 = vpop.f32.mrf.mxu0
      %v6488 = vadd.f32 %v6359, %v6487
      %v6489 = vpop.f32.mrf.mxu0
      %v6490 = vadd.f32 %v6359, %v6489
      %6491 = vmatmul.bf16.gmra.mxu0 %v389
      %v6492 = vpop.f32.mrf.mxu0
      %v6493 = vadd.f32 %v6359, %v6492
      %v6494 = vpop.f32.mrf.mxu0
      %v6495 = vadd.f32 %v6359, %v6494
      %6496 = vmatmul.bf16.gmra.mxu0 %v390
      %v6497 = vpop.f32.mrf.mxu0
      %v6498 = vadd.f32 %v6359, %v6497
      %v6499 = vpop.f32.mrf.mxu0
      %v6500 = vadd.f32 %v6359, %v6499
      %6501 = vmatmul.bf16.gmra.mxu0 %v391
      %v6502 = vpop.f32.mrf.mxu0
      %v6503 = vadd.f32 %v6359, %v6502
      %v6504 = vpop.f32.mrf.mxu0
      %v6505 = vadd.f32 %v6359, %v6504
      %6506 = vmatmul.bf16.gmra.mxu0 %v392
      %v6507 = vpop.f32.mrf.mxu0
      %v6508 = vadd.f32 %v6359, %v6507
      %v6509 = vpop.f32.mrf.mxu0
      %v6510 = vadd.f32 %v6359, %v6509
      %6511 = vmatmul.bf16.gmra.mxu0 %v393
      %v6512 = vpop.f32.mrf.mxu0
      %v6513 = vadd.f32 %v6359, %v6512
      %v6514 = vpop.f32.mrf.mxu0
      %v6515 = vadd.f32 %v6359, %v6514
      %6516 = vmatmul.bf16.gmra.mxu0 %v394
      %v6517 = vpop.f32.mrf.mxu0
      %v6518 = vadd.f32 %v6359, %v6517
      %v6519 = vpop.f32.mrf.mxu0
      %v6520 = vadd.f32 %v6359, %v6519
      %6521 = vmatmul.bf16.gmra.mxu0 %v395
      %v6522 = vpop.f32.mrf.mxu0
      %v6523 = vadd.f32 %v6359, %v6522
      %v6524 = vpop.f32.mrf.mxu0
      %v6525 = vadd.f32 %v6359, %v6524
      %6526 = vmatmul.bf16.gmra.mxu0 %v396
      %v6527 = vpop.f32.mrf.mxu0
      %v6528 = vadd.f32 %v6359, %v6527
      %v6529 = vpop.f32.mrf.mxu0
      %v6530 = vadd.f32 %v6359, %v6529
      %6531 = vmatmul.bf16.gmra.mxu0 %v397
      %v6532 = vpop.f32.mrf.mxu0
      %v6533 = vadd.f32 %v6359, %v6532
      %v6534 = vpop.f32.mrf.mxu0
      %v6535 = vadd.f32 %v6359, %v6534
      %6536 = vmatmul.bf16.gmra.mxu0 %v398
      %v6537 = vpop.f32.mrf.mxu0
      %v6538 = vadd.f32 %v6359, %v6537
      %v6539 = vpop.f32.mrf.mxu0
      %v6540 = vadd.f32 %v6359, %v6539
      %6541 = vmatmul.bf16.gmra.mxu0 %v399
      %v6542 = vpop.f32.mrf.mxu0
      %v6543 = vadd.f32 %v6359, %v6542
      %v6544 = vpop.f32.mrf.mxu0
      %v6545 = vadd.f32 %v6359, %v6544
      %6546 = vmatmul.bf16.gmra.mxu0 %v400
      %v6547 = vpop.f32.mrf.mxu0
      %v6548 = vadd.f32 %v6359, %v6547
      %v6549 = vpop.f32.mrf.mxu0
      %v6550 = vadd.f32 %v6359, %v6549
      %6551 = vmatmul.bf16.gmra.mxu0 %v401
      %v6552 = vpop.f32.mrf.mxu0
      %v6553 = vadd.f32 %v6359, %v6552
      %v6554 = vpop.f32.mrf.mxu0
      %v6555 = vadd.f32 %v6359, %v6554
      %6556 = vmatmul.bf16.gmra.mxu0 %v402
      %v6557 = vpop.f32.mrf.mxu0
      %v6558 = vadd.f32 %v6359, %v6557
      %v6559 = vpop.f32.mrf.mxu0
      %v6560 = vadd.f32 %v6359, %v6559
      %6561 = vmatmul.bf16.gmra.mxu0 %v403
      %v6562 = vpop.f32.mrf.mxu0
      %v6563 = vadd.f32 %v6359, %v6562
      %v6564 = vpop.f32.mrf.mxu0
      %v6565 = vadd.f32 %v6359, %v6564
      %6566 = vmatmul.bf16.gmra.mxu0 %v404
      %v6567 = vpop.f32.mrf.mxu0
      %v6568 = vadd.f32 %v6359, %v6567
      %v6569 = vpop.f32.mrf.mxu0
      %v6570 = vadd.f32 %v6359, %v6569
      %6571 = vmatmul.bf16.gmra.mxu0 %v405
      %v6572 = vpop.f32.mrf.mxu0
      %v6573 = vadd.f32 %v6359, %v6572
      %v6574 = vpop.f32.mrf.mxu0
      %v6575 = vadd.f32 %v6359, %v6574
      %6576 = vdwg.mxu0
      %v6577 = vmax.f32 %v6418, 0.0
      %v6578 = vmax.f32 %v6420, 0.0
      %v6579 = vmax.f32 %v6423, 0.0
      %v6580 = vmax.f32 %v6425, 0.0
      %v6581 = vmax.f32 %v6428, 0.0
      %v6582 = vmax.f32 %v6430, 0.0
      %v6583 = vmax.f32 %v6433, 0.0
      %v6584 = vmax.f32 %v6435, 0.0
      %v6585 = vmax.f32 %v6438, 0.0
      %v6586 = vmax.f32 %v6440, 0.0
      %v6587 = vmax.f32 %v6443, 0.0
      %v6588 = vmax.f32 %v6445, 0.0
      %v6589 = vmax.f32 %v6448, 0.0
      %v6590 = vmax.f32 %v6450, 0.0
      %v6591 = vmax.f32 %v6453, 0.0
      %v6592 = vmax.f32 %v6455, 0.0
      %v6593 = vmax.f32 %v6458, 0.0
      %v6594 = vmax.f32 %v6460, 0.0
      %v6595 = vmax.f32 %v6463, 0.0
      %v6596 = vmax.f32 %v6465, 0.0
      %v6597 = vmax.f32 %v6468, 0.0
      %v6598 = vmax.f32 %v6470, 0.0
      %v6599 = vmax.f32 %v6473, 0.0
      %v6600 = vmax.f32 %v6475, 0.0
      %v6601 = vmax.f32 %v6478, 0.0
      %v6602 = vmax.f32 %v6480, 0.0
      %v6603 = vmax.f32 %v6483, 0.0
      %v6604 = vmax.f32 %v6485, 0.0
      %v6605 = vmax.f32 %v6488, 0.0
      %v6606 = vmax.f32 %v6490, 0.0
      %v6607 = vmax.f32 %v6493, 0.0
      %v6608 = vmax.f32 %v6495, 0.0
      %v6609 = vmax.f32 %v6498, 0.0
      %v6610 = vmax.f32 %v6500, 0.0
      %v6611 = vmax.f32 %v6503, 0.0
      %v6612 = vmax.f32 %v6505, 0.0
      %v6613 = vmax.f32 %v6508, 0.0
      %v6614 = vmax.f32 %v6510, 0.0
      %v6615 = vmax.f32 %v6513, 0.0
      %v6616 = vmax.f32 %v6515, 0.0
      %v6617 = vmax.f32 %v6518, 0.0
      %v6618 = vmax.f32 %v6520, 0.0
      %v6619 = vmax.f32 %v6523, 0.0
      %v6620 = vmax.f32 %v6525, 0.0
      %v6621 = vmax.f32 %v6528, 0.0
      %v6622 = vmax.f32 %v6530, 0.0
      %v6623 = vmax.f32 %v6533, 0.0
      %v6624 = vmax.f32 %v6535, 0.0
      %v6625 = vmax.f32 %v6538, 0.0
      %v6626 = vmax.f32 %v6540, 0.0
      %v6627 = vmax.f32 %v6543, 0.0
      %v6628 = vmax.f32 %v6545, 0.0
      %v6629 = vmax.f32 %v6548, 0.0
      %v6630 = vmax.f32 %v6550, 0.0
      %v6631 = vmax.f32 %v6553, 0.0
      %v6632 = vmax.f32 %v6555, 0.0
      %v6633 = vmax.f32 %v6558, 0.0
      %v6634 = vmax.f32 %v6560, 0.0
      %v6635 = vmax.f32 %v6563, 0.0
      %v6636 = vmax.f32 %v6565, 0.0
      %v6637 = vmax.f32 %v6568, 0.0
      %v6638 = vmax.f32 %v6570, 0.0
      %v6639 = vmax.f32 %v6573, 0.0
      %v6640 = vmax.f32 %v6575, 0.0
      %s6641 = scalar_lea.vmem %s1, 224
      %v6642 = vld [vmem:[%s6641] sm:$0xf]
      %v6643 = vld [vmem:[%s6641 + $0x4] sm:$0xf]
      %v6644 = vld [vmem:[%s6641 + $0x8] sm:$0xf]
      %v6645 = vld [vmem:[%s6641 + $0xc] sm:$0xf]
      %v6646 = vld [vmem:[%s6641 + $0x10] sm:$0xf]
      %v6647 = vld [vmem:[%s6641 + $0x14] sm:$0xf]
      %v6648 = vld [vmem:[%s6641 + $0x18] sm:$0xf]
      %v6649 = vld [vmem:[%s6641 + $0x1c] sm:$0xf]
      %v6650 = vpack.c.bf16 %v6578, %v6577
      %v6651 = vpack.c.bf16 %v6580, %v6579
      %v6652 = vpack.c.bf16 %v6582, %v6581
      %v6653 = vpack.c.bf16 %v6584, %v6583
      %v6654 = vpack.c.bf16 %v6586, %v6585
      %v6655 = vpack.c.bf16 %v6588, %v6587
      %v6656 = vpack.c.bf16 %v6590, %v6589
      %v6657 = vpack.c.bf16 %v6592, %v6591
      %v6658 = vpack.c.bf16 %v6594, %v6593
      %v6659 = vpack.c.bf16 %v6596, %v6595
      %v6660 = vpack.c.bf16 %v6598, %v6597
      %v6661 = vpack.c.bf16 %v6600, %v6599
      %v6662 = vpack.c.bf16 %v6602, %v6601
      %v6663 = vpack.c.bf16 %v6604, %v6603
      %v6664 = vpack.c.bf16 %v6606, %v6605
      %v6665 = vpack.c.bf16 %v6608, %v6607
      %v6666 = vpack.c.bf16 %v6610, %v6609
      %v6667 = vpack.c.bf16 %v6612, %v6611
      %v6668 = vpack.c.bf16 %v6614, %v6613
      %v6669 = vpack.c.bf16 %v6616, %v6615
      %v6670 = vpack.c.bf16 %v6618, %v6617
      %v6671 = vpack.c.bf16 %v6620, %v6619
      %v6672 = vpack.c.bf16 %v6622, %v6621
      %v6673 = vpack.c.bf16 %v6624, %v6623
      %v6674 = vpack.c.bf16 %v6626, %v6625
      %v6675 = vpack.c.bf16 %v6628, %v6627
      %v6676 = vpack.c.bf16 %v6630, %v6629
      %v6677 = vpack.c.bf16 %v6632, %v6631
      %v6678 = vpack.c.bf16 %v6634, %v6633
      %v6679 = vpack.c.bf16 %v6636, %v6635
      %v6680 = vpack.c.bf16 %v6638, %v6637
      %v6681 = vpack.c.bf16 %v6640, %v6639
      %v6682 = vperm.slane %v407, 2
      %v6691 = vunpack.c.l.b16 %v6642
      %v6692 = vunpack.c.l.b16 %v6643
      %v6693 = vunpack.c.l.b16 %v6644
      %v6694 = vunpack.c.l.b16 %v6645
      %v6695 = vunpack.c.l.b16 %v6646
      %v6696 = vunpack.c.l.b16 %v6647
      %v6697 = vunpack.c.l.b16 %v6648
      %v6698 = vunpack.c.l.b16 %v6649
      %v6699 = vpack.c.b16 %v6692, %v6691
      %v6700 = vpack.c.b16 %v6694, %v6693
      %v6701 = vpack.c.b16 %v6696, %v6695
      %v6702 = vpack.c.b16 %v6698, %v6697
      %v6708 = vsel %vm772, %v6650, 0
      %v6711 = vsel %vm772, %v6651, 0
      %v6714 = vsel %vm772, %v6652, 0
      %v6717 = vsel %vm772, %v6653, 0
      %v6720 = vsel %vm772, %v6654, 0
      %v6723 = vsel %vm772, %v6655, 0
      %v6726 = vsel %vm772, %v6656, 0
      %v6729 = vsel %vm772, %v6657, 0
      %v6732 = vsel %vm772, %v6658, 0
      %v6735 = vsel %vm772, %v6659, 0
      %v6738 = vsel %vm772, %v6660, 0
      %v6741 = vsel %vm772, %v6661, 0
      %v6744 = vsel %vm772, %v6662, 0
      %v6747 = vsel %vm772, %v6663, 0
      %v6750 = vsel %vm772, %v6664, 0
      %v6753 = vsel %vm772, %v6665, 0
      %v6756 = vsel %vm772, %v6666, 0
      %v6759 = vsel %vm772, %v6667, 0
      %v6762 = vsel %vm772, %v6668, 0
      %v6765 = vsel %vm772, %v6669, 0
      %v6768 = vsel %vm772, %v6670, 0
      %v6771 = vsel %vm772, %v6671, 0
      %v6774 = vsel %vm772, %v6672, 0
      %v6777 = vsel %vm772, %v6673, 0
      %v6780 = vsel %vm772, %v6674, 0
      %v6783 = vsel %vm772, %v6675, 0
      %v6786 = vsel %vm772, %v6676, 0
      %v6789 = vsel %vm772, %v6677, 0
      %v6792 = vsel %vm772, %v6678, 0
      %v6795 = vsel %vm772, %v6679, 0
      %v6798 = vsel %vm772, %v6680, 0
      %v6801 = vsel %vm772, %v6681, 0
      %6803 = vmatpush.bf16.msra.mxu0 0
      %6804 = vmatpush.bf16.msra.mxu0 0
      %6805 = vmatpush.bf16.msra.mxu0 0
      %6806 = vmatpush.bf16.msra.mxu0 0
      %6807 = vmatpush.bf16.msra.mxu0 %v6702
      %6808 = vmatpush.bf16.msra.mxu0 %v6701
      %6809 = vmatpush.bf16.msra.mxu0 %v6700
      %6810 = vmatpush.bf16.msra.mxu0 %v6699
      %6811 = vmatmul.bf16.gmra.mxu0 %v6708
      %v6812 = vpop.f32.mrf.mxu0
      %v6813 = vadd.f32 %v6682, %v6812
      %v6814 = vpop.f32.mrf.mxu0
      %v6815 = vadd.f32 %v6682, %v6814
      %6816 = vmatmul.bf16.gmra.mxu0 %v6711
      %v6817 = vpop.f32.mrf.mxu0
      %v6818 = vadd.f32 %v6682, %v6817
      %v6819 = vpop.f32.mrf.mxu0
      %v6820 = vadd.f32 %v6682, %v6819
      %6821 = vmatmul.bf16.gmra.mxu0 %v6714
      %v6822 = vpop.f32.mrf.mxu0
      %v6823 = vadd.f32 %v6682, %v6822
      %v6824 = vpop.f32.mrf.mxu0
      %v6825 = vadd.f32 %v6682, %v6824
      %6826 = vmatmul.bf16.gmra.mxu0 %v6717
      %v6827 = vpop.f32.mrf.mxu0
      %v6828 = vadd.f32 %v6682, %v6827
      %v6829 = vpop.f32.mrf.mxu0
      %v6830 = vadd.f32 %v6682, %v6829
      %6831 = vmatmul.bf16.gmra.mxu0 %v6720
      %v6832 = vpop.f32.mrf.mxu0
      %v6833 = vadd.f32 %v6682, %v6832
      %v6834 = vpop.f32.mrf.mxu0
      %v6835 = vadd.f32 %v6682, %v6834
      %6836 = vmatmul.bf16.gmra.mxu0 %v6723
      %v6837 = vpop.f32.mrf.mxu0
      %v6838 = vadd.f32 %v6682, %v6837
      %v6839 = vpop.f32.mrf.mxu0
      %v6840 = vadd.f32 %v6682, %v6839
      %6841 = vmatmul.bf16.gmra.mxu0 %v6726
      %v6842 = vpop.f32.mrf.mxu0
      %v6843 = vadd.f32 %v6682, %v6842
      %v6844 = vpop.f32.mrf.mxu0
      %v6845 = vadd.f32 %v6682, %v6844
      %6846 = vmatmul.bf16.gmra.mxu0 %v6729
      %v6847 = vpop.f32.mrf.mxu0
      %v6848 = vadd.f32 %v6682, %v6847
      %v6849 = vpop.f32.mrf.mxu0
      %v6850 = vadd.f32 %v6682, %v6849
      %6851 = vmatmul.bf16.gmra.mxu0 %v6732
      %v6852 = vpop.f32.mrf.mxu0
      %v6853 = vadd.f32 %v6682, %v6852
      %v6854 = vpop.f32.mrf.mxu0
      %v6855 = vadd.f32 %v6682, %v6854
      %6856 = vmatmul.bf16.gmra.mxu0 %v6735
      %v6857 = vpop.f32.mrf.mxu0
      %v6858 = vadd.f32 %v6682, %v6857
      %v6859 = vpop.f32.mrf.mxu0
      %v6860 = vadd.f32 %v6682, %v6859
      %6861 = vmatmul.bf16.gmra.mxu0 %v6738
      %v6862 = vpop.f32.mrf.mxu0
      %v6863 = vadd.f32 %v6682, %v6862
      %v6864 = vpop.f32.mrf.mxu0
      %v6865 = vadd.f32 %v6682, %v6864
      %6866 = vmatmul.bf16.gmra.mxu0 %v6741
      %v6867 = vpop.f32.mrf.mxu0
      %v6868 = vadd.f32 %v6682, %v6867
      %v6869 = vpop.f32.mrf.mxu0
      %v6870 = vadd.f32 %v6682, %v6869
      %6871 = vmatmul.bf16.gmra.mxu0 %v6744
      %v6872 = vpop.f32.mrf.mxu0
      %v6873 = vadd.f32 %v6682, %v6872
      %v6874 = vpop.f32.mrf.mxu0
      %v6875 = vadd.f32 %v6682, %v6874
      %6876 = vmatmul.bf16.gmra.mxu0 %v6747
      %v6877 = vpop.f32.mrf.mxu0
      %v6878 = vadd.f32 %v6682, %v6877
      %v6879 = vpop.f32.mrf.mxu0
      %v6880 = vadd.f32 %v6682, %v6879
      %6881 = vmatmul.bf16.gmra.mxu0 %v6750
      %v6882 = vpop.f32.mrf.mxu0
      %v6883 = vadd.f32 %v6682, %v6882
      %v6884 = vpop.f32.mrf.mxu0
      %v6885 = vadd.f32 %v6682, %v6884
      %6886 = vmatmul.bf16.gmra.mxu0 %v6753
      %v6887 = vpop.f32.mrf.mxu0
      %v6888 = vadd.f32 %v6682, %v6887
      %v6889 = vpop.f32.mrf.mxu0
      %v6890 = vadd.f32 %v6682, %v6889
      %6891 = vmatmul.bf16.gmra.mxu0 %v6756
      %v6892 = vpop.f32.mrf.mxu0
      %v6893 = vadd.f32 %v6682, %v6892
      %v6894 = vpop.f32.mrf.mxu0
      %v6895 = vadd.f32 %v6682, %v6894
      %6896 = vmatmul.bf16.gmra.mxu0 %v6759
      %v6897 = vpop.f32.mrf.mxu0
      %v6898 = vadd.f32 %v6682, %v6897
      %v6899 = vpop.f32.mrf.mxu0
      %v6900 = vadd.f32 %v6682, %v6899
      %6901 = vmatmul.bf16.gmra.mxu0 %v6762
      %v6902 = vpop.f32.mrf.mxu0
      %v6903 = vadd.f32 %v6682, %v6902
      %v6904 = vpop.f32.mrf.mxu0
      %v6905 = vadd.f32 %v6682, %v6904
      %6906 = vmatmul.bf16.gmra.mxu0 %v6765
      %v6907 = vpop.f32.mrf.mxu0
      %v6908 = vadd.f32 %v6682, %v6907
      %v6909 = vpop.f32.mrf.mxu0
      %v6910 = vadd.f32 %v6682, %v6909
      %6911 = vmatmul.bf16.gmra.mxu0 %v6768
      %v6912 = vpop.f32.mrf.mxu0
      %v6913 = vadd.f32 %v6682, %v6912
      %v6914 = vpop.f32.mrf.mxu0
      %v6915 = vadd.f32 %v6682, %v6914
      %6916 = vmatmul.bf16.gmra.mxu0 %v6771
      %v6917 = vpop.f32.mrf.mxu0
      %v6918 = vadd.f32 %v6682, %v6917
      %v6919 = vpop.f32.mrf.mxu0
      %v6920 = vadd.f32 %v6682, %v6919
      %6921 = vmatmul.bf16.gmra.mxu0 %v6774
      %v6922 = vpop.f32.mrf.mxu0
      %v6923 = vadd.f32 %v6682, %v6922
      %v6924 = vpop.f32.mrf.mxu0
      %v6925 = vadd.f32 %v6682, %v6924
      %6926 = vmatmul.bf16.gmra.mxu0 %v6777
      %v6927 = vpop.f32.mrf.mxu0
      %v6928 = vadd.f32 %v6682, %v6927
      %v6929 = vpop.f32.mrf.mxu0
      %v6930 = vadd.f32 %v6682, %v6929
      %6931 = vmatmul.bf16.gmra.mxu0 %v6780
      %v6932 = vpop.f32.mrf.mxu0
      %v6933 = vadd.f32 %v6682, %v6932
      %v6934 = vpop.f32.mrf.mxu0
      %v6935 = vadd.f32 %v6682, %v6934
      %6936 = vmatmul.bf16.gmra.mxu0 %v6783
      %v6937 = vpop.f32.mrf.mxu0
      %v6938 = vadd.f32 %v6682, %v6937
      %v6939 = vpop.f32.mrf.mxu0
      %v6940 = vadd.f32 %v6682, %v6939
      %6941 = vmatmul.bf16.gmra.mxu0 %v6786
      %v6942 = vpop.f32.mrf.mxu0
      %v6943 = vadd.f32 %v6682, %v6942
      %v6944 = vpop.f32.mrf.mxu0
      %v6945 = vadd.f32 %v6682, %v6944
      %6946 = vmatmul.bf16.gmra.mxu0 %v6789
      %v6947 = vpop.f32.mrf.mxu0
      %v6948 = vadd.f32 %v6682, %v6947
      %v6949 = vpop.f32.mrf.mxu0
      %v6950 = vadd.f32 %v6682, %v6949
      %6951 = vmatmul.bf16.gmra.mxu0 %v6792
      %v6952 = vpop.f32.mrf.mxu0
      %v6953 = vadd.f32 %v6682, %v6952
      %v6954 = vpop.f32.mrf.mxu0
      %v6955 = vadd.f32 %v6682, %v6954
      %6956 = vmatmul.bf16.gmra.mxu0 %v6795
      %v6957 = vpop.f32.mrf.mxu0
      %v6958 = vadd.f32 %v6682, %v6957
      %v6959 = vpop.f32.mrf.mxu0
      %v6960 = vadd.f32 %v6682, %v6959
      %6961 = vmatmul.bf16.gmra.mxu0 %v6798
      %v6962 = vpop.f32.mrf.mxu0
      %v6963 = vadd.f32 %v6682, %v6962
      %v6964 = vpop.f32.mrf.mxu0
      %v6965 = vadd.f32 %v6682, %v6964
      %6966 = vmatmul.bf16.gmra.mxu0 %v6801
      %v6967 = vpop.f32.mrf.mxu0
      %v6968 = vadd.f32 %v6682, %v6967
      %v6969 = vpop.f32.mrf.mxu0
      %v6970 = vadd.f32 %v6682, %v6969
      %6971 = vdwg.mxu0
      %v6972 = vmax.f32 %v6813, 0.0
      %v6973 = vmax.f32 %v6815, 0.0
      %v6974 = vmax.f32 %v6818, 0.0
      %v6975 = vmax.f32 %v6820, 0.0
      %v6976 = vmax.f32 %v6823, 0.0
      %v6977 = vmax.f32 %v6825, 0.0
      %v6978 = vmax.f32 %v6828, 0.0
      %v6979 = vmax.f32 %v6830, 0.0
      %v6980 = vmax.f32 %v6833, 0.0
      %v6981 = vmax.f32 %v6835, 0.0
      %v6982 = vmax.f32 %v6838, 0.0
      %v6983 = vmax.f32 %v6840, 0.0
      %v6984 = vmax.f32 %v6843, 0.0
      %v6985 = vmax.f32 %v6845, 0.0
      %v6986 = vmax.f32 %v6848, 0.0
      %v6987 = vmax.f32 %v6850, 0.0
      %v6988 = vmax.f32 %v6853, 0.0
      %v6989 = vmax.f32 %v6855, 0.0
      %v6990 = vmax.f32 %v6858, 0.0
      %v6991 = vmax.f32 %v6860, 0.0
      %v6992 = vmax.f32 %v6863, 0.0
      %v6993 = vmax.f32 %v6865, 0.0
      %v6994 = vmax.f32 %v6868, 0.0
      %v6995 = vmax.f32 %v6870, 0.0
      %v6996 = vmax.f32 %v6873, 0.0
      %v6997 = vmax.f32 %v6875, 0.0
      %v6998 = vmax.f32 %v6878, 0.0
      %v6999 = vmax.f32 %v6880, 0.0
      %v7000 = vmax.f32 %v6883, 0.0
      %v7001 = vmax.f32 %v6885, 0.0
      %v7002 = vmax.f32 %v6888, 0.0
      %v7003 = vmax.f32 %v6890, 0.0
      %v7004 = vmax.f32 %v6893, 0.0
      %v7005 = vmax.f32 %v6895, 0.0
      %v7006 = vmax.f32 %v6898, 0.0
      %v7007 = vmax.f32 %v6900, 0.0
      %v7008 = vmax.f32 %v6903, 0.0
      %v7009 = vmax.f32 %v6905, 0.0
      %v7010 = vmax.f32 %v6908, 0.0
      %v7011 = vmax.f32 %v6910, 0.0
      %v7012 = vmax.f32 %v6913, 0.0
      %v7013 = vmax.f32 %v6915, 0.0
      %v7014 = vmax.f32 %v6918, 0.0
      %v7015 = vmax.f32 %v6920, 0.0
      %v7016 = vmax.f32 %v6923, 0.0
      %v7017 = vmax.f32 %v6925, 0.0
      %v7018 = vmax.f32 %v6928, 0.0
      %v7019 = vmax.f32 %v6930, 0.0
      %v7020 = vmax.f32 %v6933, 0.0
      %v7021 = vmax.f32 %v6935, 0.0
      %v7022 = vmax.f32 %v6938, 0.0
      %v7023 = vmax.f32 %v6940, 0.0
      %v7024 = vmax.f32 %v6943, 0.0
      %v7025 = vmax.f32 %v6945, 0.0
      %v7026 = vmax.f32 %v6948, 0.0
      %v7027 = vmax.f32 %v6950, 0.0
      %v7028 = vmax.f32 %v6953, 0.0
      %v7029 = vmax.f32 %v6955, 0.0
      %v7030 = vmax.f32 %v6958, 0.0
      %v7031 = vmax.f32 %v6960, 0.0
      %v7032 = vmax.f32 %v6963, 0.0
      %v7033 = vmax.f32 %v6965, 0.0
      %v7034 = vmax.f32 %v6968, 0.0
      %v7035 = vmax.f32 %v6970, 0.0
      %s7036 = scalar_lea.vmem %s4, 32
      %v7037 = vld [vmem:[%s7036] sm:$0xf]
      %v7038 = vld [vmem:[%s7036 + $0x4] sm:$0xf]
      %v7039 = vld [vmem:[%s7036 + $0x8] sm:$0xf]
      %v7040 = vld [vmem:[%s7036 + $0xc] sm:$0xf]
      %v7041 = vld [vmem:[%s7036 + $0x10] sm:$0xf]
      %v7042 = vld [vmem:[%s7036 + $0x14] sm:$0xf]
      %v7043 = vld [vmem:[%s7036 + $0x18] sm:$0xf]
      %v7044 = vld [vmem:[%s7036 + $0x1c] sm:$0xf]
      %v7045 = vpack.c.bf16 %v6973, %v6972
      %v7046 = vpack.c.bf16 %v6975, %v6974
      %v7047 = vpack.c.bf16 %v6977, %v6976
      %v7048 = vpack.c.bf16 %v6979, %v6978
      %v7049 = vpack.c.bf16 %v6981, %v6980
      %v7050 = vpack.c.bf16 %v6983, %v6982
      %v7051 = vpack.c.bf16 %v6985, %v6984
      %v7052 = vpack.c.bf16 %v6987, %v6986
      %v7053 = vpack.c.bf16 %v6989, %v6988
      %v7054 = vpack.c.bf16 %v6991, %v6990
      %v7055 = vpack.c.bf16 %v6993, %v6992
      %v7056 = vpack.c.bf16 %v6995, %v6994
      %v7057 = vpack.c.bf16 %v6997, %v6996
      %v7058 = vpack.c.bf16 %v6999, %v6998
      %v7059 = vpack.c.bf16 %v7001, %v7000
      %v7060 = vpack.c.bf16 %v7003, %v7002
      %v7061 = vpack.c.bf16 %v7005, %v7004
      %v7062 = vpack.c.bf16 %v7007, %v7006
      %v7063 = vpack.c.bf16 %v7009, %v7008
      %v7064 = vpack.c.bf16 %v7011, %v7010
      %v7065 = vpack.c.bf16 %v7013, %v7012
      %v7066 = vpack.c.bf16 %v7015, %v7014
      %v7067 = vpack.c.bf16 %v7017, %v7016
      %v7068 = vpack.c.bf16 %v7019, %v7018
      %v7069 = vpack.c.bf16 %v7021, %v7020
      %v7070 = vpack.c.bf16 %v7023, %v7022
      %v7071 = vpack.c.bf16 %v7025, %v7024
      %v7072 = vpack.c.bf16 %v7027, %v7026
      %v7073 = vpack.c.bf16 %v7029, %v7028
      %v7074 = vpack.c.bf16 %v7031, %v7030
      %v7075 = vpack.c.bf16 %v7033, %v7032
      %v7076 = vpack.c.bf16 %v7035, %v7034
      %v7077 = vperm.slane %v408, 1
      %v7086 = vunpack.c.l.b16 %v7037
      %v7087 = vunpack.c.l.b16 %v7038
      %v7088 = vunpack.c.l.b16 %v7039
      %v7089 = vunpack.c.l.b16 %v7040
      %v7090 = vunpack.c.l.b16 %v7041
      %v7091 = vunpack.c.l.b16 %v7042
      %v7092 = vunpack.c.l.b16 %v7043
      %v7093 = vunpack.c.l.b16 %v7044
      %v7094 = vpack.c.b16 %v7087, %v7086
      %v7095 = vpack.c.b16 %v7089, %v7088
      %v7096 = vpack.c.b16 %v7091, %v7090
      %v7097 = vpack.c.b16 %v7093, %v7092
      %v7103 = vsel %vm772, %v7045, 0
      %v7106 = vsel %vm772, %v7046, 0
      %v7109 = vsel %vm772, %v7047, 0
      %v7112 = vsel %vm772, %v7048, 0
      %v7115 = vsel %vm772, %v7049, 0
      %v7118 = vsel %vm772, %v7050, 0
      %v7121 = vsel %vm772, %v7051, 0
      %v7124 = vsel %vm772, %v7052, 0
      %v7127 = vsel %vm772, %v7053, 0
      %v7130 = vsel %vm772, %v7054, 0
      %v7133 = vsel %vm772, %v7055, 0
      %v7136 = vsel %vm772, %v7056, 0
      %v7139 = vsel %vm772, %v7057, 0
      %v7142 = vsel %vm772, %v7058, 0
      %v7145 = vsel %vm772, %v7059, 0
      %v7148 = vsel %vm772, %v7060, 0
      %v7151 = vsel %vm772, %v7061, 0
      %v7154 = vsel %vm772, %v7062, 0
      %v7157 = vsel %vm772, %v7063, 0
      %v7160 = vsel %vm772, %v7064, 0
      %v7163 = vsel %vm772, %v7065, 0
      %v7166 = vsel %vm772, %v7066, 0
      %v7169 = vsel %vm772, %v7067, 0
      %v7172 = vsel %vm772, %v7068, 0
      %v7175 = vsel %vm772, %v7069, 0
      %v7178 = vsel %vm772, %v7070, 0
      %v7181 = vsel %vm772, %v7071, 0
      %v7184 = vsel %vm772, %v7072, 0
      %v7187 = vsel %vm772, %v7073, 0
      %v7190 = vsel %vm772, %v7074, 0
      %v7193 = vsel %vm772, %v7075, 0
      %v7196 = vsel %vm772, %v7076, 0
      %7198 = vmatpush.bf16.msra.mxu0 0
      %7199 = vmatpush.bf16.msra.mxu0 0
      %7200 = vmatpush.bf16.msra.mxu0 0
      %7201 = vmatpush.bf16.msra.mxu0 0
      %7202 = vmatpush.bf16.msra.mxu0 %v7097
      %7203 = vmatpush.bf16.msra.mxu0 %v7096
      %7204 = vmatpush.bf16.msra.mxu0 %v7095
      %7205 = vmatpush.bf16.msra.mxu0 %v7094
      %7206 = vmatmul.bf16.gmra.mxu0 %v7103
      %v7207 = vpop.f32.mrf.mxu0
      %v7208 = vadd.f32 %v7077, %v7207
      %v7209 = vpop.f32.mrf.mxu0
      %v7210 = vadd.f32 %v7077, %v7209
      %7211 = vmatmul.bf16.gmra.mxu0 %v7106
      %v7212 = vpop.f32.mrf.mxu0
      %v7213 = vadd.f32 %v7077, %v7212
      %v7214 = vpop.f32.mrf.mxu0
      %v7215 = vadd.f32 %v7077, %v7214
      %7216 = vmatmul.bf16.gmra.mxu0 %v7109
      %v7217 = vpop.f32.mrf.mxu0
      %v7218 = vadd.f32 %v7077, %v7217
      %v7219 = vpop.f32.mrf.mxu0
      %v7220 = vadd.f32 %v7077, %v7219
      %7221 = vmatmul.bf16.gmra.mxu0 %v7112
      %v7222 = vpop.f32.mrf.mxu0
      %v7223 = vadd.f32 %v7077, %v7222
      %v7224 = vpop.f32.mrf.mxu0
      %v7225 = vadd.f32 %v7077, %v7224
      %7226 = vmatmul.bf16.gmra.mxu0 %v7115
      %v7227 = vpop.f32.mrf.mxu0
      %v7228 = vadd.f32 %v7077, %v7227
      %v7229 = vpop.f32.mrf.mxu0
      %v7230 = vadd.f32 %v7077, %v7229
      %7231 = vmatmul.bf16.gmra.mxu0 %v7118
      %v7232 = vpop.f32.mrf.mxu0
      %v7233 = vadd.f32 %v7077, %v7232
      %v7234 = vpop.f32.mrf.mxu0
      %v7235 = vadd.f32 %v7077, %v7234
      %7236 = vmatmul.bf16.gmra.mxu0 %v7121
      %v7237 = vpop.f32.mrf.mxu0
      %v7238 = vadd.f32 %v7077, %v7237
      %v7239 = vpop.f32.mrf.mxu0
      %v7240 = vadd.f32 %v7077, %v7239
      %7241 = vmatmul.bf16.gmra.mxu0 %v7124
      %v7242 = vpop.f32.mrf.mxu0
      %v7243 = vadd.f32 %v7077, %v7242
      %v7244 = vpop.f32.mrf.mxu0
      %v7245 = vadd.f32 %v7077, %v7244
      %7246 = vmatmul.bf16.gmra.mxu0 %v7127
      %v7247 = vpop.f32.mrf.mxu0
      %v7248 = vadd.f32 %v7077, %v7247
      %v7249 = vpop.f32.mrf.mxu0
      %v7250 = vadd.f32 %v7077, %v7249
      %7251 = vmatmul.bf16.gmra.mxu0 %v7130
      %v7252 = vpop.f32.mrf.mxu0
      %v7253 = vadd.f32 %v7077, %v7252
      %v7254 = vpop.f32.mrf.mxu0
      %v7255 = vadd.f32 %v7077, %v7254
      %7256 = vmatmul.bf16.gmra.mxu0 %v7133
      %v7257 = vpop.f32.mrf.mxu0
      %v7258 = vadd.f32 %v7077, %v7257
      %v7259 = vpop.f32.mrf.mxu0
      %v7260 = vadd.f32 %v7077, %v7259
      %7261 = vmatmul.bf16.gmra.mxu0 %v7136
      %v7262 = vpop.f32.mrf.mxu0
      %v7263 = vadd.f32 %v7077, %v7262
      %v7264 = vpop.f32.mrf.mxu0
      %v7265 = vadd.f32 %v7077, %v7264
      %7266 = vmatmul.bf16.gmra.mxu0 %v7139
      %v7267 = vpop.f32.mrf.mxu0
      %v7268 = vadd.f32 %v7077, %v7267
      %v7269 = vpop.f32.mrf.mxu0
      %v7270 = vadd.f32 %v7077, %v7269
      %7271 = vmatmul.bf16.gmra.mxu0 %v7142
      %v7272 = vpop.f32.mrf.mxu0
      %v7273 = vadd.f32 %v7077, %v7272
      %v7274 = vpop.f32.mrf.mxu0
      %v7275 = vadd.f32 %v7077, %v7274
      %7276 = vmatmul.bf16.gmra.mxu0 %v7145
      %v7277 = vpop.f32.mrf.mxu0
      %v7278 = vadd.f32 %v7077, %v7277
      %v7279 = vpop.f32.mrf.mxu0
      %v7280 = vadd.f32 %v7077, %v7279
      %7281 = vmatmul.bf16.gmra.mxu0 %v7148
      %v7282 = vpop.f32.mrf.mxu0
      %v7283 = vadd.f32 %v7077, %v7282
      %v7284 = vpop.f32.mrf.mxu0
      %v7285 = vadd.f32 %v7077, %v7284
      %7286 = vmatmul.bf16.gmra.mxu0 %v7151
      %v7287 = vpop.f32.mrf.mxu0
      %v7288 = vadd.f32 %v7077, %v7287
      %v7289 = vpop.f32.mrf.mxu0
      %v7290 = vadd.f32 %v7077, %v7289
      %7291 = vmatmul.bf16.gmra.mxu0 %v7154
      %v7292 = vpop.f32.mrf.mxu0
      %v7293 = vadd.f32 %v7077, %v7292
      %v7294 = vpop.f32.mrf.mxu0
      %v7295 = vadd.f32 %v7077, %v7294
      %7296 = vmatmul.bf16.gmra.mxu0 %v7157
      %v7297 = vpop.f32.mrf.mxu0
      %v7298 = vadd.f32 %v7077, %v7297
      %v7299 = vpop.f32.mrf.mxu0
      %v7300 = vadd.f32 %v7077, %v7299
      %7301 = vmatmul.bf16.gmra.mxu0 %v7160
      %v7302 = vpop.f32.mrf.mxu0
      %v7303 = vadd.f32 %v7077, %v7302
      %v7304 = vpop.f32.mrf.mxu0
      %v7305 = vadd.f32 %v7077, %v7304
      %7306 = vmatmul.bf16.gmra.mxu0 %v7163
      %v7307 = vpop.f32.mrf.mxu0
      %v7308 = vadd.f32 %v7077, %v7307
      %v7309 = vpop.f32.mrf.mxu0
      %v7310 = vadd.f32 %v7077, %v7309
      %7311 = vmatmul.bf16.gmra.mxu0 %v7166
      %v7312 = vpop.f32.mrf.mxu0
      %v7313 = vadd.f32 %v7077, %v7312
      %v7314 = vpop.f32.mrf.mxu0
      %v7315 = vadd.f32 %v7077, %v7314
      %7316 = vmatmul.bf16.gmra.mxu0 %v7169
      %v7317 = vpop.f32.mrf.mxu0
      %v7318 = vadd.f32 %v7077, %v7317
      %v7319 = vpop.f32.mrf.mxu0
      %v7320 = vadd.f32 %v7077, %v7319
      %7321 = vmatmul.bf16.gmra.mxu0 %v7172
      %v7322 = vpop.f32.mrf.mxu0
      %v7323 = vadd.f32 %v7077, %v7322
      %v7324 = vpop.f32.mrf.mxu0
      %v7325 = vadd.f32 %v7077, %v7324
      %7326 = vmatmul.bf16.gmra.mxu0 %v7175
      %v7327 = vpop.f32.mrf.mxu0
      %v7328 = vadd.f32 %v7077, %v7327
      %v7329 = vpop.f32.mrf.mxu0
      %v7330 = vadd.f32 %v7077, %v7329
      %7331 = vmatmul.bf16.gmra.mxu0 %v7178
      %v7332 = vpop.f32.mrf.mxu0
      %v7333 = vadd.f32 %v7077, %v7332
      %v7334 = vpop.f32.mrf.mxu0
      %v7335 = vadd.f32 %v7077, %v7334
      %7336 = vmatmul.bf16.gmra.mxu0 %v7181
      %v7337 = vpop.f32.mrf.mxu0
      %v7338 = vadd.f32 %v7077, %v7337
      %v7339 = vpop.f32.mrf.mxu0
      %v7340 = vadd.f32 %v7077, %v7339
      %7341 = vmatmul.bf16.gmra.mxu0 %v7184
      %v7342 = vpop.f32.mrf.mxu0
      %v7343 = vadd.f32 %v7077, %v7342
      %v7344 = vpop.f32.mrf.mxu0
      %v7345 = vadd.f32 %v7077, %v7344
      %7346 = vmatmul.bf16.gmra.mxu0 %v7187
      %v7347 = vpop.f32.mrf.mxu0
      %v7348 = vadd.f32 %v7077, %v7347
      %v7349 = vpop.f32.mrf.mxu0
      %v7350 = vadd.f32 %v7077, %v7349
      %7351 = vmatmul.bf16.gmra.mxu0 %v7190
      %v7352 = vpop.f32.mrf.mxu0
      %v7353 = vadd.f32 %v7077, %v7352
      %v7354 = vpop.f32.mrf.mxu0
      %v7355 = vadd.f32 %v7077, %v7354
      %7356 = vmatmul.bf16.gmra.mxu0 %v7193
      %v7357 = vpop.f32.mrf.mxu0
      %v7358 = vadd.f32 %v7077, %v7357
      %v7359 = vpop.f32.mrf.mxu0
      %v7360 = vadd.f32 %v7077, %v7359
      %7361 = vmatmul.bf16.gmra.mxu0 %v7196
      %v7362 = vpop.f32.mrf.mxu0
      %v7363 = vadd.f32 %v7077, %v7362
      %v7364 = vpop.f32.mrf.mxu0
      %v7365 = vadd.f32 %v7077, %v7364
      %7366 = vdwg.mxu0
      %v7367 = vxor.u32 %v7208, 2147483648
      %v7368 = vxor.u32 %v7210, 2147483648
      %v7369 = vxor.u32 %v7213, 2147483648
      %v7370 = vxor.u32 %v7215, 2147483648
      %v7371 = vxor.u32 %v7218, 2147483648
      %v7372 = vxor.u32 %v7220, 2147483648
      %v7373 = vxor.u32 %v7223, 2147483648
      %v7374 = vxor.u32 %v7225, 2147483648
      %v7375 = vxor.u32 %v7228, 2147483648
      %v7376 = vxor.u32 %v7230, 2147483648
      %v7377 = vxor.u32 %v7233, 2147483648
      %v7378 = vxor.u32 %v7235, 2147483648
      %v7379 = vxor.u32 %v7238, 2147483648
      %v7380 = vxor.u32 %v7240, 2147483648
      %v7381 = vxor.u32 %v7243, 2147483648
      %v7382 = vxor.u32 %v7245, 2147483648
      %v7383 = vxor.u32 %v7248, 2147483648
      %v7384 = vxor.u32 %v7250, 2147483648
      %v7385 = vxor.u32 %v7253, 2147483648
      %v7386 = vxor.u32 %v7255, 2147483648
      %v7387 = vxor.u32 %v7258, 2147483648
      %v7388 = vxor.u32 %v7260, 2147483648
      %v7389 = vxor.u32 %v7263, 2147483648
      %v7390 = vxor.u32 %v7265, 2147483648
      %v7391 = vxor.u32 %v7268, 2147483648
      %v7392 = vxor.u32 %v7270, 2147483648
      %v7393 = vxor.u32 %v7273, 2147483648
      %v7394 = vxor.u32 %v7275, 2147483648
      %v7395 = vxor.u32 %v7278, 2147483648
      %v7396 = vxor.u32 %v7280, 2147483648
      %v7397 = vxor.u32 %v7283, 2147483648
      %v7398 = vxor.u32 %v7285, 2147483648
      %v7399 = vxor.u32 %v7288, 2147483648
      %v7400 = vxor.u32 %v7290, 2147483648
      %v7401 = vxor.u32 %v7293, 2147483648
      %v7402 = vxor.u32 %v7295, 2147483648
      %v7403 = vxor.u32 %v7298, 2147483648
      %v7404 = vxor.u32 %v7300, 2147483648
      %v7405 = vxor.u32 %v7303, 2147483648
      %v7406 = vxor.u32 %v7305, 2147483648
      %v7407 = vxor.u32 %v7308, 2147483648
      %v7408 = vxor.u32 %v7310, 2147483648
      %v7409 = vxor.u32 %v7313, 2147483648
      %v7410 = vxor.u32 %v7315, 2147483648
      %v7411 = vxor.u32 %v7318, 2147483648
      %v7412 = vxor.u32 %v7320, 2147483648
      %v7413 = vxor.u32 %v7323, 2147483648
      %v7414 = vxor.u32 %v7325, 2147483648
      %v7415 = vxor.u32 %v7328, 2147483648
      %v7416 = vxor.u32 %v7330, 2147483648
      %v7417 = vxor.u32 %v7333, 2147483648
      %v7418 = vxor.u32 %v7335, 2147483648
      %v7419 = vxor.u32 %v7338, 2147483648
      %v7420 = vxor.u32 %v7340, 2147483648
      %v7421 = vxor.u32 %v7343, 2147483648
      %v7422 = vxor.u32 %v7345, 2147483648
      %v7423 = vxor.u32 %v7348, 2147483648
      %v7424 = vxor.u32 %v7350, 2147483648
      %v7425 = vxor.u32 %v7353, 2147483648
      %v7426 = vxor.u32 %v7355, 2147483648
      %v7427 = vxor.u32 %v7358, 2147483648
      %v7428 = vxor.u32 %v7360, 2147483648
      %v7429 = vxor.u32 %v7363, 2147483648
      %v7430 = vxor.u32 %v7365, 2147483648
      %v7431 = vmul.f32 %v7367, 1.442695
      %v7432 = vpow.pop %v7431
      %v7433 = vmul.f32 %v7368, 1.442695
      %v7434 = vpow.pop %v7433
      %v7435 = vmul.f32 %v7369, 1.442695
      %v7436 = vpow.pop %v7435
      %v7437 = vmul.f32 %v7370, 1.442695
      %v7438 = vpow.pop %v7437
      %v7439 = vmul.f32 %v7371, 1.442695
      %v7440 = vpow.pop %v7439
      %v7441 = vmul.f32 %v7372, 1.442695
      %v7442 = vpow.pop %v7441
      %v7443 = vmul.f32 %v7373, 1.442695
      %v7444 = vpow.pop %v7443
      %v7445 = vmul.f32 %v7374, 1.442695
      %v7446 = vpow.pop %v7445
      %v7447 = vmul.f32 %v7375, 1.442695
      %v7448 = vpow.pop %v7447
      %v7449 = vmul.f32 %v7376, 1.442695
      %v7450 = vpow.pop %v7449
      %v7451 = vmul.f32 %v7377, 1.442695
      %v7452 = vpow.pop %v7451
      %v7453 = vmul.f32 %v7378, 1.442695
      %v7454 = vpow.pop %v7453
      %v7455 = vmul.f32 %v7379, 1.442695
      %v7456 = vpow.pop %v7455
      %v7457 = vmul.f32 %v7380, 1.442695
      %v7458 = vpow.pop %v7457
      %v7459 = vmul.f32 %v7381, 1.442695
      %v7460 = vpow.pop %v7459
      %v7461 = vmul.f32 %v7382, 1.442695
      %v7462 = vpow.pop %v7461
      %v7463 = vmul.f32 %v7383, 1.442695
      %v7464 = vpow.pop %v7463
      %v7465 = vmul.f32 %v7384, 1.442695
      %v7466 = vpow.pop %v7465
      %v7467 = vmul.f32 %v7385, 1.442695
      %v7468 = vpow.pop %v7467
      %v7469 = vmul.f32 %v7386, 1.442695
      %v7470 = vpow.pop %v7469
      %v7471 = vmul.f32 %v7387, 1.442695
      %v7472 = vpow.pop %v7471
      %v7473 = vmul.f32 %v7388, 1.442695
      %v7474 = vpow.pop %v7473
      %v7475 = vmul.f32 %v7389, 1.442695
      %v7476 = vpow.pop %v7475
      %v7477 = vmul.f32 %v7390, 1.442695
      %v7478 = vpow.pop %v7477
      %v7479 = vmul.f32 %v7391, 1.442695
      %v7480 = vpow.pop %v7479
      %v7481 = vmul.f32 %v7392, 1.442695
      %v7482 = vpow.pop %v7481
      %v7483 = vmul.f32 %v7393, 1.442695
      %v7484 = vpow.pop %v7483
      %v7485 = vmul.f32 %v7394, 1.442695
      %v7486 = vpow.pop %v7485
      %v7487 = vmul.f32 %v7395, 1.442695
      %v7488 = vpow.pop %v7487
      %v7489 = vmul.f32 %v7396, 1.442695
      %v7490 = vpow.pop %v7489
      %v7491 = vmul.f32 %v7397, 1.442695
      %v7492 = vpow.pop %v7491
      %v7493 = vmul.f32 %v7398, 1.442695
      %v7494 = vpow.pop %v7493
      %v7495 = vmul.f32 %v7399, 1.442695
      %v7496 = vpow.pop %v7495
      %v7497 = vmul.f32 %v7400, 1.442695
      %v7498 = vpow.pop %v7497
      %v7499 = vmul.f32 %v7401, 1.442695
      %v7500 = vpow.pop %v7499
      %v7501 = vmul.f32 %v7402, 1.442695
      %v7502 = vpow.pop %v7501
      %v7503 = vmul.f32 %v7403, 1.442695
      %v7504 = vpow.pop %v7503
      %v7505 = vmul.f32 %v7404, 1.442695
      %v7506 = vpow.pop %v7505
      %v7507 = vmul.f32 %v7405, 1.442695
      %v7508 = vpow.pop %v7507
      %v7509 = vmul.f32 %v7406, 1.442695
      %v7510 = vpow.pop %v7509
      %v7511 = vmul.f32 %v7407, 1.442695
      %v7512 = vpow.pop %v7511
      %v7513 = vmul.f32 %v7408, 1.442695
      %v7514 = vpow.pop %v7513
      %v7515 = vmul.f32 %v7409, 1.442695
      %v7516 = vpow.pop %v7515
      %v7517 = vmul.f32 %v7410, 1.442695
      %v7518 = vpow.pop %v7517
      %v7519 = vmul.f32 %v7411, 1.442695
      %v7520 = vpow.pop %v7519
      %v7521 = vmul.f32 %v7412, 1.442695
      %v7522 = vpow.pop %v7521
      %v7523 = vmul.f32 %v7413, 1.442695
      %v7524 = vpow.pop %v7523
      %v7525 = vmul.f32 %v7414, 1.442695
      %v7526 = vpow.pop %v7525
      %v7527 = vmul.f32 %v7415, 1.442695
      %v7528 = vpow.pop %v7527
      %v7529 = vmul.f32 %v7416, 1.442695
      %v7530 = vpow.pop %v7529
      %v7531 = vmul.f32 %v7417, 1.442695
      %v7532 = vpow.pop %v7531
      %v7533 = vmul.f32 %v7418, 1.442695
      %v7534 = vpow.pop %v7533
      %v7535 = vmul.f32 %v7419, 1.442695
      %v7536 = vpow.pop %v7535
      %v7537 = vmul.f32 %v7420, 1.442695
      %v7538 = vpow.pop %v7537
      %v7539 = vmul.f32 %v7421, 1.442695
      %v7540 = vpow.pop %v7539
      %v7541 = vmul.f32 %v7422, 1.442695
      %v7542 = vpow.pop %v7541
      %v7543 = vmul.f32 %v7423, 1.442695
      %v7544 = vpow.pop %v7543
      %v7545 = vmul.f32 %v7424, 1.442695
      %v7546 = vpow.pop %v7545
      %v7547 = vmul.f32 %v7425, 1.442695
      %v7548 = vpow.pop %v7547
      %v7549 = vmul.f32 %v7426, 1.442695
      %v7550 = vpow.pop %v7549
      %v7551 = vmul.f32 %v7427, 1.442695
      %v7552 = vpow.pop %v7551
      %v7553 = vmul.f32 %v7428, 1.442695
      %v7554 = vpow.pop %v7553
      %v7555 = vmul.f32 %v7429, 1.442695
      %v7556 = vpow.pop %v7555
      %v7557 = vmul.f32 %v7430, 1.442695
      %v7558 = vpow.pop %v7557
      %v7559 = vadd.f32 %v7432, 1.0
      %v7560 = vadd.f32 %v7434, 1.0
      %v7561 = vadd.f32 %v7436, 1.0
      %v7562 = vadd.f32 %v7438, 1.0
      %v7563 = vadd.f32 %v7440, 1.0
      %v7564 = vadd.f32 %v7442, 1.0
      %v7565 = vadd.f32 %v7444, 1.0
      %v7566 = vadd.f32 %v7446, 1.0
      %v7567 = vadd.f32 %v7448, 1.0
      %v7568 = vadd.f32 %v7450, 1.0
      %v7569 = vadd.f32 %v7452, 1.0
      %v7570 = vadd.f32 %v7454, 1.0
      %v7571 = vadd.f32 %v7456, 1.0
      %v7572 = vadd.f32 %v7458, 1.0
      %v7573 = vadd.f32 %v7460, 1.0
      %v7574 = vadd.f32 %v7462, 1.0
      %v7575 = vadd.f32 %v7464, 1.0
      %v7576 = vadd.f32 %v7466, 1.0
      %v7577 = vadd.f32 %v7468, 1.0
      %v7578 = vadd.f32 %v7470, 1.0
      %v7579 = vadd.f32 %v7472, 1.0
      %v7580 = vadd.f32 %v7474, 1.0
      %v7581 = vadd.f32 %v7476, 1.0
      %v7582 = vadd.f32 %v7478, 1.0
      %v7583 = vadd.f32 %v7480, 1.0
      %v7584 = vadd.f32 %v7482, 1.0
      %v7585 = vadd.f32 %v7484, 1.0
      %v7586 = vadd.f32 %v7486, 1.0
      %v7587 = vadd.f32 %v7488, 1.0
      %v7588 = vadd.f32 %v7490, 1.0
      %v7589 = vadd.f32 %v7492, 1.0
      %v7590 = vadd.f32 %v7494, 1.0
      %v7591 = vadd.f32 %v7496, 1.0
      %v7592 = vadd.f32 %v7498, 1.0
      %v7593 = vadd.f32 %v7500, 1.0
      %v7594 = vadd.f32 %v7502, 1.0
      %v7595 = vadd.f32 %v7504, 1.0
      %v7596 = vadd.f32 %v7506, 1.0
      %v7597 = vadd.f32 %v7508, 1.0
      %v7598 = vadd.f32 %v7510, 1.0
      %v7599 = vadd.f32 %v7512, 1.0
      %v7600 = vadd.f32 %v7514, 1.0
      %v7601 = vadd.f32 %v7516, 1.0
      %v7602 = vadd.f32 %v7518, 1.0
      %v7603 = vadd.f32 %v7520, 1.0
      %v7604 = vadd.f32 %v7522, 1.0
      %v7605 = vadd.f32 %v7524, 1.0
      %v7606 = vadd.f32 %v7526, 1.0
      %v7607 = vadd.f32 %v7528, 1.0
      %v7608 = vadd.f32 %v7530, 1.0
      %v7609 = vadd.f32 %v7532, 1.0
      %v7610 = vadd.f32 %v7534, 1.0
      %v7611 = vadd.f32 %v7536, 1.0
      %v7612 = vadd.f32 %v7538, 1.0
      %v7613 = vadd.f32 %v7540, 1.0
      %v7614 = vadd.f32 %v7542, 1.0
      %v7615 = vadd.f32 %v7544, 1.0
      %v7616 = vadd.f32 %v7546, 1.0
      %v7617 = vadd.f32 %v7548, 1.0
      %v7618 = vadd.f32 %v7550, 1.0
      %v7619 = vadd.f32 %v7552, 1.0
      %v7620 = vadd.f32 %v7554, 1.0
      %v7621 = vadd.f32 %v7556, 1.0
      %v7622 = vadd.f32 %v7558, 1.0
      %v7623 = vrcp.pop %v7559
      %v7624 = vmul.f32 %v7559, %v7623
      %v7625 = vsub.f32 1.0, %v7624
      %v7626 = vmul.f32 %v7623, %v7625
      %v7627 = vadd.f32 %v7623, %v7626
      %vm7628 = vweird.f32 %v7559
      %vm7629 = vweird.f32 %v7623
      %vm7630 = vmor %vm7628, %vm7629
      %v7631 = vsel %vm7630, %v7623, %v7627
      %v7632 = vand.u32 2147483647, %v7559
      %vm7633 = vcmp.eq.f32.partialorder %v7632, 8.507059e+37
      %v7634 = vand.u32 %v7559, 2147483648
      %v7635 = vor.u32 1.1754944e-38, %v7634
      %v7636 = vsel %vm7633, %v7635, %v7631
      %v7637 = vmul.f32 1.0, %v7636
      %v7638 = vrcp.pop %v7560
      %v7639 = vmul.f32 %v7560, %v7638
      %v7640 = vsub.f32 1.0, %v7639
      %v7641 = vmul.f32 %v7638, %v7640
      %v7642 = vadd.f32 %v7638, %v7641
      %vm7643 = vweird.f32 %v7560
      %vm7644 = vweird.f32 %v7638
      %vm7645 = vmor %vm7643, %vm7644
      %v7646 = vsel %vm7645, %v7638, %v7642
      %v7647 = vand.u32 2147483647, %v7560
      %vm7648 = vcmp.eq.f32.partialorder %v7647, 8.507059e+37
      %v7649 = vand.u32 %v7560, 2147483648
      %v7650 = vor.u32 1.1754944e-38, %v7649
      %v7651 = vsel %vm7648, %v7650, %v7646
      %v7652 = vmul.f32 1.0, %v7651
      %v7653 = vrcp.pop %v7561
      %v7654 = vmul.f32 %v7561, %v7653
      %v7655 = vsub.f32 1.0, %v7654
      %v7656 = vmul.f32 %v7653, %v7655
      %v7657 = vadd.f32 %v7653, %v7656
      %vm7658 = vweird.f32 %v7561
      %vm7659 = vweird.f32 %v7653
      %vm7660 = vmor %vm7658, %vm7659
      %v7661 = vsel %vm7660, %v7653, %v7657
      %v7662 = vand.u32 2147483647, %v7561
      %vm7663 = vcmp.eq.f32.partialorder %v7662, 8.507059e+37
      %v7664 = vand.u32 %v7561, 2147483648
      %v7665 = vor.u32 1.1754944e-38, %v7664
      %v7666 = vsel %vm7663, %v7665, %v7661
      %v7667 = vmul.f32 1.0, %v7666
      %v7668 = vrcp.pop %v7562
      %v7669 = vmul.f32 %v7562, %v7668
      %v7670 = vsub.f32 1.0, %v7669
      %v7671 = vmul.f32 %v7668, %v7670
      %v7672 = vadd.f32 %v7668, %v7671
      %vm7673 = vweird.f32 %v7562
      %vm7674 = vweird.f32 %v7668
      %vm7675 = vmor %vm7673, %vm7674
      %v7676 = vsel %vm7675, %v7668, %v7672
      %v7677 = vand.u32 2147483647, %v7562
      %vm7678 = vcmp.eq.f32.partialorder %v7677, 8.507059e+37
      %v7679 = vand.u32 %v7562, 2147483648
      %v7680 = vor.u32 1.1754944e-38, %v7679
      %v7681 = vsel %vm7678, %v7680, %v7676
      %v7682 = vmul.f32 1.0, %v7681
      %v7683 = vrcp.pop %v7563
      %v7684 = vmul.f32 %v7563, %v7683
      %v7685 = vsub.f32 1.0, %v7684
      %v7686 = vmul.f32 %v7683, %v7685
      %v7687 = vadd.f32 %v7683, %v7686
      %vm7688 = vweird.f32 %v7563
      %vm7689 = vweird.f32 %v7683
      %vm7690 = vmor %vm7688, %vm7689
      %v7691 = vsel %vm7690, %v7683, %v7687
      %v7692 = vand.u32 2147483647, %v7563
      %vm7693 = vcmp.eq.f32.partialorder %v7692, 8.507059e+37
      %v7694 = vand.u32 %v7563, 2147483648
      %v7695 = vor.u32 1.1754944e-38, %v7694
      %v7696 = vsel %vm7693, %v7695, %v7691
      %v7697 = vmul.f32 1.0, %v7696
      %v7698 = vrcp.pop %v7564
      %v7699 = vmul.f32 %v7564, %v7698
      %v7700 = vsub.f32 1.0, %v7699
      %v7701 = vmul.f32 %v7698, %v7700
      %v7702 = vadd.f32 %v7698, %v7701
      %vm7703 = vweird.f32 %v7564
      %vm7704 = vweird.f32 %v7698
      %vm7705 = vmor %vm7703, %vm7704
      %v7706 = vsel %vm7705, %v7698, %v7702
      %v7707 = vand.u32 2147483647, %v7564
      %vm7708 = vcmp.eq.f32.partialorder %v7707, 8.507059e+37
      %v7709 = vand.u32 %v7564, 2147483648
      %v7710 = vor.u32 1.1754944e-38, %v7709
      %v7711 = vsel %vm7708, %v7710, %v7706
      %v7712 = vmul.f32 1.0, %v7711
      %v7713 = vrcp.pop %v7565
      %v7714 = vmul.f32 %v7565, %v7713
      %v7715 = vsub.f32 1.0, %v7714
      %v7716 = vmul.f32 %v7713, %v7715
      %v7717 = vadd.f32 %v7713, %v7716
      %vm7718 = vweird.f32 %v7565
      %vm7719 = vweird.f32 %v7713
      %vm7720 = vmor %vm7718, %vm7719
      %v7721 = vsel %vm7720, %v7713, %v7717
      %v7722 = vand.u32 2147483647, %v7565
      %vm7723 = vcmp.eq.f32.partialorder %v7722, 8.507059e+37
      %v7724 = vand.u32 %v7565, 2147483648
      %v7725 = vor.u32 1.1754944e-38, %v7724
      %v7726 = vsel %vm7723, %v7725, %v7721
      %v7727 = vmul.f32 1.0, %v7726
      %v7728 = vrcp.pop %v7566
      %v7729 = vmul.f32 %v7566, %v7728
      %v7730 = vsub.f32 1.0, %v7729
      %v7731 = vmul.f32 %v7728, %v7730
      %v7732 = vadd.f32 %v7728, %v7731
      %vm7733 = vweird.f32 %v7566
      %vm7734 = vweird.f32 %v7728
      %vm7735 = vmor %vm7733, %vm7734
      %v7736 = vsel %vm7735, %v7728, %v7732
      %v7737 = vand.u32 2147483647, %v7566
      %vm7738 = vcmp.eq.f32.partialorder %v7737, 8.507059e+37
      %v7739 = vand.u32 %v7566, 2147483648
      %v7740 = vor.u32 1.1754944e-38, %v7739
      %v7741 = vsel %vm7738, %v7740, %v7736
      %v7742 = vmul.f32 1.0, %v7741
      %v7743 = vrcp.pop %v7567
      %v7744 = vmul.f32 %v7567, %v7743
      %v7745 = vsub.f32 1.0, %v7744
      %v7746 = vmul.f32 %v7743, %v7745
      %v7747 = vadd.f32 %v7743, %v7746
      %vm7748 = vweird.f32 %v7567
      %vm7749 = vweird.f32 %v7743
      %vm7750 = vmor %vm7748, %vm7749
      %v7751 = vsel %vm7750, %v7743, %v7747
      %v7752 = vand.u32 2147483647, %v7567
      %vm7753 = vcmp.eq.f32.partialorder %v7752, 8.507059e+37
      %v7754 = vand.u32 %v7567, 2147483648
      %v7755 = vor.u32 1.1754944e-38, %v7754
      %v7756 = vsel %vm7753, %v7755, %v7751
      %v7757 = vmul.f32 1.0, %v7756
      %v7758 = vrcp.pop %v7568
      %v7759 = vmul.f32 %v7568, %v7758
      %v7760 = vsub.f32 1.0, %v7759
      %v7761 = vmul.f32 %v7758, %v7760
      %v7762 = vadd.f32 %v7758, %v7761
      %vm7763 = vweird.f32 %v7568
      %vm7764 = vweird.f32 %v7758
      %vm7765 = vmor %vm7763, %vm7764
      %v7766 = vsel %vm7765, %v7758, %v7762
      %v7767 = vand.u32 2147483647, %v7568
      %vm7768 = vcmp.eq.f32.partialorder %v7767, 8.507059e+37
      %v7769 = vand.u32 %v7568, 2147483648
      %v7770 = vor.u32 1.1754944e-38, %v7769
      %v7771 = vsel %vm7768, %v7770, %v7766
      %v7772 = vmul.f32 1.0, %v7771
      %v7773 = vrcp.pop %v7569
      %v7774 = vmul.f32 %v7569, %v7773
      %v7775 = vsub.f32 1.0, %v7774
      %v7776 = vmul.f32 %v7773, %v7775
      %v7777 = vadd.f32 %v7773, %v7776
      %vm7778 = vweird.f32 %v7569
      %vm7779 = vweird.f32 %v7773
      %vm7780 = vmor %vm7778, %vm7779
      %v7781 = vsel %vm7780, %v7773, %v7777
      %v7782 = vand.u32 2147483647, %v7569
      %vm7783 = vcmp.eq.f32.partialorder %v7782, 8.507059e+37
      %v7784 = vand.u32 %v7569, 2147483648
      %v7785 = vor.u32 1.1754944e-38, %v7784
      %v7786 = vsel %vm7783, %v7785, %v7781
      %v7787 = vmul.f32 1.0, %v7786
      %v7788 = vrcp.pop %v7570
      %v7789 = vmul.f32 %v7570, %v7788
      %v7790 = vsub.f32 1.0, %v7789
      %v7791 = vmul.f32 %v7788, %v7790
      %v7792 = vadd.f32 %v7788, %v7791
      %vm7793 = vweird.f32 %v7570
      %vm7794 = vweird.f32 %v7788
      %vm7795 = vmor %vm7793, %vm7794
      %v7796 = vsel %vm7795, %v7788, %v7792
      %v7797 = vand.u32 2147483647, %v7570
      %vm7798 = vcmp.eq.f32.partialorder %v7797, 8.507059e+37
      %v7799 = vand.u32 %v7570, 2147483648
      %v7800 = vor.u32 1.1754944e-38, %v7799
      %v7801 = vsel %vm7798, %v7800, %v7796
      %v7802 = vmul.f32 1.0, %v7801
      %v7803 = vrcp.pop %v7571
      %v7804 = vmul.f32 %v7571, %v7803
      %v7805 = vsub.f32 1.0, %v7804
      %v7806 = vmul.f32 %v7803, %v7805
      %v7807 = vadd.f32 %v7803, %v7806
      %vm7808 = vweird.f32 %v7571
      %vm7809 = vweird.f32 %v7803
      %vm7810 = vmor %vm7808, %vm7809
      %v7811 = vsel %vm7810, %v7803, %v7807
      %v7812 = vand.u32 2147483647, %v7571
      %vm7813 = vcmp.eq.f32.partialorder %v7812, 8.507059e+37
      %v7814 = vand.u32 %v7571, 2147483648
      %v7815 = vor.u32 1.1754944e-38, %v7814
      %v7816 = vsel %vm7813, %v7815, %v7811
      %v7817 = vmul.f32 1.0, %v7816
      %v7818 = vrcp.pop %v7572
      %v7819 = vmul.f32 %v7572, %v7818
      %v7820 = vsub.f32 1.0, %v7819
      %v7821 = vmul.f32 %v7818, %v7820
      %v7822 = vadd.f32 %v7818, %v7821
      %vm7823 = vweird.f32 %v7572
      %vm7824 = vweird.f32 %v7818
      %vm7825 = vmor %vm7823, %vm7824
      %v7826 = vsel %vm7825, %v7818, %v7822
      %v7827 = vand.u32 2147483647, %v7572
      %vm7828 = vcmp.eq.f32.partialorder %v7827, 8.507059e+37
      %v7829 = vand.u32 %v7572, 2147483648
      %v7830 = vor.u32 1.1754944e-38, %v7829
      %v7831 = vsel %vm7828, %v7830, %v7826
      %v7832 = vmul.f32 1.0, %v7831
      %v7833 = vrcp.pop %v7573
      %v7834 = vmul.f32 %v7573, %v7833
      %v7835 = vsub.f32 1.0, %v7834
      %v7836 = vmul.f32 %v7833, %v7835
      %v7837 = vadd.f32 %v7833, %v7836
      %vm7838 = vweird.f32 %v7573
      %vm7839 = vweird.f32 %v7833
      %vm7840 = vmor %vm7838, %vm7839
      %v7841 = vsel %vm7840, %v7833, %v7837
      %v7842 = vand.u32 2147483647, %v7573
      %vm7843 = vcmp.eq.f32.partialorder %v7842, 8.507059e+37
      %v7844 = vand.u32 %v7573, 2147483648
      %v7845 = vor.u32 1.1754944e-38, %v7844
      %v7846 = vsel %vm7843, %v7845, %v7841
      %v7847 = vmul.f32 1.0, %v7846
      %v7848 = vrcp.pop %v7574
      %v7849 = vmul.f32 %v7574, %v7848
      %v7850 = vsub.f32 1.0, %v7849
      %v7851 = vmul.f32 %v7848, %v7850
      %v7852 = vadd.f32 %v7848, %v7851
      %vm7853 = vweird.f32 %v7574
      %vm7854 = vweird.f32 %v7848
      %vm7855 = vmor %vm7853, %vm7854
      %v7856 = vsel %vm7855, %v7848, %v7852
      %v7857 = vand.u32 2147483647, %v7574
      %vm7858 = vcmp.eq.f32.partialorder %v7857, 8.507059e+37
      %v7859 = vand.u32 %v7574, 2147483648
      %v7860 = vor.u32 1.1754944e-38, %v7859
      %v7861 = vsel %vm7858, %v7860, %v7856
      %v7862 = vmul.f32 1.0, %v7861
      %v7863 = vrcp.pop %v7575
      %v7864 = vmul.f32 %v7575, %v7863
      %v7865 = vsub.f32 1.0, %v7864
      %v7866 = vmul.f32 %v7863, %v7865
      %v7867 = vadd.f32 %v7863, %v7866
      %vm7868 = vweird.f32 %v7575
      %vm7869 = vweird.f32 %v7863
      %vm7870 = vmor %vm7868, %vm7869
      %v7871 = vsel %vm7870, %v7863, %v7867
      %v7872 = vand.u32 2147483647, %v7575
      %vm7873 = vcmp.eq.f32.partialorder %v7872, 8.507059e+37
      %v7874 = vand.u32 %v7575, 2147483648
      %v7875 = vor.u32 1.1754944e-38, %v7874
      %v7876 = vsel %vm7873, %v7875, %v7871
      %v7877 = vmul.f32 1.0, %v7876
      %v7878 = vrcp.pop %v7576
      %v7879 = vmul.f32 %v7576, %v7878
      %v7880 = vsub.f32 1.0, %v7879
      %v7881 = vmul.f32 %v7878, %v7880
      %v7882 = vadd.f32 %v7878, %v7881
      %vm7883 = vweird.f32 %v7576
      %vm7884 = vweird.f32 %v7878
      %vm7885 = vmor %vm7883, %vm7884
      %v7886 = vsel %vm7885, %v7878, %v7882
      %v7887 = vand.u32 2147483647, %v7576
      %vm7888 = vcmp.eq.f32.partialorder %v7887, 8.507059e+37
      %v7889 = vand.u32 %v7576, 2147483648
      %v7890 = vor.u32 1.1754944e-38, %v7889
      %v7891 = vsel %vm7888, %v7890, %v7886
      %v7892 = vmul.f32 1.0, %v7891
      %v7893 = vrcp.pop %v7577
      %v7894 = vmul.f32 %v7577, %v7893
      %v7895 = vsub.f32 1.0, %v7894
      %v7896 = vmul.f32 %v7893, %v7895
      %v7897 = vadd.f32 %v7893, %v7896
      %vm7898 = vweird.f32 %v7577
      %vm7899 = vweird.f32 %v7893
      %vm7900 = vmor %vm7898, %vm7899
      %v7901 = vsel %vm7900, %v7893, %v7897
      %v7902 = vand.u32 2147483647, %v7577
      %vm7903 = vcmp.eq.f32.partialorder %v7902, 8.507059e+37
      %v7904 = vand.u32 %v7577, 2147483648
      %v7905 = vor.u32 1.1754944e-38, %v7904
      %v7906 = vsel %vm7903, %v7905, %v7901
      %v7907 = vmul.f32 1.0, %v7906
      %v7908 = vrcp.pop %v7578
      %v7909 = vmul.f32 %v7578, %v7908
      %v7910 = vsub.f32 1.0, %v7909
      %v7911 = vmul.f32 %v7908, %v7910
      %v7912 = vadd.f32 %v7908, %v7911
      %vm7913 = vweird.f32 %v7578
      %vm7914 = vweird.f32 %v7908
      %vm7915 = vmor %vm7913, %vm7914
      %v7916 = vsel %vm7915, %v7908, %v7912
      %v7917 = vand.u32 2147483647, %v7578
      %vm7918 = vcmp.eq.f32.partialorder %v7917, 8.507059e+37
      %v7919 = vand.u32 %v7578, 2147483648
      %v7920 = vor.u32 1.1754944e-38, %v7919
      %v7921 = vsel %vm7918, %v7920, %v7916
      %v7922 = vmul.f32 1.0, %v7921
      %v7923 = vrcp.pop %v7579
      %v7924 = vmul.f32 %v7579, %v7923
      %v7925 = vsub.f32 1.0, %v7924
      %v7926 = vmul.f32 %v7923, %v7925
      %v7927 = vadd.f32 %v7923, %v7926
      %vm7928 = vweird.f32 %v7579
      %vm7929 = vweird.f32 %v7923
      %vm7930 = vmor %vm7928, %vm7929
      %v7931 = vsel %vm7930, %v7923, %v7927
      %v7932 = vand.u32 2147483647, %v7579
      %vm7933 = vcmp.eq.f32.partialorder %v7932, 8.507059e+37
      %v7934 = vand.u32 %v7579, 2147483648
      %v7935 = vor.u32 1.1754944e-38, %v7934
      %v7936 = vsel %vm7933, %v7935, %v7931
      %v7937 = vmul.f32 1.0, %v7936
      %v7938 = vrcp.pop %v7580
      %v7939 = vmul.f32 %v7580, %v7938
      %v7940 = vsub.f32 1.0, %v7939
      %v7941 = vmul.f32 %v7938, %v7940
      %v7942 = vadd.f32 %v7938, %v7941
      %vm7943 = vweird.f32 %v7580
      %vm7944 = vweird.f32 %v7938
      %vm7945 = vmor %vm7943, %vm7944
      %v7946 = vsel %vm7945, %v7938, %v7942
      %v7947 = vand.u32 2147483647, %v7580
      %vm7948 = vcmp.eq.f32.partialorder %v7947, 8.507059e+37
      %v7949 = vand.u32 %v7580, 2147483648
      %v7950 = vor.u32 1.1754944e-38, %v7949
      %v7951 = vsel %vm7948, %v7950, %v7946
      %v7952 = vmul.f32 1.0, %v7951
      %v7953 = vrcp.pop %v7581
      %v7954 = vmul.f32 %v7581, %v7953
      %v7955 = vsub.f32 1.0, %v7954
      %v7956 = vmul.f32 %v7953, %v7955
      %v7957 = vadd.f32 %v7953, %v7956
      %vm7958 = vweird.f32 %v7581
      %vm7959 = vweird.f32 %v7953
      %vm7960 = vmor %vm7958, %vm7959
      %v7961 = vsel %vm7960, %v7953, %v7957
      %v7962 = vand.u32 2147483647, %v7581
      %vm7963 = vcmp.eq.f32.partialorder %v7962, 8.507059e+37
      %v7964 = vand.u32 %v7581, 2147483648
      %v7965 = vor.u32 1.1754944e-38, %v7964
      %v7966 = vsel %vm7963, %v7965, %v7961
      %v7967 = vmul.f32 1.0, %v7966
      %v7968 = vrcp.pop %v7582
      %v7969 = vmul.f32 %v7582, %v7968
      %v7970 = vsub.f32 1.0, %v7969
      %v7971 = vmul.f32 %v7968, %v7970
      %v7972 = vadd.f32 %v7968, %v7971
      %vm7973 = vweird.f32 %v7582
      %vm7974 = vweird.f32 %v7968
      %vm7975 = vmor %vm7973, %vm7974
      %v7976 = vsel %vm7975, %v7968, %v7972
      %v7977 = vand.u32 2147483647, %v7582
      %vm7978 = vcmp.eq.f32.partialorder %v7977, 8.507059e+37
      %v7979 = vand.u32 %v7582, 2147483648
      %v7980 = vor.u32 1.1754944e-38, %v7979
      %v7981 = vsel %vm7978, %v7980, %v7976
      %v7982 = vmul.f32 1.0, %v7981
      %v7983 = vrcp.pop %v7583
      %v7984 = vmul.f32 %v7583, %v7983
      %v7985 = vsub.f32 1.0, %v7984
      %v7986 = vmul.f32 %v7983, %v7985
      %v7987 = vadd.f32 %v7983, %v7986
      %vm7988 = vweird.f32 %v7583
      %vm7989 = vweird.f32 %v7983
      %vm7990 = vmor %vm7988, %vm7989
      %v7991 = vsel %vm7990, %v7983, %v7987
      %v7992 = vand.u32 2147483647, %v7583
      %vm7993 = vcmp.eq.f32.partialorder %v7992, 8.507059e+37
      %v7994 = vand.u32 %v7583, 2147483648
      %v7995 = vor.u32 1.1754944e-38, %v7994
      %v7996 = vsel %vm7993, %v7995, %v7991
      %v7997 = vmul.f32 1.0, %v7996
      %v7998 = vrcp.pop %v7584
      %v7999 = vmul.f32 %v7584, %v7998
      %v8000 = vsub.f32 1.0, %v7999
      %v8001 = vmul.f32 %v7998, %v8000
      %v8002 = vadd.f32 %v7998, %v8001
      %vm8003 = vweird.f32 %v7584
      %vm8004 = vweird.f32 %v7998
      %vm8005 = vmor %vm8003, %vm8004
      %v8006 = vsel %vm8005, %v7998, %v8002
      %v8007 = vand.u32 2147483647, %v7584
      %vm8008 = vcmp.eq.f32.partialorder %v8007, 8.507059e+37
      %v8009 = vand.u32 %v7584, 2147483648
      %v8010 = vor.u32 1.1754944e-38, %v8009
      %v8011 = vsel %vm8008, %v8010, %v8006
      %v8012 = vmul.f32 1.0, %v8011
      %v8013 = vrcp.pop %v7585
      %v8014 = vmul.f32 %v7585, %v8013
      %v8015 = vsub.f32 1.0, %v8014
      %v8016 = vmul.f32 %v8013, %v8015
      %v8017 = vadd.f32 %v8013, %v8016
      %vm8018 = vweird.f32 %v7585
      %vm8019 = vweird.f32 %v8013
      %vm8020 = vmor %vm8018, %vm8019
      %v8021 = vsel %vm8020, %v8013, %v8017
      %v8022 = vand.u32 2147483647, %v7585
      %vm8023 = vcmp.eq.f32.partialorder %v8022, 8.507059e+37
      %v8024 = vand.u32 %v7585, 2147483648
      %v8025 = vor.u32 1.1754944e-38, %v8024
      %v8026 = vsel %vm8023, %v8025, %v8021
      %v8027 = vmul.f32 1.0, %v8026
      %v8028 = vrcp.pop %v7586
      %v8029 = vmul.f32 %v7586, %v8028
      %v8030 = vsub.f32 1.0, %v8029
      %v8031 = vmul.f32 %v8028, %v8030
      %v8032 = vadd.f32 %v8028, %v8031
      %vm8033 = vweird.f32 %v7586
      %vm8034 = vweird.f32 %v8028
      %vm8035 = vmor %vm8033, %vm8034
      %v8036 = vsel %vm8035, %v8028, %v8032
      %v8037 = vand.u32 2147483647, %v7586
      %vm8038 = vcmp.eq.f32.partialorder %v8037, 8.507059e+37
      %v8039 = vand.u32 %v7586, 2147483648
      %v8040 = vor.u32 1.1754944e-38, %v8039
      %v8041 = vsel %vm8038, %v8040, %v8036
      %v8042 = vmul.f32 1.0, %v8041
      %v8043 = vrcp.pop %v7587
      %v8044 = vmul.f32 %v7587, %v8043
      %v8045 = vsub.f32 1.0, %v8044
      %v8046 = vmul.f32 %v8043, %v8045
      %v8047 = vadd.f32 %v8043, %v8046
      %vm8048 = vweird.f32 %v7587
      %vm8049 = vweird.f32 %v8043
      %vm8050 = vmor %vm8048, %vm8049
      %v8051 = vsel %vm8050, %v8043, %v8047
      %v8052 = vand.u32 2147483647, %v7587
      %vm8053 = vcmp.eq.f32.partialorder %v8052, 8.507059e+37
      %v8054 = vand.u32 %v7587, 2147483648
      %v8055 = vor.u32 1.1754944e-38, %v8054
      %v8056 = vsel %vm8053, %v8055, %v8051
      %v8057 = vmul.f32 1.0, %v8056
      %v8058 = vrcp.pop %v7588
      %v8059 = vmul.f32 %v7588, %v8058
      %v8060 = vsub.f32 1.0, %v8059
      %v8061 = vmul.f32 %v8058, %v8060
      %v8062 = vadd.f32 %v8058, %v8061
      %vm8063 = vweird.f32 %v7588
      %vm8064 = vweird.f32 %v8058
      %vm8065 = vmor %vm8063, %vm8064
      %v8066 = vsel %vm8065, %v8058, %v8062
      %v8067 = vand.u32 2147483647, %v7588
      %vm8068 = vcmp.eq.f32.partialorder %v8067, 8.507059e+37
      %v8069 = vand.u32 %v7588, 2147483648
      %v8070 = vor.u32 1.1754944e-38, %v8069
      %v8071 = vsel %vm8068, %v8070, %v8066
      %v8072 = vmul.f32 1.0, %v8071
      %v8073 = vrcp.pop %v7589
      %v8074 = vmul.f32 %v7589, %v8073
      %v8075 = vsub.f32 1.0, %v8074
      %v8076 = vmul.f32 %v8073, %v8075
      %v8077 = vadd.f32 %v8073, %v8076
      %vm8078 = vweird.f32 %v7589
      %vm8079 = vweird.f32 %v8073
      %vm8080 = vmor %vm8078, %vm8079
      %v8081 = vsel %vm8080, %v8073, %v8077
      %v8082 = vand.u32 2147483647, %v7589
      %vm8083 = vcmp.eq.f32.partialorder %v8082, 8.507059e+37
      %v8084 = vand.u32 %v7589, 2147483648
      %v8085 = vor.u32 1.1754944e-38, %v8084
      %v8086 = vsel %vm8083, %v8085, %v8081
      %v8087 = vmul.f32 1.0, %v8086
      %v8088 = vrcp.pop %v7590
      %v8089 = vmul.f32 %v7590, %v8088
      %v8090 = vsub.f32 1.0, %v8089
      %v8091 = vmul.f32 %v8088, %v8090
      %v8092 = vadd.f32 %v8088, %v8091
      %vm8093 = vweird.f32 %v7590
      %vm8094 = vweird.f32 %v8088
      %vm8095 = vmor %vm8093, %vm8094
      %v8096 = vsel %vm8095, %v8088, %v8092
      %v8097 = vand.u32 2147483647, %v7590
      %vm8098 = vcmp.eq.f32.partialorder %v8097, 8.507059e+37
      %v8099 = vand.u32 %v7590, 2147483648
      %v8100 = vor.u32 1.1754944e-38, %v8099
      %v8101 = vsel %vm8098, %v8100, %v8096
      %v8102 = vmul.f32 1.0, %v8101
      %v8103 = vrcp.pop %v7591
      %v8104 = vmul.f32 %v7591, %v8103
      %v8105 = vsub.f32 1.0, %v8104
      %v8106 = vmul.f32 %v8103, %v8105
      %v8107 = vadd.f32 %v8103, %v8106
      %vm8108 = vweird.f32 %v7591
      %vm8109 = vweird.f32 %v8103
      %vm8110 = vmor %vm8108, %vm8109
      %v8111 = vsel %vm8110, %v8103, %v8107
      %v8112 = vand.u32 2147483647, %v7591
      %vm8113 = vcmp.eq.f32.partialorder %v8112, 8.507059e+37
      %v8114 = vand.u32 %v7591, 2147483648
      %v8115 = vor.u32 1.1754944e-38, %v8114
      %v8116 = vsel %vm8113, %v8115, %v8111
      %v8117 = vmul.f32 1.0, %v8116
      %v8118 = vrcp.pop %v7592
      %v8119 = vmul.f32 %v7592, %v8118
      %v8120 = vsub.f32 1.0, %v8119
      %v8121 = vmul.f32 %v8118, %v8120
      %v8122 = vadd.f32 %v8118, %v8121
      %vm8123 = vweird.f32 %v7592
      %vm8124 = vweird.f32 %v8118
      %vm8125 = vmor %vm8123, %vm8124
      %v8126 = vsel %vm8125, %v8118, %v8122
      %v8127 = vand.u32 2147483647, %v7592
      %vm8128 = vcmp.eq.f32.partialorder %v8127, 8.507059e+37
      %v8129 = vand.u32 %v7592, 2147483648
      %v8130 = vor.u32 1.1754944e-38, %v8129
      %v8131 = vsel %vm8128, %v8130, %v8126
      %v8132 = vmul.f32 1.0, %v8131
      %v8133 = vrcp.pop %v7593
      %v8134 = vmul.f32 %v7593, %v8133
      %v8135 = vsub.f32 1.0, %v8134
      %v8136 = vmul.f32 %v8133, %v8135
      %v8137 = vadd.f32 %v8133, %v8136
      %vm8138 = vweird.f32 %v7593
      %vm8139 = vweird.f32 %v8133
      %vm8140 = vmor %vm8138, %vm8139
      %v8141 = vsel %vm8140, %v8133, %v8137
      %v8142 = vand.u32 2147483647, %v7593
      %vm8143 = vcmp.eq.f32.partialorder %v8142, 8.507059e+37
      %v8144 = vand.u32 %v7593, 2147483648
      %v8145 = vor.u32 1.1754944e-38, %v8144
      %v8146 = vsel %vm8143, %v8145, %v8141
      %v8147 = vmul.f32 1.0, %v8146
      %v8148 = vrcp.pop %v7594
      %v8149 = vmul.f32 %v7594, %v8148
      %v8150 = vsub.f32 1.0, %v8149
      %v8151 = vmul.f32 %v8148, %v8150
      %v8152 = vadd.f32 %v8148, %v8151
      %vm8153 = vweird.f32 %v7594
      %vm8154 = vweird.f32 %v8148
      %vm8155 = vmor %vm8153, %vm8154
      %v8156 = vsel %vm8155, %v8148, %v8152
      %v8157 = vand.u32 2147483647, %v7594
      %vm8158 = vcmp.eq.f32.partialorder %v8157, 8.507059e+37
      %v8159 = vand.u32 %v7594, 2147483648
      %v8160 = vor.u32 1.1754944e-38, %v8159
      %v8161 = vsel %vm8158, %v8160, %v8156
      %v8162 = vmul.f32 1.0, %v8161
      %v8163 = vrcp.pop %v7595
      %v8164 = vmul.f32 %v7595, %v8163
      %v8165 = vsub.f32 1.0, %v8164
      %v8166 = vmul.f32 %v8163, %v8165
      %v8167 = vadd.f32 %v8163, %v8166
      %vm8168 = vweird.f32 %v7595
      %vm8169 = vweird.f32 %v8163
      %vm8170 = vmor %vm8168, %vm8169
      %v8171 = vsel %vm8170, %v8163, %v8167
      %v8172 = vand.u32 2147483647, %v7595
      %vm8173 = vcmp.eq.f32.partialorder %v8172, 8.507059e+37
      %v8174 = vand.u32 %v7595, 2147483648
      %v8175 = vor.u32 1.1754944e-38, %v8174
      %v8176 = vsel %vm8173, %v8175, %v8171
      %v8177 = vmul.f32 1.0, %v8176
      %v8178 = vrcp.pop %v7596
      %v8179 = vmul.f32 %v7596, %v8178
      %v8180 = vsub.f32 1.0, %v8179
      %v8181 = vmul.f32 %v8178, %v8180
      %v8182 = vadd.f32 %v8178, %v8181
      %vm8183 = vweird.f32 %v7596
      %vm8184 = vweird.f32 %v8178
      %vm8185 = vmor %vm8183, %vm8184
      %v8186 = vsel %vm8185, %v8178, %v8182
      %v8187 = vand.u32 2147483647, %v7596
      %vm8188 = vcmp.eq.f32.partialorder %v8187, 8.507059e+37
      %v8189 = vand.u32 %v7596, 2147483648
      %v8190 = vor.u32 1.1754944e-38, %v8189
      %v8191 = vsel %vm8188, %v8190, %v8186
      %v8192 = vmul.f32 1.0, %v8191
      %v8193 = vrcp.pop %v7597
      %v8194 = vmul.f32 %v7597, %v8193
      %v8195 = vsub.f32 1.0, %v8194
      %v8196 = vmul.f32 %v8193, %v8195
      %v8197 = vadd.f32 %v8193, %v8196
      %vm8198 = vweird.f32 %v7597
      %vm8199 = vweird.f32 %v8193
      %vm8200 = vmor %vm8198, %vm8199
      %v8201 = vsel %vm8200, %v8193, %v8197
      %v8202 = vand.u32 2147483647, %v7597
      %vm8203 = vcmp.eq.f32.partialorder %v8202, 8.507059e+37
      %v8204 = vand.u32 %v7597, 2147483648
      %v8205 = vor.u32 1.1754944e-38, %v8204
      %v8206 = vsel %vm8203, %v8205, %v8201
      %v8207 = vmul.f32 1.0, %v8206
      %v8208 = vrcp.pop %v7598
      %v8209 = vmul.f32 %v7598, %v8208
      %v8210 = vsub.f32 1.0, %v8209
      %v8211 = vmul.f32 %v8208, %v8210
      %v8212 = vadd.f32 %v8208, %v8211
      %vm8213 = vweird.f32 %v7598
      %vm8214 = vweird.f32 %v8208
      %vm8215 = vmor %vm8213, %vm8214
      %v8216 = vsel %vm8215, %v8208, %v8212
      %v8217 = vand.u32 2147483647, %v7598
      %vm8218 = vcmp.eq.f32.partialorder %v8217, 8.507059e+37
      %v8219 = vand.u32 %v7598, 2147483648
      %v8220 = vor.u32 1.1754944e-38, %v8219
      %v8221 = vsel %vm8218, %v8220, %v8216
      %v8222 = vmul.f32 1.0, %v8221
      %v8223 = vrcp.pop %v7599
      %v8224 = vmul.f32 %v7599, %v8223
      %v8225 = vsub.f32 1.0, %v8224
      %v8226 = vmul.f32 %v8223, %v8225
      %v8227 = vadd.f32 %v8223, %v8226
      %vm8228 = vweird.f32 %v7599
      %vm8229 = vweird.f32 %v8223
      %vm8230 = vmor %vm8228, %vm8229
      %v8231 = vsel %vm8230, %v8223, %v8227
      %v8232 = vand.u32 2147483647, %v7599
      %vm8233 = vcmp.eq.f32.partialorder %v8232, 8.507059e+37
      %v8234 = vand.u32 %v7599, 2147483648
      %v8235 = vor.u32 1.1754944e-38, %v8234
      %v8236 = vsel %vm8233, %v8235, %v8231
      %v8237 = vmul.f32 1.0, %v8236
      %v8238 = vrcp.pop %v7600
      %v8239 = vmul.f32 %v7600, %v8238
      %v8240 = vsub.f32 1.0, %v8239
      %v8241 = vmul.f32 %v8238, %v8240
      %v8242 = vadd.f32 %v8238, %v8241
      %vm8243 = vweird.f32 %v7600
      %vm8244 = vweird.f32 %v8238
      %vm8245 = vmor %vm8243, %vm8244
      %v8246 = vsel %vm8245, %v8238, %v8242
      %v8247 = vand.u32 2147483647, %v7600
      %vm8248 = vcmp.eq.f32.partialorder %v8247, 8.507059e+37
      %v8249 = vand.u32 %v7600, 2147483648
      %v8250 = vor.u32 1.1754944e-38, %v8249
      %v8251 = vsel %vm8248, %v8250, %v8246
      %v8252 = vmul.f32 1.0, %v8251
      %v8253 = vrcp.pop %v7601
      %v8254 = vmul.f32 %v7601, %v8253
      %v8255 = vsub.f32 1.0, %v8254
      %v8256 = vmul.f32 %v8253, %v8255
      %v8257 = vadd.f32 %v8253, %v8256
      %vm8258 = vweird.f32 %v7601
      %vm8259 = vweird.f32 %v8253
      %vm8260 = vmor %vm8258, %vm8259
      %v8261 = vsel %vm8260, %v8253, %v8257
      %v8262 = vand.u32 2147483647, %v7601
      %vm8263 = vcmp.eq.f32.partialorder %v8262, 8.507059e+37
      %v8264 = vand.u32 %v7601, 2147483648
      %v8265 = vor.u32 1.1754944e-38, %v8264
      %v8266 = vsel %vm8263, %v8265, %v8261
      %v8267 = vmul.f32 1.0, %v8266
      %v8268 = vrcp.pop %v7602
      %v8269 = vmul.f32 %v7602, %v8268
      %v8270 = vsub.f32 1.0, %v8269
      %v8271 = vmul.f32 %v8268, %v8270
      %v8272 = vadd.f32 %v8268, %v8271
      %vm8273 = vweird.f32 %v7602
      %vm8274 = vweird.f32 %v8268
      %vm8275 = vmor %vm8273, %vm8274
      %v8276 = vsel %vm8275, %v8268, %v8272
      %v8277 = vand.u32 2147483647, %v7602
      %vm8278 = vcmp.eq.f32.partialorder %v8277, 8.507059e+37
      %v8279 = vand.u32 %v7602, 2147483648
      %v8280 = vor.u32 1.1754944e-38, %v8279
      %v8281 = vsel %vm8278, %v8280, %v8276
      %v8282 = vmul.f32 1.0, %v8281
      %v8283 = vrcp.pop %v7603
      %v8284 = vmul.f32 %v7603, %v8283
      %v8285 = vsub.f32 1.0, %v8284
      %v8286 = vmul.f32 %v8283, %v8285
      %v8287 = vadd.f32 %v8283, %v8286
      %vm8288 = vweird.f32 %v7603
      %vm8289 = vweird.f32 %v8283
      %vm8290 = vmor %vm8288, %vm8289
      %v8291 = vsel %vm8290, %v8283, %v8287
      %v8292 = vand.u32 2147483647, %v7603
      %vm8293 = vcmp.eq.f32.partialorder %v8292, 8.507059e+37
      %v8294 = vand.u32 %v7603, 2147483648
      %v8295 = vor.u32 1.1754944e-38, %v8294
      %v8296 = vsel %vm8293, %v8295, %v8291
      %v8297 = vmul.f32 1.0, %v8296
      %v8298 = vrcp.pop %v7604
      %v8299 = vmul.f32 %v7604, %v8298
      %v8300 = vsub.f32 1.0, %v8299
      %v8301 = vmul.f32 %v8298, %v8300
      %v8302 = vadd.f32 %v8298, %v8301
      %vm8303 = vweird.f32 %v7604
      %vm8304 = vweird.f32 %v8298
      %vm8305 = vmor %vm8303, %vm8304
      %v8306 = vsel %vm8305, %v8298, %v8302
      %v8307 = vand.u32 2147483647, %v7604
      %vm8308 = vcmp.eq.f32.partialorder %v8307, 8.507059e+37
      %v8309 = vand.u32 %v7604, 2147483648
      %v8310 = vor.u32 1.1754944e-38, %v8309
      %v8311 = vsel %vm8308, %v8310, %v8306
      %v8312 = vmul.f32 1.0, %v8311
      %v8313 = vrcp.pop %v7605
      %v8314 = vmul.f32 %v7605, %v8313
      %v8315 = vsub.f32 1.0, %v8314
      %v8316 = vmul.f32 %v8313, %v8315
      %v8317 = vadd.f32 %v8313, %v8316
      %vm8318 = vweird.f32 %v7605
      %vm8319 = vweird.f32 %v8313
      %vm8320 = vmor %vm8318, %vm8319
      %v8321 = vsel %vm8320, %v8313, %v8317
      %v8322 = vand.u32 2147483647, %v7605
      %vm8323 = vcmp.eq.f32.partialorder %v8322, 8.507059e+37
      %v8324 = vand.u32 %v7605, 2147483648
      %v8325 = vor.u32 1.1754944e-38, %v8324
      %v8326 = vsel %vm8323, %v8325, %v8321
      %v8327 = vmul.f32 1.0, %v8326
      %v8328 = vrcp.pop %v7606
      %v8329 = vmul.f32 %v7606, %v8328
      %v8330 = vsub.f32 1.0, %v8329
      %v8331 = vmul.f32 %v8328, %v8330
      %v8332 = vadd.f32 %v8328, %v8331
      %vm8333 = vweird.f32 %v7606
      %vm8334 = vweird.f32 %v8328
      %vm8335 = vmor %vm8333, %vm8334
      %v8336 = vsel %vm8335, %v8328, %v8332
      %v8337 = vand.u32 2147483647, %v7606
      %vm8338 = vcmp.eq.f32.partialorder %v8337, 8.507059e+37
      %v8339 = vand.u32 %v7606, 2147483648
      %v8340 = vor.u32 1.1754944e-38, %v8339
      %v8341 = vsel %vm8338, %v8340, %v8336
      %v8342 = vmul.f32 1.0, %v8341
      %v8343 = vrcp.pop %v7607
      %v8344 = vmul.f32 %v7607, %v8343
      %v8345 = vsub.f32 1.0, %v8344
      %v8346 = vmul.f32 %v8343, %v8345
      %v8347 = vadd.f32 %v8343, %v8346
      %vm8348 = vweird.f32 %v7607
      %vm8349 = vweird.f32 %v8343
      %vm8350 = vmor %vm8348, %vm8349
      %v8351 = vsel %vm8350, %v8343, %v8347
      %v8352 = vand.u32 2147483647, %v7607
      %vm8353 = vcmp.eq.f32.partialorder %v8352, 8.507059e+37
      %v8354 = vand.u32 %v7607, 2147483648
      %v8355 = vor.u32 1.1754944e-38, %v8354
      %v8356 = vsel %vm8353, %v8355, %v8351
      %v8357 = vmul.f32 1.0, %v8356
      %v8358 = vrcp.pop %v7608
      %v8359 = vmul.f32 %v7608, %v8358
      %v8360 = vsub.f32 1.0, %v8359
      %v8361 = vmul.f32 %v8358, %v8360
      %v8362 = vadd.f32 %v8358, %v8361
      %vm8363 = vweird.f32 %v7608
      %vm8364 = vweird.f32 %v8358
      %vm8365 = vmor %vm8363, %vm8364
      %v8366 = vsel %vm8365, %v8358, %v8362
      %v8367 = vand.u32 2147483647, %v7608
      %vm8368 = vcmp.eq.f32.partialorder %v8367, 8.507059e+37
      %v8369 = vand.u32 %v7608, 2147483648
      %v8370 = vor.u32 1.1754944e-38, %v8369
      %v8371 = vsel %vm8368, %v8370, %v8366
      %v8372 = vmul.f32 1.0, %v8371
      %v8373 = vrcp.pop %v7609
      %v8374 = vmul.f32 %v7609, %v8373
      %v8375 = vsub.f32 1.0, %v8374
      %v8376 = vmul.f32 %v8373, %v8375
      %v8377 = vadd.f32 %v8373, %v8376
      %vm8378 = vweird.f32 %v7609
      %vm8379 = vweird.f32 %v8373
      %vm8380 = vmor %vm8378, %vm8379
      %v8381 = vsel %vm8380, %v8373, %v8377
      %v8382 = vand.u32 2147483647, %v7609
      %vm8383 = vcmp.eq.f32.partialorder %v8382, 8.507059e+37
      %v8384 = vand.u32 %v7609, 2147483648
      %v8385 = vor.u32 1.1754944e-38, %v8384
      %v8386 = vsel %vm8383, %v8385, %v8381
      %v8387 = vmul.f32 1.0, %v8386
      %v8388 = vrcp.pop %v7610
      %v8389 = vmul.f32 %v7610, %v8388
      %v8390 = vsub.f32 1.0, %v8389
      %v8391 = vmul.f32 %v8388, %v8390
      %v8392 = vadd.f32 %v8388, %v8391
      %vm8393 = vweird.f32 %v7610
      %vm8394 = vweird.f32 %v8388
      %vm8395 = vmor %vm8393, %vm8394
      %v8396 = vsel %vm8395, %v8388, %v8392
      %v8397 = vand.u32 2147483647, %v7610
      %vm8398 = vcmp.eq.f32.partialorder %v8397, 8.507059e+37
      %v8399 = vand.u32 %v7610, 2147483648
      %v8400 = vor.u32 1.1754944e-38, %v8399
      %v8401 = vsel %vm8398, %v8400, %v8396
      %v8402 = vmul.f32 1.0, %v8401
      %v8403 = vrcp.pop %v7611
      %v8404 = vmul.f32 %v7611, %v8403
      %v8405 = vsub.f32 1.0, %v8404
      %v8406 = vmul.f32 %v8403, %v8405
      %v8407 = vadd.f32 %v8403, %v8406
      %vm8408 = vweird.f32 %v7611
      %vm8409 = vweird.f32 %v8403
      %vm8410 = vmor %vm8408, %vm8409
      %v8411 = vsel %vm8410, %v8403, %v8407
      %v8412 = vand.u32 2147483647, %v7611
      %vm8413 = vcmp.eq.f32.partialorder %v8412, 8.507059e+37
      %v8414 = vand.u32 %v7611, 2147483648
      %v8415 = vor.u32 1.1754944e-38, %v8414
      %v8416 = vsel %vm8413, %v8415, %v8411
      %v8417 = vmul.f32 1.0, %v8416
      %v8418 = vrcp.pop %v7612
      %v8419 = vmul.f32 %v7612, %v8418
      %v8420 = vsub.f32 1.0, %v8419
      %v8421 = vmul.f32 %v8418, %v8420
      %v8422 = vadd.f32 %v8418, %v8421
      %vm8423 = vweird.f32 %v7612
      %vm8424 = vweird.f32 %v8418
      %vm8425 = vmor %vm8423, %vm8424
      %v8426 = vsel %vm8425, %v8418, %v8422
      %v8427 = vand.u32 2147483647, %v7612
      %vm8428 = vcmp.eq.f32.partialorder %v8427, 8.507059e+37
      %v8429 = vand.u32 %v7612, 2147483648
      %v8430 = vor.u32 1.1754944e-38, %v8429
      %v8431 = vsel %vm8428, %v8430, %v8426
      %v8432 = vmul.f32 1.0, %v8431
      %v8433 = vrcp.pop %v7613
      %v8434 = vmul.f32 %v7613, %v8433
      %v8435 = vsub.f32 1.0, %v8434
      %v8436 = vmul.f32 %v8433, %v8435
      %v8437 = vadd.f32 %v8433, %v8436
      %vm8438 = vweird.f32 %v7613
      %vm8439 = vweird.f32 %v8433
      %vm8440 = vmor %vm8438, %vm8439
      %v8441 = vsel %vm8440, %v8433, %v8437
      %v8442 = vand.u32 2147483647, %v7613
      %vm8443 = vcmp.eq.f32.partialorder %v8442, 8.507059e+37
      %v8444 = vand.u32 %v7613, 2147483648
      %v8445 = vor.u32 1.1754944e-38, %v8444
      %v8446 = vsel %vm8443, %v8445, %v8441
      %v8447 = vmul.f32 1.0, %v8446
      %v8448 = vrcp.pop %v7614
      %v8449 = vmul.f32 %v7614, %v8448
      %v8450 = vsub.f32 1.0, %v8449
      %v8451 = vmul.f32 %v8448, %v8450
      %v8452 = vadd.f32 %v8448, %v8451
      %vm8453 = vweird.f32 %v7614
      %vm8454 = vweird.f32 %v8448
      %vm8455 = vmor %vm8453, %vm8454
      %v8456 = vsel %vm8455, %v8448, %v8452
      %v8457 = vand.u32 2147483647, %v7614
      %vm8458 = vcmp.eq.f32.partialorder %v8457, 8.507059e+37
      %v8459 = vand.u32 %v7614, 2147483648
      %v8460 = vor.u32 1.1754944e-38, %v8459
      %v8461 = vsel %vm8458, %v8460, %v8456
      %v8462 = vmul.f32 1.0, %v8461
      %v8463 = vrcp.pop %v7615
      %v8464 = vmul.f32 %v7615, %v8463
      %v8465 = vsub.f32 1.0, %v8464
      %v8466 = vmul.f32 %v8463, %v8465
      %v8467 = vadd.f32 %v8463, %v8466
      %vm8468 = vweird.f32 %v7615
      %vm8469 = vweird.f32 %v8463
      %vm8470 = vmor %vm8468, %vm8469
      %v8471 = vsel %vm8470, %v8463, %v8467
      %v8472 = vand.u32 2147483647, %v7615
      %vm8473 = vcmp.eq.f32.partialorder %v8472, 8.507059e+37
      %v8474 = vand.u32 %v7615, 2147483648
      %v8475 = vor.u32 1.1754944e-38, %v8474
      %v8476 = vsel %vm8473, %v8475, %v8471
      %v8477 = vmul.f32 1.0, %v8476
      %v8478 = vrcp.pop %v7616
      %v8479 = vmul.f32 %v7616, %v8478
      %v8480 = vsub.f32 1.0, %v8479
      %v8481 = vmul.f32 %v8478, %v8480
      %v8482 = vadd.f32 %v8478, %v8481
      %vm8483 = vweird.f32 %v7616
      %vm8484 = vweird.f32 %v8478
      %vm8485 = vmor %vm8483, %vm8484
      %v8486 = vsel %vm8485, %v8478, %v8482
      %v8487 = vand.u32 2147483647, %v7616
      %vm8488 = vcmp.eq.f32.partialorder %v8487, 8.507059e+37
      %v8489 = vand.u32 %v7616, 2147483648
      %v8490 = vor.u32 1.1754944e-38, %v8489
      %v8491 = vsel %vm8488, %v8490, %v8486
      %v8492 = vmul.f32 1.0, %v8491
      %v8493 = vrcp.pop %v7617
      %v8494 = vmul.f32 %v7617, %v8493
      %v8495 = vsub.f32 1.0, %v8494
      %v8496 = vmul.f32 %v8493, %v8495
      %v8497 = vadd.f32 %v8493, %v8496
      %vm8498 = vweird.f32 %v7617
      %vm8499 = vweird.f32 %v8493
      %vm8500 = vmor %vm8498, %vm8499
      %v8501 = vsel %vm8500, %v8493, %v8497
      %v8502 = vand.u32 2147483647, %v7617
      %vm8503 = vcmp.eq.f32.partialorder %v8502, 8.507059e+37
      %v8504 = vand.u32 %v7617, 2147483648
      %v8505 = vor.u32 1.1754944e-38, %v8504
      %v8506 = vsel %vm8503, %v8505, %v8501
      %v8507 = vmul.f32 1.0, %v8506
      %v8508 = vrcp.pop %v7618
      %v8509 = vmul.f32 %v7618, %v8508
      %v8510 = vsub.f32 1.0, %v8509
      %v8511 = vmul.f32 %v8508, %v8510
      %v8512 = vadd.f32 %v8508, %v8511
      %vm8513 = vweird.f32 %v7618
      %vm8514 = vweird.f32 %v8508
      %vm8515 = vmor %vm8513, %vm8514
      %v8516 = vsel %vm8515, %v8508, %v8512
      %v8517 = vand.u32 2147483647, %v7618
      %vm8518 = vcmp.eq.f32.partialorder %v8517, 8.507059e+37
      %v8519 = vand.u32 %v7618, 2147483648
      %v8520 = vor.u32 1.1754944e-38, %v8519
      %v8521 = vsel %vm8518, %v8520, %v8516
      %v8522 = vmul.f32 1.0, %v8521
      %v8523 = vrcp.pop %v7619
      %v8524 = vmul.f32 %v7619, %v8523
      %v8525 = vsub.f32 1.0, %v8524
      %v8526 = vmul.f32 %v8523, %v8525
      %v8527 = vadd.f32 %v8523, %v8526
      %vm8528 = vweird.f32 %v7619
      %vm8529 = vweird.f32 %v8523
      %vm8530 = vmor %vm8528, %vm8529
      %v8531 = vsel %vm8530, %v8523, %v8527
      %v8532 = vand.u32 2147483647, %v7619
      %vm8533 = vcmp.eq.f32.partialorder %v8532, 8.507059e+37
      %v8534 = vand.u32 %v7619, 2147483648
      %v8535 = vor.u32 1.1754944e-38, %v8534
      %v8536 = vsel %vm8533, %v8535, %v8531
      %v8537 = vmul.f32 1.0, %v8536
      %v8538 = vrcp.pop %v7620
      %v8539 = vmul.f32 %v7620, %v8538
      %v8540 = vsub.f32 1.0, %v8539
      %v8541 = vmul.f32 %v8538, %v8540
      %v8542 = vadd.f32 %v8538, %v8541
      %vm8543 = vweird.f32 %v7620
      %vm8544 = vweird.f32 %v8538
      %vm8545 = vmor %vm8543, %vm8544
      %v8546 = vsel %vm8545, %v8538, %v8542
      %v8547 = vand.u32 2147483647, %v7620
      %vm8548 = vcmp.eq.f32.partialorder %v8547, 8.507059e+37
      %v8549 = vand.u32 %v7620, 2147483648
      %v8550 = vor.u32 1.1754944e-38, %v8549
      %v8551 = vsel %vm8548, %v8550, %v8546
      %v8552 = vmul.f32 1.0, %v8551
      %v8553 = vrcp.pop %v7621
      %v8554 = vmul.f32 %v7621, %v8553
      %v8555 = vsub.f32 1.0, %v8554
      %v8556 = vmul.f32 %v8553, %v8555
      %v8557 = vadd.f32 %v8553, %v8556
      %vm8558 = vweird.f32 %v7621
      %vm8559 = vweird.f32 %v8553
      %vm8560 = vmor %vm8558, %vm8559
      %v8561 = vsel %vm8560, %v8553, %v8557
      %v8562 = vand.u32 2147483647, %v7621
      %vm8563 = vcmp.eq.f32.partialorder %v8562, 8.507059e+37
      %v8564 = vand.u32 %v7621, 2147483648
      %v8565 = vor.u32 1.1754944e-38, %v8564
      %v8566 = vsel %vm8563, %v8565, %v8561
      %v8567 = vmul.f32 1.0, %v8566
      %v8568 = vrcp.pop %v7622
      %v8569 = vmul.f32 %v7622, %v8568
      %v8570 = vsub.f32 1.0, %v8569
      %v8571 = vmul.f32 %v8568, %v8570
      %v8572 = vadd.f32 %v8568, %v8571
      %vm8573 = vweird.f32 %v7622
      %vm8574 = vweird.f32 %v8568
      %vm8575 = vmor %vm8573, %vm8574
      %v8576 = vsel %vm8575, %v8568, %v8572
      %v8577 = vand.u32 2147483647, %v7622
      %vm8578 = vcmp.eq.f32.partialorder %v8577, 8.507059e+37
      %v8579 = vand.u32 %v7622, 2147483648
      %v8580 = vor.u32 1.1754944e-38, %v8579
      %v8581 = vsel %vm8578, %v8580, %v8576
      %v8582 = vmul.f32 1.0, %v8581
      %v8583 = vmax.f32 %v7208, 0.0
      %v8584 = vmax.f32 %v7210, 0.0
      %v8585 = vmax.f32 %v7213, 0.0
      %v8586 = vmax.f32 %v7215, 0.0
      %v8587 = vmax.f32 %v7218, 0.0
      %v8588 = vmax.f32 %v7220, 0.0
      %v8589 = vmax.f32 %v7223, 0.0
      %v8590 = vmax.f32 %v7225, 0.0
      %v8591 = vmax.f32 %v7228, 0.0
      %v8592 = vmax.f32 %v7230, 0.0
      %v8593 = vmax.f32 %v7233, 0.0
      %v8594 = vmax.f32 %v7235, 0.0
      %v8595 = vmax.f32 %v7238, 0.0
      %v8596 = vmax.f32 %v7240, 0.0
      %v8597 = vmax.f32 %v7243, 0.0
      %v8598 = vmax.f32 %v7245, 0.0
      %v8599 = vmax.f32 %v7248, 0.0
      %v8600 = vmax.f32 %v7250, 0.0
      %v8601 = vmax.f32 %v7253, 0.0
      %v8602 = vmax.f32 %v7255, 0.0
      %v8603 = vmax.f32 %v7258, 0.0
      %v8604 = vmax.f32 %v7260, 0.0
      %v8605 = vmax.f32 %v7263, 0.0
      %v8606 = vmax.f32 %v7265, 0.0
      %v8607 = vmax.f32 %v7268, 0.0
      %v8608 = vmax.f32 %v7270, 0.0
      %v8609 = vmax.f32 %v7273, 0.0
      %v8610 = vmax.f32 %v7275, 0.0
      %v8611 = vmax.f32 %v7278, 0.0
      %v8612 = vmax.f32 %v7280, 0.0
      %v8613 = vmax.f32 %v7283, 0.0
      %v8614 = vmax.f32 %v7285, 0.0
      %v8615 = vmax.f32 %v7288, 0.0
      %v8616 = vmax.f32 %v7290, 0.0
      %v8617 = vmax.f32 %v7293, 0.0
      %v8618 = vmax.f32 %v7295, 0.0
      %v8619 = vmax.f32 %v7298, 0.0
      %v8620 = vmax.f32 %v7300, 0.0
      %v8621 = vmax.f32 %v7303, 0.0
      %v8622 = vmax.f32 %v7305, 0.0
      %v8623 = vmax.f32 %v7308, 0.0
      %v8624 = vmax.f32 %v7310, 0.0
      %v8625 = vmax.f32 %v7313, 0.0
      %v8626 = vmax.f32 %v7315, 0.0
      %v8627 = vmax.f32 %v7318, 0.0
      %v8628 = vmax.f32 %v7320, 0.0
      %v8629 = vmax.f32 %v7323, 0.0
      %v8630 = vmax.f32 %v7325, 0.0
      %v8631 = vmax.f32 %v7328, 0.0
      %v8632 = vmax.f32 %v7330, 0.0
      %v8633 = vmax.f32 %v7333, 0.0
      %v8634 = vmax.f32 %v7335, 0.0
      %v8635 = vmax.f32 %v7338, 0.0
      %v8636 = vmax.f32 %v7340, 0.0
      %v8637 = vmax.f32 %v7343, 0.0
      %v8638 = vmax.f32 %v7345, 0.0
      %v8639 = vmax.f32 %v7348, 0.0
      %v8640 = vmax.f32 %v7350, 0.0
      %v8641 = vmax.f32 %v7353, 0.0
      %v8642 = vmax.f32 %v7355, 0.0
      %v8643 = vmax.f32 %v7358, 0.0
      %v8644 = vmax.f32 %v7360, 0.0
      %v8645 = vmax.f32 %v7363, 0.0
      %v8646 = vmax.f32 %v7365, 0.0
      %8711 = vrot.lane.b32.xlu0 %v3944, 67
      %v8712 = vpop.permute.xlu0 %8711
      %8713 = vrot.lane.b32.xlu0 %v3946, 67
      %v8714 = vpop.permute.xlu0 %8713
      %8715 = vrot.lane.b32.xlu0 %v3949, 67
      %v8716 = vpop.permute.xlu0 %8715
      %8717 = vrot.lane.b32.xlu0 %v3951, 67
      %v8718 = vpop.permute.xlu0 %8717
      %8719 = vrot.lane.b32.xlu0 %v3954, 67
      %v8720 = vpop.permute.xlu0 %8719
      %8721 = vrot.lane.b32.xlu0 %v3956, 67
      %v8722 = vpop.permute.xlu0 %8721
      %8723 = vrot.lane.b32.xlu0 %v3959, 67
      %v8724 = vpop.permute.xlu0 %8723
      %8725 = vrot.lane.b32.xlu0 %v3961, 67
      %v8726 = vpop.permute.xlu0 %8725
      %8727 = vrot.lane.b32.xlu0 %v3964, 67
      %v8728 = vpop.permute.xlu0 %8727
      %8729 = vrot.lane.b32.xlu0 %v3966, 67
      %v8730 = vpop.permute.xlu0 %8729
      %8731 = vrot.lane.b32.xlu0 %v3969, 67
      %v8732 = vpop.permute.xlu0 %8731
      %8733 = vrot.lane.b32.xlu0 %v3971, 67
      %v8734 = vpop.permute.xlu0 %8733
      %8735 = vrot.lane.b32.xlu0 %v3974, 67
      %v8736 = vpop.permute.xlu0 %8735
      %8737 = vrot.lane.b32.xlu0 %v3976, 67
      %v8738 = vpop.permute.xlu0 %8737
      %8739 = vrot.lane.b32.xlu0 %v3979, 67
      %v8740 = vpop.permute.xlu0 %8739
      %8741 = vrot.lane.b32.xlu0 %v3981, 67
      %v8742 = vpop.permute.xlu0 %8741
      %8743 = vrot.lane.b32.xlu0 %v3984, 67
      %v8744 = vpop.permute.xlu0 %8743
      %8745 = vrot.lane.b32.xlu0 %v3986, 67
      %v8746 = vpop.permute.xlu0 %8745
      %8747 = vrot.lane.b32.xlu0 %v3989, 67
      %v8748 = vpop.permute.xlu0 %8747
      %8749 = vrot.lane.b32.xlu0 %v3991, 67
      %v8750 = vpop.permute.xlu0 %8749
      %8751 = vrot.lane.b32.xlu0 %v3994, 67
      %v8752 = vpop.permute.xlu0 %8751
      %8753 = vrot.lane.b32.xlu0 %v3996, 67
      %v8754 = vpop.permute.xlu0 %8753
      %8755 = vrot.lane.b32.xlu0 %v3999, 67
      %v8756 = vpop.permute.xlu0 %8755
      %8757 = vrot.lane.b32.xlu0 %v4001, 67
      %v8758 = vpop.permute.xlu0 %8757
      %8759 = vrot.lane.b32.xlu0 %v4004, 67
      %v8760 = vpop.permute.xlu0 %8759
      %8761 = vrot.lane.b32.xlu0 %v4006, 67
      %v8762 = vpop.permute.xlu0 %8761
      %8763 = vrot.lane.b32.xlu0 %v4009, 67
      %v8764 = vpop.permute.xlu0 %8763
      %8765 = vrot.lane.b32.xlu0 %v4011, 67
      %v8766 = vpop.permute.xlu0 %8765
      %8767 = vrot.lane.b32.xlu0 %v4014, 67
      %v8768 = vpop.permute.xlu0 %8767
      %8769 = vrot.lane.b32.xlu0 %v4016, 67
      %v8770 = vpop.permute.xlu0 %8769
      %8771 = vrot.lane.b32.xlu0 %v4019, 67
      %v8772 = vpop.permute.xlu0 %8771
      %8773 = vrot.lane.b32.xlu0 %v4021, 67
      %v8774 = vpop.permute.xlu0 %8773
      %8775 = vrot.lane.b32.xlu0 %v4024, 67
      %v8776 = vpop.permute.xlu0 %8775
      %8777 = vrot.lane.b32.xlu0 %v4026, 67
      %v8778 = vpop.permute.xlu0 %8777
      %8779 = vrot.lane.b32.xlu0 %v4029, 67
      %v8780 = vpop.permute.xlu0 %8779
      %8781 = vrot.lane.b32.xlu0 %v4031, 67
      %v8782 = vpop.permute.xlu0 %8781
      %8783 = vrot.lane.b32.xlu0 %v4034, 67
      %v8784 = vpop.permute.xlu0 %8783
      %8785 = vrot.lane.b32.xlu0 %v4036, 67
      %v8786 = vpop.permute.xlu0 %8785
      %8787 = vrot.lane.b32.xlu0 %v4039, 67
      %v8788 = vpop.permute.xlu0 %8787
      %8789 = vrot.lane.b32.xlu0 %v4041, 67
      %v8790 = vpop.permute.xlu0 %8789
      %8791 = vrot.lane.b32.xlu0 %v4044, 67
      %v8792 = vpop.permute.xlu0 %8791
      %8793 = vrot.lane.b32.xlu0 %v4046, 67
      %v8794 = vpop.permute.xlu0 %8793
      %8795 = vrot.lane.b32.xlu0 %v4049, 67
      %v8796 = vpop.permute.xlu0 %8795
      %8797 = vrot.lane.b32.xlu0 %v4051, 67
      %v8798 = vpop.permute.xlu0 %8797
      %8799 = vrot.lane.b32.xlu0 %v4054, 67
      %v8800 = vpop.permute.xlu0 %8799
      %8801 = vrot.lane.b32.xlu0 %v4056, 67
      %v8802 = vpop.permute.xlu0 %8801
      %8803 = vrot.lane.b32.xlu0 %v4059, 67
      %v8804 = vpop.permute.xlu0 %8803
      %8805 = vrot.lane.b32.xlu0 %v4061, 67
      %v8806 = vpop.permute.xlu0 %8805
      %8807 = vrot.lane.b32.xlu0 %v4064, 67
      %v8808 = vpop.permute.xlu0 %8807
      %8809 = vrot.lane.b32.xlu0 %v4066, 67
      %v8810 = vpop.permute.xlu0 %8809
      %8811 = vrot.lane.b32.xlu0 %v4069, 67
      %v8812 = vpop.permute.xlu0 %8811
      %8813 = vrot.lane.b32.xlu0 %v4071, 67
      %v8814 = vpop.permute.xlu0 %8813
      %8815 = vrot.lane.b32.xlu0 %v4074, 67
      %v8816 = vpop.permute.xlu0 %8815
      %8817 = vrot.lane.b32.xlu0 %v4076, 67
      %v8818 = vpop.permute.xlu0 %8817
      %8819 = vrot.lane.b32.xlu0 %v4079, 67
      %v8820 = vpop.permute.xlu0 %8819
      %8821 = vrot.lane.b32.xlu0 %v4081, 67
      %v8822 = vpop.permute.xlu0 %8821
      %8823 = vrot.lane.b32.xlu0 %v4084, 67
      %v8824 = vpop.permute.xlu0 %8823
      %8825 = vrot.lane.b32.xlu0 %v4086, 67
      %v8826 = vpop.permute.xlu0 %8825
      %8827 = vrot.lane.b32.xlu0 %v4089, 67
      %v8828 = vpop.permute.xlu0 %8827
      %8829 = vrot.lane.b32.xlu0 %v4091, 67
      %v8830 = vpop.permute.xlu0 %8829
      %8831 = vrot.lane.b32.xlu0 %v4094, 67
      %v8832 = vpop.permute.xlu0 %8831
      %8833 = vrot.lane.b32.xlu0 %v4096, 67
      %v8834 = vpop.permute.xlu0 %8833
      %8835 = vrot.lane.b32.xlu0 %v4099, 67
      %v8836 = vpop.permute.xlu0 %8835
      %8837 = vrot.lane.b32.xlu0 %v4101, 67
      %v8838 = vpop.permute.xlu0 %8837
      %8967 = vrot.lane.b32.xlu0 %v7637, 4
      %v8968 = vpop.permute.xlu0 %8967
      %8969 = vrot.lane.b32.xlu0 %v7652, 4
      %v8970 = vpop.permute.xlu0 %8969
      %8971 = vrot.lane.b32.xlu0 %v7667, 4
      %v8972 = vpop.permute.xlu0 %8971
      %8973 = vrot.lane.b32.xlu0 %v7682, 4
      %v8974 = vpop.permute.xlu0 %8973
      %8975 = vrot.lane.b32.xlu0 %v7697, 4
      %v8976 = vpop.permute.xlu0 %8975
      %8977 = vrot.lane.b32.xlu0 %v7712, 4
      %v8978 = vpop.permute.xlu0 %8977
      %8979 = vrot.lane.b32.xlu0 %v7727, 4
      %v8980 = vpop.permute.xlu0 %8979
      %8981 = vrot.lane.b32.xlu0 %v7742, 4
      %v8982 = vpop.permute.xlu0 %8981
      %8983 = vrot.lane.b32.xlu0 %v7757, 4
      %v8984 = vpop.permute.xlu0 %8983
      %8985 = vrot.lane.b32.xlu0 %v7772, 4
      %v8986 = vpop.permute.xlu0 %8985
      %8987 = vrot.lane.b32.xlu0 %v7787, 4
      %v8988 = vpop.permute.xlu0 %8987
      %8989 = vrot.lane.b32.xlu0 %v7802, 4
      %v8990 = vpop.permute.xlu0 %8989
      %8991 = vrot.lane.b32.xlu0 %v7817, 4
      %v8992 = vpop.permute.xlu0 %8991
      %8993 = vrot.lane.b32.xlu0 %v7832, 4
      %v8994 = vpop.permute.xlu0 %8993
      %8995 = vrot.lane.b32.xlu0 %v7847, 4
      %v8996 = vpop.permute.xlu0 %8995
      %8997 = vrot.lane.b32.xlu0 %v7862, 4
      %v8998 = vpop.permute.xlu0 %8997
      %8999 = vrot.lane.b32.xlu0 %v7877, 4
      %v9000 = vpop.permute.xlu0 %8999
      %9001 = vrot.lane.b32.xlu0 %v7892, 4
      %v9002 = vpop.permute.xlu0 %9001
      %9003 = vrot.lane.b32.xlu0 %v7907, 4
      %v9004 = vpop.permute.xlu0 %9003
      %9005 = vrot.lane.b32.xlu0 %v7922, 4
      %v9006 = vpop.permute.xlu0 %9005
      %9007 = vrot.lane.b32.xlu0 %v7937, 4
      %v9008 = vpop.permute.xlu0 %9007
      %9009 = vrot.lane.b32.xlu0 %v7952, 4
      %v9010 = vpop.permute.xlu0 %9009
      %9011 = vrot.lane.b32.xlu0 %v7967, 4
      %v9012 = vpop.permute.xlu0 %9011
      %9013 = vrot.lane.b32.xlu0 %v7982, 4
      %v9014 = vpop.permute.xlu0 %9013
      %9015 = vrot.lane.b32.xlu0 %v7997, 4
      %v9016 = vpop.permute.xlu0 %9015
      %9017 = vrot.lane.b32.xlu0 %v8012, 4
      %v9018 = vpop.permute.xlu0 %9017
      %9019 = vrot.lane.b32.xlu0 %v8027, 4
      %v9020 = vpop.permute.xlu0 %9019
      %9021 = vrot.lane.b32.xlu0 %v8042, 4
      %v9022 = vpop.permute.xlu0 %9021
      %9023 = vrot.lane.b32.xlu0 %v8057, 4
      %v9024 = vpop.permute.xlu0 %9023
      %9025 = vrot.lane.b32.xlu0 %v8072, 4
      %v9026 = vpop.permute.xlu0 %9025
      %9027 = vrot.lane.b32.xlu0 %v8087, 4
      %v9028 = vpop.permute.xlu0 %9027
      %9029 = vrot.lane.b32.xlu0 %v8102, 4
      %v9030 = vpop.permute.xlu0 %9029
      %9031 = vrot.lane.b32.xlu0 %v8117, 4
      %v9032 = vpop.permute.xlu0 %9031
      %9033 = vrot.lane.b32.xlu0 %v8132, 4
      %v9034 = vpop.permute.xlu0 %9033
      %9035 = vrot.lane.b32.xlu0 %v8147, 4
      %v9036 = vpop.permute.xlu0 %9035
      %9037 = vrot.lane.b32.xlu0 %v8162, 4
      %v9038 = vpop.permute.xlu0 %9037
      %9039 = vrot.lane.b32.xlu0 %v8177, 4
      %v9040 = vpop.permute.xlu0 %9039
      %9041 = vrot.lane.b32.xlu0 %v8192, 4
      %v9042 = vpop.permute.xlu0 %9041
      %9043 = vrot.lane.b32.xlu0 %v8207, 4
      %v9044 = vpop.permute.xlu0 %9043
      %9045 = vrot.lane.b32.xlu0 %v8222, 4
      %v9046 = vpop.permute.xlu0 %9045
      %9047 = vrot.lane.b32.xlu0 %v8237, 4
      %v9048 = vpop.permute.xlu0 %9047
      %9049 = vrot.lane.b32.xlu0 %v8252, 4
      %v9050 = vpop.permute.xlu0 %9049
      %9051 = vrot.lane.b32.xlu0 %v8267, 4
      %v9052 = vpop.permute.xlu0 %9051
      %9053 = vrot.lane.b32.xlu0 %v8282, 4
      %v9054 = vpop.permute.xlu0 %9053
      %9055 = vrot.lane.b32.xlu0 %v8297, 4
      %v9056 = vpop.permute.xlu0 %9055
      %9057 = vrot.lane.b32.xlu0 %v8312, 4
      %v9058 = vpop.permute.xlu0 %9057
      %9059 = vrot.lane.b32.xlu0 %v8327, 4
      %v9060 = vpop.permute.xlu0 %9059
      %9061 = vrot.lane.b32.xlu0 %v8342, 4
      %v9062 = vpop.permute.xlu0 %9061
      %9063 = vrot.lane.b32.xlu0 %v8357, 4
      %v9064 = vpop.permute.xlu0 %9063
      %9065 = vrot.lane.b32.xlu0 %v8372, 4
      %v9066 = vpop.permute.xlu0 %9065
      %9067 = vrot.lane.b32.xlu0 %v8387, 4
      %v9068 = vpop.permute.xlu0 %9067
      %9069 = vrot.lane.b32.xlu0 %v8402, 4
      %v9070 = vpop.permute.xlu0 %9069
      %9071 = vrot.lane.b32.xlu0 %v8417, 4
      %v9072 = vpop.permute.xlu0 %9071
      %9073 = vrot.lane.b32.xlu0 %v8432, 4
      %v9074 = vpop.permute.xlu0 %9073
      %9075 = vrot.lane.b32.xlu0 %v8447, 4
      %v9076 = vpop.permute.xlu0 %9075
      %9077 = vrot.lane.b32.xlu0 %v8462, 4
      %v9078 = vpop.permute.xlu0 %9077
      %9079 = vrot.lane.b32.xlu0 %v8477, 4
      %v9080 = vpop.permute.xlu0 %9079
      %9081 = vrot.lane.b32.xlu0 %v8492, 4
      %v9082 = vpop.permute.xlu0 %9081
      %9083 = vrot.lane.b32.xlu0 %v8507, 4
      %v9084 = vpop.permute.xlu0 %9083
      %9085 = vrot.lane.b32.xlu0 %v8522, 4
      %v9086 = vpop.permute.xlu0 %9085
      %9087 = vrot.lane.b32.xlu0 %v8537, 4
      %v9088 = vpop.permute.xlu0 %9087
      %9089 = vrot.lane.b32.xlu0 %v8552, 4
      %v9090 = vpop.permute.xlu0 %9089
      %9091 = vrot.lane.b32.xlu0 %v8567, 4
      %v9092 = vpop.permute.xlu0 %9091
      %9093 = vrot.lane.b32.xlu0 %v8582, 4
      %v9094 = vpop.permute.xlu0 %9093
      %9223 = vrot.lane.b32.xlu0 %v8583, 4
      %v9224 = vpop.permute.xlu0 %9223
      %9225 = vrot.lane.b32.xlu0 %v8584, 4
      %v9226 = vpop.permute.xlu0 %9225
      %9227 = vrot.lane.b32.xlu0 %v8585, 4
      %v9228 = vpop.permute.xlu0 %9227
      %9229 = vrot.lane.b32.xlu0 %v8586, 4
      %v9230 = vpop.permute.xlu0 %9229
      %9231 = vrot.lane.b32.xlu0 %v8587, 4
      %v9232 = vpop.permute.xlu0 %9231
      %9233 = vrot.lane.b32.xlu0 %v8588, 4
      %v9234 = vpop.permute.xlu0 %9233
      %9235 = vrot.lane.b32.xlu0 %v8589, 4
      %v9236 = vpop.permute.xlu0 %9235
      %9237 = vrot.lane.b32.xlu0 %v8590, 4
      %v9238 = vpop.permute.xlu0 %9237
      %9239 = vrot.lane.b32.xlu0 %v8591, 4
      %v9240 = vpop.permute.xlu0 %9239
      %9241 = vrot.lane.b32.xlu0 %v8592, 4
      %v9242 = vpop.permute.xlu0 %9241
      %9243 = vrot.lane.b32.xlu0 %v8593, 4
      %v9244 = vpop.permute.xlu0 %9243
      %9245 = vrot.lane.b32.xlu0 %v8594, 4
      %v9246 = vpop.permute.xlu0 %9245
      %9247 = vrot.lane.b32.xlu0 %v8595, 4
      %v9248 = vpop.permute.xlu0 %9247
      %9249 = vrot.lane.b32.xlu0 %v8596, 4
      %v9250 = vpop.permute.xlu0 %9249
      %9251 = vrot.lane.b32.xlu0 %v8597, 4
      %v9252 = vpop.permute.xlu0 %9251
      %9253 = vrot.lane.b32.xlu0 %v8598, 4
      %v9254 = vpop.permute.xlu0 %9253
      %9255 = vrot.lane.b32.xlu0 %v8599, 4
      %v9256 = vpop.permute.xlu0 %9255
      %9257 = vrot.lane.b32.xlu0 %v8600, 4
      %v9258 = vpop.permute.xlu0 %9257
      %9259 = vrot.lane.b32.xlu0 %v8601, 4
      %v9260 = vpop.permute.xlu0 %9259
      %9261 = vrot.lane.b32.xlu0 %v8602, 4
      %v9262 = vpop.permute.xlu0 %9261
      %9263 = vrot.lane.b32.xlu0 %v8603, 4
      %v9264 = vpop.permute.xlu0 %9263
      %9265 = vrot.lane.b32.xlu0 %v8604, 4
      %v9266 = vpop.permute.xlu0 %9265
      %9267 = vrot.lane.b32.xlu0 %v8605, 4
      %v9268 = vpop.permute.xlu0 %9267
      %9269 = vrot.lane.b32.xlu0 %v8606, 4
      %v9270 = vpop.permute.xlu0 %9269
      %9271 = vrot.lane.b32.xlu0 %v8607, 4
      %v9272 = vpop.permute.xlu0 %9271
      %9273 = vrot.lane.b32.xlu0 %v8608, 4
      %v9274 = vpop.permute.xlu0 %9273
      %9275 = vrot.lane.b32.xlu0 %v8609, 4
      %v9276 = vpop.permute.xlu0 %9275
      %9277 = vrot.lane.b32.xlu0 %v8610, 4
      %v9278 = vpop.permute.xlu0 %9277
      %9279 = vrot.lane.b32.xlu0 %v8611, 4
      %v9280 = vpop.permute.xlu0 %9279
      %9281 = vrot.lane.b32.xlu0 %v8612, 4
      %v9282 = vpop.permute.xlu0 %9281
      %9283 = vrot.lane.b32.xlu0 %v8613, 4
      %v9284 = vpop.permute.xlu0 %9283
      %9285 = vrot.lane.b32.xlu0 %v8614, 4
      %v9286 = vpop.permute.xlu0 %9285
      %9287 = vrot.lane.b32.xlu0 %v8615, 4
      %v9288 = vpop.permute.xlu0 %9287
      %9289 = vrot.lane.b32.xlu0 %v8616, 4
      %v9290 = vpop.permute.xlu0 %9289
      %9291 = vrot.lane.b32.xlu0 %v8617, 4
      %v9292 = vpop.permute.xlu0 %9291
      %9293 = vrot.lane.b32.xlu0 %v8618, 4
      %v9294 = vpop.permute.xlu0 %9293
      %9295 = vrot.lane.b32.xlu0 %v8619, 4
      %v9296 = vpop.permute.xlu0 %9295
      %9297 = vrot.lane.b32.xlu0 %v8620, 4
      %v9298 = vpop.permute.xlu0 %9297
      %9299 = vrot.lane.b32.xlu0 %v8621, 4
      %v9300 = vpop.permute.xlu0 %9299
      %9301 = vrot.lane.b32.xlu0 %v8622, 4
      %v9302 = vpop.permute.xlu0 %9301
      %9303 = vrot.lane.b32.xlu0 %v8623, 4
      %v9304 = vpop.permute.xlu0 %9303
      %9305 = vrot.lane.b32.xlu0 %v8624, 4
      %v9306 = vpop.permute.xlu0 %9305
      %9307 = vrot.lane.b32.xlu0 %v8625, 4
      %v9308 = vpop.permute.xlu0 %9307
      %9309 = vrot.lane.b32.xlu0 %v8626, 4
      %v9310 = vpop.permute.xlu0 %9309
      %9311 = vrot.lane.b32.xlu0 %v8627, 4
      %v9312 = vpop.permute.xlu0 %9311
      %9313 = vrot.lane.b32.xlu0 %v8628, 4
      %v9314 = vpop.permute.xlu0 %9313
      %9315 = vrot.lane.b32.xlu0 %v8629, 4
      %v9316 = vpop.permute.xlu0 %9315
      %9317 = vrot.lane.b32.xlu0 %v8630, 4
      %v9318 = vpop.permute.xlu0 %9317
      %9319 = vrot.lane.b32.xlu0 %v8631, 4
      %v9320 = vpop.permute.xlu0 %9319
      %9321 = vrot.lane.b32.xlu0 %v8632, 4
      %v9322 = vpop.permute.xlu0 %9321
      %9323 = vrot.lane.b32.xlu0 %v8633, 4
      %v9324 = vpop.permute.xlu0 %9323
      %9325 = vrot.lane.b32.xlu0 %v8634, 4
      %v9326 = vpop.permute.xlu0 %9325
      %9327 = vrot.lane.b32.xlu0 %v8635, 4
      %v9328 = vpop.permute.xlu0 %9327
      %9329 = vrot.lane.b32.xlu0 %v8636, 4
      %v9330 = vpop.permute.xlu0 %9329
      %9331 = vrot.lane.b32.xlu0 %v8637, 4
      %v9332 = vpop.permute.xlu0 %9331
      %9333 = vrot.lane.b32.xlu0 %v8638, 4
      %v9334 = vpop.permute.xlu0 %9333
      %9335 = vrot.lane.b32.xlu0 %v8639, 4
      %v9336 = vpop.permute.xlu0 %9335
      %9337 = vrot.lane.b32.xlu0 %v8640, 4
      %v9338 = vpop.permute.xlu0 %9337
      %9339 = vrot.lane.b32.xlu0 %v8641, 4
      %v9340 = vpop.permute.xlu0 %9339
      %9341 = vrot.lane.b32.xlu0 %v8642, 4
      %v9342 = vpop.permute.xlu0 %9341
      %9343 = vrot.lane.b32.xlu0 %v8643, 4
      %v9344 = vpop.permute.xlu0 %9343
      %9345 = vrot.lane.b32.xlu0 %v8644, 4
      %v9346 = vpop.permute.xlu0 %9345
      %9347 = vrot.lane.b32.xlu0 %v8645, 4
      %v9348 = vpop.permute.xlu0 %9347
      %9349 = vrot.lane.b32.xlu0 %v8646, 4
      %v9350 = vpop.permute.xlu0 %9349
      %vm9415 = vcmask 23552
      %v9416 = vsel %vm9415, %v5396, %v8712
      %v9417 = vsel %vm9415, %v5411, %v8714
      %v9418 = vsel %vm9415, %v5426, %v8716
      %v9419 = vsel %vm9415, %v5441, %v8718
      %v9420 = vsel %vm9415, %v5456, %v8720
      %v9421 = vsel %vm9415, %v5471, %v8722
      %v9422 = vsel %vm9415, %v5486, %v8724
      %v9423 = vsel %vm9415, %v5501, %v8726
      %v9424 = vsel %vm9415, %v5516, %v8728
      %v9425 = vsel %vm9415, %v5531, %v8730
      %v9426 = vsel %vm9415, %v5546, %v8732
      %v9427 = vsel %vm9415, %v5561, %v8734
      %v9428 = vsel %vm9415, %v5576, %v8736
      %v9429 = vsel %vm9415, %v5591, %v8738
      %v9430 = vsel %vm9415, %v5606, %v8740
      %v9431 = vsel %vm9415, %v5621, %v8742
      %v9432 = vsel %vm9415, %v5636, %v8744
      %v9433 = vsel %vm9415, %v5651, %v8746
      %v9434 = vsel %vm9415, %v5666, %v8748
      %v9435 = vsel %vm9415, %v5681, %v8750
      %v9436 = vsel %vm9415, %v5696, %v8752
      %v9437 = vsel %vm9415, %v5711, %v8754
      %v9438 = vsel %vm9415, %v5726, %v8756
      %v9439 = vsel %vm9415, %v5741, %v8758
      %v9440 = vsel %vm9415, %v5756, %v8760
      %v9441 = vsel %vm9415, %v5771, %v8762
      %v9442 = vsel %vm9415, %v5786, %v8764
      %v9443 = vsel %vm9415, %v5801, %v8766
      %v9444 = vsel %vm9415, %v5816, %v8768
      %v9445 = vsel %vm9415, %v5831, %v8770
      %v9446 = vsel %vm9415, %v5846, %v8772
      %v9447 = vsel %vm9415, %v5861, %v8774
      %v9448 = vsel %vm9415, %v5876, %v8776
      %v9449 = vsel %vm9415, %v5891, %v8778
      %v9450 = vsel %vm9415, %v5906, %v8780
      %v9451 = vsel %vm9415, %v5921, %v8782
      %v9452 = vsel %vm9415, %v5936, %v8784
      %v9453 = vsel %vm9415, %v5951, %v8786
      %v9454 = vsel %vm9415, %v5966, %v8788
      %v9455 = vsel %vm9415, %v5981, %v8790
      %v9456 = vsel %vm9415, %v5996, %v8792
      %v9457 = vsel %vm9415, %v6011, %v8794
      %v9458 = vsel %vm9415, %v6026, %v8796
      %v9459 = vsel %vm9415, %v6041, %v8798
      %v9460 = vsel %vm9415, %v6056, %v8800
      %v9461 = vsel %vm9415, %v6071, %v8802
      %v9462 = vsel %vm9415, %v6086, %v8804
      %v9463 = vsel %vm9415, %v6101, %v8806
      %v9464 = vsel %vm9415, %v6116, %v8808
      %v9465 = vsel %vm9415, %v6131, %v8810
      %v9466 = vsel %vm9415, %v6146, %v8812
      %v9467 = vsel %vm9415, %v6161, %v8814
      %v9468 = vsel %vm9415, %v6176, %v8816
      %v9469 = vsel %vm9415, %v6191, %v8818
      %v9470 = vsel %vm9415, %v6206, %v8820
      %v9471 = vsel %vm9415, %v6221, %v8822
      %v9472 = vsel %vm9415, %v6236, %v8824
      %v9473 = vsel %vm9415, %v6251, %v8826
      %v9474 = vsel %vm9415, %v6266, %v8828
      %v9475 = vsel %vm9415, %v6281, %v8830
      %v9476 = vsel %vm9415, %v6296, %v8832
      %v9477 = vsel %vm9415, %v6311, %v8834
      %v9478 = vsel %vm9415, %v6326, %v8836
      %v9479 = vsel %vm9415, %v6341, %v8838
      %vm9480 = vcmask 31744
      %v9481 = vsel %vm9480, %v9416, %v8968
      %v9482 = vsel %vm9480, %v9417, %v8970
      %v9483 = vsel %vm9480, %v9418, %v8972
      %v9484 = vsel %vm9480, %v9419, %v8974
      %v9485 = vsel %vm9480, %v9420, %v8976
      %v9486 = vsel %vm9480, %v9421, %v8978
      %v9487 = vsel %vm9480, %v9422, %v8980
      %v9488 = vsel %vm9480, %v9423, %v8982
      %v9489 = vsel %vm9480, %v9424, %v8984
      %v9490 = vsel %vm9480, %v9425, %v8986
      %v9491 = vsel %vm9480, %v9426, %v8988
      %v9492 = vsel %vm9480, %v9427, %v8990
      %v9493 = vsel %vm9480, %v9428, %v8992
      %v9494 = vsel %vm9480, %v9429, %v8994
      %v9495 = vsel %vm9480, %v9430, %v8996
      %v9496 = vsel %vm9480, %v9431, %v8998
      %v9497 = vsel %vm9480, %v9432, %v9000
      %v9498 = vsel %vm9480, %v9433, %v9002
      %v9499 = vsel %vm9480, %v9434, %v9004
      %v9500 = vsel %vm9480, %v9435, %v9006
      %v9501 = vsel %vm9480, %v9436, %v9008
      %v9502 = vsel %vm9480, %v9437, %v9010
      %v9503 = vsel %vm9480, %v9438, %v9012
      %v9504 = vsel %vm9480, %v9439, %v9014
      %v9505 = vsel %vm9480, %v9440, %v9016
      %v9506 = vsel %vm9480, %v9441, %v9018
      %v9507 = vsel %vm9480, %v9442, %v9020
      %v9508 = vsel %vm9480, %v9443, %v9022
      %v9509 = vsel %vm9480, %v9444, %v9024
      %v9510 = vsel %vm9480, %v9445, %v9026
      %v9511 = vsel %vm9480, %v9446, %v9028
      %v9512 = vsel %vm9480, %v9447, %v9030
      %v9513 = vsel %vm9480, %v9448, %v9032
      %v9514 = vsel %vm9480, %v9449, %v9034
      %v9515 = vsel %vm9480, %v9450, %v9036
      %v9516 = vsel %vm9480, %v9451, %v9038
      %v9517 = vsel %vm9480, %v9452, %v9040
      %v9518 = vsel %vm9480, %v9453, %v9042
      %v9519 = vsel %vm9480, %v9454, %v9044
      %v9520 = vsel %vm9480, %v9455, %v9046
      %v9521 = vsel %vm9480, %v9456, %v9048
      %v9522 = vsel %vm9480, %v9457, %v9050
      %v9523 = vsel %vm9480, %v9458, %v9052
      %v9524 = vsel %vm9480, %v9459, %v9054
      %v9525 = vsel %vm9480, %v9460, %v9056
      %v9526 = vsel %vm9480, %v9461, %v9058
      %v9527 = vsel %vm9480, %v9462, %v9060
      %v9528 = vsel %vm9480, %v9463, %v9062
      %v9529 = vsel %vm9480, %v9464, %v9064
      %v9530 = vsel %vm9480, %v9465, %v9066
      %v9531 = vsel %vm9480, %v9466, %v9068
      %v9532 = vsel %vm9480, %v9467, %v9070
      %v9533 = vsel %vm9480, %v9468, %v9072
      %v9534 = vsel %vm9480, %v9469, %v9074
      %v9535 = vsel %vm9480, %v9470, %v9076
      %v9536 = vsel %vm9480, %v9471, %v9078
      %v9537 = vsel %vm9480, %v9472, %v9080
      %v9538 = vsel %vm9480, %v9473, %v9082
      %v9539 = vsel %vm9480, %v9474, %v9084
      %v9540 = vsel %vm9480, %v9475, %v9086
      %v9541 = vsel %vm9480, %v9476, %v9088
      %v9542 = vsel %vm9480, %v9477, %v9090
      %v9543 = vsel %vm9480, %v9478, %v9092
      %v9544 = vsel %vm9480, %v9479, %v9094
      %vm9545 = vcmask 56320
      %v9546 = vsel %vm9545, %v9481, %v9224
      %v9547 = vsel %vm9545, %v9482, %v9226
      %v9548 = vsel %vm9545, %v9483, %v9228
      %v9549 = vsel %vm9545, %v9484, %v9230
      %v9550 = vsel %vm9545, %v9485, %v9232
      %v9551 = vsel %vm9545, %v9486, %v9234
      %v9552 = vsel %vm9545, %v9487, %v9236
      %v9553 = vsel %vm9545, %v9488, %v9238
      %v9554 = vsel %vm9545, %v9489, %v9240
      %v9555 = vsel %vm9545, %v9490, %v9242
      %v9556 = vsel %vm9545, %v9491, %v9244
      %v9557 = vsel %vm9545, %v9492, %v9246
      %v9558 = vsel %vm9545, %v9493, %v9248
      %v9559 = vsel %vm9545, %v9494, %v9250
      %v9560 = vsel %vm9545, %v9495, %v9252
      %v9561 = vsel %vm9545, %v9496, %v9254
      %v9562 = vsel %vm9545, %v9497, %v9256
      %v9563 = vsel %vm9545, %v9498, %v9258
      %v9564 = vsel %vm9545, %v9499, %v9260
      %v9565 = vsel %vm9545, %v9500, %v9262
      %v9566 = vsel %vm9545, %v9501, %v9264
      %v9567 = vsel %vm9545, %v9502, %v9266
      %v9568 = vsel %vm9545, %v9503, %v9268
      %v9569 = vsel %vm9545, %v9504, %v9270
      %v9570 = vsel %vm9545, %v9505, %v9272
      %v9571 = vsel %vm9545, %v9506, %v9274
      %v9572 = vsel %vm9545, %v9507, %v9276
      %v9573 = vsel %vm9545, %v9508, %v9278
      %v9574 = vsel %vm9545, %v9509, %v9280
      %v9575 = vsel %vm9545, %v9510, %v9282
      %v9576 = vsel %vm9545, %v9511, %v9284
      %v9577 = vsel %vm9545, %v9512, %v9286
      %v9578 = vsel %vm9545, %v9513, %v9288
      %v9579 = vsel %vm9545, %v9514, %v9290
      %v9580 = vsel %vm9545, %v9515, %v9292
      %v9581 = vsel %vm9545, %v9516, %v9294
      %v9582 = vsel %vm9545, %v9517, %v9296
      %v9583 = vsel %vm9545, %v9518, %v9298
      %v9584 = vsel %vm9545, %v9519, %v9300
      %v9585 = vsel %vm9545, %v9520, %v9302
      %v9586 = vsel %vm9545, %v9521, %v9304
      %v9587 = vsel %vm9545, %v9522, %v9306
      %v9588 = vsel %vm9545, %v9523, %v9308
      %v9589 = vsel %vm9545, %v9524, %v9310
      %v9590 = vsel %vm9545, %v9525, %v9312
      %v9591 = vsel %vm9545, %v9526, %v9314
      %v9592 = vsel %vm9545, %v9527, %v9316
      %v9593 = vsel %vm9545, %v9528, %v9318
      %v9594 = vsel %vm9545, %v9529, %v9320
      %v9595 = vsel %vm9545, %v9530, %v9322
      %v9596 = vsel %vm9545, %v9531, %v9324
      %v9597 = vsel %vm9545, %v9532, %v9326
      %v9598 = vsel %vm9545, %v9533, %v9328
      %v9599 = vsel %vm9545, %v9534, %v9330
      %v9600 = vsel %vm9545, %v9535, %v9332
      %v9601 = vsel %vm9545, %v9536, %v9334
      %v9602 = vsel %vm9545, %v9537, %v9336
      %v9603 = vsel %vm9545, %v9538, %v9338
      %v9604 = vsel %vm9545, %v9539, %v9340
      %v9605 = vsel %vm9545, %v9540, %v9342
      %v9606 = vsel %vm9545, %v9541, %v9344
      %v9607 = vsel %vm9545, %v9542, %v9346
      %v9608 = vsel %vm9545, %v9543, %v9348
      %v9609 = vsel %vm9545, %v9544, %v9350
      %vm9610 = vcmask 64512
      %v9611 = vsel %vm9610, %v9546, %v8968
      %v9612 = vsel %vm9610, %v9547, %v8970
      %v9613 = vsel %vm9610, %v9548, %v8972
      %v9614 = vsel %vm9610, %v9549, %v8974
      %v9615 = vsel %vm9610, %v9550, %v8976
      %v9616 = vsel %vm9610, %v9551, %v8978
      %v9617 = vsel %vm9610, %v9552, %v8980
      %v9618 = vsel %vm9610, %v9553, %v8982
      %v9619 = vsel %vm9610, %v9554, %v8984
      %v9620 = vsel %vm9610, %v9555, %v8986
      %v9621 = vsel %vm9610, %v9556, %v8988
      %v9622 = vsel %vm9610, %v9557, %v8990
      %v9623 = vsel %vm9610, %v9558, %v8992
      %v9624 = vsel %vm9610, %v9559, %v8994
      %v9625 = vsel %vm9610, %v9560, %v8996
      %v9626 = vsel %vm9610, %v9561, %v8998
      %v9627 = vsel %vm9610, %v9562, %v9000
      %v9628 = vsel %vm9610, %v9563, %v9002
      %v9629 = vsel %vm9610, %v9564, %v9004
      %v9630 = vsel %vm9610, %v9565, %v9006
      %v9631 = vsel %vm9610, %v9566, %v9008
      %v9632 = vsel %vm9610, %v9567, %v9010
      %v9633 = vsel %vm9610, %v9568, %v9012
      %v9634 = vsel %vm9610, %v9569, %v9014
      %v9635 = vsel %vm9610, %v9570, %v9016
      %v9636 = vsel %vm9610, %v9571, %v9018
      %v9637 = vsel %vm9610, %v9572, %v9020
      %v9638 = vsel %vm9610, %v9573, %v9022
      %v9639 = vsel %vm9610, %v9574, %v9024
      %v9640 = vsel %vm9610, %v9575, %v9026
      %v9641 = vsel %vm9610, %v9576, %v9028
      %v9642 = vsel %vm9610, %v9577, %v9030
      %v9643 = vsel %vm9610, %v9578, %v9032
      %v9644 = vsel %vm9610, %v9579, %v9034
      %v9645 = vsel %vm9610, %v9580, %v9036
      %v9646 = vsel %vm9610, %v9581, %v9038
      %v9647 = vsel %vm9610, %v9582, %v9040
      %v9648 = vsel %vm9610, %v9583, %v9042
      %v9649 = vsel %vm9610, %v9584, %v9044
      %v9650 = vsel %vm9610, %v9585, %v9046
      %v9651 = vsel %vm9610, %v9586, %v9048
      %v9652 = vsel %vm9610, %v9587, %v9050
      %v9653 = vsel %vm9610, %v9588, %v9052
      %v9654 = vsel %vm9610, %v9589, %v9054
      %v9655 = vsel %vm9610, %v9590, %v9056
      %v9656 = vsel %vm9610, %v9591, %v9058
      %v9657 = vsel %vm9610, %v9592, %v9060
      %v9658 = vsel %vm9610, %v9593, %v9062
      %v9659 = vsel %vm9610, %v9594, %v9064
      %v9660 = vsel %vm9610, %v9595, %v9066
      %v9661 = vsel %vm9610, %v9596, %v9068
      %v9662 = vsel %vm9610, %v9597, %v9070
      %v9663 = vsel %vm9610, %v9598, %v9072
      %v9664 = vsel %vm9610, %v9599, %v9074
      %v9665 = vsel %vm9610, %v9600, %v9076
      %v9666 = vsel %vm9610, %v9601, %v9078
      %v9667 = vsel %vm9610, %v9602, %v9080
      %v9668 = vsel %vm9610, %v9603, %v9082
      %v9669 = vsel %vm9610, %v9604, %v9084
      %v9670 = vsel %vm9610, %v9605, %v9086
      %v9671 = vsel %vm9610, %v9606, %v9088
      %v9672 = vsel %vm9610, %v9607, %v9090
      %v9673 = vsel %vm9610, %v9608, %v9092
      %v9674 = vsel %vm9610, %v9609, %v9094
      %vm9675 = vcmask 72704
      %v9676 = vsel %vm9675, %v9611, 0.0
      %v9677 = vsel %vm9675, %v9612, 0.0
      %v9678 = vsel %vm9675, %v9613, 0.0
      %v9679 = vsel %vm9675, %v9614, 0.0
      %v9680 = vsel %vm9675, %v9615, 0.0
      %v9681 = vsel %vm9675, %v9616, 0.0
      %v9682 = vsel %vm9675, %v9617, 0.0
      %v9683 = vsel %vm9675, %v9618, 0.0
      %v9684 = vsel %vm9675, %v9619, 0.0
      %v9685 = vsel %vm9675, %v9620, 0.0
      %v9686 = vsel %vm9675, %v9621, 0.0
      %v9687 = vsel %vm9675, %v9622, 0.0
      %v9688 = vsel %vm9675, %v9623, 0.0
      %v9689 = vsel %vm9675, %v9624, 0.0
      %v9690 = vsel %vm9675, %v9625, 0.0
      %v9691 = vsel %vm9675, %v9626, 0.0
      %v9692 = vsel %vm9675, %v9627, 0.0
      %v9693 = vsel %vm9675, %v9628, 0.0
      %v9694 = vsel %vm9675, %v9629, 0.0
      %v9695 = vsel %vm9675, %v9630, 0.0
      %v9696 = vsel %vm9675, %v9631, 0.0
      %v9697 = vsel %vm9675, %v9632, 0.0
      %v9698 = vsel %vm9675, %v9633, 0.0
      %v9699 = vsel %vm9675, %v9634, 0.0
      %v9700 = vsel %vm9675, %v9635, 0.0
      %v9701 = vsel %vm9675, %v9636, 0.0
      %v9702 = vsel %vm9675, %v9637, 0.0
      %v9703 = vsel %vm9675, %v9638, 0.0
      %v9704 = vsel %vm9675, %v9639, 0.0
      %v9705 = vsel %vm9675, %v9640, 0.0
      %v9706 = vsel %vm9675, %v9641, 0.0
      %v9707 = vsel %vm9675, %v9642, 0.0
      %v9708 = vsel %vm9675, %v9643, 0.0
      %v9709 = vsel %vm9675, %v9644, 0.0
      %v9710 = vsel %vm9675, %v9645, 0.0
      %v9711 = vsel %vm9675, %v9646, 0.0
      %v9712 = vsel %vm9675, %v9647, 0.0
      %v9713 = vsel %vm9675, %v9648, 0.0
      %v9714 = vsel %vm9675, %v9649, 0.0
      %v9715 = vsel %vm9675, %v9650, 0.0
      %v9716 = vsel %vm9675, %v9651, 0.0
      %v9717 = vsel %vm9675, %v9652, 0.0
      %v9718 = vsel %vm9675, %v9653, 0.0
      %v9719 = vsel %vm9675, %v9654, 0.0
      %v9720 = vsel %vm9675, %v9655, 0.0
      %v9721 = vsel %vm9675, %v9656, 0.0
      %v9722 = vsel %vm9675, %v9657, 0.0
      %v9723 = vsel %vm9675, %v9658, 0.0
      %v9724 = vsel %vm9675, %v9659, 0.0
      %v9725 = vsel %vm9675, %v9660, 0.0
      %v9726 = vsel %vm9675, %v9661, 0.0
      %v9727 = vsel %vm9675, %v9662, 0.0
      %v9728 = vsel %vm9675, %v9663, 0.0
      %v9729 = vsel %vm9675, %v9664, 0.0
      %v9730 = vsel %vm9675, %v9665, 0.0
      %v9731 = vsel %vm9675, %v9666, 0.0
      %v9732 = vsel %vm9675, %v9667, 0.0
      %v9733 = vsel %vm9675, %v9668, 0.0
      %v9734 = vsel %vm9675, %v9669, 0.0
      %v9735 = vsel %vm9675, %v9670, 0.0
      %v9736 = vsel %vm9675, %v9671, 0.0
      %v9737 = vsel %vm9675, %v9672, 0.0
      %v9738 = vsel %vm9675, %v9673, 0.0
      %v9739 = vsel %vm9675, %v9674, 0.0
      %vm9740 = vcmask 130048
      %9741 = vst.msk [vmem:[%s307] sm:$0xff] %vm9740, %v9676
      %9742 = vst.msk [vmem:[%s307 + $0x8] sm:$0xff] %vm9740, %v9677
      %9743 = vst.msk [vmem:[%s307 + $0x10] sm:$0xff] %vm9740, %v9678
      %9744 = vst.msk [vmem:[%s307 + $0x18] sm:$0xff] %vm9740, %v9679
      %9745 = vst.msk [vmem:[%s307 + $0x20] sm:$0xff] %vm9740, %v9680
      %9746 = vst.msk [vmem:[%s307 + $0x28] sm:$0xff] %vm9740, %v9681
      %9747 = vst.msk [vmem:[%s307 + $0x30] sm:$0xff] %vm9740, %v9682
      %9748 = vst.msk [vmem:[%s307 + $0x38] sm:$0xff] %vm9740, %v9683
      %9749 = vst.msk [vmem:[%s307 + $0x40] sm:$0xff] %vm9740, %v9684
      %9750 = vst.msk [vmem:[%s307 + $0x48] sm:$0xff] %vm9740, %v9685
      %9751 = vst.msk [vmem:[%s307 + $0x50] sm:$0xff] %vm9740, %v9686
      %9752 = vst.msk [vmem:[%s307 + $0x58] sm:$0xff] %vm9740, %v9687
      %9753 = vst.msk [vmem:[%s307 + $0x60] sm:$0xff] %vm9740, %v9688
      %9754 = vst.msk [vmem:[%s307 + $0x68] sm:$0xff] %vm9740, %v9689
      %9755 = vst.msk [vmem:[%s307 + $0x70] sm:$0xff] %vm9740, %v9690
      %9756 = vst.msk [vmem:[%s307 + $0x78] sm:$0xff] %vm9740, %v9691
      %9757 = vst.msk [vmem:[%s307 + $0x80] sm:$0xff] %vm9740, %v9692
      %9758 = vst.msk [vmem:[%s307 + $0x88] sm:$0xff] %vm9740, %v9693
      %9759 = vst.msk [vmem:[%s307 + $0x90] sm:$0xff] %vm9740, %v9694
      %9760 = vst.msk [vmem:[%s307 + $0x98] sm:$0xff] %vm9740, %v9695
      %9761 = vst.msk [vmem:[%s307 + $0xa0] sm:$0xff] %vm9740, %v9696
      %9762 = vst.msk [vmem:[%s307 + $0xa8] sm:$0xff] %vm9740, %v9697
      %9763 = vst.msk [vmem:[%s307 + $0xb0] sm:$0xff] %vm9740, %v9698
      %9764 = vst.msk [vmem:[%s307 + $0xb8] sm:$0xff] %vm9740, %v9699
      %9765 = vst.msk [vmem:[%s307 + $0xc0] sm:$0xff] %vm9740, %v9700
      %9766 = vst.msk [vmem:[%s307 + $0xc8] sm:$0xff] %vm9740, %v9701
      %9767 = vst.msk [vmem:[%s307 + $0xd0] sm:$0xff] %vm9740, %v9702
      %9768 = vst.msk [vmem:[%s307 + $0xd8] sm:$0xff] %vm9740, %v9703
      %9769 = vst.msk [vmem:[%s307 + $0xe0] sm:$0xff] %vm9740, %v9704
      %9770 = vst.msk [vmem:[%s307 + $0xe8] sm:$0xff] %vm9740, %v9705
      %9771 = vst.msk [vmem:[%s307 + $0xf0] sm:$0xff] %vm9740, %v9706
      %9772 = vst.msk [vmem:[%s307 + $0xf8] sm:$0xff] %vm9740, %v9707
      %9773 = vst.msk [vmem:[%s307 + $0x100] sm:$0xff] %vm9740, %v9708
      %9774 = vst.msk [vmem:[%s307 + $0x108] sm:$0xff] %vm9740, %v9709
      %9775 = vst.msk [vmem:[%s307 + $0x110] sm:$0xff] %vm9740, %v9710
      %9776 = vst.msk [vmem:[%s307 + $0x118] sm:$0xff] %vm9740, %v9711
      %9777 = vst.msk [vmem:[%s307 + $0x120] sm:$0xff] %vm9740, %v9712
      %9778 = vst.msk [vmem:[%s307 + $0x128] sm:$0xff] %vm9740, %v9713
      %9779 = vst.msk [vmem:[%s307 + $0x130] sm:$0xff] %vm9740, %v9714
      %9780 = vst.msk [vmem:[%s307 + $0x138] sm:$0xff] %vm9740, %v9715
      %9781 = vst.msk [vmem:[%s307 + $0x140] sm:$0xff] %vm9740, %v9716
      %9782 = vst.msk [vmem:[%s307 + $0x148] sm:$0xff] %vm9740, %v9717
      %9783 = vst.msk [vmem:[%s307 + $0x150] sm:$0xff] %vm9740, %v9718
      %9784 = vst.msk [vmem:[%s307 + $0x158] sm:$0xff] %vm9740, %v9719
      %9785 = vst.msk [vmem:[%s307 + $0x160] sm:$0xff] %vm9740, %v9720
      %9786 = vst.msk [vmem:[%s307 + $0x168] sm:$0xff] %vm9740, %v9721
      %9787 = vst.msk [vmem:[%s307 + $0x170] sm:$0xff] %vm9740, %v9722
      %9788 = vst.msk [vmem:[%s307 + $0x178] sm:$0xff] %vm9740, %v9723
      %9789 = vst.msk [vmem:[%s307 + $0x180] sm:$0xff] %vm9740, %v9724
      %9790 = vst.msk [vmem:[%s307 + $0x188] sm:$0xff] %vm9740, %v9725
      %9791 = vst.msk [vmem:[%s307 + $0x190] sm:$0xff] %vm9740, %v9726
      %9792 = vst.msk [vmem:[%s307 + $0x198] sm:$0xff] %vm9740, %v9727
      %9793 = vst.msk [vmem:[%s307 + $0x1a0] sm:$0xff] %vm9740, %v9728
      %9794 = vst.msk [vmem:[%s307 + $0x1a8] sm:$0xff] %vm9740, %v9729
      %9795 = vst.msk [vmem:[%s307 + $0x1b0] sm:$0xff] %vm9740, %v9730
      %9796 = vst.msk [vmem:[%s307 + $0x1b8] sm:$0xff] %vm9740, %v9731
      %9797 = vst.msk [vmem:[%s307 + $0x1c0] sm:$0xff] %vm9740, %v9732
      %9798 = vst.msk [vmem:[%s307 + $0x1c8] sm:$0xff] %vm9740, %v9733
      %9799 = vst.msk [vmem:[%s307 + $0x1d0] sm:$0xff] %vm9740, %v9734
      %9800 = vst.msk [vmem:[%s307 + $0x1d8] sm:$0xff] %vm9740, %v9735
      %9801 = vst.msk [vmem:[%s307 + $0x1e0] sm:$0xff] %vm9740, %v9736
      %9802 = vst.msk [vmem:[%s307 + $0x1e8] sm:$0xff] %vm9740, %v9737
      %9803 = vst.msk [vmem:[%s307 + $0x1f0] sm:$0xff] %vm9740, %v9738
      %9804 = vst.msk [vmem:[%s307 + $0x1f8] sm:$0xff] %vm9740, %v9739
      %s9805 = smul.u32 64, %s19
      %p9806 = scmp.lt.s32.totalorder %s9805, 127
      %s9807 = scalar_select %p9806, %s9805, 127
      %s9808 = smul.addr %s9807, 8
      %s9809 = scalar_lea.vmem %s8, %s9808
      // Predicated region
      $region53: #{nerfw_forward.1} parent=51 // pred_check
        %p9810 = pneg %p210
      $region54: #{nerfw_forward.1} parent=51 // pred_check_branch
        %9812 = sbr.rel (%p9810) target = $region56
      $region55: #{nerfw_forward.1} parent=51 // pred_region
        %s9813 = smul.u32 64, %s19
      $region56: #{nerfw_forward.1} parent=51 // pred_fallthru
        _
    $region52: #{nerfw_forward.1} parent=5 // pred_fallthru
      _
    %p9814 = scmp.le.s32.totalorder 2, %s14
    // Predicated region
    $region57: #{nerfw_forward.1} parent=5 // pred_check
      %p9815 = pneg %p9814
    $region58: #{nerfw_forward.1} parent=5 // pred_check_branch
      %9817 = sbr.rel (%p9815) target = $region60
    $region59: #{nerfw_forward.1} parent=5 // pred_region
      %s9818 = ssub.s32 %s14, 2
      // Predicated region
      $region61: #{nerfw_forward.1} parent=59 // pred_check
        %p9819 = pneg %p216
      $region62: #{nerfw_forward.1} parent=59 // pred_check_branch
        %9821 = sbr.rel (%p9819) target = $region64
      $region63: #{nerfw_forward.1} parent=59 // pred_region
        %s9822 = smul.u32 64, %s20
        %p9823 = scmp.lt.s32.totalorder %s9822, 127
        %s9824 = scalar_select %p9823, %s9822, 127
        %s9825 = smul.addr %s9824, 8
        %s9826 = scalar_lea.vmem %s8, %s9825
      $region64: #{nerfw_forward.1} parent=59 // pred_fallthru
        _
    $region60: #{nerfw_forward.1} parent=5 // pred_fallthru
      _
  $region6: #{nerfw_forward.1} parent=0 // loop_footer
    %s18 = sadd.s32 1, %s14
  $region7: #{nerfw_forward.1} parent=0 // loop_footer_branch
    %13 = sbr.rel target = $region3
  $region8: #{nerfw_forward.1} parent=0 // loop_exit
    _

</llo_original>
